<compile_context>
chip_gen: v7x
topology: tpu7x:2x2x1
jax: 0.10.0
libtpu: 0.0.40
codegen_flags: <defaults>
</compile_context>

<pallas_src>
import jax
import jax.numpy as jnp
from jax.experimental import pallas as pl
from jax.experimental.pallas import tpu as pltpu

EPS = 1e-5
K = 3  # deconv kernel size (all three ConvTranspose2d layers are 3x3, stride 2, pad 0)

# (Cin, Cout, H_in) of the three ConvTranspose2d layers.  H_out = 2*H_in + 1.
_LAYER_CFG = ((64, 32, 4), (32, 8, 9), (8, 3, 19))
_H_FINAL = 39  # spatial size after the last deconv


# ---------------------------------------------------------------------------
# Kernel 1: fused  fc4+BN+ReLU -> fc5+BN+ReLU -> 3x (ConvTranspose2d+BN2d+act)
# Activation layout inside the deconv chain:  rows = (b, w), cols = (c, h).
# ---------------------------------------------------------------------------
def _bn2d_act(y, e, et, bias, gamma, beta, act):
    """Per-channel (training mode) BatchNorm + activation in the (B*Wo, Cout*Ho) layout.

    e : (Cout, Cout*Ho) 0/1 channel-membership matrix, et = e.T (passed precomputed).
    bias / gamma / beta : (1, Cout).
    """
    cout = e.shape[0]
    y = y + jnp.dot(bias, e, preferred_element_type=jnp.float32)          # conv bias
    n = y.shape[0] * (y.shape[1] // cout)                                  # B * Wo * Ho
    col_sum = jnp.sum(y, axis=0, keepdims=True)                            # (1, Cout*Ho)
    mu = jnp.dot(col_sum, et, preferred_element_type=jnp.float32) / n      # (1, Cout)
    yc = y - jnp.dot(mu, e, preferred_element_type=jnp.float32)
    sq_sum = jnp.sum(yc * yc, axis=0, keepdims=True)
    var = jnp.dot(sq_sum, et, preferred_element_type=jnp.float32) / n      # biased variance
    a = gamma * jax.lax.rsqrt(var + EPS)                                   # (1, Cout)
    out = yc * jnp.dot(a, e, preferred_element_type=jnp.float32) \
        + jnp.dot(beta, e, preferred_element_type=jnp.float32)
    if act == "relu":
        return jnp.maximum(out, 0.0)
    return jax.nn.sigmoid(out)


def _deconv_layer(x, g_ref, p_ref, e_ref, et_ref, b_ref, ga_ref, be_ref, act):
    """ConvTranspose2d(3x3, stride 2) + BN2d + act as 2-D matmuls.

    x      : (B*W,  Cin*H)   activation (rows = (b, w), cols = (c, h))
    g_ref  : (3, Cin*H, Cout*Ho)   bf16, kh/cin contraction folded per kw
    p_ref  : (3, B*Wo, B*W)        0/1 width-placement (block diagonal over batch)
    returns: (B*Wo, Cout*Ho)
    """
    xb = x.astype(jnp.bfloat16)
    y = None
    for kw in range(K):
        v = jnp.dot(xb, g_ref[kw], preferred_element_type=jnp.float32)     # (B*W,  Cout*Ho)
        t = jnp.dot(p_ref[kw], v, preferred_element_type=jnp.float32)      # (B*Wo, Cout*Ho)
        y = t if y is None else y + t
    return _bn2d_act(y, e_ref[...], et_ref[...], b_ref[...], ga_ref[...], be_ref[...], act)


def fused_decoder_kernel(z_ref, p_ref,
                         w4z_ref, w4p_ref, b4_ref, g4_ref, be4_ref,
                         w5_ref, b5_ref, g5_ref, be5_ref, qj_ref,
                         g6_ref, p6_ref, e6_ref, et6_ref, b6_ref, ga6_ref, be6_ref,
                         g7_ref, p7_ref, e7_ref, et7_ref, b7_ref, ga7_ref, be7_ref,
                         g8_ref, p8_ref, e8_ref, et8_ref, b8_ref, ga8_ref, be8_ref,
                         o_ref):
    # ---- fc4 -> BN1d -> ReLU   (batch on sublanes, 768 features dense on lanes)
    z = z_ref[...]                                                # (B, latent)
    p = p_ref[...]                                                # (B, 1)
    h = jnp.dot(z.astype(jnp.bfloat16), w4z_ref[...],
                preferred_element_type=jnp.float32)
    h = h + p * w4p_ref[...] + b4_ref[...]                        # no host-side concat
    mu = jnp.mean(h, axis=0, keepdims=True)
    hc = h - mu
    var = jnp.mean(hc * hc, axis=0, keepdims=True)
    h = jnp.maximum(hc * jax.lax.rsqrt(var + EPS) * g4_ref[...] + be4_ref[...], 0.0)

    # ---- fc5 -> BN1d -> ReLU   (fc5 columns pre-permuted to (j, c, i) order in the wrapper)
    h2 = jnp.dot(h.astype(jnp.bfloat16), w5_ref[...],
                 preferred_element_type=jnp.float32) + b5_ref[...]
    mu2 = jnp.mean(h2, axis=0, keepdims=True)
    h2c = h2 - mu2
    var2 = jnp.mean(h2c * h2c, axis=0, keepdims=True)
    f = jnp.maximum(h2c * jax.lax.rsqrt(var2 + EPS) * g5_ref[...] + be5_ref[...], 0.0)  # (B,1024)

    # ---- rearrange fc output into the deconv layout A[(b, j), (c, i)] with 4 tiny matmuls
    blk = 64 * 4                                                  # Cin*H of the first deconv
    a = None
    for j in range(4):
        t = jnp.dot(qj_ref[j], f[:, j * blk:(j + 1) * blk],
                    preferred_element_type=jnp.float32)           # (B*4, 256)
        a = t if a is None else a + t

    # ---- three fused ConvTranspose2d + BN2d + act layers (all intermediates stay on-chip)
    y6 = _deconv_layer(a,  g6_ref, p6_ref, e6_ref, et6_ref, b6_ref, ga6_ref, be6_ref, "relu")
    y7 = _deconv_layer(y6, g7_ref, p7_ref, e7_ref, et7_ref, b7_ref, ga7_ref, be7_ref, "relu")
    y8 = _deconv_layer(y7, g8_ref, p8_ref, e8_ref, et8_ref, b8_ref, ga8_ref, be8_ref, "sigmoid")
    o_ref[...] = y8                                               # (B*39, 3*39)


# ---------------------------------------------------------------------------
# Kernel 2: bilinear resize (align_corners=False), gridded over (channel, batch)
# planes, each plane = two dense matmuls, output written directly in NCHW.
# ---------------------------------------------------------------------------
def resize_kernel(x_ref, ah_ref, awt_ref, o_ref):
    plane = x_ref[0, 0]                                                     # (Hi, Wi)
    t = jnp.dot(ah_ref[...], plane, preferred_element_type=jnp.float32)     # (Ho, Wi)
    o_ref[0, 0] = jnp.dot(t, awt_ref[...], preferred_element_type=jnp.float32)


# ---------------------------------------------------------------------------
# Parameter preparation (wrapper-side, plain JAX — runs once under jit)
# ---------------------------------------------------------------------------
def _g_matrix(w_pt, h_in):
    """Fold kh + cin of a ConvTranspose2d weight into one matmul operand.

    w_pt: (Cin, Cout, 3, 3) PyTorch layout.
    Returns (3, Cin*H, Cout*Ho) bf16 with
      G[kw, ci*H + i, co*Ho + oh] = w_pt[ci, co, oh - 2*i, kw]  (0 if oh-2*i not in [0,3)).
    """
    cin, cout = w_pt.shape[0], w_pt.shape[1]
    ho = 2 * h_in + 1
    kh = jnp.arange(K)[:, None, None]
    oh = jnp.arange(ho)[None, :, None]
    ii = jnp.arange(h_in)[None, None, :]
    tsel = (oh == 2 * ii + kh).astype(jnp.float32)                # (K, Ho, H)  [kh, oh, i]
    g = jnp.einsum('abcd,cef->dafbe', w_pt, tsel)                 # (kw, ci, i, co, oh)
    return g.reshape(K, cin * h_in, cout * ho).astype(jnp.bfloat16)


def _p_matrix(batch, w_in):
    """Width/kw placement: (3, B*Wo, B*W) 0/1, entry 1 iff same batch and ow == 2*j + kw."""
    wo = 2 * w_in + 1
    q = jnp.arange(batch * wo)
    r = jnp.arange(batch * w_in)
    b2, ow = q // wo, q % wo
    b1, j1 = r // w_in, r % w_in
    same_b = b2[:, None] == b1[None, :]
    return jnp.stack(
        [(same_b & (ow[:, None] == 2 * j1[None, :] + kw)).astype(jnp.float32)
         for kw in range(K)], axis=0)


def _e_matrices(cout, ho):
    e = (jnp.arange(cout)[:, None] == (jnp.arange(cout * ho)[None, :] // ho)).astype(jnp.float32)
    return e, e.T


def _bilinear_matrix(out_size, in_size):
    # PyTorch F.interpolate(mode='bilinear', align_corners=False)
    scale = in_size / out_size
    dst = jnp.arange(out_size, dtype=jnp.float32)
    src = jnp.maximum((dst + 0.5) * scale - 0.5, 0.0)
    i0 = jnp.minimum(jnp.floor(src).astype(jnp.int32), in_size - 1)
    i1 = jnp.minimum(i0 + 1, in_size - 1)
    w1 = src - i0.astype(jnp.float32)
    w0 = 1.0 - w1
    rows = jnp.arange(out_size)
    a = jnp.zeros((out_size, in_size), jnp.float32)
    a = a.at[rows, i0].add(w0)
    a = a.at[rows, i1].add(w1)
    return a


def _prepare_operands(params, batch, latent_dim):
    p = params
    # fc4 split into z / p parts (no concat needed on the host or in the kernel)
    w4z = p["w4"][:latent_dim].astype(jnp.bfloat16)               # (latent, 768)
    w4p = p["w4"][latent_dim:latent_dim + 1]                      # (1, 768) f32

    # permute fc5 output features (c, i, j) -> (j, c, i) so the kernel can build the
    # (B*4, 64*4) deconv-input layout with 4 tiny matmuls (BN1d is permutation invariant).
    idx = jnp.arange(64 * 4 * 4)
    jj = idx // 256
    rem = idx % 256
    cc = rem // 4
    ii = rem % 4
    perm = cc * 16 + ii * 4 + jj
    w5p = p["w5"][:, perm].astype(jnp.bfloat16)
    b5p, g5p, be5p = p["b5"][:, perm], p["g5"][:, perm], p["be5"][:, perm]

    # QJ[j][(b*4 + j'), b'] = 1 iff b == b' and j == j'   -> places j-block of fc output
    rows = jnp.arange(4 * batch)
    cols = jnp.arange(batch)
    b_r, j_r = rows // 4, rows % 4
    qj = jnp.stack([((b_r[:, None] == cols[None, :]) & (j_r[:, None] == j)).astype(jnp.float32)
                    for j in range(4)], axis=0)                   # (4, 4B, B)

    ops = [w4z, w4p, p["b4"], p["g4"], p["be4"],
           w5p, b5p, g5p, be5p, qj]
    for (lname, (cin, cout, h_in)) in zip(("6", "7", "8"), _LAYER_CFG):
        ho = 2 * h_in + 1
        e, et = _e_matrices(cout, ho)
        ops += [_g_matrix(p["w" + lname], h_in),
                _p_matrix(batch, h_in),
                e, et,
                p["b" + lname], p["g" + lname], p["be" + lname]]
    return ops


def init_params(key, latent_dim):
    ks = jax.random.split(key, 10)

    def rnd(k, shape, scale=0.05):
        return jax.random.normal(k, shape, jnp.float32) * scale

    p = {}
    p["w4"] = rnd(ks[0], (latent_dim + 1, 768))
    p["b4"] = rnd(ks[1], (1, 768))
    p["g4"] = jnp.ones((1, 768), jnp.float32)
    p["be4"] = jnp.zeros((1, 768), jnp.float32)
    p["w5"] = rnd(ks[2], (768, 1024))
    p["b5"] = rnd(ks[3], (1, 1024))
    p["g5"] = jnp.ones((1, 1024), jnp.float32)
    p["be5"] = jnp.zeros((1, 1024), jnp.float32)
    # ConvTranspose2d weights in the native PyTorch layout (Cin, Cout, K, K)
    for (lname, kb, (cin, cout, _)) in zip(("6", "7", "8"), (4, 6, 8), _LAYER_CFG):
        p["w" + lname] = rnd(ks[kb], (cin, cout, K, K))
        p["b" + lname] = rnd(ks[kb + 1], (1, cout))
        p["g" + lname] = jnp.ones((1, cout), jnp.float32)
        p["be" + lname] = jnp.zeros((1, cout), jnp.float32)
    return p


# ---------------------------------------------------------------------------
# Forward
# ---------------------------------------------------------------------------
def private_decoder_forward(z, p_scalar, params, img_dim):
    batch, latent_dim = z.shape
    ops = _prepare_operands(params, batch, latent_dim)
    n_in = 2 + len(ops)

    # (1) fused FC + deconv chain — single pallas_call, everything stays in VMEM.
    y8 = pl.pallas_call(
        fused_decoder_kernel,
        out_shape=jax.ShapeDtypeStruct((batch * _H_FINAL, 3 * _H_FINAL), jnp.float32),
        in_specs=[pl.BlockSpec(memory_space=pltpu.MemorySpace.VMEM)] * n_in,
        out_specs=pl.BlockSpec(memory_space=pltpu.MemorySpace.VMEM),
    )(z, p_scalar.reshape(-1, 1), *ops)

    # (B*39, 3*39) with rows (b, w), cols (c, h)  ->  (3, B, 39, 39) planes (cheap XLA glue).
    planes = y8.reshape(batch, _H_FINAL, 3, _H_FINAL).transpose(2, 0, 3, 1)

    # (2) bilinear resize, gridded over (channel, batch) planes, NCHW output blocks.
    ah = _bilinear_matrix(img_dim, _H_FINAL)                      # (img, 39)
    awt = _bilinear_matrix(img_dim, _H_FINAL).T                   # (39, img)
    out = pl.pallas_call(
        resize_kernel,
        out_shape=jax.ShapeDtypeStruct((batch, 3, img_dim, img_dim), jnp.float32),
        grid=(3, batch),
        in_specs=[
            pl.BlockSpec((1, 1, _H_FINAL, _H_FINAL), lambda c, b: (c, b, 0, 0)),
            pl.BlockSpec((img_dim, _H_FINAL), lambda c, b: (0, 0)),
            pl.BlockSpec((_H_FINAL, img_dim), lambda c, b: (0, 0)),
        ],
        out_specs=pl.BlockSpec((1, 1, img_dim, img_dim), lambda c, b: (b, c, 0, 0)),
        compiler_params=pltpu.CompilerParams(
            dimension_semantics=("parallel", "parallel")),
    )(planes, ah, awt)
    return out                                                    # (B, 3, img, img) NCHW


if __name__ == "__main__":
    latent_dim = 8
    img_dim = 64          # small img_dim for the demo (module default is 256)
    B = 2

    key = jax.random.PRNGKey(0)
    k_z, k_p, k_par = jax.random.split(key, 3)
    z = jax.random.normal(k_z, (B, latent_dim), jnp.float32)
    p_in = jax.random.normal(k_p, (B,), jnp.float32)
    params = init_params(k_par, latent_dim)

    fwd = jax.jit(private_decoder_forward, static_argnames=("img_dim",))
    out = fwd(z, p_in, params, img_dim=img_dim)
    out = jax.block_until_ready(out)

    assert out.shape == (B, 3, img_dim, img_dim), out.shape
    assert bool(jnp.all(jnp.isfinite(out)))
    assert bool(jnp.all((out >= 0.0) & (out <= 1.0)))   # sigmoid + bilinear stays in [0, 1]
    print("KERNEL_OK")
</pallas_src>

<mosaic_0001>
module attributes {stable_mosaic.version = 11 : i64} {
  func.func private @main(%arg0: i32) attributes {dimension_semantics = [#tpu.dimension_semantics<core_parallel>], iteration_bounds = array<i64: 2>, tpu.core_type = #tpu.core_type<sc_scalar_subcore>, window_params = []} {
    return
  }
}

module attributes {stable_mosaic.version = 11 : i64} {
  func.func private @main(%arg0: i32) attributes {dimension_semantics = [#tpu.dimension_semantics<core_parallel>], iteration_bounds = array<i64: 2>, tpu.core_type = #tpu.core_type<sc_scalar_subcore>, window_params = []} {
    return
  }
}

module attributes {stable_mosaic.version = 11 : i64} {
  func.func @fused_decoder_kernel(%arg0: memref<2x8xf32, #tpu.memory_space<vmem>>, %arg1: memref<2x1xf32, #tpu.memory_space<vmem>>, %arg2: memref<8x768xbf16, #tpu.memory_space<vmem>>, %arg3: memref<1x768xf32, #tpu.memory_space<vmem>>, %arg4: memref<1x768xf32, #tpu.memory_space<vmem>>, %arg5: memref<1x768xf32, #tpu.memory_space<vmem>>, %arg6: memref<1x768xf32, #tpu.memory_space<vmem>>, %arg7: memref<768x1024xbf16, #tpu.memory_space<vmem>>, %arg8: memref<1x1024xf32, #tpu.memory_space<vmem>>, %arg9: memref<1x1024xf32, #tpu.memory_space<vmem>>, %arg10: memref<1x1024xf32, #tpu.memory_space<vmem>>, %arg11: memref<4x8x2xf32, #tpu.memory_space<vmem>>, %arg12: memref<3x256x288xbf16, #tpu.memory_space<vmem>>, %arg13: memref<3x18x8xf32, #tpu.memory_space<vmem>>, %arg14: memref<32x288xf32, #tpu.memory_space<vmem>>, %arg15: memref<288x32xf32, #tpu.memory_space<vmem>>, %arg16: memref<1x32xf32, #tpu.memory_space<vmem>>, %arg17: memref<1x32xf32, #tpu.memory_space<vmem>>, %arg18: memref<1x32xf32, #tpu.memory_space<vmem>>, %arg19: memref<3x288x152xbf16, #tpu.memory_space<vmem>>, %arg20: memref<3x38x18xf32, #tpu.memory_space<vmem>>, %arg21: memref<8x152xf32, #tpu.memory_space<vmem>>, %arg22: memref<152x8xf32, #tpu.memory_space<vmem>>, %arg23: memref<1x8xf32, #tpu.memory_space<vmem>>, %arg24: memref<1x8xf32, #tpu.memory_space<vmem>>, %arg25: memref<1x8xf32, #tpu.memory_space<vmem>>, %arg26: memref<3x152x117xbf16, #tpu.memory_space<vmem>>, %arg27: memref<3x78x38xf32, #tpu.memory_space<vmem>>, %arg28: memref<3x117xf32, #tpu.memory_space<vmem>>, %arg29: memref<117x3xf32, #tpu.memory_space<vmem>>, %arg30: memref<1x3xf32, #tpu.memory_space<vmem>>, %arg31: memref<1x3xf32, #tpu.memory_space<vmem>>, %arg32: memref<1x3xf32, #tpu.memory_space<vmem>>, %arg33: memref<78x117xf32, #tpu.memory_space<vmem>>) attributes {dimension_semantics = [], scalar_prefetch = 0 : i64, scratch_operands = 0 : i64, tpu.core_type = #tpu.core_type<tc>} {
    %c0 = arith.constant 0 : index
    %c0_0 = arith.constant 0 : index
    %0 = vector.load %arg0[%c0, %c0_0] : memref<2x8xf32, #tpu.memory_space<vmem>>, vector<2x8xf32>
    %c0_1 = arith.constant 0 : index
    %c0_2 = arith.constant 0 : index
    %1 = vector.load %arg1[%c0_1, %c0_2] : memref<2x1xf32, #tpu.memory_space<vmem>>, vector<2x1xf32>
    %2 = arith.truncf %0 : vector<2x8xf32> to vector<2x8xbf16>
    %c0_3 = arith.constant 0 : index
    %c0_4 = arith.constant 0 : index
    %3 = vector.load %arg2[%c0_3, %c0_4] : memref<8x768xbf16, #tpu.memory_space<vmem>>, vector<8x768xbf16>
    %cst = arith.constant dense<0.000000e+00> : vector<2x768xf32>
    %4 = tpu.matmul %2, %3, %cst {dimension_numbers = #tpu.dot_dimension_numbers<[1], [0], [0], [1], [0, 0, 1, 1], [], []>} : vector<2x8xbf16>, vector<8x768xbf16>, vector<2x768xf32> -> vector<2x768xf32>
    %c0_5 = arith.constant 0 : index
    %c0_6 = arith.constant 0 : index
    %5 = vector.load %arg3[%c0_5, %c0_6] : memref<1x768xf32, #tpu.memory_space<vmem>>, vector<1x768xf32>
    %6 = vector.broadcast %1 : vector<2x1xf32> to vector<2x768xf32>
    %7 = vector.broadcast %5 : vector<1x768xf32> to vector<2x768xf32>
    %8 = arith.mulf %6, %7 : vector<2x768xf32>
    %9 = arith.addf %4, %8 : vector<2x768xf32>
    %c0_7 = arith.constant 0 : index
    %c0_8 = arith.constant 0 : index
    %10 = vector.load %arg4[%c0_7, %c0_8] : memref<1x768xf32, #tpu.memory_space<vmem>>, vector<1x768xf32>
    %11 = vector.broadcast %10 : vector<1x768xf32> to vector<2x768xf32>
    %12 = arith.addf %9, %11 : vector<2x768xf32>
    %cst_9 = arith.constant dense<0.000000e+00> : vector<768xf32>
    %13 = vector.multi_reduction <add>, %12, %cst_9 [0] : vector<2x768xf32> to vector<768xf32>
    %14 = vector.shape_cast %13 : vector<768xf32> to vector<1x768xf32>
    %cst_10 = arith.constant 2.000000e+00 : f32
    %15 = vector.broadcast %cst_10 : f32 to vector<1x768xf32>
    %16 = arith.divf %14, %15 : vector<1x768xf32>
    %17 = vector.broadcast %16 : vector<1x768xf32> to vector<2x768xf32>
    %18 = arith.subf %12, %17 : vector<2x768xf32>
    %19 = arith.mulf %18, %18 : vector<2x768xf32>
    %cst_11 = arith.constant dense<0.000000e+00> : vector<768xf32>
    %20 = vector.multi_reduction <add>, %19, %cst_11 [0] : vector<2x768xf32> to vector<768xf32>
    %21 = vector.shape_cast %20 : vector<768xf32> to vector<1x768xf32>
    %cst_12 = arith.constant 2.000000e+00 : f32
    %22 = vector.broadcast %cst_12 : f32 to vector<1x768xf32>
    %23 = arith.divf %21, %22 : vector<1x768xf32>
    %cst_13 = arith.constant 9.99999974E-6 : f32
    %24 = vector.broadcast %cst_13 : f32 to vector<1x768xf32>
    %25 = arith.addf %23, %24 : vector<1x768xf32>
    %26 = math.rsqrt %25 : vector<1x768xf32>
    %27 = vector.broadcast %26 : vector<1x768xf32> to vector<2x768xf32>
    %28 = arith.mulf %18, %27 : vector<2x768xf32>
    %c0_14 = arith.constant 0 : index
    %c0_15 = arith.constant 0 : index
    %29 = vector.load %arg5[%c0_14, %c0_15] : memref<1x768xf32, #tpu.memory_space<vmem>>, vector<1x768xf32>
    %30 = vector.broadcast %29 : vector<1x768xf32> to vector<2x768xf32>
    %31 = arith.mulf %28, %30 : vector<2x768xf32>
    %c0_16 = arith.constant 0 : index
    %c0_17 = arith.constant 0 : index
    %32 = vector.load %arg6[%c0_16, %c0_17] : memref<1x768xf32, #tpu.memory_space<vmem>>, vector<1x768xf32>
    %33 = vector.broadcast %32 : vector<1x768xf32> to vector<2x768xf32>
    %34 = arith.addf %31, %33 : vector<2x768xf32>
    %cst_18 = arith.constant 0.000000e+00 : f32
    %35 = vector.broadcast %cst_18 : f32 to vector<2x768xf32>
    %36 = arith.maximumf %34, %35 : vector<2x768xf32>
    %37 = arith.truncf %36 : vector<2x768xf32> to vector<2x768xbf16>
    %c0_19 = arith.constant 0 : index
    %c0_20 = arith.constant 0 : index
    %38 = vector.load %arg7[%c0_19, %c0_20] : memref<768x1024xbf16, #tpu.memory_space<vmem>>, vector<768x1024xbf16>
    %cst_21 = arith.constant dense<0.000000e+00> : vector<2x1024xf32>
    %39 = tpu.matmul %37, %38, %cst_21 {dimension_numbers = #tpu.dot_dimension_numbers<[1], [0], [0], [1], [0, 0, 1, 1], [], []>} : vector<2x768xbf16>, vector<768x1024xbf16>, vector<2x1024xf32> -> vector<2x1024xf32>
    %c0_22 = arith.constant 0 : index
    %c0_23 = arith.constant 0 : index
    %40 = vector.load %arg8[%c0_22, %c0_23] : memref<1x1024xf32, #tpu.memory_space<vmem>>, vector<1x1024xf32>
    %41 = vector.broadcast %40 : vector<1x1024xf32> to vector<2x1024xf32>
    %42 = arith.addf %39, %41 : vector<2x1024xf32>
    %cst_24 = arith.constant dense<0.000000e+00> : vector<1024xf32>
    %43 = vector.multi_reduction <add>, %42, %cst_24 [0] : vector<2x1024xf32> to vector<1024xf32>
    %44 = vector.shape_cast %43 : vector<1024xf32> to vector<1x1024xf32>
    %cst_25 = arith.constant 2.000000e+00 : f32
    %45 = vector.broadcast %cst_25 : f32 to vector<1x1024xf32>
    %46 = arith.divf %44, %45 : vector<1x1024xf32>
    %47 = vector.broadcast %46 : vector<1x1024xf32> to vector<2x1024xf32>
    %48 = arith.subf %42, %47 : vector<2x1024xf32>
    %49 = arith.mulf %48, %48 : vector<2x1024xf32>
    %cst_26 = arith.constant dense<0.000000e+00> : vector<1024xf32>
    %50 = vector.multi_reduction <add>, %49, %cst_26 [0] : vector<2x1024xf32> to vector<1024xf32>
    %51 = vector.shape_cast %50 : vector<1024xf32> to vector<1x1024xf32>
    %cst_27 = arith.constant 2.000000e+00 : f32
    %52 = vector.broadcast %cst_27 : f32 to vector<1x1024xf32>
    %53 = arith.divf %51, %52 : vector<1x1024xf32>
    %cst_28 = arith.constant 9.99999974E-6 : f32
    %54 = vector.broadcast %cst_28 : f32 to vector<1x1024xf32>
    %55 = arith.addf %53, %54 : vector<1x1024xf32>
    %56 = math.rsqrt %55 : vector<1x1024xf32>
    %57 = vector.broadcast %56 : vector<1x1024xf32> to vector<2x1024xf32>
    %58 = arith.mulf %48, %57 : vector<2x1024xf32>
    %c0_29 = arith.constant 0 : index
    %c0_30 = arith.constant 0 : index
    %59 = vector.load %arg9[%c0_29, %c0_30] : memref<1x1024xf32, #tpu.memory_space<vmem>>, vector<1x1024xf32>
    %60 = vector.broadcast %59 : vector<1x1024xf32> to vector<2x1024xf32>
    %61 = arith.mulf %58, %60 : vector<2x1024xf32>
    %c0_31 = arith.constant 0 : index
    %c0_32 = arith.constant 0 : index
    %62 = vector.load %arg10[%c0_31, %c0_32] : memref<1x1024xf32, #tpu.memory_space<vmem>>, vector<1x1024xf32>
    %63 = vector.broadcast %62 : vector<1x1024xf32> to vector<2x1024xf32>
    %64 = arith.addf %61, %63 : vector<2x1024xf32>
    %cst_33 = arith.constant 0.000000e+00 : f32
    %65 = vector.broadcast %cst_33 : f32 to vector<2x1024xf32>
    %66 = arith.maximumf %64, %65 : vector<2x1024xf32>
    %c0_34 = arith.constant 0 : index
    %c0_35 = arith.constant 0 : index
    %c0_36 = arith.constant 0 : index
    %67 = vector.load %arg11[%c0_34, %c0_35, %c0_36] : memref<4x8x2xf32, #tpu.memory_space<vmem>>, vector<1x8x2xf32>
    %68 = vector.shape_cast %67 : vector<1x8x2xf32> to vector<8x2xf32>
    %69 = vector.extract_strided_slice %66 {offsets = [0, 0], sizes = [2, 256], strides = [1, 1]} : vector<2x1024xf32> to vector<2x256xf32>
    %cst_37 = arith.constant dense<0.000000e+00> : vector<8x256xf32>
    %70 = tpu.matmul %68, %69, %cst_37 {dimension_numbers = #tpu.dot_dimension_numbers<[1], [0], [0], [1], [0, 0, 1, 1], [], []>} : vector<8x2xf32>, vector<2x256xf32>, vector<8x256xf32> -> vector<8x256xf32>
    %c1 = arith.constant 1 : index
    %c0_38 = arith.constant 0 : index
    %c0_39 = arith.constant 0 : index
    %71 = vector.load %arg11[%c1, %c0_38, %c0_39] : memref<4x8x2xf32, #tpu.memory_space<vmem>>, vector<1x8x2xf32>
    %72 = vector.shape_cast %71 : vector<1x8x2xf32> to vector<8x2xf32>
    %73 = vector.extract_strided_slice %66 {offsets = [0, 256], sizes = [2, 256], strides = [1, 1]} : vector<2x1024xf32> to vector<2x256xf32>
    %cst_40 = arith.constant dense<0.000000e+00> : vector<8x256xf32>
    %74 = tpu.matmul %72, %73, %cst_40 {dimension_numbers = #tpu.dot_dimension_numbers<[1], [0], [0], [1], [0, 0, 1, 1], [], []>} : vector<8x2xf32>, vector<2x256xf32>, vector<8x256xf32> -> vector<8x256xf32>
    %75 = arith.addf %70, %74 : vector<8x256xf32>
    %c2 = arith.constant 2 : index
    %c0_41 = arith.constant 0 : index
    %c0_42 = arith.constant 0 : index
    %76 = vector.load %arg11[%c2, %c0_41, %c0_42] : memref<4x8x2xf32, #tpu.memory_space<vmem>>, vector<1x8x2xf32>
    %77 = vector.shape_cast %76 : vector<1x8x2xf32> to vector<8x2xf32>
    %78 = vector.extract_strided_slice %66 {offsets = [0, 512], sizes = [2, 256], strides = [1, 1]} : vector<2x1024xf32> to vector<2x256xf32>
    %cst_43 = arith.constant dense<0.000000e+00> : vector<8x256xf32>
    %79 = tpu.matmul %77, %78, %cst_43 {dimension_numbers = #tpu.dot_dimension_numbers<[1], [0], [0], [1], [0, 0, 1, 1], [], []>} : vector<8x2xf32>, vector<2x256xf32>, vector<8x256xf32> -> vector<8x256xf32>
    %80 = arith.addf %75, %79 : vector<8x256xf32>
    %c3 = arith.constant 3 : index
    %c0_44 = arith.constant 0 : index
    %c0_45 = arith.constant 0 : index
    %81 = vector.load %arg11[%c3, %c0_44, %c0_45] : memref<4x8x2xf32, #tpu.memory_space<vmem>>, vector<1x8x2xf32>
    %82 = vector.shape_cast %81 : vector<1x8x2xf32> to vector<8x2xf32>
    %83 = vector.extract_strided_slice %66 {offsets = [0, 768], sizes = [2, 256], strides = [1, 1]} : vector<2x1024xf32> to vector<2x256xf32>
    %cst_46 = arith.constant dense<0.000000e+00> : vector<8x256xf32>
    %84 = tpu.matmul %82, %83, %cst_46 {dimension_numbers = #tpu.dot_dimension_numbers<[1], [0], [0], [1], [0, 0, 1, 1], [], []>} : vector<8x2xf32>, vector<2x256xf32>, vector<8x256xf32> -> vector<8x256xf32>
    %85 = arith.addf %80, %84 : vector<8x256xf32>
    %86 = arith.truncf %85 : vector<8x256xf32> to vector<8x256xbf16>
    %c0_47 = arith.constant 0 : index
    %c0_48 = arith.constant 0 : index
    %c0_49 = arith.constant 0 : index
    %87 = vector.load %arg12[%c0_47, %c0_48, %c0_49] : memref<3x256x288xbf16, #tpu.memory_space<vmem>>, vector<1x256x288xbf16>
    %88 = vector.shape_cast %87 : vector<1x256x288xbf16> to vector<256x288xbf16>
    %cst_50 = arith.constant dense<0.000000e+00> : vector<8x288xf32>
    %89 = tpu.matmul %86, %88, %cst_50 {dimension_numbers = #tpu.dot_dimension_numbers<[1], [0], [0], [1], [0, 0, 1, 1], [], []>} : vector<8x256xbf16>, vector<256x288xbf16>, vector<8x288xf32> -> vector<8x288xf32>
    %c0_51 = arith.constant 0 : index
    %c0_52 = arith.constant 0 : index
    %c0_53 = arith.constant 0 : index
    %90 = vector.load %arg13[%c0_51, %c0_52, %c0_53] : memref<3x18x8xf32, #tpu.memory_space<vmem>>, vector<1x18x8xf32>
    %91 = vector.shape_cast %90 : vector<1x18x8xf32> to vector<18x8xf32>
    %cst_54 = arith.constant dense<0.000000e+00> : vector<18x288xf32>
    %92 = tpu.matmul %91, %89, %cst_54 {dimension_numbers = #tpu.dot_dimension_numbers<[1], [0], [0], [1], [0, 0, 1, 1], [], []>} : vector<18x8xf32>, vector<8x288xf32>, vector<18x288xf32> -> vector<18x288xf32>
    %c1_55 = arith.constant 1 : index
    %c0_56 = arith.constant 0 : index
    %c0_57 = arith.constant 0 : index
    %93 = vector.load %arg12[%c1_55, %c0_56, %c0_57] : memref<3x256x288xbf16, #tpu.memory_space<vmem>>, vector<1x256x288xbf16>
    %94 = vector.shape_cast %93 : vector<1x256x288xbf16> to vector<256x288xbf16>
    %cst_58 = arith.constant dense<0.000000e+00> : vector<8x288xf32>
    %95 = tpu.matmul %86, %94, %cst_58 {dimension_numbers = #tpu.dot_dimension_numbers<[1], [0], [0], [1], [0, 0, 1, 1], [], []>} : vector<8x256xbf16>, vector<256x288xbf16>, vector<8x288xf32> -> vector<8x288xf32>
    %c1_59 = arith.constant 1 : index
    %c0_60 = arith.constant 0 : index
    %c0_61 = arith.constant 0 : index
    %96 = vector.load %arg13[%c1_59, %c0_60, %c0_61] : memref<3x18x8xf32, #tpu.memory_space<vmem>>, vector<1x18x8xf32>
    %97 = vector.shape_cast %96 : vector<1x18x8xf32> to vector<18x8xf32>
    %cst_62 = arith.constant dense<0.000000e+00> : vector<18x288xf32>
    %98 = tpu.matmul %97, %95, %cst_62 {dimension_numbers = #tpu.dot_dimension_numbers<[1], [0], [0], [1], [0, 0, 1, 1], [], []>} : vector<18x8xf32>, vector<8x288xf32>, vector<18x288xf32> -> vector<18x288xf32>
    %99 = arith.addf %92, %98 : vector<18x288xf32>
    %c2_63 = arith.constant 2 : index
    %c0_64 = arith.constant 0 : index
    %c0_65 = arith.constant 0 : index
    %100 = vector.load %arg12[%c2_63, %c0_64, %c0_65] : memref<3x256x288xbf16, #tpu.memory_space<vmem>>, vector<1x256x288xbf16>
    %101 = vector.shape_cast %100 : vector<1x256x288xbf16> to vector<256x288xbf16>
    %cst_66 = arith.constant dense<0.000000e+00> : vector<8x288xf32>
    %102 = tpu.matmul %86, %101, %cst_66 {dimension_numbers = #tpu.dot_dimension_numbers<[1], [0], [0], [1], [0, 0, 1, 1], [], []>} : vector<8x256xbf16>, vector<256x288xbf16>, vector<8x288xf32> -> vector<8x288xf32>
    %c2_67 = arith.constant 2 : index
    %c0_68 = arith.constant 0 : index
    %c0_69 = arith.constant 0 : index
    %103 = vector.load %arg13[%c2_67, %c0_68, %c0_69] : memref<3x18x8xf32, #tpu.memory_space<vmem>>, vector<1x18x8xf32>
    %104 = vector.shape_cast %103 : vector<1x18x8xf32> to vector<18x8xf32>
    %cst_70 = arith.constant dense<0.000000e+00> : vector<18x288xf32>
    %105 = tpu.matmul %104, %102, %cst_70 {dimension_numbers = #tpu.dot_dimension_numbers<[1], [0], [0], [1], [0, 0, 1, 1], [], []>} : vector<18x8xf32>, vector<8x288xf32>, vector<18x288xf32> -> vector<18x288xf32>
    %106 = arith.addf %99, %105 : vector<18x288xf32>
    %c0_71 = arith.constant 0 : index
    %c0_72 = arith.constant 0 : index
    %107 = vector.load %arg14[%c0_71, %c0_72] : memref<32x288xf32, #tpu.memory_space<vmem>>, vector<32x288xf32>
    %c0_73 = arith.constant 0 : index
    %c0_74 = arith.constant 0 : index
    %108 = vector.load %arg15[%c0_73, %c0_74] : memref<288x32xf32, #tpu.memory_space<vmem>>, vector<288x32xf32>
    %c0_75 = arith.constant 0 : index
    %c0_76 = arith.constant 0 : index
    %109 = vector.load %arg16[%c0_75, %c0_76] : memref<1x32xf32, #tpu.memory_space<vmem>>, vector<1x32xf32>
    %c0_77 = arith.constant 0 : index
    %c0_78 = arith.constant 0 : index
    %110 = vector.load %arg17[%c0_77, %c0_78] : memref<1x32xf32, #tpu.memory_space<vmem>>, vector<1x32xf32>
    %c0_79 = arith.constant 0 : index
    %c0_80 = arith.constant 0 : index
    %111 = vector.load %arg18[%c0_79, %c0_80] : memref<1x32xf32, #tpu.memory_space<vmem>>, vector<1x32xf32>
    %cst_81 = arith.constant dense<0.000000e+00> : vector<1x288xf32>
    %112 = tpu.matmul %109, %107, %cst_81 {dimension_numbers = #tpu.dot_dimension_numbers<[1], [0], [0], [1], [0, 0, 1, 1], [], []>} : vector<1x32xf32>, vector<32x288xf32>, vector<1x288xf32> -> vector<1x288xf32>
    %113 = vector.broadcast %112 : vector<1x288xf32> to vector<18x288xf32>
    %114 = arith.addf %106, %113 : vector<18x288xf32>
    %cst_82 = arith.constant dense<0.000000e+00> : vector<288xf32>
    %115 = vector.multi_reduction <add>, %114, %cst_82 [0] : vector<18x288xf32> to vector<288xf32>
    %116 = vector.shape_cast %115 : vector<288xf32> to vector<1x288xf32>
    %cst_83 = arith.constant dense<0.000000e+00> : vector<1x32xf32>
    %117 = tpu.matmul %116, %108, %cst_83 {dimension_numbers = #tpu.dot_dimension_numbers<[1], [0], [0], [1], [0, 0, 1, 1], [], []>} : vector<1x288xf32>, vector<288x32xf32>, vector<1x32xf32> -> vector<1x32xf32>
    %cst_84 = arith.constant 1.620000e+02 : f32
    %118 = vector.broadcast %cst_84 : f32 to vector<1x32xf32>
    %119 = arith.divf %117, %118 : vector<1x32xf32>
    %cst_85 = arith.constant dense<0.000000e+00> : vector<1x288xf32>
    %120 = tpu.matmul %119, %107, %cst_85 {dimension_numbers = #tpu.dot_dimension_numbers<[1], [0], [0], [1], [0, 0, 1, 1], [], []>} : vector<1x32xf32>, vector<32x288xf32>, vector<1x288xf32> -> vector<1x288xf32>
    %121 = vector.broadcast %120 : vector<1x288xf32> to vector<18x288xf32>
    %122 = arith.subf %114, %121 : vector<18x288xf32>
    %123 = arith.mulf %122, %122 : vector<18x288xf32>
    %cst_86 = arith.constant dense<0.000000e+00> : vector<288xf32>
    %124 = vector.multi_reduction <add>, %123, %cst_86 [0] : vector<18x288xf32> to vector<288xf32>
    %125 = vector.shape_cast %124 : vector<288xf32> to vector<1x288xf32>
    %cst_87 = arith.constant dense<0.000000e+00> : vector<1x32xf32>
    %126 = tpu.matmul %125, %108, %cst_87 {dimension_numbers = #tpu.dot_dimension_numbers<[1], [0], [0], [1], [0, 0, 1, 1], [], []>} : vector<1x288xf32>, vector<288x32xf32>, vector<1x32xf32> -> vector<1x32xf32>
    %cst_88 = arith.constant 1.620000e+02 : f32
    %127 = vector.broadcast %cst_88 : f32 to vector<1x32xf32>
    %128 = arith.divf %126, %127 : vector<1x32xf32>
    %cst_89 = arith.constant 9.99999974E-6 : f32
    %129 = vector.broadcast %cst_89 : f32 to vector<1x32xf32>
    %130 = arith.addf %128, %129 : vector<1x32xf32>
    %131 = math.rsqrt %130 : vector<1x32xf32>
    %132 = arith.mulf %110, %131 : vector<1x32xf32>
    %cst_90 = arith.constant dense<0.000000e+00> : vector<1x288xf32>
    %133 = tpu.matmul %132, %107, %cst_90 {dimension_numbers = #tpu.dot_dimension_numbers<[1], [0], [0], [1], [0, 0, 1, 1], [], []>} : vector<1x32xf32>, vector<32x288xf32>, vector<1x288xf32> -> vector<1x288xf32>
    %134 = vector.broadcast %133 : vector<1x288xf32> to vector<18x288xf32>
    %135 = arith.mulf %122, %134 : vector<18x288xf32>
    %cst_91 = arith.constant dense<0.000000e+00> : vector<1x288xf32>
    %136 = tpu.matmul %111, %107, %cst_91 {dimension_numbers = #tpu.dot_dimension_numbers<[1], [0], [0], [1], [0, 0, 1, 1], [], []>} : vector<1x32xf32>, vector<32x288xf32>, vector<1x288xf32> -> vector<1x288xf32>
    %137 = vector.broadcast %136 : vector<1x288xf32> to vector<18x288xf32>
    %138 = arith.addf %135, %137 : vector<18x288xf32>
    %cst_92 = arith.constant 0.000000e+00 : f32
    %139 = vector.broadcast %cst_92 : f32 to vector<18x288xf32>
    %140 = arith.maximumf %138, %139 : vector<18x288xf32>
    %141 = arith.truncf %140 : vector<18x288xf32> to vector<18x288xbf16>
    %c0_93 = arith.constant 0 : index
    %c0_94 = arith.constant 0 : index
    %c0_95 = arith.constant 0 : index
    %142 = vector.load %arg19[%c0_93, %c0_94, %c0_95] : memref<3x288x152xbf16, #tpu.memory_space<vmem>>, vector<1x288x152xbf16>
    %143 = vector.shape_cast %142 : vector<1x288x152xbf16> to vector<288x152xbf16>
    %cst_96 = arith.constant dense<0.000000e+00> : vector<18x152xf32>
    %144 = tpu.matmul %141, %143, %cst_96 {dimension_numbers = #tpu.dot_dimension_numbers<[1], [0], [0], [1], [0, 0, 1, 1], [], []>} : vector<18x288xbf16>, vector<288x152xbf16>, vector<18x152xf32> -> vector<18x152xf32>
    %c0_97 = arith.constant 0 : index
    %c0_98 = arith.constant 0 : index
    %c0_99 = arith.constant 0 : index
    %145 = vector.load %arg20[%c0_97, %c0_98, %c0_99] : memref<3x38x18xf32, #tpu.memory_space<vmem>>, vector<1x38x18xf32>
    %146 = vector.shape_cast %145 : vector<1x38x18xf32> to vector<38x18xf32>
    %cst_100 = arith.constant dense<0.000000e+00> : vector<38x152xf32>
    %147 = tpu.matmul %146, %144, %cst_100 {dimension_numbers = #tpu.dot_dimension_numbers<[1], [0], [0], [1], [0, 0, 1, 1], [], []>} : vector<38x18xf32>, vector<18x152xf32>, vector<38x152xf32> -> vector<38x152xf32>
    %c1_101 = arith.constant 1 : index
    %c0_102 = arith.constant 0 : index
    %c0_103 = arith.constant 0 : index
    %148 = vector.load %arg19[%c1_101, %c0_102, %c0_103] : memref<3x288x152xbf16, #tpu.memory_space<vmem>>, vector<1x288x152xbf16>
    %149 = vector.shape_cast %148 : vector<1x288x152xbf16> to vector<288x152xbf16>
    %cst_104 = arith.constant dense<0.000000e+00> : vector<18x152xf32>
    %150 = tpu.matmul %141, %149, %cst_104 {dimension_numbers = #tpu.dot_dimension_numbers<[1], [0], [0], [1], [0, 0, 1, 1], [], []>} : vector<18x288xbf16>, vector<288x152xbf16>, vector<18x152xf32> -> vector<18x152xf32>
    %c1_105 = arith.constant 1 : index
    %c0_106 = arith.constant 0 : index
    %c0_107 = arith.constant 0 : index
    %151 = vector.load %arg20[%c1_105, %c0_106, %c0_107] : memref<3x38x18xf32, #tpu.memory_space<vmem>>, vector<1x38x18xf32>
    %152 = vector.shape_cast %151 : vector<1x38x18xf32> to vector<38x18xf32>
    %cst_108 = arith.constant dense<0.000000e+00> : vector<38x152xf32>
    %153 = tpu.matmul %152, %150, %cst_108 {dimension_numbers = #tpu.dot_dimension_numbers<[1], [0], [0], [1], [0, 0, 1, 1], [], []>} : vector<38x18xf32>, vector<18x152xf32>, vector<38x152xf32> -> vector<38x152xf32>
    %154 = arith.addf %147, %153 : vector<38x152xf32>
    %c2_109 = arith.constant 2 : index
    %c0_110 = arith.constant 0 : index
    %c0_111 = arith.constant 0 : index
    %155 = vector.load %arg19[%c2_109, %c0_110, %c0_111] : memref<3x288x152xbf16, #tpu.memory_space<vmem>>, vector<1x288x152xbf16>
    %156 = vector.shape_cast %155 : vector<1x288x152xbf16> to vector<288x152xbf16>
    %cst_112 = arith.constant dense<0.000000e+00> : vector<18x152xf32>
    %157 = tpu.matmul %141, %156, %cst_112 {dimension_numbers = #tpu.dot_dimension_numbers<[1], [0], [0], [1], [0, 0, 1, 1], [], []>} : vector<18x288xbf16>, vector<288x152xbf16>, vector<18x152xf32> -> vector<18x152xf32>
    %c2_113 = arith.constant 2 : index
    %c0_114 = arith.constant 0 : index
    %c0_115 = arith.constant 0 : index
    %158 = vector.load %arg20[%c2_113, %c0_114, %c0_115] : memref<3x38x18xf32, #tpu.memory_space<vmem>>, vector<1x38x18xf32>
    %159 = vector.shape_cast %158 : vector<1x38x18xf32> to vector<38x18xf32>
    %cst_116 = arith.constant dense<0.000000e+00> : vector<38x152xf32>
    %160 = tpu.matmul %159, %157, %cst_116 {dimension_numbers = #tpu.dot_dimension_numbers<[1], [0], [0], [1], [0, 0, 1, 1], [], []>} : vector<38x18xf32>, vector<18x152xf32>, vector<38x152xf32> -> vector<38x152xf32>
    %161 = arith.addf %154, %160 : vector<38x152xf32>
    %c0_117 = arith.constant 0 : index
    %c0_118 = arith.constant 0 : index
    %162 = vector.load %arg21[%c0_117, %c0_118] : memref<8x152xf32, #tpu.memory_space<vmem>>, vector<8x152xf32>
    %c0_119 = arith.constant 0 : index
    %c0_120 = arith.constant 0 : index
    %163 = vector.load %arg22[%c0_119, %c0_120] : memref<152x8xf32, #tpu.memory_space<vmem>>, vector<152x8xf32>
    %c0_121 = arith.constant 0 : index
    %c0_122 = arith.constant 0 : index
    %164 = vector.load %arg23[%c0_121, %c0_122] : memref<1x8xf32, #tpu.memory_space<vmem>>, vector<1x8xf32>
    %c0_123 = arith.constant 0 : index
    %c0_124 = arith.constant 0 : index
    %165 = vector.load %arg24[%c0_123, %c0_124] : memref<1x8xf32, #tpu.memory_space<vmem>>, vector<1x8xf32>
    %c0_125 = arith.constant 0 : index
    %c0_126 = arith.constant 0 : index
    %166 = vector.load %arg25[%c0_125, %c0_126] : memref<1x8xf32, #tpu.memory_space<vmem>>, vector<1x8xf32>
    %cst_127 = arith.constant dense<0.000000e+00> : vector<1x152xf32>
    %167 = tpu.matmul %164, %162, %cst_127 {dimension_numbers = #tpu.dot_dimension_numbers<[1], [0], [0], [1], [0, 0, 1, 1], [], []>} : vector<1x8xf32>, vector<8x152xf32>, vector<1x152xf32> -> vector<1x152xf32>
    %168 = vector.broadcast %167 : vector<1x152xf32> to vector<38x152xf32>
    %169 = arith.addf %161, %168 : vector<38x152xf32>
    %cst_128 = arith.constant dense<0.000000e+00> : vector<152xf32>
    %170 = vector.multi_reduction <add>, %169, %cst_128 [0] : vector<38x152xf32> to vector<152xf32>
    %171 = vector.shape_cast %170 : vector<152xf32> to vector<1x152xf32>
    %cst_129 = arith.constant dense<0.000000e+00> : vector<1x8xf32>
    %172 = tpu.matmul %171, %163, %cst_129 {dimension_numbers = #tpu.dot_dimension_numbers<[1], [0], [0], [1], [0, 0, 1, 1], [], []>} : vector<1x152xf32>, vector<152x8xf32>, vector<1x8xf32> -> vector<1x8xf32>
    %cst_130 = arith.constant 7.220000e+02 : f32
    %173 = vector.broadcast %cst_130 : f32 to vector<1x8xf32>
    %174 = arith.divf %172, %173 : vector<1x8xf32>
    %cst_131 = arith.constant dense<0.000000e+00> : vector<1x152xf32>
    %175 = tpu.matmul %174, %162, %cst_131 {dimension_numbers = #tpu.dot_dimension_numbers<[1], [0], [0], [1], [0, 0, 1, 1], [], []>} : vector<1x8xf32>, vector<8x152xf32>, vector<1x152xf32> -> vector<1x152xf32>
    %176 = vector.broadcast %175 : vector<1x152xf32> to vector<38x152xf32>
    %177 = arith.subf %169, %176 : vector<38x152xf32>
    %178 = arith.mulf %177, %177 : vector<38x152xf32>
    %cst_132 = arith.constant dense<0.000000e+00> : vector<152xf32>
    %179 = vector.multi_reduction <add>, %178, %cst_132 [0] : vector<38x152xf32> to vector<152xf32>
    %180 = vector.shape_cast %179 : vector<152xf32> to vector<1x152xf32>
    %cst_133 = arith.constant dense<0.000000e+00> : vector<1x8xf32>
    %181 = tpu.matmul %180, %163, %cst_133 {dimension_numbers = #tpu.dot_dimension_numbers<[1], [0], [0], [1], [0, 0, 1, 1], [], []>} : vector<1x152xf32>, vector<152x8xf32>, vector<1x8xf32> -> vector<1x8xf32>
    %cst_134 = arith.constant 7.220000e+02 : f32
    %182 = vector.broadcast %cst_134 : f32 to vector<1x8xf32>
    %183 = arith.divf %181, %182 : vector<1x8xf32>
    %cst_135 = arith.constant 9.99999974E-6 : f32
    %184 = vector.broadcast %cst_135 : f32 to vector<1x8xf32>
    %185 = arith.addf %183, %184 : vector<1x8xf32>
    %186 = math.rsqrt %185 : vector<1x8xf32>
    %187 = arith.mulf %165, %186 : vector<1x8xf32>
    %cst_136 = arith.constant dense<0.000000e+00> : vector<1x152xf32>
    %188 = tpu.matmul %187, %162, %cst_136 {dimension_numbers = #tpu.dot_dimension_numbers<[1], [0], [0], [1], [0, 0, 1, 1], [], []>} : vector<1x8xf32>, vector<8x152xf32>, vector<1x152xf32> -> vector<1x152xf32>
    %189 = vector.broadcast %188 : vector<1x152xf32> to vector<38x152xf32>
    %190 = arith.mulf %177, %189 : vector<38x152xf32>
    %cst_137 = arith.constant dense<0.000000e+00> : vector<1x152xf32>
    %191 = tpu.matmul %166, %162, %cst_137 {dimension_numbers = #tpu.dot_dimension_numbers<[1], [0], [0], [1], [0, 0, 1, 1], [], []>} : vector<1x8xf32>, vector<8x152xf32>, vector<1x152xf32> -> vector<1x152xf32>
    %192 = vector.broadcast %191 : vector<1x152xf32> to vector<38x152xf32>
    %193 = arith.addf %190, %192 : vector<38x152xf32>
    %cst_138 = arith.constant 0.000000e+00 : f32
    %194 = vector.broadcast %cst_138 : f32 to vector<38x152xf32>
    %195 = arith.maximumf %193, %194 : vector<38x152xf32>
    %196 = arith.truncf %195 : vector<38x152xf32> to vector<38x152xbf16>
    %c0_139 = arith.constant 0 : index
    %c0_140 = arith.constant 0 : index
    %c0_141 = arith.constant 0 : index
    %197 = vector.load %arg26[%c0_139, %c0_140, %c0_141] : memref<3x152x117xbf16, #tpu.memory_space<vmem>>, vector<1x152x117xbf16>
    %198 = vector.shape_cast %197 : vector<1x152x117xbf16> to vector<152x117xbf16>
    %cst_142 = arith.constant dense<0.000000e+00> : vector<38x117xf32>
    %199 = tpu.matmul %196, %198, %cst_142 {dimension_numbers = #tpu.dot_dimension_numbers<[1], [0], [0], [1], [0, 0, 1, 1], [], []>} : vector<38x152xbf16>, vector<152x117xbf16>, vector<38x117xf32> -> vector<38x117xf32>
    %c0_143 = arith.constant 0 : index
    %c0_144 = arith.constant 0 : index
    %c0_145 = arith.constant 0 : index
    %200 = vector.load %arg27[%c0_143, %c0_144, %c0_145] : memref<3x78x38xf32, #tpu.memory_space<vmem>>, vector<1x78x38xf32>
    %201 = vector.shape_cast %200 : vector<1x78x38xf32> to vector<78x38xf32>
    %cst_146 = arith.constant dense<0.000000e+00> : vector<78x117xf32>
    %202 = tpu.matmul %201, %199, %cst_146 {dimension_numbers = #tpu.dot_dimension_numbers<[1], [0], [0], [1], [0, 0, 1, 1], [], []>} : vector<78x38xf32>, vector<38x117xf32>, vector<78x117xf32> -> vector<78x117xf32>
    %c1_147 = arith.constant 1 : index
    %c0_148 = arith.constant 0 : index
    %c0_149 = arith.constant 0 : index
    %203 = vector.load %arg26[%c1_147, %c0_148, %c0_149] : memref<3x152x117xbf16, #tpu.memory_space<vmem>>, vector<1x152x117xbf16>
    %204 = vector.shape_cast %203 : vector<1x152x117xbf16> to vector<152x117xbf16>
    %cst_150 = arith.constant dense<0.000000e+00> : vector<38x117xf32>
    %205 = tpu.matmul %196, %204, %cst_150 {dimension_numbers = #tpu.dot_dimension_numbers<[1], [0], [0], [1], [0, 0, 1, 1], [], []>} : vector<38x152xbf16>, vector<152x117xbf16>, vector<38x117xf32> -> vector<38x117xf32>
    %c1_151 = arith.constant 1 : index
    %c0_152 = arith.constant 0 : index
    %c0_153 = arith.constant 0 : index
    %206 = vector.load %arg27[%c1_151, %c0_152, %c0_153] : memref<3x78x38xf32, #tpu.memory_space<vmem>>, vector<1x78x38xf32>
    %207 = vector.shape_cast %206 : vector<1x78x38xf32> to vector<78x38xf32>
    %cst_154 = arith.constant dense<0.000000e+00> : vector<78x117xf32>
    %208 = tpu.matmul %207, %205, %cst_154 {dimension_numbers = #tpu.dot_dimension_numbers<[1], [0], [0], [1], [0, 0, 1, 1], [], []>} : vector<78x38xf32>, vector<38x117xf32>, vector<78x117xf32> -> vector<78x117xf32>
    %209 = arith.addf %202, %208 : vector<78x117xf32>
    %c2_155 = arith.constant 2 : index
    %c0_156 = arith.constant 0 : index
    %c0_157 = arith.constant 0 : index
    %210 = vector.load %arg26[%c2_155, %c0_156, %c0_157] : memref<3x152x117xbf16, #tpu.memory_space<vmem>>, vector<1x152x117xbf16>
    %211 = vector.shape_cast %210 : vector<1x152x117xbf16> to vector<152x117xbf16>
    %cst_158 = arith.constant dense<0.000000e+00> : vector<38x117xf32>
    %212 = tpu.matmul %196, %211, %cst_158 {dimension_numbers = #tpu.dot_dimension_numbers<[1], [0], [0], [1], [0, 0, 1, 1], [], []>} : vector<38x152xbf16>, vector<152x117xbf16>, vector<38x117xf32> -> vector<38x117xf32>
    %c2_159 = arith.constant 2 : index
    %c0_160 = arith.constant 0 : index
    %c0_161 = arith.constant 0 : index
    %213 = vector.load %arg27[%c2_159, %c0_160, %c0_161] : memref<3x78x38xf32, #tpu.memory_space<vmem>>, vector<1x78x38xf32>
    %214 = vector.shape_cast %213 : vector<1x78x38xf32> to vector<78x38xf32>
    %cst_162 = arith.constant dense<0.000000e+00> : vector<78x117xf32>
    %215 = tpu.matmul %214, %212, %cst_162 {dimension_numbers = #tpu.dot_dimension_numbers<[1], [0], [0], [1], [0, 0, 1, 1], [], []>} : vector<78x38xf32>, vector<38x117xf32>, vector<78x117xf32> -> vector<78x117xf32>
    %216 = arith.addf %209, %215 : vector<78x117xf32>
    %c0_163 = arith.constant 0 : index
    %c0_164 = arith.constant 0 : index
    %217 = vector.load %arg28[%c0_163, %c0_164] : memref<3x117xf32, #tpu.memory_space<vmem>>, vector<3x117xf32>
    %c0_165 = arith.constant 0 : index
    %c0_166 = arith.constant 0 : index
    %218 = vector.load %arg29[%c0_165, %c0_166] : memref<117x3xf32, #tpu.memory_space<vmem>>, vector<117x3xf32>
    %c0_167 = arith.constant 0 : index
    %c0_168 = arith.constant 0 : index
    %219 = vector.load %arg30[%c0_167, %c0_168] : memref<1x3xf32, #tpu.memory_space<vmem>>, vector<1x3xf32>
    %c0_169 = arith.constant 0 : index
    %c0_170 = arith.constant 0 : index
    %220 = vector.load %arg31[%c0_169, %c0_170] : memref<1x3xf32, #tpu.memory_space<vmem>>, vector<1x3xf32>
    %c0_171 = arith.constant 0 : index
    %c0_172 = arith.constant 0 : index
    %221 = vector.load %arg32[%c0_171, %c0_172] : memref<1x3xf32, #tpu.memory_space<vmem>>, vector<1x3xf32>
    %cst_173 = arith.constant dense<0.000000e+00> : vector<1x117xf32>
    %222 = tpu.matmul %219, %217, %cst_173 {dimension_numbers = #tpu.dot_dimension_numbers<[1], [0], [0], [1], [0, 0, 1, 1], [], []>} : vector<1x3xf32>, vector<3x117xf32>, vector<1x117xf32> -> vector<1x117xf32>
    %223 = vector.broadcast %222 : vector<1x117xf32> to vector<78x117xf32>
    %224 = arith.addf %216, %223 : vector<78x117xf32>
    %cst_174 = arith.constant dense<0.000000e+00> : vector<117xf32>
    %225 = vector.multi_reduction <add>, %224, %cst_174 [0] : vector<78x117xf32> to vector<117xf32>
    %226 = vector.shape_cast %225 : vector<117xf32> to vector<1x117xf32>
    %cst_175 = arith.constant dense<0.000000e+00> : vector<1x3xf32>
    %227 = tpu.matmul %226, %218, %cst_175 {dimension_numbers = #tpu.dot_dimension_numbers<[1], [0], [0], [1], [0, 0, 1, 1], [], []>} : vector<1x117xf32>, vector<117x3xf32>, vector<1x3xf32> -> vector<1x3xf32>
    %cst_176 = arith.constant 3.042000e+03 : f32
    %228 = vector.broadcast %cst_176 : f32 to vector<1x3xf32>
    %229 = arith.divf %227, %228 : vector<1x3xf32>
    %cst_177 = arith.constant dense<0.000000e+00> : vector<1x117xf32>
    %230 = tpu.matmul %229, %217, %cst_177 {dimension_numbers = #tpu.dot_dimension_numbers<[1], [0], [0], [1], [0, 0, 1, 1], [], []>} : vector<1x3xf32>, vector<3x117xf32>, vector<1x117xf32> -> vector<1x117xf32>
    %231 = vector.broadcast %230 : vector<1x117xf32> to vector<78x117xf32>
    %232 = arith.subf %224, %231 : vector<78x117xf32>
    %233 = arith.mulf %232, %232 : vector<78x117xf32>
    %cst_178 = arith.constant dense<0.000000e+00> : vector<117xf32>
    %234 = vector.multi_reduction <add>, %233, %cst_178 [0] : vector<78x117xf32> to vector<117xf32>
    %235 = vector.shape_cast %234 : vector<117xf32> to vector<1x117xf32>
    %cst_179 = arith.constant dense<0.000000e+00> : vector<1x3xf32>
    %236 = tpu.matmul %235, %218, %cst_179 {dimension_numbers = #tpu.dot_dimension_numbers<[1], [0], [0], [1], [0, 0, 1, 1], [], []>} : vector<1x117xf32>, vector<117x3xf32>, vector<1x3xf32> -> vector<1x3xf32>
    %cst_180 = arith.constant 3.042000e+03 : f32
    %237 = vector.broadcast %cst_180 : f32 to vector<1x3xf32>
    %238 = arith.divf %236, %237 : vector<1x3xf32>
    %cst_181 = arith.constant 9.99999974E-6 : f32
    %239 = vector.broadcast %cst_181 : f32 to vector<1x3xf32>
    %240 = arith.addf %238, %239 : vector<1x3xf32>
    %241 = math.rsqrt %240 : vector<1x3xf32>
    %242 = arith.mulf %220, %241 : vector<1x3xf32>
    %cst_182 = arith.constant dense<0.000000e+00> : vector<1x117xf32>
    %243 = tpu.matmul %242, %217, %cst_182 {dimension_numbers = #tpu.dot_dimension_numbers<[1], [0], [0], [1], [0, 0, 1, 1], [], []>} : vector<1x3xf32>, vector<3x117xf32>, vector<1x117xf32> -> vector<1x117xf32>
    %244 = vector.broadcast %243 : vector<1x117xf32> to vector<78x117xf32>
    %245 = arith.mulf %232, %244 : vector<78x117xf32>
    %cst_183 = arith.constant dense<0.000000e+00> : vector<1x117xf32>
    %246 = tpu.matmul %221, %217, %cst_183 {dimension_numbers = #tpu.dot_dimension_numbers<[1], [0], [0], [1], [0, 0, 1, 1], [], []>} : vector<1x3xf32>, vector<3x117xf32>, vector<1x117xf32> -> vector<1x117xf32>
    %247 = vector.broadcast %246 : vector<1x117xf32> to vector<78x117xf32>
    %248 = arith.addf %245, %247 : vector<78x117xf32>
    %249 = arith.negf %248 : vector<78x117xf32>
    %250 = math.exp %249 : vector<78x117xf32>
    %cst_184 = arith.constant 1.000000e+00 : f32
    %251 = vector.broadcast %cst_184 : f32 to vector<78x117xf32>
    %252 = arith.addf %251, %250 : vector<78x117xf32>
    %253 = arith.divf %251, %252 : vector<78x117xf32>
    %c0_185 = arith.constant 0 : index
    %c0_186 = arith.constant 0 : index
    %254 = vector.load %arg33[%c0_185, %c0_186] : memref<78x117xf32, #tpu.memory_space<vmem>>, vector<78x117xf32>
    tpu.vector_store %arg33[%c0_185, %c0_186], %253 {strides = array<i32>} : memref<78x117xf32, #tpu.memory_space<vmem>>, vector<78x117xf32>,
    return
  }
}

module attributes {stable_mosaic.version = 11 : i64} {
  func.func @resize_kernel(%arg0: i32, %arg1: i32, %arg2: memref<1x1x39x39xf32, #tpu.memory_space<vmem>>, %arg3: memref<64x39xf32, #tpu.memory_space<vmem>>, %arg4: memref<39x64xf32, #tpu.memory_space<vmem>>, %arg5: memref<1x1x64x64xf32, #tpu.memory_space<vmem>>) attributes {dimension_semantics = [#tpu.dimension_semantics<parallel>, #tpu.dimension_semantics<parallel>], iteration_bounds = array<i64: 3, 2>, scalar_prefetch = 0 : i64, scratch_operands = 0 : i64, tpu.core_type = #tpu.core_type<tc>, window_params = [{transform_indices = @transform_0, window_bounds = array<i64: 1, 1, 39, 39>}, {pipeline_mode = #tpu.pipeline_mode<synchronous>, transform_indices = @transform_1, window_bounds = array<i64: 64, 39>}, {pipeline_mode = #tpu.pipeline_mode<synchronous>, transform_indices = @transform_2, window_bounds = array<i64: 39, 64>}, {transform_indices = @transform_3, window_bounds = array<i64: 1, 1, 64, 64>}]} {
    %c0 = arith.constant 0 : index
    %c0_0 = arith.constant 0 : index
    %c0_1 = arith.constant 0 : index
    %c0_2 = arith.constant 0 : index
    %0 = vector.load %arg2[%c0, %c0_0, %c0_1, %c0_2] : memref<1x1x39x39xf32, #tpu.memory_space<vmem>>, vector<1x1x39x39xf32>
    %1 = vector.shape_cast %0 : vector<1x1x39x39xf32> to vector<39x39xf32>
    %c0_3 = arith.constant 0 : index
    %c0_4 = arith.constant 0 : index
    %2 = vector.load %arg3[%c0_3, %c0_4] : memref<64x39xf32, #tpu.memory_space<vmem>>, vector<64x39xf32>
    %cst = arith.constant dense<0.000000e+00> : vector<64x39xf32>
    %3 = tpu.matmul %2, %1, %cst {dimension_numbers = #tpu.dot_dimension_numbers<[1], [0], [0], [1], [0, 0, 1, 1], [], []>} : vector<64x39xf32>, vector<39x39xf32>, vector<64x39xf32> -> vector<64x39xf32>
    %c0_5 = arith.constant 0 : index
    %c0_6 = arith.constant 0 : index
    %4 = vector.load %arg4[%c0_5, %c0_6] : memref<39x64xf32, #tpu.memory_space<vmem>>, vector<39x64xf32>
    %cst_7 = arith.constant dense<0.000000e+00> : vector<64x64xf32>
    %5 = tpu.matmul %3, %4, %cst_7 {dimension_numbers = #tpu.dot_dimension_numbers<[1], [0], [0], [1], [0, 0, 1, 1], [], []>} : vector<64x39xf32>, vector<39x64xf32>, vector<64x64xf32> -> vector<64x64xf32>
    %c0_8 = arith.constant 0 : index
    %c0_9 = arith.constant 0 : index
    %c0_10 = arith.constant 0 : index
    %c0_11 = arith.constant 0 : index
    %6 = vector.load %arg5[%c0_8, %c0_9, %c0_10, %c0_11] : memref<1x1x64x64xf32, #tpu.memory_space<vmem>>, vector<1x1x64x64xf32>
    %7 = vector.shape_cast %6 : vector<1x1x64x64xf32> to vector<64x64xf32>
    %8 = vector.shape_cast %5 : vector<64x64xf32> to vector<1x1x64x64xf32>
    tpu.vector_store %arg5[%c0_8, %c0_9, %c0_10, %c0_11], %8 {strides = array<i32>} : memref<1x1x64x64xf32, #tpu.memory_space<vmem>>, vector<1x1x64x64xf32>,
    return
  }
  func.func @transform_0(%arg0: i32, %arg1: i32) -> (i32, i32, i32, i32) {
    %c0_i32 = arith.constant 0 : i32
    %c0_i32_0 = arith.constant 0 : i32
    %c0_i32_1 = arith.constant 0 : i32
    return %arg0, %arg1, %c0_i32, %c0_i32_0 : i32, i32, i32, i32
  }
  func.func @transform_1(%arg0: i32, %arg1: i32) -> (i32, i32) {
    %c0_i32 = arith.constant 0 : i32
    %c0_i32_0 = arith.constant 0 : i32
    %c0_i32_1 = arith.constant 0 : i32
    return %c0_i32, %c0_i32_0 : i32, i32
  }
  func.func @transform_2(%arg0: i32, %arg1: i32) -> (i32, i32) {
    %c0_i32 = arith.constant 0 : i32
    %c0_i32_0 = arith.constant 0 : i32
    %c0_i32_1 = arith.constant 0 : i32
    return %c0_i32, %c0_i32_0 : i32, i32
  }
  func.func @transform_3(%arg0: i32, %arg1: i32) -> (i32, i32, i32, i32) {
    %c0_i32 = arith.constant 0 : i32
    %c0_i32_0 = arith.constant 0 : i32
    %c0_i32_1 = arith.constant 0 : i32
    return %arg1, %arg0, %c0_i32, %c0_i32_0 : i32, i32, i32, i32
  }
}

</mosaic_0001>

<llo_original>
// kernel: private_decoder_forward.3
$region0: #{private_decoder_forward.3}
  #allocation0 [shape = 'u32[]', space=smem, size = 0x4, offset = 0x4, fixed_abs, tag = 'smem constant byte address 0x4 - core index']
  #allocation1 [shape = 'u32[144,128]{1,0:T(1,128)}', space=vmem, size = 0x12000, scoped, tag = 'internal scratch']
  %s0 = inlined_call_operand.vmem [shape: f32[3,2,39,39], index: 0, kind: input, shape index: {}]
  %s1 = inlined_call_operand.vmem [shape: f32[64,39], index: 1, kind: input, shape index: {}]
  %s2 = inlined_call_operand.hbm [shape: f32[39,64], index: 2, kind: input, shape index: {}]
  %s3 = inlined_call_operand.hbm [shape: f32[2,3,64,64], index: 3, kind: output, shape index: {}]
  %s4 = sld [smem:[#allocation0]]
  $region49: #{private_decoder_forward.3} parent=0
    _
  %s6 = ssub.s32 1, %s4
  %s7 = scalar_select 0, %s6, %s4
  $region1: #{private_decoder_forward.3} parent=0
    #allocation2 [shape = 'u8[20480]{0}', space=vmem, size = 0x5000, scoped, tag = 'input window, operand 2, single buffered']
    #allocation3 [shape = 's32[2]{0}', space=sflag, size = 0x8, scoped, tag = 'scoped memory for private_decoder_forward.3']
    #allocation4 [shape = 's32[2]{0}', space=sflag, size = 0x8, scoped, tag = 'scoped memory for private_decoder_forward.3']
    #allocation5 [shape = 'u8[65536]{0}', space=vmem, size = 0x10000, scoped, tag = 'output window, operand 0']
    %8 = vsyncpa [#allocation3], 0
    %9 = vsyncpa [#allocation4], 0
    %s10 = scalar_lea.sflag [#allocation4], 1
    %11 = vsyncpa %s10, 0
    loop: start=0, step=1, limit=8
    $region2: #{private_decoder_forward.3} parent=1 // loop_pre_header
      _
    $region3: #{private_decoder_forward.3} parent=1 // loop_header
      %s13 = sphi 0, %s17
      %p14 = scmp.ge.s32.totalorder %s13, 8
      %s20 = sphi 0, %s32
      %s21 = sphi 0, %s28
      %s22 = sphi 0, %s20
      %s23 = sphi 0, %s21
      %s24 = sphi 0, %s22
      %s25 = sphi 0, %s23
      %s37 = sphi 0, %s39
      %s40 = sphi 0, %s37
      %s41 = sphi 0, %s40
      %s57 = sphi 0, %s41
      %s61 = sphi 0, %s61
      %s63 = sphi 0, %s61
      %s64 = sphi 0, %s63
      %s78 = sphi 0, %s64
      %s82 = sphi 0, %s82
      %s84 = sphi 0, %s82
      %s85 = sphi 0, %s84
      %s99 = sphi 0, %s85
      %s107 = sphi 0, %s109
      %s110 = sphi 0, %s107
      %s111 = sphi 0, %s110
      %s127 = sphi 0, %s111
    $region4: #{private_decoder_forward.3} parent=1 // loop_header_branch
      %16 = sbr.rel (%p14) target = $region8
    $region5: #{private_decoder_forward.3} parent=1 // loop_body
      %s18 = ssub.s32 %s13, 1
      %s19 = ssub.s32 %s13, 2
      %s26 = sadd.s32 1, %s21
      %p27 = scmp.ge.s32.totalorder %s26, 2
      %s28 = scalar_select %p27, 0, %s26
      %s29 = sadd.s32 1, %s20
      %s30 = scalar_select %p27, %s29, %s20
      %p31 = scmp.ge.s32.totalorder %s30, 3
      %s32 = scalar_select %p31, 0, %s30
      %s33 = ssub.s32 %s20, %s32
      %s34 = ssub.s32 %s21, %s28
      %s35 = sor.u32 %s33, %s34
      %p36 = scmp.eq.s32.totalorder %s35, 0
      %s38 = sadd.s32 %s37, 1
      %s39 = scalar_select %p36, %s37, %s38
      %p42 = pneg %p36
      %p43 = scmp.eq.s32.totalorder %s13, 5
      %p44 = por %p42, %p43
      %p45 = scmp.ne.s32.totalorder %s37, %s40
      %p46 = scmp.eq.s32.totalorder %s13, 0
      %p47 = por %p45, %p46
      %p48 = scmp.ne.s32.totalorder %s37, %s40
      %p49 = scmp.eq.s32.totalorder %s18, 5
      %p50 = por %p48, %p49
      %p51 = scmp.ne.s32.totalorder %s40, %s41
      %p52 = scmp.eq.s32.totalorder %s18, 0
      %p53 = por %p51, %p52
      %p54 = scmp.ne.s32.totalorder %s40, %s41
      %p55 = scmp.eq.s32.totalorder %s19, 5
      %p56 = por %p54, %p55
      %p58 = scmp.ne.s32.totalorder %s41, %s57
      %p59 = scmp.eq.s32.totalorder %s19, 0
      %p60 = por %p58, %p59
      %s62 = sadd.s32 %s61, 1
      %p65 = scmp.eq.s32.totalorder %s13, 5
      %p66 = scmp.ne.s32.totalorder %s61, %s63
      %p67 = scmp.eq.s32.totalorder %s13, 0
      %p68 = por %p66, %p67
      %p69 = scmp.ne.s32.totalorder %s61, %s63
      %p70 = scmp.eq.s32.totalorder %s18, 5
      %p71 = por %p69, %p70
      %p72 = scmp.ne.s32.totalorder %s63, %s64
      %p73 = scmp.eq.s32.totalorder %s18, 0
      %p74 = por %p72, %p73
      %p75 = scmp.ne.s32.totalorder %s63, %s64
      %p76 = scmp.eq.s32.totalorder %s19, 5
      %p77 = por %p75, %p76
      %p79 = scmp.ne.s32.totalorder %s64, %s78
      %p80 = scmp.eq.s32.totalorder %s19, 0
      %p81 = por %p79, %p80
      %s83 = sadd.s32 %s82, 1
      %p86 = scmp.eq.s32.totalorder %s13, 5
      %p87 = scmp.ne.s32.totalorder %s82, %s84
      %p88 = scmp.eq.s32.totalorder %s13, 0
      %p89 = por %p87, %p88
      %p90 = scmp.ne.s32.totalorder %s82, %s84
      %p91 = scmp.eq.s32.totalorder %s18, 5
      %p92 = por %p90, %p91
      %p93 = scmp.ne.s32.totalorder %s84, %s85
      %p94 = scmp.eq.s32.totalorder %s18, 0
      %p95 = por %p93, %p94
      %p96 = scmp.ne.s32.totalorder %s84, %s85
      %p97 = scmp.eq.s32.totalorder %s19, 5
      %p98 = por %p96, %p97
      %p100 = scmp.ne.s32.totalorder %s85, %s99
      %p101 = scmp.eq.s32.totalorder %s19, 0
      %p102 = por %p100, %p101
      %s103 = ssub.s32 %s21, %s28
      %s104 = ssub.s32 %s20, %s32
      %s105 = sor.u32 %s103, %s104
      %p106 = scmp.eq.s32.totalorder %s105, 0
      %s108 = sadd.s32 %s107, 1
      %s109 = scalar_select %p106, %s107, %s108
      %p112 = pneg %p106
      %p113 = scmp.eq.s32.totalorder %s13, 5
      %p114 = por %p112, %p113
      %p115 = scmp.ne.s32.totalorder %s107, %s110
      %p116 = scmp.eq.s32.totalorder %s13, 0
      %p117 = por %p115, %p116
      %p118 = scmp.ne.s32.totalorder %s107, %s110
      %p119 = scmp.eq.s32.totalorder %s18, 5
      %p120 = por %p118, %p119
      %p121 = scmp.ne.s32.totalorder %s110, %s111
      %p122 = scmp.eq.s32.totalorder %s18, 0
      %p123 = por %p121, %p122
      %p124 = scmp.ne.s32.totalorder %s110, %s111
      %p125 = scmp.eq.s32.totalorder %s19, 5
      %p126 = por %p124, %p125
      %p128 = scmp.ne.s32.totalorder %s111, %s127
      %p129 = scmp.eq.s32.totalorder %s19, 0
      %p130 = por %p128, %p129
      %p131 = scmp.le.s32.totalorder 1, %s13
      %p132 = scmp.lt.s32.totalorder %s13, 7
      %p133 = pnand %p131, %p132
      %p134 = pneg %p133
      // Predicated region
      $region9: #{private_decoder_forward.3} parent=5 // pred_check
        _
      $region10: #{private_decoder_forward.3} parent=5 // pred_check_branch
        %136 = sbr.rel (%p133) target = $region12
      $region11: #{private_decoder_forward.3} parent=5 // pred_region
        %s137 = ssub.s32 %s13, 1
        // Predicated region
        $region13: #{private_decoder_forward.3} parent=11 // pred_check
          %p138 = pneg %p74
        $region14: #{private_decoder_forward.3} parent=11 // pred_check_branch
          %140 = sbr.rel (%p138) target = $region16
        $region15: #{private_decoder_forward.3} parent=11 // pred_region
          _
        $region16: #{private_decoder_forward.3} parent=11 // pred_fallthru
          _
        // Predicated region
        $region17: #{private_decoder_forward.3} parent=11 // pred_check
          %p141 = pneg %p95
        $region18: #{private_decoder_forward.3} parent=11 // pred_check_branch
          %143 = sbr.rel (%p141) target = $region20
        $region19: #{private_decoder_forward.3} parent=11 // pred_region
          %s145 = ssub.s32 640, 640
          %146 = vsyncadd [#allocation3], %s145
          %s147 = sshll.u32 [#allocation2], 4
          %s148 = int_to_ptr.vmem [resolvable:$true] %s147
          %153 = dma.hbm_to_vmem [thread:$0]  %s2, 640, %s148, [#allocation3], 128, 128, 8
        $region20: #{private_decoder_forward.3} parent=11 // pred_fallthru
          _
      $region12: #{private_decoder_forward.3} parent=5 // pred_fallthru
        _
      %p154 = scmp.lt.s32.totalorder %s13, 6
      // Predicated region
      $region21: #{private_decoder_forward.3} parent=5 // pred_check
        %p155 = pneg %p154
      $region22: #{private_decoder_forward.3} parent=5 // pred_check_branch
        %157 = sbr.rel (%p155) target = $region24
      $region23: #{private_decoder_forward.3} parent=5 // pred_region
        // Predicated region
        $region25: #{private_decoder_forward.3} parent=23 // pred_check
          %p158 = pneg %p47
        $region26: #{private_decoder_forward.3} parent=23 // pred_check_branch
          %160 = sbr.rel (%p158) target = $region28
        $region27: #{private_decoder_forward.3} parent=23 // pred_region
          %p161 = scmp.lt.s32.totalorder %s20, 2
          %s162 = scalar_select %p161, %s20, 2
          %p163 = scmp.lt.s32.totalorder %s21, 1
          %s164 = scalar_select %p163, %s21, 1
          %s165 = smul.addr %s164, 5
          %s166 = smul.addr %s162, 10
          %s167 = sadd.s32 %s165, %s166
          %s168 = smul.addr %s167, 8
          %s169 = scalar_lea.vmem %s0, %s168
        $region28: #{private_decoder_forward.3} parent=23 // pred_fallthru
          _
      $region24: #{private_decoder_forward.3} parent=5 // pred_fallthru
        _
      %p170 = scmp.le.s32.totalorder 1, %s13
      %p171 = scmp.lt.s32.totalorder %s13, 7
      %p172 = pnand %p170, %p171
      %p173 = pneg %p172
      // Predicated region
      $region29: #{private_decoder_forward.3} parent=5 // pred_check
        _
      $region30: #{private_decoder_forward.3} parent=5 // pred_check_branch
        %175 = sbr.rel (%p172) target = $region32
      $region31: #{private_decoder_forward.3} parent=5 // pred_region
        %s176 = ssub.s32 %s13, 1
        // Predicated region
        $region33: #{private_decoder_forward.3} parent=31 // pred_check
          %p177 = pneg %p95
        $region34: #{private_decoder_forward.3} parent=31 // pred_check_branch
          %179 = sbr.rel (%p177) target = $region36
        $region35: #{private_decoder_forward.3} parent=31 // pred_region
          %180 = dma.done [#allocation3], 640
        $region36: #{private_decoder_forward.3} parent=31 // pred_fallthru
          _
        %p181 = scmp.lt.s32.totalorder %s22, 2
        %s182 = scalar_select %p181, %s22, 2
        %p183 = scmp.lt.s32.totalorder %s23, 1
        %s184 = scalar_select %p183, %s23, 1
        %s185 = smul.addr %s184, 5
        %s186 = smul.addr %s182, 10
        %s187 = sadd.s32 %s185, %s186
        %s188 = smul.addr %s187, 8
        %s189 = scalar_lea.vmem %s0, %s188
        %p190 = pneg %p53
        %p191 = pneg %p50
        %p192 = pneg %p74
        %p193 = pneg %p71
        %p194 = pneg %p95
        %p195 = pneg %p92
        %p196 = pneg %p123
        %p197 = pneg %p120
        %s198 = sand.u32 %s110, 1
        %s199 = scalar_lea.sflag [#allocation4], %s198
        %s200 = sand.u32 %s110, 1
        %s201 = smul.addr %s200, 64
        %s202 = scalar_lea.vmem [#allocation5], %s201
        %p203 = scmp.lt.s32.totalorder %s22, 2
        %s204 = scalar_select %p203, %s22, 2
        %p205 = scmp.lt.s32.totalorder %s23, 1
        %s206 = scalar_select %p205, %s23, 1
        %s207 = smul.addr %s206, 5
        %s208 = smul.addr %s204, 10
        %s209 = sadd.s32 %s207, %s208
        %s210 = smul.addr %s209, 8
        %s211 = scalar_lea.vmem %s0, %s210
        %v212 = vld [vmem:[%s211] sm:$0xff]
        %v213 = vld [vmem:[%s211 + $0x8] sm:$0xff]
        %v214 = vld [vmem:[%s211 + $0x10] sm:$0xff]
        %v215 = vld [vmem:[%s211 + $0x18] sm:$0xff]
        %v216 = vld [vmem:[%s211 + $0x20] sm:$0x7f]
        %v217 = vld [vmem:[%s1] sm:$0xff]
        %v218 = vld [vmem:[%s1 + $0x8] sm:$0xff]
        %v219 = vld [vmem:[%s1 + $0x10] sm:$0xff]
        %v220 = vld [vmem:[%s1 + $0x18] sm:$0xff]
        %v221 = vld [vmem:[%s1 + $0x20] sm:$0xff]
        %v222 = vld [vmem:[%s1 + $0x28] sm:$0xff]
        %v223 = vld [vmem:[%s1 + $0x30] sm:$0xff]
        %v224 = vld [vmem:[%s1 + $0x38] sm:$0xff]
        %vm225 = vcmask 318464
        %v227 = vsel %vm225, %v217, 0
        %v230 = vsel %vm225, %v218, 0
        %v233 = vsel %vm225, %v219, 0
        %v236 = vsel %vm225, %v220, 0
        %v239 = vsel %vm225, %v221, 0
        %v242 = vsel %vm225, %v222, 0
        %v245 = vsel %vm225, %v223, 0
        %v248 = vsel %vm225, %v224, 0
        %vm250 = vcmask 1046528
        %v252 = vsel %vm250, %v216, 0
        %254 = vmatprep.subr.mxu0 0.0
        %255 = vmatpush1.msra.mxu0 %v212
        %256 = vmatprep.subr.mxu0 0.0
        %257 = vmatpush1.msra.mxu0 %v213
        %258 = vmatprep.subr.mxu0 0.0
        %259 = vmatpush1.msra.mxu0 %v214
        %260 = vmatprep.subr.mxu0 0.0
        %261 = vmatpush1.msra.mxu0 %v215
        %262 = vmatprep.subr.mxu0 0.0
        %263 = vmatpush1.msra.mxu0 %v252
        %264 = vmatprep.subr.mxu0 0.0
        %265 = vmatpush1.msra.mxu0 0.0
        %266 = vmatprep.subr.mxu0 0.0
        %267 = vmatpush1.msra.mxu0 0.0
        %268 = vmatprep.subr.mxu0 0.0
        %269 = vmatpush1.msra.mxu0 0.0
        %270 = vmatprep.subr.mxu0 0.0
        %271 = vmatpush1.msra.mxu0 0.0
        %272 = vmatprep.subr.mxu0 0.0
        %273 = vmatpush1.msra.mxu0 0.0
        %274 = vmatprep.subr.mxu0 0.0
        %275 = vmatpush1.msra.mxu0 0.0
        %276 = vmatprep.subr.mxu0 0.0
        %277 = vmatpush1.msra.mxu0 0.0
        %278 = vmatprep.subr.mxu0 0.0
        %279 = vmatpush1.msra.mxu0 0.0
        %280 = vmatprep.subr.mxu0 0.0
        %281 = vmatpush1.msra.mxu0 0.0
        %282 = vmatprep.subr.mxu0 0.0
        %283 = vmatpush1.msra.mxu0 0.0
        %284 = vmatprep.subr.mxu0 0.0
        %285 = vmatpush1.msra.mxu0 0.0
        %286 = vmatprep.subr.mxu0 0.0
        %287 = vmatpush1.msra.mxu0 0.0
        %288 = vmatprep.subr.mxu0 0.0
        %289 = vmatpush1.msra.mxu0 0.0
        %290 = vmatprep.subr.mxu0 0.0
        %291 = vmatpush1.msra.mxu0 0.0
        %292 = vmatprep.subr.mxu0 0.0
        %293 = vmatpush1.msra.mxu0 0.0
        %294 = vmatprep.subr.mxu0 0.0
        %295 = vmatpush1.msra.mxu0 0.0
        %296 = vmatprep.subr.mxu0 0.0
        %297 = vmatpush1.msra.mxu0 0.0
        %298 = vmatprep.subr.mxu0 0.0
        %299 = vmatpush1.msra.mxu0 0.0
        %300 = vmatprep.subr.mxu0 0.0
        %301 = vmatpush1.msra.mxu0 0.0
        %302 = vmatprep.subr.mxu0 0.0
        %303 = vmatpush1.msra.mxu0 0.0
        %304 = vmatprep.subr.mxu0 0.0
        %305 = vmatpush1.msra.mxu0 0.0
        %306 = vmatprep.subr.mxu0 0.0
        %307 = vmatpush1.msra.mxu0 0.0
        %308 = vmatprep.subr.mxu0 0.0
        %309 = vmatpush1.msra.mxu0 0.0
        %310 = vmatprep.subr.mxu0 0.0
        %311 = vmatpush1.msra.mxu0 0.0
        %312 = vmatprep.subr.mxu0 0.0
        %313 = vmatpush1.msra.mxu0 0.0
        %314 = vmatprep.subr.mxu0 0.0
        %315 = vmatpush1.msra.mxu0 0.0
        %316 = vmatprep.subr.mxu0 0.0
        %317 = vmatpush1.msra.mxu0 0.0
        %318 = vmatprep.mubr.f32.mxu0 0.0
        %319 = vmatmul.mubr.f32.gmra.mrb[0].mxu0 %v227
        %v320 = vpop.f32.mrb[0].mxu0
        %v321 = vadd.f32 0.0, %v320
        %v322 = vpop.f32.mrb[0].mxu0
        %323 = vmatprep.mubr.f32.mxu0 0.0
        %324 = vmatmul.mubr.f32.gmra.mrb[0].mxu0 %v230
        %v325 = vpop.f32.mrb[0].mxu0
        %v326 = vadd.f32 0.0, %v325
        %v327 = vpop.f32.mrb[0].mxu0
        %328 = vmatprep.mubr.f32.mxu0 0.0
        %329 = vmatmul.mubr.f32.gmra.mrb[0].mxu0 %v233
        %v330 = vpop.f32.mrb[0].mxu0
        %v331 = vadd.f32 0.0, %v330
        %v332 = vpop.f32.mrb[0].mxu0
        %333 = vmatprep.mubr.f32.mxu0 0.0
        %334 = vmatmul.mubr.f32.gmra.mrb[0].mxu0 %v236
        %v335 = vpop.f32.mrb[0].mxu0
        %v336 = vadd.f32 0.0, %v335
        %v337 = vpop.f32.mrb[0].mxu0
        %338 = vmatprep.mubr.f32.mxu0 0.0
        %339 = vmatmul.mubr.f32.gmra.mrb[0].mxu0 %v239
        %v340 = vpop.f32.mrb[0].mxu0
        %v341 = vadd.f32 0.0, %v340
        %v342 = vpop.f32.mrb[0].mxu0
        %343 = vmatprep.mubr.f32.mxu0 0.0
        %344 = vmatmul.mubr.f32.gmra.mrb[0].mxu0 %v242
        %v345 = vpop.f32.mrb[0].mxu0
        %v346 = vadd.f32 0.0, %v345
        %v347 = vpop.f32.mrb[0].mxu0
        %348 = vmatprep.mubr.f32.mxu0 0.0
        %349 = vmatmul.mubr.f32.gmra.mrb[0].mxu0 %v245
        %v350 = vpop.f32.mrb[0].mxu0
        %v351 = vadd.f32 0.0, %v350
        %v352 = vpop.f32.mrb[0].mxu0
        %353 = vmatprep.mubr.f32.mxu0 0.0
        %354 = vmatmul.mubr.f32.gmra.mrb[0].mxu0 %v248
        %v355 = vpop.f32.mrb[0].mxu0
        %v356 = vadd.f32 0.0, %v355
        %v357 = vpop.f32.mrb[0].mxu0
        %358 = vdwg.mxu0
        %v359 = vld [vmem:[#allocation2] sm:$0xff]
        %v360 = vld [vmem:[#allocation2 + $0x8] sm:$0xff]
        %v361 = vld [vmem:[#allocation2 + $0x10] sm:$0xff]
        %v362 = vld [vmem:[#allocation2 + $0x18] sm:$0xff]
        %v363 = vld [vmem:[#allocation2 + $0x20] sm:$0x7f]
        %v365 = vsel %vm225, %v321, 0
        %v368 = vsel %vm225, %v326, 0
        %v371 = vsel %vm225, %v331, 0
        %v374 = vsel %vm225, %v336, 0
        %v377 = vsel %vm225, %v341, 0
        %v380 = vsel %vm225, %v346, 0
        %v383 = vsel %vm225, %v351, 0
        %v386 = vsel %vm225, %v356, 0
        %v389 = vsel %vm250, %v363, 0
        %391 = vmatprep.subr.mxu0 0.0
        %392 = vmatpush1.msra.mxu0 %v359
        %393 = vmatprep.subr.mxu0 0.0
        %394 = vmatpush1.msra.mxu0 %v360
        %395 = vmatprep.subr.mxu0 0.0
        %396 = vmatpush1.msra.mxu0 %v361
        %397 = vmatprep.subr.mxu0 0.0
        %398 = vmatpush1.msra.mxu0 %v362
        %399 = vmatprep.subr.mxu0 0.0
        %400 = vmatpush1.msra.mxu0 %v389
        %401 = vmatprep.subr.mxu0 0.0
        %402 = vmatpush1.msra.mxu0 0.0
        %403 = vmatprep.subr.mxu0 0.0
        %404 = vmatpush1.msra.mxu0 0.0
        %405 = vmatprep.subr.mxu0 0.0
        %406 = vmatpush1.msra.mxu0 0.0
        %407 = vmatprep.subr.mxu0 0.0
        %408 = vmatpush1.msra.mxu0 0.0
        %409 = vmatprep.subr.mxu0 0.0
        %410 = vmatpush1.msra.mxu0 0.0
        %411 = vmatprep.subr.mxu0 0.0
        %412 = vmatpush1.msra.mxu0 0.0
        %413 = vmatprep.subr.mxu0 0.0
        %414 = vmatpush1.msra.mxu0 0.0
        %415 = vmatprep.subr.mxu0 0.0
        %416 = vmatpush1.msra.mxu0 0.0
        %417 = vmatprep.subr.mxu0 0.0
        %418 = vmatpush1.msra.mxu0 0.0
        %419 = vmatprep.subr.mxu0 0.0
        %420 = vmatpush1.msra.mxu0 0.0
        %421 = vmatprep.subr.mxu0 0.0
        %422 = vmatpush1.msra.mxu0 0.0
        %423 = vmatprep.subr.mxu0 0.0
        %424 = vmatpush1.msra.mxu0 0.0
        %425 = vmatprep.subr.mxu0 0.0
        %426 = vmatpush1.msra.mxu0 0.0
        %427 = vmatprep.subr.mxu0 0.0
        %428 = vmatpush1.msra.mxu0 0.0
        %429 = vmatprep.subr.mxu0 0.0
        %430 = vmatpush1.msra.mxu0 0.0
        %431 = vmatprep.subr.mxu0 0.0
        %432 = vmatpush1.msra.mxu0 0.0
        %433 = vmatprep.subr.mxu0 0.0
        %434 = vmatpush1.msra.mxu0 0.0
        %435 = vmatprep.subr.mxu0 0.0
        %436 = vmatpush1.msra.mxu0 0.0
        %437 = vmatprep.subr.mxu0 0.0
        %438 = vmatpush1.msra.mxu0 0.0
        %439 = vmatprep.subr.mxu0 0.0
        %440 = vmatpush1.msra.mxu0 0.0
        %441 = vmatprep.subr.mxu0 0.0
        %442 = vmatpush1.msra.mxu0 0.0
        %443 = vmatprep.subr.mxu0 0.0
        %444 = vmatpush1.msra.mxu0 0.0
        %445 = vmatprep.subr.mxu0 0.0
        %446 = vmatpush1.msra.mxu0 0.0
        %447 = vmatprep.subr.mxu0 0.0
        %448 = vmatpush1.msra.mxu0 0.0
        %449 = vmatprep.subr.mxu0 0.0
        %450 = vmatpush1.msra.mxu0 0.0
        %451 = vmatprep.subr.mxu0 0.0
        %452 = vmatpush1.msra.mxu0 0.0
        %453 = vmatprep.subr.mxu0 0.0
        %454 = vmatpush1.msra.mxu0 0.0
        %455 = vmatprep.mubr.f32.mxu0 0.0
        %456 = vmatmul.mubr.f32.gmra.mrb[0].mxu0 %v365
        %v457 = vpop.f32.mrb[0].mxu0
        %v458 = vadd.f32 0.0, %v457
        %v459 = vpop.f32.mrb[0].mxu0
        %460 = vmatprep.mubr.f32.mxu0 0.0
        %461 = vmatmul.mubr.f32.gmra.mrb[0].mxu0 %v368
        %v462 = vpop.f32.mrb[0].mxu0
        %v463 = vadd.f32 0.0, %v462
        %v464 = vpop.f32.mrb[0].mxu0
        %465 = vmatprep.mubr.f32.mxu0 0.0
        %466 = vmatmul.mubr.f32.gmra.mrb[0].mxu0 %v371
        %v467 = vpop.f32.mrb[0].mxu0
        %v468 = vadd.f32 0.0, %v467
        %v469 = vpop.f32.mrb[0].mxu0
        %470 = vmatprep.mubr.f32.mxu0 0.0
        %471 = vmatmul.mubr.f32.gmra.mrb[0].mxu0 %v374
        %v472 = vpop.f32.mrb[0].mxu0
        %v473 = vadd.f32 0.0, %v472
        %v474 = vpop.f32.mrb[0].mxu0
        %475 = vmatprep.mubr.f32.mxu0 0.0
        %476 = vmatmul.mubr.f32.gmra.mrb[0].mxu0 %v377
        %v477 = vpop.f32.mrb[0].mxu0
        %v478 = vadd.f32 0.0, %v477
        %v479 = vpop.f32.mrb[0].mxu0
        %480 = vmatprep.mubr.f32.mxu0 0.0
        %481 = vmatmul.mubr.f32.gmra.mrb[0].mxu0 %v380
        %v482 = vpop.f32.mrb[0].mxu0
        %v483 = vadd.f32 0.0, %v482
        %v484 = vpop.f32.mrb[0].mxu0
        %485 = vmatprep.mubr.f32.mxu0 0.0
        %486 = vmatmul.mubr.f32.gmra.mrb[0].mxu0 %v383
        %v487 = vpop.f32.mrb[0].mxu0
        %v488 = vadd.f32 0.0, %v487
        %v489 = vpop.f32.mrb[0].mxu0
        %490 = vmatprep.mubr.f32.mxu0 0.0
        %491 = vmatmul.mubr.f32.gmra.mrb[0].mxu0 %v386
        %v492 = vpop.f32.mrb[0].mxu0
        %v493 = vadd.f32 0.0, %v492
        %v494 = vpop.f32.mrb[0].mxu0
        %495 = vdwg.mxu0
        %vm496 = vcmask 523264
        %497 = vst.msk [vmem:[%s202] sm:$0xff] %vm496, %v458
        %498 = vst.msk [vmem:[%s202 + $0x8] sm:$0xff] %vm496, %v463
        %499 = vst.msk [vmem:[%s202 + $0x10] sm:$0xff] %vm496, %v468
        %500 = vst.msk [vmem:[%s202 + $0x18] sm:$0xff] %vm496, %v473
        %501 = vst.msk [vmem:[%s202 + $0x20] sm:$0xff] %vm496, %v478
        %502 = vst.msk [vmem:[%s202 + $0x28] sm:$0xff] %vm496, %v483
        %503 = vst.msk [vmem:[%s202 + $0x30] sm:$0xff] %vm496, %v488
        %504 = vst.msk [vmem:[%s202 + $0x38] sm:$0xff] %vm496, %v493
        %s505 = sand.u32 %s110, 1
        %s506 = scalar_lea.sflag [#allocation4], %s505
        %s507 = sand.u32 %s110, 1
        %s508 = smul.addr %s507, 64
        %s509 = scalar_lea.vmem [#allocation5], %s508
        // Predicated region
        $region37: #{private_decoder_forward.3} parent=31 // pred_check
          %p510 = pneg %p120
        $region38: #{private_decoder_forward.3} parent=31 // pred_check_branch
          %512 = sbr.rel (%p510) target = $region40
        $region39: #{private_decoder_forward.3} parent=31 // pred_region
          %s514 = ssub.s32 1024, 1024
          %515 = vsyncadd %s506, %s514
          %s516 = smul.addr %s22, 8
          %s517 = smul.addr %s23, 24
          %s518 = sadd.s32 %s516, %s517
          %s519 = smul.addr %s518, 128
          %s520 = scalar_lea.hbm %s3, %s519
          %s521 = sshll.u32 %s509, 4
          %s522 = int_to_ptr.vmem [resolvable:$true] %s521
          %527 = dma.vmem_to_hbm [thread:$0]  %s522, 1024, %s520, %s506, 128, 128, 8
        $region40: #{private_decoder_forward.3} parent=31 // pred_fallthru
          _
      $region32: #{private_decoder_forward.3} parent=5 // pred_fallthru
        _
      %p528 = scmp.le.s32.totalorder 2, %s13
      // Predicated region
      $region41: #{private_decoder_forward.3} parent=5 // pred_check
        %p529 = pneg %p528
      $region42: #{private_decoder_forward.3} parent=5 // pred_check_branch
        %531 = sbr.rel (%p529) target = $region44
      $region43: #{private_decoder_forward.3} parent=5 // pred_region
        %s532 = ssub.s32 %s13, 2
        // Predicated region
        $region45: #{private_decoder_forward.3} parent=43 // pred_check
          %p533 = pneg %p126
        $region46: #{private_decoder_forward.3} parent=43 // pred_check_branch
          %535 = sbr.rel (%p533) target = $region48
        $region47: #{private_decoder_forward.3} parent=43 // pred_region
          %s536 = sand.u32 %s111, 1
          %s537 = scalar_lea.sflag [#allocation4], %s536
          %s538 = sand.u32 %s111, 1
          %s539 = smul.addr %s538, 64
          %s540 = scalar_lea.vmem [#allocation5], %s539
          %541 = dma.done %s537, 1024
        $region48: #{private_decoder_forward.3} parent=43 // pred_fallthru
          _
      $region44: #{private_decoder_forward.3} parent=5 // pred_fallthru
        _
    $region6: #{private_decoder_forward.3} parent=1 // loop_footer
      %s17 = sadd.s32 1, %s13
    $region7: #{private_decoder_forward.3} parent=1 // loop_footer_branch
      %12 = sbr.rel target = $region3
    $region8: #{private_decoder_forward.3} parent=1 // loop_exit
      _
    %542 = vsyncpa [#allocation3], 1
    %s543 = scalar_lea.sflag [#allocation3], 1
    %544 = vsyncpa %s543, 1
    %545 = vsyncpa [#allocation4], 1
    %s546 = scalar_lea.sflag [#allocation4], 1
    %547 = vsyncpa %s546, 1

// kernel: private_decoder_forward.2
$region0: #{private_decoder_forward.2}
  #allocation0 [shape = 'u32[]', space=smem, size = 0x4, offset = 0x4, fixed_abs, tag = 'smem constant byte address 0x4 - core index']
  #allocation1 [shape = 'u32[144,128]{1,0:T(1,128)}', space=vmem, size = 0x12000, scoped, tag = 'internal scratch']
  %s0 = inlined_call_operand.smem [shape: u32[34], index: -1, kind: input, shape index: {}]
  %s1 = sld [smem:[%s0]]
  %s2 = scalar_lea.smem %s0, 1
  %s3 = sld [smem:[%s2]]
  %s4 = scalar_lea.smem %s0, 2
  %s5 = sld [smem:[%s4]]
  %s6 = scalar_lea.smem %s0, 3
  %s7 = sld [smem:[%s6]]
  %s8 = scalar_lea.smem %s0, 4
  %s9 = sld [smem:[%s8]]
  %s10 = scalar_lea.smem %s0, 5
  %s11 = sld [smem:[%s10]]
  %s12 = scalar_lea.smem %s0, 6
  %s13 = sld [smem:[%s12]]
  %s14 = scalar_lea.smem %s0, 7
  %s15 = sld [smem:[%s14]]
  %s16 = scalar_lea.smem %s0, 8
  %s17 = sld [smem:[%s16]]
  %s18 = scalar_lea.smem %s0, 9
  %s19 = sld [smem:[%s18]]
  %s20 = scalar_lea.smem %s0, 10
  %s21 = sld [smem:[%s20]]
  %s22 = scalar_lea.smem %s0, 11
  %s23 = sld [smem:[%s22]]
  %s24 = scalar_lea.smem %s0, 12
  %s25 = sld [smem:[%s24]]
  %s26 = scalar_lea.smem %s0, 13
  %s27 = sld [smem:[%s26]]
  %s28 = scalar_lea.smem %s0, 14
  %s29 = sld [smem:[%s28]]
  %s30 = scalar_lea.smem %s0, 15
  %s31 = sld [smem:[%s30]]
  %s32 = scalar_lea.smem %s0, 16
  %s33 = sld [smem:[%s32]]
  %s34 = scalar_lea.smem %s0, 17
  %s35 = sld [smem:[%s34]]
  %s36 = scalar_lea.smem %s0, 18
  %s37 = sld [smem:[%s36]]
  %s38 = scalar_lea.smem %s0, 19
  %s39 = sld [smem:[%s38]]
  %s40 = scalar_lea.smem %s0, 20
  %s41 = sld [smem:[%s40]]
  %s42 = scalar_lea.smem %s0, 21
  %s43 = sld [smem:[%s42]]
  %s44 = scalar_lea.smem %s0, 22
  %s45 = sld [smem:[%s44]]
  %s46 = scalar_lea.smem %s0, 23
  %s47 = sld [smem:[%s46]]
  %s48 = scalar_lea.smem %s0, 24
  %s49 = sld [smem:[%s48]]
  %s50 = scalar_lea.smem %s0, 25
  %s51 = sld [smem:[%s50]]
  %s52 = scalar_lea.smem %s0, 26
  %s53 = sld [smem:[%s52]]
  %s54 = scalar_lea.smem %s0, 27
  %s55 = sld [smem:[%s54]]
  %s56 = scalar_lea.smem %s0, 28
  %s57 = sld [smem:[%s56]]
  %s58 = scalar_lea.smem %s0, 29
  %s59 = sld [smem:[%s58]]
  %s60 = scalar_lea.smem %s0, 30
  %s61 = sld [smem:[%s60]]
  %s62 = scalar_lea.smem %s0, 31
  %s63 = sld [smem:[%s62]]
  %s64 = scalar_lea.smem %s0, 32
  %s65 = sld [smem:[%s64]]
  %s66 = scalar_lea.smem %s0, 33
  %s67 = sld [smem:[%s66]]
  %s68 = sld [smem:[#allocation0]]
  $region142: #{private_decoder_forward.2} parent=0
    _
  %s70 = ssub.s32 1, %s68
  %s71 = scalar_select 0, %s70, %s68
  // Predicated region
  $region2: #{private_decoder_forward.2} parent=0 // pred_check
    _
  $region3: #{private_decoder_forward.2} parent=0 // pred_check_branch
    %73 = sbr.rel (0) target = $region5
  $region4: #{private_decoder_forward.2} parent=0 // pred_region
    _
  $region5: #{private_decoder_forward.2} parent=0 // pred_fallthru
    _
  // Predicated region
  $region6: #{private_decoder_forward.2} parent=0 // pred_check
    _
  $region7: #{private_decoder_forward.2} parent=0 // pred_check_branch
    %75 = sbr.rel (0) target = $region9
  $region8: #{private_decoder_forward.2} parent=0 // pred_region
    _
  $region9: #{private_decoder_forward.2} parent=0 // pred_fallthru
    _
  // Predicated region
  $region10: #{private_decoder_forward.2} parent=0 // pred_check
    _
  $region11: #{private_decoder_forward.2} parent=0 // pred_check_branch
    %77 = sbr.rel (0) target = $region13
  $region12: #{private_decoder_forward.2} parent=0 // pred_region
    _
  $region13: #{private_decoder_forward.2} parent=0 // pred_fallthru
    _
  // Predicated region
  $region14: #{private_decoder_forward.2} parent=0 // pred_check
    _
  $region15: #{private_decoder_forward.2} parent=0 // pred_check_branch
    %79 = sbr.rel (0) target = $region17
  $region16: #{private_decoder_forward.2} parent=0 // pred_region
    _
  $region17: #{private_decoder_forward.2} parent=0 // pred_fallthru
    _
  // Predicated region
  $region18: #{private_decoder_forward.2} parent=0 // pred_check
    _
  $region19: #{private_decoder_forward.2} parent=0 // pred_check_branch
    %81 = sbr.rel (0) target = $region21
  $region20: #{private_decoder_forward.2} parent=0 // pred_region
    _
  $region21: #{private_decoder_forward.2} parent=0 // pred_fallthru
    _
  // Predicated region
  $region22: #{private_decoder_forward.2} parent=0 // pred_check
    _
  $region23: #{private_decoder_forward.2} parent=0 // pred_check_branch
    %83 = sbr.rel (0) target = $region25
  $region24: #{private_decoder_forward.2} parent=0 // pred_region
    _
  $region25: #{private_decoder_forward.2} parent=0 // pred_fallthru
    _
  // Predicated region
  $region26: #{private_decoder_forward.2} parent=0 // pred_check
    _
  $region27: #{private_decoder_forward.2} parent=0 // pred_check_branch
    %85 = sbr.rel (0) target = $region29
  $region28: #{private_decoder_forward.2} parent=0 // pred_region
    _
  $region29: #{private_decoder_forward.2} parent=0 // pred_fallthru
    _
  // Predicated region
  $region30: #{private_decoder_forward.2} parent=0 // pred_check
    _
  $region31: #{private_decoder_forward.2} parent=0 // pred_check_branch
    %87 = sbr.rel (0) target = $region33
  $region32: #{private_decoder_forward.2} parent=0 // pred_region
    _
  $region33: #{private_decoder_forward.2} parent=0 // pred_fallthru
    _
  // Predicated region
  $region34: #{private_decoder_forward.2} parent=0 // pred_check
    _
  $region35: #{private_decoder_forward.2} parent=0 // pred_check_branch
    %89 = sbr.rel (0) target = $region37
  $region36: #{private_decoder_forward.2} parent=0 // pred_region
    _
  $region37: #{private_decoder_forward.2} parent=0 // pred_fallthru
    _
  // Predicated region
  $region38: #{private_decoder_forward.2} parent=0 // pred_check
    _
  $region39: #{private_decoder_forward.2} parent=0 // pred_check_branch
    %91 = sbr.rel (0) target = $region41
  $region40: #{private_decoder_forward.2} parent=0 // pred_region
    _
  $region41: #{private_decoder_forward.2} parent=0 // pred_fallthru
    _
  // Predicated region
  $region42: #{private_decoder_forward.2} parent=0 // pred_check
    _
  $region43: #{private_decoder_forward.2} parent=0 // pred_check_branch
    %93 = sbr.rel (0) target = $region45
  $region44: #{private_decoder_forward.2} parent=0 // pred_region
    _
  $region45: #{private_decoder_forward.2} parent=0 // pred_fallthru
    _
  // Predicated region
  $region46: #{private_decoder_forward.2} parent=0 // pred_check
    _
  $region47: #{private_decoder_forward.2} parent=0 // pred_check_branch
    %95 = sbr.rel (0) target = $region49
  $region48: #{private_decoder_forward.2} parent=0 // pred_region
    _
  $region49: #{private_decoder_forward.2} parent=0 // pred_fallthru
    _
  // Predicated region
  $region50: #{private_decoder_forward.2} parent=0 // pred_check
    _
  $region51: #{private_decoder_forward.2} parent=0 // pred_check_branch
    %97 = sbr.rel (0) target = $region53
  $region52: #{private_decoder_forward.2} parent=0 // pred_region
    _
  $region53: #{private_decoder_forward.2} parent=0 // pred_fallthru
    _
  // Predicated region
  $region54: #{private_decoder_forward.2} parent=0 // pred_check
    _
  $region55: #{private_decoder_forward.2} parent=0 // pred_check_branch
    %99 = sbr.rel (0) target = $region57
  $region56: #{private_decoder_forward.2} parent=0 // pred_region
    _
  $region57: #{private_decoder_forward.2} parent=0 // pred_fallthru
    _
  // Predicated region
  $region58: #{private_decoder_forward.2} parent=0 // pred_check
    _
  $region59: #{private_decoder_forward.2} parent=0 // pred_check_branch
    %101 = sbr.rel (0) target = $region61
  $region60: #{private_decoder_forward.2} parent=0 // pred_region
    _
  $region61: #{private_decoder_forward.2} parent=0 // pred_fallthru
    _
  // Predicated region
  $region62: #{private_decoder_forward.2} parent=0 // pred_check
    _
  $region63: #{private_decoder_forward.2} parent=0 // pred_check_branch
    %103 = sbr.rel (0) target = $region65
  $region64: #{private_decoder_forward.2} parent=0 // pred_region
    _
  $region65: #{private_decoder_forward.2} parent=0 // pred_fallthru
    _
  // Predicated region
  $region66: #{private_decoder_forward.2} parent=0 // pred_check
    _
  $region67: #{private_decoder_forward.2} parent=0 // pred_check_branch
    %105 = sbr.rel (0) target = $region69
  $region68: #{private_decoder_forward.2} parent=0 // pred_region
    _
  $region69: #{private_decoder_forward.2} parent=0 // pred_fallthru
    _
  // Predicated region
  $region70: #{private_decoder_forward.2} parent=0 // pred_check
    _
  $region71: #{private_decoder_forward.2} parent=0 // pred_check_branch
    %107 = sbr.rel (0) target = $region73
  $region72: #{private_decoder_forward.2} parent=0 // pred_region
    _
  $region73: #{private_decoder_forward.2} parent=0 // pred_fallthru
    _
  // Predicated region
  $region74: #{private_decoder_forward.2} parent=0 // pred_check
    _
  $region75: #{private_decoder_forward.2} parent=0 // pred_check_branch
    %109 = sbr.rel (0) target = $region77
  $region76: #{private_decoder_forward.2} parent=0 // pred_region
    _
  $region77: #{private_decoder_forward.2} parent=0 // pred_fallthru
    _
  // Predicated region
  $region78: #{private_decoder_forward.2} parent=0 // pred_check
    _
  $region79: #{private_decoder_forward.2} parent=0 // pred_check_branch
    %111 = sbr.rel (0) target = $region81
  $region80: #{private_decoder_forward.2} parent=0 // pred_region
    _
  $region81: #{private_decoder_forward.2} parent=0 // pred_fallthru
    _
  // Predicated region
  $region82: #{private_decoder_forward.2} parent=0 // pred_check
    _
  $region83: #{private_decoder_forward.2} parent=0 // pred_check_branch
    %113 = sbr.rel (0) target = $region85
  $region84: #{private_decoder_forward.2} parent=0 // pred_region
    _
  $region85: #{private_decoder_forward.2} parent=0 // pred_fallthru
    _
  // Predicated region
  $region86: #{private_decoder_forward.2} parent=0 // pred_check
    _
  $region87: #{private_decoder_forward.2} parent=0 // pred_check_branch
    %115 = sbr.rel (0) target = $region89
  $region88: #{private_decoder_forward.2} parent=0 // pred_region
    _
  $region89: #{private_decoder_forward.2} parent=0 // pred_fallthru
    _
  // Predicated region
  $region90: #{private_decoder_forward.2} parent=0 // pred_check
    _
  $region91: #{private_decoder_forward.2} parent=0 // pred_check_branch
    %117 = sbr.rel (0) target = $region93
  $region92: #{private_decoder_forward.2} parent=0 // pred_region
    _
  $region93: #{private_decoder_forward.2} parent=0 // pred_fallthru
    _
  // Predicated region
  $region94: #{private_decoder_forward.2} parent=0 // pred_check
    _
  $region95: #{private_decoder_forward.2} parent=0 // pred_check_branch
    %119 = sbr.rel (0) target = $region97
  $region96: #{private_decoder_forward.2} parent=0 // pred_region
    _
  $region97: #{private_decoder_forward.2} parent=0 // pred_fallthru
    _
  // Predicated region
  $region98: #{private_decoder_forward.2} parent=0 // pred_check
    _
  $region99: #{private_decoder_forward.2} parent=0 // pred_check_branch
    %121 = sbr.rel (0) target = $region101
  $region100: #{private_decoder_forward.2} parent=0 // pred_region
    _
  $region101: #{private_decoder_forward.2} parent=0 // pred_fallthru
    _
  // Predicated region
  $region102: #{private_decoder_forward.2} parent=0 // pred_check
    _
  $region103: #{private_decoder_forward.2} parent=0 // pred_check_branch
    %123 = sbr.rel (0) target = $region105
  $region104: #{private_decoder_forward.2} parent=0 // pred_region
    _
  $region105: #{private_decoder_forward.2} parent=0 // pred_fallthru
    _
  // Predicated region
  $region106: #{private_decoder_forward.2} parent=0 // pred_check
    _
  $region107: #{private_decoder_forward.2} parent=0 // pred_check_branch
    %125 = sbr.rel (0) target = $region109
  $region108: #{private_decoder_forward.2} parent=0 // pred_region
    _
  $region109: #{private_decoder_forward.2} parent=0 // pred_fallthru
    _
  // Predicated region
  $region110: #{private_decoder_forward.2} parent=0 // pred_check
    _
  $region111: #{private_decoder_forward.2} parent=0 // pred_check_branch
    %127 = sbr.rel (0) target = $region113
  $region112: #{private_decoder_forward.2} parent=0 // pred_region
    _
  $region113: #{private_decoder_forward.2} parent=0 // pred_fallthru
    _
  // Predicated region
  $region114: #{private_decoder_forward.2} parent=0 // pred_check
    _
  $region115: #{private_decoder_forward.2} parent=0 // pred_check_branch
    %129 = sbr.rel (0) target = $region117
  $region116: #{private_decoder_forward.2} parent=0 // pred_region
    _
  $region117: #{private_decoder_forward.2} parent=0 // pred_fallthru
    _
  // Predicated region
  $region118: #{private_decoder_forward.2} parent=0 // pred_check
    _
  $region119: #{private_decoder_forward.2} parent=0 // pred_check_branch
    %131 = sbr.rel (0) target = $region121
  $region120: #{private_decoder_forward.2} parent=0 // pred_region
    _
  $region121: #{private_decoder_forward.2} parent=0 // pred_fallthru
    _
  // Predicated region
  $region122: #{private_decoder_forward.2} parent=0 // pred_check
    _
  $region123: #{private_decoder_forward.2} parent=0 // pred_check_branch
    %133 = sbr.rel (0) target = $region125
  $region124: #{private_decoder_forward.2} parent=0 // pred_region
    _
  $region125: #{private_decoder_forward.2} parent=0 // pred_fallthru
    _
  // Predicated region
  $region126: #{private_decoder_forward.2} parent=0 // pred_check
    _
  $region127: #{private_decoder_forward.2} parent=0 // pred_check_branch
    %135 = sbr.rel (0) target = $region129
  $region128: #{private_decoder_forward.2} parent=0 // pred_region
    _
  $region129: #{private_decoder_forward.2} parent=0 // pred_fallthru
    _
  // Predicated region
  $region130: #{private_decoder_forward.2} parent=0 // pred_check
    _
  $region131: #{private_decoder_forward.2} parent=0 // pred_check_branch
    %137 = sbr.rel (0) target = $region133
  $region132: #{private_decoder_forward.2} parent=0 // pred_region
    _
  $region133: #{private_decoder_forward.2} parent=0 // pred_fallthru
    _
  %v139 = vld [vmem:[%s1] sm:$0x3]
  %v140 = vld [vmem:[%s3] sm:$0x3]
  %v141 = vpack.c.bf16 %v139, %v139
  %v142 = vld [vmem:[%s5] sm:$0xff]
  %v143 = vld [vmem:[%s5 + $0x8] sm:$0xff]
  %v144 = vld [vmem:[%s5 + $0x10] sm:$0xff]
  %v145 = vld [vmem:[%s7] sm:$0x3f]
  %147 = vset.pattern.permute.xlu0 0
  %148 = vperm.xlu0 %147, %v140
  %v149 = vpop.permute.xlu0 %148
  %v152 = vlaneseq
  %v153 = vshrl.u32 %v152, 7
  %v154 = vsub.s32 0, %v153
  %v155 = vrot.slane %v145, %v154
  %v156 = vlaneseq
  %v157 = vshrl.u32 %v156, 7
  %v158 = vsub.s32 1, %v157
  %v159 = vrot.slane %v145, %v158
  %v160 = vlaneseq
  %v161 = vshrl.u32 %v160, 7
  %v162 = vsub.s32 2, %v161
  %v163 = vrot.slane %v145, %v162
  %v164 = vlaneseq
  %v165 = vshrl.u32 %v164, 7
  %v166 = vsub.s32 3, %v165
  %v167 = vrot.slane %v145, %v166
  %v168 = vlaneseq
  %v169 = vshrl.u32 %v168, 7
  %v170 = vsub.s32 4, %v169
  %v171 = vrot.slane %v145, %v170
  %v172 = vlaneseq
  %v173 = vshrl.u32 %v172, 7
  %v174 = vsub.s32 5, %v173
  %v175 = vrot.slane %v145, %v174
  %v182 = vmul.f32 %v149, %v155
  %v183 = vmul.f32 %v149, %v159
  %v184 = vmul.f32 %v149, %v163
  %v185 = vmul.f32 %v149, %v167
  %v186 = vmul.f32 %v149, %v171
  %v187 = vmul.f32 %v149, %v175
  %v191 = vunpack.c.l.b16 %v142
  %v192 = vunpack.c.h.b16 %v142
  %v193 = vunpack.c.l.b16 %v143
  %v194 = vunpack.c.h.b16 %v143
  %v195 = vunpack.c.l.b16 %v144
  %v196 = vunpack.c.h.b16 %v144
  %v197 = vpack.c.b16 %v191, %v191
  %v198 = vpack.c.b16 %v192, %v192
  %v199 = vpack.c.b16 %v193, %v193
  %v200 = vpack.c.b16 %v194, %v194
  %v201 = vpack.c.b16 %v195, %v195
  %v202 = vpack.c.b16 %v196, %v196
  %vm203 = vcmask 64512
  %v205 = vsel %vm203, %v141, 0
  %vm207 = vcmask 1043456
  %v209 = vsel %vm207, %v197, 0
  %v212 = vsel %vm207, %v198, 0
  %v215 = vsel %vm207, %v199, 0
  %v218 = vsel %vm207, %v200, 0
  %v221 = vsel %vm207, %v201, 0
  %v224 = vsel %vm207, %v202, 0
  %226 = vmatprep.subr.bf16.mxu0 %v212
  %227 = vmatpush1.bf16.msra.mxu0 %v209
  %228 = vmatprep.subr.bf16.mxu0 0
  %229 = vmatpush1.bf16.msra.mxu0 0
  %230 = vmatprep.subr.bf16.mxu0 0
  %231 = vmatpush1.bf16.msra.mxu0 0
  %232 = vmatprep.subr.bf16.mxu0 0
  %233 = vmatpush1.bf16.msra.mxu0 0
  %234 = vmatprep.subr.bf16.mxu0 0
  %235 = vmatpush1.bf16.msra.mxu0 0
  %236 = vmatprep.subr.bf16.mxu0 0
  %237 = vmatpush1.bf16.msra.mxu0 0
  %238 = vmatprep.subr.bf16.mxu0 0
  %239 = vmatpush1.bf16.msra.mxu0 0
  %240 = vmatprep.subr.bf16.mxu0 0
  %241 = vmatpush1.bf16.msra.mxu0 0
  %242 = vmatprep.subr.bf16.mxu0 0
  %243 = vmatpush1.bf16.msra.mxu0 0
  %244 = vmatprep.subr.bf16.mxu0 0
  %245 = vmatpush1.bf16.msra.mxu0 0
  %246 = vmatprep.subr.bf16.mxu0 0
  %247 = vmatpush1.bf16.msra.mxu0 0
  %248 = vmatprep.subr.bf16.mxu0 0
  %249 = vmatpush1.bf16.msra.mxu0 0
  %250 = vmatprep.subr.bf16.mxu0 0
  %251 = vmatpush1.bf16.msra.mxu0 0
  %252 = vmatprep.subr.bf16.mxu0 0
  %253 = vmatpush1.bf16.msra.mxu0 0
  %254 = vmatprep.subr.bf16.mxu0 0
  %255 = vmatpush1.bf16.msra.mxu0 0
  %256 = vmatprep.subr.bf16.mxu0 0
  %257 = vmatpush1.bf16.msra.mxu0 0
  %258 = vmatprep.mubr.bf16.mxu0 0
  %259 = vmatmul.mubr.bf16.gmra.mrb[0].mxu0 %v205
  %v260 = vpop.f32.mrb[0].mxu0
  %v261 = vadd.f32 %v182, %v260
  %v262 = vpop.f32.mrb[0].mxu0
  %v263 = vadd.f32 %v183, %v262
  %v264 = vpop.f32.mrb[0].mxu0
  %v265 = vpop.f32.mrb[0].mxu0
  %266 = vdwg.mxu0
  %267 = vmatprep.subr.bf16.mxu0 %v218
  %268 = vmatpush1.bf16.msra.mxu0 %v215
  %269 = vmatprep.subr.bf16.mxu0 0
  %270 = vmatpush1.bf16.msra.mxu0 0
  %271 = vmatprep.subr.bf16.mxu0 0
  %272 = vmatpush1.bf16.msra.mxu0 0
  %273 = vmatprep.subr.bf16.mxu0 0
  %274 = vmatpush1.bf16.msra.mxu0 0
  %275 = vmatprep.subr.bf16.mxu0 0
  %276 = vmatpush1.bf16.msra.mxu0 0
  %277 = vmatprep.subr.bf16.mxu0 0
  %278 = vmatpush1.bf16.msra.mxu0 0
  %279 = vmatprep.subr.bf16.mxu0 0
  %280 = vmatpush1.bf16.msra.mxu0 0
  %281 = vmatprep.subr.bf16.mxu0 0
  %282 = vmatpush1.bf16.msra.mxu0 0
  %283 = vmatprep.subr.bf16.mxu0 0
  %284 = vmatpush1.bf16.msra.mxu0 0
  %285 = vmatprep.subr.bf16.mxu0 0
  %286 = vmatpush1.bf16.msra.mxu0 0
  %287 = vmatprep.subr.bf16.mxu0 0
  %288 = vmatpush1.bf16.msra.mxu0 0
  %289 = vmatprep.subr.bf16.mxu0 0
  %290 = vmatpush1.bf16.msra.mxu0 0
  %291 = vmatprep.subr.bf16.mxu0 0
  %292 = vmatpush1.bf16.msra.mxu0 0
  %293 = vmatprep.subr.bf16.mxu0 0
  %294 = vmatpush1.bf16.msra.mxu0 0
  %295 = vmatprep.subr.bf16.mxu0 0
  %296 = vmatpush1.bf16.msra.mxu0 0
  %297 = vmatprep.subr.bf16.mxu0 0
  %298 = vmatpush1.bf16.msra.mxu0 0
  %299 = vmatprep.mubr.bf16.mxu0 0
  %300 = vmatmul.mubr.bf16.gmra.mrb[0].mxu0 %v205
  %v301 = vpop.f32.mrb[0].mxu0
  %v302 = vadd.f32 %v184, %v301
  %v303 = vpop.f32.mrb[0].mxu0
  %v304 = vadd.f32 %v185, %v303
  %v305 = vpop.f32.mrb[0].mxu0
  %v306 = vpop.f32.mrb[0].mxu0
  %307 = vdwg.mxu0
  %308 = vmatprep.subr.bf16.mxu0 %v224
  %309 = vmatpush1.bf16.msra.mxu0 %v221
  %310 = vmatprep.subr.bf16.mxu0 0
  %311 = vmatpush1.bf16.msra.mxu0 0
  %312 = vmatprep.subr.bf16.mxu0 0
  %313 = vmatpush1.bf16.msra.mxu0 0
  %314 = vmatprep.subr.bf16.mxu0 0
  %315 = vmatpush1.bf16.msra.mxu0 0
  %316 = vmatprep.subr.bf16.mxu0 0
  %317 = vmatpush1.bf16.msra.mxu0 0
  %318 = vmatprep.subr.bf16.mxu0 0
  %319 = vmatpush1.bf16.msra.mxu0 0
  %320 = vmatprep.subr.bf16.mxu0 0
  %321 = vmatpush1.bf16.msra.mxu0 0
  %322 = vmatprep.subr.bf16.mxu0 0
  %323 = vmatpush1.bf16.msra.mxu0 0
  %324 = vmatprep.subr.bf16.mxu0 0
  %325 = vmatpush1.bf16.msra.mxu0 0
  %326 = vmatprep.subr.bf16.mxu0 0
  %327 = vmatpush1.bf16.msra.mxu0 0
  %328 = vmatprep.subr.bf16.mxu0 0
  %329 = vmatpush1.bf16.msra.mxu0 0
  %330 = vmatprep.subr.bf16.mxu0 0
  %331 = vmatpush1.bf16.msra.mxu0 0
  %332 = vmatprep.subr.bf16.mxu0 0
  %333 = vmatpush1.bf16.msra.mxu0 0
  %334 = vmatprep.subr.bf16.mxu0 0
  %335 = vmatpush1.bf16.msra.mxu0 0
  %336 = vmatprep.subr.bf16.mxu0 0
  %337 = vmatpush1.bf16.msra.mxu0 0
  %338 = vmatprep.subr.bf16.mxu0 0
  %339 = vmatpush1.bf16.msra.mxu0 0
  %340 = vmatprep.mubr.bf16.mxu0 0
  %341 = vmatmul.mubr.bf16.gmra.mrb[0].mxu0 %v205
  %v342 = vpop.f32.mrb[0].mxu0
  %v343 = vadd.f32 %v186, %v342
  %v344 = vpop.f32.mrb[0].mxu0
  %v345 = vadd.f32 %v187, %v344
  %v346 = vpop.f32.mrb[0].mxu0
  %v347 = vpop.f32.mrb[0].mxu0
  %348 = vdwg.mxu0
  %v349 = vld [vmem:[%s9] sm:$0x3f]
  %v351 = vlaneseq
  %v352 = vshrl.u32 %v351, 7
  %v353 = vsub.s32 0, %v352
  %v354 = vrot.slane %v349, %v353
  %v355 = vlaneseq
  %v356 = vshrl.u32 %v355, 7
  %v357 = vsub.s32 1, %v356
  %v358 = vrot.slane %v349, %v357
  %v359 = vlaneseq
  %v360 = vshrl.u32 %v359, 7
  %v361 = vsub.s32 2, %v360
  %v362 = vrot.slane %v349, %v361
  %v363 = vlaneseq
  %v364 = vshrl.u32 %v363, 7
  %v365 = vsub.s32 3, %v364
  %v366 = vrot.slane %v349, %v365
  %v367 = vlaneseq
  %v368 = vshrl.u32 %v367, 7
  %v369 = vsub.s32 4, %v368
  %v370 = vrot.slane %v349, %v369
  %v371 = vlaneseq
  %v372 = vshrl.u32 %v371, 7
  %v373 = vsub.s32 5, %v372
  %v374 = vrot.slane %v349, %v373
  %v381 = vadd.f32 %v261, %v354
  %v382 = vadd.f32 %v263, %v358
  %v383 = vadd.f32 %v302, %v362
  %v384 = vadd.f32 %v304, %v366
  %v385 = vadd.f32 %v343, %v370
  %v386 = vadd.f32 %v345, %v374
  %vm387 = vcmask 1041408
  %v388 = vsel %vm387, %v381, 0.0
  %v389 = vrot.slane %v388, 4
  %v390 = vadd.f32 %v388, %v389
  %v391 = vrot.slane %v390, 2
  %v392 = vadd.f32 %v390, %v391
  %v393 = vrot.slane %v392, 1
  %v394 = vadd.f32 %v392, %v393
  %v395 = vsel %vm387, %v382, 0.0
  %v396 = vrot.slane %v395, 4
  %v397 = vadd.f32 %v395, %v396
  %v398 = vrot.slane %v397, 2
  %v399 = vadd.f32 %v397, %v398
  %v400 = vrot.slane %v399, 1
  %v401 = vadd.f32 %v399, %v400
  %v402 = vsel %vm387, %v383, 0.0
  %v403 = vrot.slane %v402, 4
  %v404 = vadd.f32 %v402, %v403
  %v405 = vrot.slane %v404, 2
  %v406 = vadd.f32 %v404, %v405
  %v407 = vrot.slane %v406, 1
  %v408 = vadd.f32 %v406, %v407
  %v409 = vsel %vm387, %v384, 0.0
  %v410 = vrot.slane %v409, 4
  %v411 = vadd.f32 %v409, %v410
  %v412 = vrot.slane %v411, 2
  %v413 = vadd.f32 %v411, %v412
  %v414 = vrot.slane %v413, 1
  %v415 = vadd.f32 %v413, %v414
  %v416 = vsel %vm387, %v385, 0.0
  %v417 = vrot.slane %v416, 4
  %v418 = vadd.f32 %v416, %v417
  %v419 = vrot.slane %v418, 2
  %v420 = vadd.f32 %v418, %v419
  %v421 = vrot.slane %v420, 1
  %v422 = vadd.f32 %v420, %v421
  %v423 = vsel %vm387, %v386, 0.0
  %v424 = vrot.slane %v423, 4
  %v425 = vadd.f32 %v423, %v424
  %v426 = vrot.slane %v425, 2
  %v427 = vadd.f32 %v425, %v426
  %v428 = vrot.slane %v427, 1
  %v429 = vadd.f32 %v427, %v428
  %v430 = vrcp.pop 2.0
  %v431 = vmul.f32 %v394, %v430
  %v432 = vmul.f32 %v401, %v430
  %v433 = vmul.f32 %v408, %v430
  %v434 = vmul.f32 %v415, %v430
  %v435 = vmul.f32 %v422, %v430
  %v436 = vmul.f32 %v429, %v430
  %v437 = vsub.f32 %v381, %v431
  %v438 = vsub.f32 %v382, %v432
  %v439 = vsub.f32 %v383, %v433
  %v440 = vsub.f32 %v384, %v434
  %v441 = vsub.f32 %v385, %v435
  %v442 = vsub.f32 %v386, %v436
  %v443 = vmul.f32 %v437, %v437
  %v444 = vmul.f32 %v438, %v438
  %v445 = vmul.f32 %v439, %v439
  %v446 = vmul.f32 %v440, %v440
  %v447 = vmul.f32 %v441, %v441
  %v448 = vmul.f32 %v442, %v442
  %v449 = vsel %vm387, %v443, 0.0
  %v450 = vrot.slane %v449, 4
  %v451 = vadd.f32 %v449, %v450
  %v452 = vrot.slane %v451, 2
  %v453 = vadd.f32 %v451, %v452
  %v454 = vrot.slane %v453, 1
  %v455 = vadd.f32 %v453, %v454
  %v456 = vsel %vm387, %v444, 0.0
  %v457 = vrot.slane %v456, 4
  %v458 = vadd.f32 %v456, %v457
  %v459 = vrot.slane %v458, 2
  %v460 = vadd.f32 %v458, %v459
  %v461 = vrot.slane %v460, 1
  %v462 = vadd.f32 %v460, %v461
  %v463 = vsel %vm387, %v445, 0.0
  %v464 = vrot.slane %v463, 4
  %v465 = vadd.f32 %v463, %v464
  %v466 = vrot.slane %v465, 2
  %v467 = vadd.f32 %v465, %v466
  %v468 = vrot.slane %v467, 1
  %v469 = vadd.f32 %v467, %v468
  %v470 = vsel %vm387, %v446, 0.0
  %v471 = vrot.slane %v470, 4
  %v472 = vadd.f32 %v470, %v471
  %v473 = vrot.slane %v472, 2
  %v474 = vadd.f32 %v472, %v473
  %v475 = vrot.slane %v474, 1
  %v476 = vadd.f32 %v474, %v475
  %v477 = vsel %vm387, %v447, 0.0
  %v478 = vrot.slane %v477, 4
  %v479 = vadd.f32 %v477, %v478
  %v480 = vrot.slane %v479, 2
  %v481 = vadd.f32 %v479, %v480
  %v482 = vrot.slane %v481, 1
  %v483 = vadd.f32 %v481, %v482
  %v484 = vsel %vm387, %v448, 0.0
  %v485 = vrot.slane %v484, 4
  %v486 = vadd.f32 %v484, %v485
  %v487 = vrot.slane %v486, 2
  %v488 = vadd.f32 %v486, %v487
  %v489 = vrot.slane %v488, 1
  %v490 = vadd.f32 %v488, %v489
  %v491 = vmul.f32 %v455, %v430
  %v492 = vmul.f32 %v462, %v430
  %v493 = vmul.f32 %v469, %v430
  %v494 = vmul.f32 %v476, %v430
  %v495 = vmul.f32 %v483, %v430
  %v496 = vmul.f32 %v490, %v430
  %v497 = vadd.f32 %v491, 1e-05
  %v498 = vadd.f32 %v492, 1e-05
  %v499 = vadd.f32 %v493, 1e-05
  %v500 = vadd.f32 %v494, 1e-05
  %v501 = vadd.f32 %v495, 1e-05
  %v502 = vadd.f32 %v496, 1e-05
  %v503 = vrsqrt.pop %v497
  %v504 = vrsqrt.pop %v498
  %v505 = vrsqrt.pop %v499
  %v506 = vrsqrt.pop %v500
  %v507 = vrsqrt.pop %v501
  %v508 = vrsqrt.pop %v502
  %v509 = vmul.f32 %v437, %v503
  %v510 = vmul.f32 %v438, %v504
  %v511 = vmul.f32 %v439, %v505
  %v512 = vmul.f32 %v440, %v506
  %v513 = vmul.f32 %v441, %v507
  %v514 = vmul.f32 %v442, %v508
  %v515 = vld [vmem:[%s11] sm:$0x3f]
  %v517 = vlaneseq
  %v518 = vshrl.u32 %v517, 7
  %v519 = vsub.s32 0, %v518
  %v520 = vrot.slane %v515, %v519
  %v521 = vlaneseq
  %v522 = vshrl.u32 %v521, 7
  %v523 = vsub.s32 1, %v522
  %v524 = vrot.slane %v515, %v523
  %v525 = vlaneseq
  %v526 = vshrl.u32 %v525, 7
  %v527 = vsub.s32 2, %v526
  %v528 = vrot.slane %v515, %v527
  %v529 = vlaneseq
  %v530 = vshrl.u32 %v529, 7
  %v531 = vsub.s32 3, %v530
  %v532 = vrot.slane %v515, %v531
  %v533 = vlaneseq
  %v534 = vshrl.u32 %v533, 7
  %v535 = vsub.s32 4, %v534
  %v536 = vrot.slane %v515, %v535
  %v537 = vlaneseq
  %v538 = vshrl.u32 %v537, 7
  %v539 = vsub.s32 5, %v538
  %v540 = vrot.slane %v515, %v539
  %v547 = vmul.f32 %v509, %v520
  %v548 = vmul.f32 %v510, %v524
  %v549 = vmul.f32 %v511, %v528
  %v550 = vmul.f32 %v512, %v532
  %v551 = vmul.f32 %v513, %v536
  %v552 = vmul.f32 %v514, %v540
  %v553 = vld [vmem:[%s13] sm:$0x3f]
  %v555 = vlaneseq
  %v556 = vshrl.u32 %v555, 7
  %v557 = vsub.s32 0, %v556
  %v558 = vrot.slane %v553, %v557
  %v559 = vlaneseq
  %v560 = vshrl.u32 %v559, 7
  %v561 = vsub.s32 1, %v560
  %v562 = vrot.slane %v553, %v561
  %v563 = vlaneseq
  %v564 = vshrl.u32 %v563, 7
  %v565 = vsub.s32 2, %v564
  %v566 = vrot.slane %v553, %v565
  %v567 = vlaneseq
  %v568 = vshrl.u32 %v567, 7
  %v569 = vsub.s32 3, %v568
  %v570 = vrot.slane %v553, %v569
  %v571 = vlaneseq
  %v572 = vshrl.u32 %v571, 7
  %v573 = vsub.s32 4, %v572
  %v574 = vrot.slane %v553, %v573
  %v575 = vlaneseq
  %v576 = vshrl.u32 %v575, 7
  %v577 = vsub.s32 5, %v576
  %v578 = vrot.slane %v553, %v577
  %v585 = vadd.f32 %v547, %v558
  %v586 = vadd.f32 %v548, %v562
  %v587 = vadd.f32 %v549, %v566
  %v588 = vadd.f32 %v550, %v570
  %v589 = vadd.f32 %v551, %v574
  %v590 = vadd.f32 %v552, %v578
  %v591 = vmax.f32 %v585, 0.0
  %v592 = vmax.f32 %v586, 0.0
  %v593 = vmax.f32 %v587, 0.0
  %v594 = vmax.f32 %v588, 0.0
  %v595 = vmax.f32 %v589, 0.0
  %v596 = vmax.f32 %v590, 0.0
  %v597 = vpack.c.bf16 %v591, %v591
  %v598 = vpack.c.bf16 %v592, %v592
  %v599 = vpack.c.bf16 %v593, %v593
  %v600 = vpack.c.bf16 %v594, %v594
  %v601 = vpack.c.bf16 %v595, %v595
  %v602 = vpack.c.bf16 %v596, %v596
  %v603 = vld [vmem:[%s15] sm:$0xff]
  %v604 = vld [vmem:[%s15 + $0x8] sm:$0xff]
  %v605 = vld [vmem:[%s15 + $0x10] sm:$0xff]
  %v606 = vld [vmem:[%s15 + $0x18] sm:$0xff]
  %v607 = vld [vmem:[%s15 + $0x20] sm:$0xff]
  %v608 = vld [vmem:[%s15 + $0x28] sm:$0xff]
  %v609 = vld [vmem:[%s15 + $0x30] sm:$0xff]
  %v610 = vld [vmem:[%s15 + $0x38] sm:$0xff]
  %v611 = vld [vmem:[%s15 + $0x40] sm:$0xff]
  %v612 = vld [vmem:[%s15 + $0x48] sm:$0xff]
  %v613 = vld [vmem:[%s15 + $0x50] sm:$0xff]
  %v614 = vld [vmem:[%s15 + $0x58] sm:$0xff]
  %v615 = vld [vmem:[%s15 + $0x60] sm:$0xff]
  %v616 = vld [vmem:[%s15 + $0x68] sm:$0xff]
  %v617 = vld [vmem:[%s15 + $0x70] sm:$0xff]
  %v618 = vld [vmem:[%s15 + $0x78] sm:$0xff]
  %v619 = vld [vmem:[%s15 + $0x80] sm:$0xff]
  %v620 = vld [vmem:[%s15 + $0x88] sm:$0xff]
  %v621 = vld [vmem:[%s15 + $0x90] sm:$0xff]
  %v622 = vld [vmem:[%s15 + $0x98] sm:$0xff]
  %v623 = vld [vmem:[%s15 + $0xa0] sm:$0xff]
  %v624 = vld [vmem:[%s15 + $0xa8] sm:$0xff]
  %v625 = vld [vmem:[%s15 + $0xb0] sm:$0xff]
  %v626 = vld [vmem:[%s15 + $0xb8] sm:$0xff]
  %v627 = vld [vmem:[%s15 + $0xc0] sm:$0xff]
  %v628 = vld [vmem:[%s15 + $0xc8] sm:$0xff]
  %v629 = vld [vmem:[%s15 + $0xd0] sm:$0xff]
  %v630 = vld [vmem:[%s15 + $0xd8] sm:$0xff]
  %v631 = vld [vmem:[%s15 + $0xe0] sm:$0xff]
  %v632 = vld [vmem:[%s15 + $0xe8] sm:$0xff]
  %v633 = vld [vmem:[%s15 + $0xf0] sm:$0xff]
  %v634 = vld [vmem:[%s15 + $0xf8] sm:$0xff]
  %v635 = vld [vmem:[%s15 + $0x100] sm:$0xff]
  %v636 = vld [vmem:[%s15 + $0x108] sm:$0xff]
  %v637 = vld [vmem:[%s15 + $0x110] sm:$0xff]
  %v638 = vld [vmem:[%s15 + $0x118] sm:$0xff]
  %v639 = vld [vmem:[%s15 + $0x120] sm:$0xff]
  %v640 = vld [vmem:[%s15 + $0x128] sm:$0xff]
  %v641 = vld [vmem:[%s15 + $0x130] sm:$0xff]
  %v642 = vld [vmem:[%s15 + $0x138] sm:$0xff]
  %v643 = vld [vmem:[%s15 + $0x140] sm:$0xff]
  %v644 = vld [vmem:[%s15 + $0x148] sm:$0xff]
  %v645 = vld [vmem:[%s15 + $0x150] sm:$0xff]
  %v646 = vld [vmem:[%s15 + $0x158] sm:$0xff]
  %v647 = vld [vmem:[%s15 + $0x160] sm:$0xff]
  %v648 = vld [vmem:[%s15 + $0x168] sm:$0xff]
  %v649 = vld [vmem:[%s15 + $0x170] sm:$0xff]
  %v650 = vld [vmem:[%s15 + $0x178] sm:$0xff]
  %v651 = vld [vmem:[%s15 + $0x180] sm:$0xff]
  %v652 = vld [vmem:[%s15 + $0x188] sm:$0xff]
  %v653 = vld [vmem:[%s15 + $0x190] sm:$0xff]
  %v654 = vld [vmem:[%s15 + $0x198] sm:$0xff]
  %v655 = vld [vmem:[%s15 + $0x1a0] sm:$0xff]
  %v656 = vld [vmem:[%s15 + $0x1a8] sm:$0xff]
  %v657 = vld [vmem:[%s15 + $0x1b0] sm:$0xff]
  %v658 = vld [vmem:[%s15 + $0x1b8] sm:$0xff]
  %v659 = vld [vmem:[%s15 + $0x1c0] sm:$0xff]
  %v660 = vld [vmem:[%s15 + $0x1c8] sm:$0xff]
  %v661 = vld [vmem:[%s15 + $0x1d0] sm:$0xff]
  %v662 = vld [vmem:[%s15 + $0x1d8] sm:$0xff]
  %v663 = vld [vmem:[%s15 + $0x1e0] sm:$0xff]
  %v664 = vld [vmem:[%s15 + $0x1e8] sm:$0xff]
  %v665 = vld [vmem:[%s15 + $0x1f0] sm:$0xff]
  %v666 = vld [vmem:[%s15 + $0x1f8] sm:$0xff]
  %v667 = vld [vmem:[%s15 + $0x200] sm:$0xff]
  %v668 = vld [vmem:[%s15 + $0x208] sm:$0xff]
  %v669 = vld [vmem:[%s15 + $0x210] sm:$0xff]
  %v670 = vld [vmem:[%s15 + $0x218] sm:$0xff]
  %v671 = vld [vmem:[%s15 + $0x220] sm:$0xff]
  %v672 = vld [vmem:[%s15 + $0x228] sm:$0xff]
  %v673 = vld [vmem:[%s15 + $0x230] sm:$0xff]
  %v674 = vld [vmem:[%s15 + $0x238] sm:$0xff]
  %v675 = vld [vmem:[%s15 + $0x240] sm:$0xff]
  %v676 = vld [vmem:[%s15 + $0x248] sm:$0xff]
  %v677 = vld [vmem:[%s15 + $0x250] sm:$0xff]
  %v678 = vld [vmem:[%s15 + $0x258] sm:$0xff]
  %v679 = vld [vmem:[%s15 + $0x260] sm:$0xff]
  %v680 = vld [vmem:[%s15 + $0x268] sm:$0xff]
  %v681 = vld [vmem:[%s15 + $0x270] sm:$0xff]
  %v682 = vld [vmem:[%s15 + $0x278] sm:$0xff]
  %v683 = vld [vmem:[%s15 + $0x280] sm:$0xff]
  %v684 = vld [vmem:[%s15 + $0x288] sm:$0xff]
  %v685 = vld [vmem:[%s15 + $0x290] sm:$0xff]
  %v686 = vld [vmem:[%s15 + $0x298] sm:$0xff]
  %v687 = vld [vmem:[%s15 + $0x2a0] sm:$0xff]
  %v688 = vld [vmem:[%s15 + $0x2a8] sm:$0xff]
  %v689 = vld [vmem:[%s15 + $0x2b0] sm:$0xff]
  %v690 = vld [vmem:[%s15 + $0x2b8] sm:$0xff]
  %v691 = vld [vmem:[%s15 + $0x2c0] sm:$0xff]
  %v692 = vld [vmem:[%s15 + $0x2c8] sm:$0xff]
  %v693 = vld [vmem:[%s15 + $0x2d0] sm:$0xff]
  %v694 = vld [vmem:[%s15 + $0x2d8] sm:$0xff]
  %v695 = vld [vmem:[%s15 + $0x2e0] sm:$0xff]
  %v696 = vld [vmem:[%s15 + $0x2e8] sm:$0xff]
  %v697 = vld [vmem:[%s15 + $0x2f0] sm:$0xff]
  %v698 = vld [vmem:[%s15 + $0x2f8] sm:$0xff]
  %v699 = vld [vmem:[%s15 + $0x300] sm:$0xff]
  %v700 = vld [vmem:[%s15 + $0x308] sm:$0xff]
  %v701 = vld [vmem:[%s15 + $0x310] sm:$0xff]
  %v702 = vld [vmem:[%s15 + $0x318] sm:$0xff]
  %v703 = vld [vmem:[%s15 + $0x320] sm:$0xff]
  %v704 = vld [vmem:[%s15 + $0x328] sm:$0xff]
  %v705 = vld [vmem:[%s15 + $0x330] sm:$0xff]
  %v706 = vld [vmem:[%s15 + $0x338] sm:$0xff]
  %v707 = vld [vmem:[%s15 + $0x340] sm:$0xff]
  %v708 = vld [vmem:[%s15 + $0x348] sm:$0xff]
  %v709 = vld [vmem:[%s15 + $0x350] sm:$0xff]
  %v710 = vld [vmem:[%s15 + $0x358] sm:$0xff]
  %v711 = vld [vmem:[%s15 + $0x360] sm:$0xff]
  %v712 = vld [vmem:[%s15 + $0x368] sm:$0xff]
  %v713 = vld [vmem:[%s15 + $0x370] sm:$0xff]
  %v714 = vld [vmem:[%s15 + $0x378] sm:$0xff]
  %v715 = vld [vmem:[%s15 + $0x380] sm:$0xff]
  %v716 = vld [vmem:[%s15 + $0x388] sm:$0xff]
  %v717 = vld [vmem:[%s15 + $0x390] sm:$0xff]
  %v718 = vld [vmem:[%s15 + $0x398] sm:$0xff]
  %v719 = vld [vmem:[%s15 + $0x3a0] sm:$0xff]
  %v720 = vld [vmem:[%s15 + $0x3a8] sm:$0xff]
  %v721 = vld [vmem:[%s15 + $0x3b0] sm:$0xff]
  %v722 = vld [vmem:[%s15 + $0x3b8] sm:$0xff]
  %v723 = vld [vmem:[%s15 + $0x3c0] sm:$0xff]
  %v724 = vld [vmem:[%s15 + $0x3c8] sm:$0xff]
  %v725 = vld [vmem:[%s15 + $0x3d0] sm:$0xff]
  %v726 = vld [vmem:[%s15 + $0x3d8] sm:$0xff]
  %v727 = vld [vmem:[%s15 + $0x3e0] sm:$0xff]
  %v728 = vld [vmem:[%s15 + $0x3e8] sm:$0xff]
  %v729 = vld [vmem:[%s15 + $0x3f0] sm:$0xff]
  %v730 = vld [vmem:[%s15 + $0x3f8] sm:$0xff]
  %v731 = vld [vmem:[%s15 + $0x400] sm:$0xff]
  %v732 = vld [vmem:[%s15 + $0x408] sm:$0xff]
  %v733 = vld [vmem:[%s15 + $0x410] sm:$0xff]
  %v734 = vld [vmem:[%s15 + $0x418] sm:$0xff]
  %v735 = vld [vmem:[%s15 + $0x420] sm:$0xff]
  %v736 = vld [vmem:[%s15 + $0x428] sm:$0xff]
  %v737 = vld [vmem:[%s15 + $0x430] sm:$0xff]
  %v738 = vld [vmem:[%s15 + $0x438] sm:$0xff]
  %v739 = vld [vmem:[%s15 + $0x440] sm:$0xff]
  %v740 = vld [vmem:[%s15 + $0x448] sm:$0xff]
  %v741 = vld [vmem:[%s15 + $0x450] sm:$0xff]
  %v742 = vld [vmem:[%s15 + $0x458] sm:$0xff]
  %v743 = vld [vmem:[%s15 + $0x460] sm:$0xff]
  %v744 = vld [vmem:[%s15 + $0x468] sm:$0xff]
  %v745 = vld [vmem:[%s15 + $0x470] sm:$0xff]
  %v746 = vld [vmem:[%s15 + $0x478] sm:$0xff]
  %v747 = vld [vmem:[%s15 + $0x480] sm:$0xff]
  %v748 = vld [vmem:[%s15 + $0x488] sm:$0xff]
  %v749 = vld [vmem:[%s15 + $0x490] sm:$0xff]
  %v750 = vld [vmem:[%s15 + $0x498] sm:$0xff]
  %v751 = vld [vmem:[%s15 + $0x4a0] sm:$0xff]
  %v752 = vld [vmem:[%s15 + $0x4a8] sm:$0xff]
  %v753 = vld [vmem:[%s15 + $0x4b0] sm:$0xff]
  %v754 = vld [vmem:[%s15 + $0x4b8] sm:$0xff]
  %v755 = vld [vmem:[%s15 + $0x4c0] sm:$0xff]
  %v756 = vld [vmem:[%s15 + $0x4c8] sm:$0xff]
  %v757 = vld [vmem:[%s15 + $0x4d0] sm:$0xff]
  %v758 = vld [vmem:[%s15 + $0x4d8] sm:$0xff]
  %v759 = vld [vmem:[%s15 + $0x4e0] sm:$0xff]
  %v760 = vld [vmem:[%s15 + $0x4e8] sm:$0xff]
  %v761 = vld [vmem:[%s15 + $0x4f0] sm:$0xff]
  %v762 = vld [vmem:[%s15 + $0x4f8] sm:$0xff]
  %v763 = vld [vmem:[%s15 + $0x500] sm:$0xff]
  %v764 = vld [vmem:[%s15 + $0x508] sm:$0xff]
  %v765 = vld [vmem:[%s15 + $0x510] sm:$0xff]
  %v766 = vld [vmem:[%s15 + $0x518] sm:$0xff]
  %v767 = vld [vmem:[%s15 + $0x520] sm:$0xff]
  %v768 = vld [vmem:[%s15 + $0x528] sm:$0xff]
  %v769 = vld [vmem:[%s15 + $0x530] sm:$0xff]
  %v770 = vld [vmem:[%s15 + $0x538] sm:$0xff]
  %v771 = vld [vmem:[%s15 + $0x540] sm:$0xff]
  %v772 = vld [vmem:[%s15 + $0x548] sm:$0xff]
  %v773 = vld [vmem:[%s15 + $0x550] sm:$0xff]
  %v774 = vld [vmem:[%s15 + $0x558] sm:$0xff]
  %v775 = vld [vmem:[%s15 + $0x560] sm:$0xff]
  %v776 = vld [vmem:[%s15 + $0x568] sm:$0xff]
  %v777 = vld [vmem:[%s15 + $0x570] sm:$0xff]
  %v778 = vld [vmem:[%s15 + $0x578] sm:$0xff]
  %v779 = vld [vmem:[%s15 + $0x580] sm:$0xff]
  %v780 = vld [vmem:[%s15 + $0x588] sm:$0xff]
  %v781 = vld [vmem:[%s15 + $0x590] sm:$0xff]
  %v782 = vld [vmem:[%s15 + $0x598] sm:$0xff]
  %v783 = vld [vmem:[%s15 + $0x5a0] sm:$0xff]
  %v784 = vld [vmem:[%s15 + $0x5a8] sm:$0xff]
  %v785 = vld [vmem:[%s15 + $0x5b0] sm:$0xff]
  %v786 = vld [vmem:[%s15 + $0x5b8] sm:$0xff]
  %v787 = vld [vmem:[%s15 + $0x5c0] sm:$0xff]
  %v788 = vld [vmem:[%s15 + $0x5c8] sm:$0xff]
  %v789 = vld [vmem:[%s15 + $0x5d0] sm:$0xff]
  %v790 = vld [vmem:[%s15 + $0x5d8] sm:$0xff]
  %v791 = vld [vmem:[%s15 + $0x5e0] sm:$0xff]
  %v792 = vld [vmem:[%s15 + $0x5e8] sm:$0xff]
  %v793 = vld [vmem:[%s15 + $0x5f0] sm:$0xff]
  %v794 = vld [vmem:[%s15 + $0x5f8] sm:$0xff]
  %v795 = vld [vmem:[%s15 + $0x600] sm:$0xff]
  %v796 = vld [vmem:[%s15 + $0x608] sm:$0xff]
  %v797 = vld [vmem:[%s15 + $0x610] sm:$0xff]
  %v798 = vld [vmem:[%s15 + $0x618] sm:$0xff]
  %v799 = vld [vmem:[%s15 + $0x620] sm:$0xff]
  %v800 = vld [vmem:[%s15 + $0x628] sm:$0xff]
  %v801 = vld [vmem:[%s15 + $0x630] sm:$0xff]
  %v802 = vld [vmem:[%s15 + $0x638] sm:$0xff]
  %v803 = vld [vmem:[%s15 + $0x640] sm:$0xff]
  %v804 = vld [vmem:[%s15 + $0x648] sm:$0xff]
  %v805 = vld [vmem:[%s15 + $0x650] sm:$0xff]
  %v806 = vld [vmem:[%s15 + $0x658] sm:$0xff]
  %v807 = vld [vmem:[%s15 + $0x660] sm:$0xff]
  %v808 = vld [vmem:[%s15 + $0x668] sm:$0xff]
  %v809 = vld [vmem:[%s15 + $0x670] sm:$0xff]
  %v810 = vld [vmem:[%s15 + $0x678] sm:$0xff]
  %v811 = vld [vmem:[%s15 + $0x680] sm:$0xff]
  %v812 = vld [vmem:[%s15 + $0x688] sm:$0xff]
  %v813 = vld [vmem:[%s15 + $0x690] sm:$0xff]
  %v814 = vld [vmem:[%s15 + $0x698] sm:$0xff]
  %v815 = vld [vmem:[%s15 + $0x6a0] sm:$0xff]
  %v816 = vld [vmem:[%s15 + $0x6a8] sm:$0xff]
  %v817 = vld [vmem:[%s15 + $0x6b0] sm:$0xff]
  %v818 = vld [vmem:[%s15 + $0x6b8] sm:$0xff]
  %v819 = vld [vmem:[%s15 + $0x6c0] sm:$0xff]
  %v820 = vld [vmem:[%s15 + $0x6c8] sm:$0xff]
  %v821 = vld [vmem:[%s15 + $0x6d0] sm:$0xff]
  %v822 = vld [vmem:[%s15 + $0x6d8] sm:$0xff]
  %v823 = vld [vmem:[%s15 + $0x6e0] sm:$0xff]
  %v824 = vld [vmem:[%s15 + $0x6e8] sm:$0xff]
  %v825 = vld [vmem:[%s15 + $0x6f0] sm:$0xff]
  %v826 = vld [vmem:[%s15 + $0x6f8] sm:$0xff]
  %v827 = vld [vmem:[%s15 + $0x700] sm:$0xff]
  %v828 = vld [vmem:[%s15 + $0x708] sm:$0xff]
  %v829 = vld [vmem:[%s15 + $0x710] sm:$0xff]
  %v830 = vld [vmem:[%s15 + $0x718] sm:$0xff]
  %v831 = vld [vmem:[%s15 + $0x720] sm:$0xff]
  %v832 = vld [vmem:[%s15 + $0x728] sm:$0xff]
  %v833 = vld [vmem:[%s15 + $0x730] sm:$0xff]
  %v834 = vld [vmem:[%s15 + $0x738] sm:$0xff]
  %v835 = vld [vmem:[%s15 + $0x740] sm:$0xff]
  %v836 = vld [vmem:[%s15 + $0x748] sm:$0xff]
  %v837 = vld [vmem:[%s15 + $0x750] sm:$0xff]
  %v838 = vld [vmem:[%s15 + $0x758] sm:$0xff]
  %v839 = vld [vmem:[%s15 + $0x760] sm:$0xff]
  %v840 = vld [vmem:[%s15 + $0x768] sm:$0xff]
  %v841 = vld [vmem:[%s15 + $0x770] sm:$0xff]
  %v842 = vld [vmem:[%s15 + $0x778] sm:$0xff]
  %v843 = vld [vmem:[%s15 + $0x780] sm:$0xff]
  %v844 = vld [vmem:[%s15 + $0x788] sm:$0xff]
  %v845 = vld [vmem:[%s15 + $0x790] sm:$0xff]
  %v846 = vld [vmem:[%s15 + $0x798] sm:$0xff]
  %v847 = vld [vmem:[%s15 + $0x7a0] sm:$0xff]
  %v848 = vld [vmem:[%s15 + $0x7a8] sm:$0xff]
  %v849 = vld [vmem:[%s15 + $0x7b0] sm:$0xff]
  %v850 = vld [vmem:[%s15 + $0x7b8] sm:$0xff]
  %v851 = vld [vmem:[%s15 + $0x7c0] sm:$0xff]
  %v852 = vld [vmem:[%s15 + $0x7c8] sm:$0xff]
  %v853 = vld [vmem:[%s15 + $0x7d0] sm:$0xff]
  %v854 = vld [vmem:[%s15 + $0x7d8] sm:$0xff]
  %v855 = vld [vmem:[%s15 + $0x7e0] sm:$0xff]
  %v856 = vld [vmem:[%s15 + $0x7e8] sm:$0xff]
  %v857 = vld [vmem:[%s15 + $0x7f0] sm:$0xff]
  %v858 = vld [vmem:[%s15 + $0x7f8] sm:$0xff]
  %v859 = vld [vmem:[%s15 + $0x800] sm:$0xff]
  %v860 = vld [vmem:[%s15 + $0x808] sm:$0xff]
  %v861 = vld [vmem:[%s15 + $0x810] sm:$0xff]
  %v862 = vld [vmem:[%s15 + $0x818] sm:$0xff]
  %v863 = vld [vmem:[%s15 + $0x820] sm:$0xff]
  %v864 = vld [vmem:[%s15 + $0x828] sm:$0xff]
  %v865 = vld [vmem:[%s15 + $0x830] sm:$0xff]
  %v866 = vld [vmem:[%s15 + $0x838] sm:$0xff]
  %v867 = vld [vmem:[%s15 + $0x840] sm:$0xff]
  %v868 = vld [vmem:[%s15 + $0x848] sm:$0xff]
  %v869 = vld [vmem:[%s15 + $0x850] sm:$0xff]
  %v870 = vld [vmem:[%s15 + $0x858] sm:$0xff]
  %v871 = vld [vmem:[%s15 + $0x860] sm:$0xff]
  %v872 = vld [vmem:[%s15 + $0x868] sm:$0xff]
  %v873 = vld [vmem:[%s15 + $0x870] sm:$0xff]
  %v874 = vld [vmem:[%s15 + $0x878] sm:$0xff]
  %v875 = vld [vmem:[%s15 + $0x880] sm:$0xff]
  %v876 = vld [vmem:[%s15 + $0x888] sm:$0xff]
  %v877 = vld [vmem:[%s15 + $0x890] sm:$0xff]
  %v878 = vld [vmem:[%s15 + $0x898] sm:$0xff]
  %v879 = vld [vmem:[%s15 + $0x8a0] sm:$0xff]
  %v880 = vld [vmem:[%s15 + $0x8a8] sm:$0xff]
  %v881 = vld [vmem:[%s15 + $0x8b0] sm:$0xff]
  %v882 = vld [vmem:[%s15 + $0x8b8] sm:$0xff]
  %v883 = vld [vmem:[%s15 + $0x8c0] sm:$0xff]
  %v884 = vld [vmem:[%s15 + $0x8c8] sm:$0xff]
  %v885 = vld [vmem:[%s15 + $0x8d0] sm:$0xff]
  %v886 = vld [vmem:[%s15 + $0x8d8] sm:$0xff]
  %v887 = vld [vmem:[%s15 + $0x8e0] sm:$0xff]
  %v888 = vld [vmem:[%s15 + $0x8e8] sm:$0xff]
  %v889 = vld [vmem:[%s15 + $0x8f0] sm:$0xff]
  %v890 = vld [vmem:[%s15 + $0x8f8] sm:$0xff]
  %v891 = vld [vmem:[%s15 + $0x900] sm:$0xff]
  %v892 = vld [vmem:[%s15 + $0x908] sm:$0xff]
  %v893 = vld [vmem:[%s15 + $0x910] sm:$0xff]
  %v894 = vld [vmem:[%s15 + $0x918] sm:$0xff]
  %v895 = vld [vmem:[%s15 + $0x920] sm:$0xff]
  %v896 = vld [vmem:[%s15 + $0x928] sm:$0xff]
  %v897 = vld [vmem:[%s15 + $0x930] sm:$0xff]
  %v898 = vld [vmem:[%s15 + $0x938] sm:$0xff]
  %v899 = vld [vmem:[%s15 + $0x940] sm:$0xff]
  %v900 = vld [vmem:[%s15 + $0x948] sm:$0xff]
  %v901 = vld [vmem:[%s15 + $0x950] sm:$0xff]
  %v902 = vld [vmem:[%s15 + $0x958] sm:$0xff]
  %v903 = vld [vmem:[%s15 + $0x960] sm:$0xff]
  %v904 = vld [vmem:[%s15 + $0x968] sm:$0xff]
  %v905 = vld [vmem:[%s15 + $0x970] sm:$0xff]
  %v906 = vld [vmem:[%s15 + $0x978] sm:$0xff]
  %v907 = vld [vmem:[%s15 + $0x980] sm:$0xff]
  %v908 = vld [vmem:[%s15 + $0x988] sm:$0xff]
  %v909 = vld [vmem:[%s15 + $0x990] sm:$0xff]
  %v910 = vld [vmem:[%s15 + $0x998] sm:$0xff]
  %v911 = vld [vmem:[%s15 + $0x9a0] sm:$0xff]
  %v912 = vld [vmem:[%s15 + $0x9a8] sm:$0xff]
  %v913 = vld [vmem:[%s15 + $0x9b0] sm:$0xff]
  %v914 = vld [vmem:[%s15 + $0x9b8] sm:$0xff]
  %v915 = vld [vmem:[%s15 + $0x9c0] sm:$0xff]
  %v916 = vld [vmem:[%s15 + $0x9c8] sm:$0xff]
  %v917 = vld [vmem:[%s15 + $0x9d0] sm:$0xff]
  %v918 = vld [vmem:[%s15 + $0x9d8] sm:$0xff]
  %v919 = vld [vmem:[%s15 + $0x9e0] sm:$0xff]
  %v920 = vld [vmem:[%s15 + $0x9e8] sm:$0xff]
  %v921 = vld [vmem:[%s15 + $0x9f0] sm:$0xff]
  %v922 = vld [vmem:[%s15 + $0x9f8] sm:$0xff]
  %v923 = vld [vmem:[%s15 + $0xa00] sm:$0xff]
  %v924 = vld [vmem:[%s15 + $0xa08] sm:$0xff]
  %v925 = vld [vmem:[%s15 + $0xa10] sm:$0xff]
  %v926 = vld [vmem:[%s15 + $0xa18] sm:$0xff]
  %v927 = vld [vmem:[%s15 + $0xa20] sm:$0xff]
  %v928 = vld [vmem:[%s15 + $0xa28] sm:$0xff]
  %v929 = vld [vmem:[%s15 + $0xa30] sm:$0xff]
  %v930 = vld [vmem:[%s15 + $0xa38] sm:$0xff]
  %v931 = vld [vmem:[%s15 + $0xa40] sm:$0xff]
  %v932 = vld [vmem:[%s15 + $0xa48] sm:$0xff]
  %v933 = vld [vmem:[%s15 + $0xa50] sm:$0xff]
  %v934 = vld [vmem:[%s15 + $0xa58] sm:$0xff]
  %v935 = vld [vmem:[%s15 + $0xa60] sm:$0xff]
  %v936 = vld [vmem:[%s15 + $0xa68] sm:$0xff]
  %v937 = vld [vmem:[%s15 + $0xa70] sm:$0xff]
  %v938 = vld [vmem:[%s15 + $0xa78] sm:$0xff]
  %v939 = vld [vmem:[%s15 + $0xa80] sm:$0xff]
  %v940 = vld [vmem:[%s15 + $0xa88] sm:$0xff]
  %v941 = vld [vmem:[%s15 + $0xa90] sm:$0xff]
  %v942 = vld [vmem:[%s15 + $0xa98] sm:$0xff]
  %v943 = vld [vmem:[%s15 + $0xaa0] sm:$0xff]
  %v944 = vld [vmem:[%s15 + $0xaa8] sm:$0xff]
  %v945 = vld [vmem:[%s15 + $0xab0] sm:$0xff]
  %v946 = vld [vmem:[%s15 + $0xab8] sm:$0xff]
  %v947 = vld [vmem:[%s15 + $0xac0] sm:$0xff]
  %v948 = vld [vmem:[%s15 + $0xac8] sm:$0xff]
  %v949 = vld [vmem:[%s15 + $0xad0] sm:$0xff]
  %v950 = vld [vmem:[%s15 + $0xad8] sm:$0xff]
  %v951 = vld [vmem:[%s15 + $0xae0] sm:$0xff]
  %v952 = vld [vmem:[%s15 + $0xae8] sm:$0xff]
  %v953 = vld [vmem:[%s15 + $0xaf0] sm:$0xff]
  %v954 = vld [vmem:[%s15 + $0xaf8] sm:$0xff]
  %v955 = vld [vmem:[%s15 + $0xb00] sm:$0xff]
  %v956 = vld [vmem:[%s15 + $0xb08] sm:$0xff]
  %v957 = vld [vmem:[%s15 + $0xb10] sm:$0xff]
  %v958 = vld [vmem:[%s15 + $0xb18] sm:$0xff]
  %v959 = vld [vmem:[%s15 + $0xb20] sm:$0xff]
  %v960 = vld [vmem:[%s15 + $0xb28] sm:$0xff]
  %v961 = vld [vmem:[%s15 + $0xb30] sm:$0xff]
  %v962 = vld [vmem:[%s15 + $0xb38] sm:$0xff]
  %v963 = vld [vmem:[%s15 + $0xb40] sm:$0xff]
  %v964 = vld [vmem:[%s15 + $0xb48] sm:$0xff]
  %v965 = vld [vmem:[%s15 + $0xb50] sm:$0xff]
  %v966 = vld [vmem:[%s15 + $0xb58] sm:$0xff]
  %v967 = vld [vmem:[%s15 + $0xb60] sm:$0xff]
  %v968 = vld [vmem:[%s15 + $0xb68] sm:$0xff]
  %v969 = vld [vmem:[%s15 + $0xb70] sm:$0xff]
  %v970 = vld [vmem:[%s15 + $0xb78] sm:$0xff]
  %v971 = vld [vmem:[%s15 + $0xb80] sm:$0xff]
  %v972 = vld [vmem:[%s15 + $0xb88] sm:$0xff]
  %v973 = vld [vmem:[%s15 + $0xb90] sm:$0xff]
  %v974 = vld [vmem:[%s15 + $0xb98] sm:$0xff]
  %v975 = vld [vmem:[%s15 + $0xba0] sm:$0xff]
  %v976 = vld [vmem:[%s15 + $0xba8] sm:$0xff]
  %v977 = vld [vmem:[%s15 + $0xbb0] sm:$0xff]
  %v978 = vld [vmem:[%s15 + $0xbb8] sm:$0xff]
  %v979 = vld [vmem:[%s15 + $0xbc0] sm:$0xff]
  %v980 = vld [vmem:[%s15 + $0xbc8] sm:$0xff]
  %v981 = vld [vmem:[%s15 + $0xbd0] sm:$0xff]
  %v982 = vld [vmem:[%s15 + $0xbd8] sm:$0xff]
  %v983 = vld [vmem:[%s15 + $0xbe0] sm:$0xff]
  %v984 = vld [vmem:[%s15 + $0xbe8] sm:$0xff]
  %v985 = vld [vmem:[%s15 + $0xbf0] sm:$0xff]
  %v986 = vld [vmem:[%s15 + $0xbf8] sm:$0xff]
  %v987 = vld [vmem:[%s17] sm:$0xff]
  %v989 = vlaneseq
  %v990 = vshrl.u32 %v989, 7
  %v991 = vsub.s32 0, %v990
  %v992 = vrot.slane %v987, %v991
  %v993 = vlaneseq
  %v994 = vshrl.u32 %v993, 7
  %v995 = vsub.s32 1, %v994
  %v996 = vrot.slane %v987, %v995
  %v997 = vlaneseq
  %v998 = vshrl.u32 %v997, 7
  %v999 = vsub.s32 2, %v998
  %v1000 = vrot.slane %v987, %v999
  %v1001 = vlaneseq
  %v1002 = vshrl.u32 %v1001, 7
  %v1003 = vsub.s32 3, %v1002
  %v1004 = vrot.slane %v987, %v1003
  %v1005 = vlaneseq
  %v1006 = vshrl.u32 %v1005, 7
  %v1007 = vsub.s32 4, %v1006
  %v1008 = vrot.slane %v987, %v1007
  %v1009 = vlaneseq
  %v1010 = vshrl.u32 %v1009, 7
  %v1011 = vsub.s32 5, %v1010
  %v1012 = vrot.slane %v987, %v1011
  %v1013 = vlaneseq
  %v1014 = vshrl.u32 %v1013, 7
  %v1015 = vsub.s32 6, %v1014
  %v1016 = vrot.slane %v987, %v1015
  %v1017 = vlaneseq
  %v1018 = vshrl.u32 %v1017, 7
  %v1019 = vsub.s32 7, %v1018
  %v1020 = vrot.slane %v987, %v1019
  %v1413 = vunpack.c.l.b16 %v603
  %v1414 = vunpack.c.h.b16 %v603
  %v1415 = vunpack.c.l.b16 %v604
  %v1416 = vunpack.c.h.b16 %v604
  %v1417 = vunpack.c.l.b16 %v605
  %v1418 = vunpack.c.h.b16 %v605
  %v1419 = vunpack.c.l.b16 %v606
  %v1420 = vunpack.c.h.b16 %v606
  %v1421 = vunpack.c.l.b16 %v607
  %v1422 = vunpack.c.h.b16 %v607
  %v1423 = vunpack.c.l.b16 %v608
  %v1424 = vunpack.c.h.b16 %v608
  %v1425 = vunpack.c.l.b16 %v609
  %v1426 = vunpack.c.h.b16 %v609
  %v1427 = vunpack.c.l.b16 %v610
  %v1428 = vunpack.c.h.b16 %v610
  %v1429 = vunpack.c.l.b16 %v611
  %v1430 = vunpack.c.h.b16 %v611
  %v1431 = vunpack.c.l.b16 %v612
  %v1432 = vunpack.c.h.b16 %v612
  %v1433 = vunpack.c.l.b16 %v613
  %v1434 = vunpack.c.h.b16 %v613
  %v1435 = vunpack.c.l.b16 %v614
  %v1436 = vunpack.c.h.b16 %v614
  %v1437 = vunpack.c.l.b16 %v615
  %v1438 = vunpack.c.h.b16 %v615
  %v1439 = vunpack.c.l.b16 %v616
  %v1440 = vunpack.c.h.b16 %v616
  %v1441 = vunpack.c.l.b16 %v617
  %v1442 = vunpack.c.h.b16 %v617
  %v1443 = vunpack.c.l.b16 %v618
  %v1444 = vunpack.c.h.b16 %v618
  %v1445 = vunpack.c.l.b16 %v619
  %v1446 = vunpack.c.h.b16 %v619
  %v1447 = vunpack.c.l.b16 %v620
  %v1448 = vunpack.c.h.b16 %v620
  %v1449 = vunpack.c.l.b16 %v621
  %v1450 = vunpack.c.h.b16 %v621
  %v1451 = vunpack.c.l.b16 %v622
  %v1452 = vunpack.c.h.b16 %v622
  %v1453 = vunpack.c.l.b16 %v623
  %v1454 = vunpack.c.h.b16 %v623
  %v1455 = vunpack.c.l.b16 %v624
  %v1456 = vunpack.c.h.b16 %v624
  %v1457 = vunpack.c.l.b16 %v625
  %v1458 = vunpack.c.h.b16 %v625
  %v1459 = vunpack.c.l.b16 %v626
  %v1460 = vunpack.c.h.b16 %v626
  %v1461 = vunpack.c.l.b16 %v627
  %v1462 = vunpack.c.h.b16 %v627
  %v1463 = vunpack.c.l.b16 %v628
  %v1464 = vunpack.c.h.b16 %v628
  %v1465 = vunpack.c.l.b16 %v629
  %v1466 = vunpack.c.h.b16 %v629
  %v1467 = vunpack.c.l.b16 %v630
  %v1468 = vunpack.c.h.b16 %v630
  %v1469 = vunpack.c.l.b16 %v631
  %v1470 = vunpack.c.h.b16 %v631
  %v1471 = vunpack.c.l.b16 %v632
  %v1472 = vunpack.c.h.b16 %v632
  %v1473 = vunpack.c.l.b16 %v633
  %v1474 = vunpack.c.h.b16 %v633
  %v1475 = vunpack.c.l.b16 %v634
  %v1476 = vunpack.c.h.b16 %v634
  %v1477 = vunpack.c.l.b16 %v635
  %v1478 = vunpack.c.h.b16 %v635
  %v1479 = vunpack.c.l.b16 %v636
  %v1480 = vunpack.c.h.b16 %v636
  %v1481 = vunpack.c.l.b16 %v637
  %v1482 = vunpack.c.h.b16 %v637
  %v1483 = vunpack.c.l.b16 %v638
  %v1484 = vunpack.c.h.b16 %v638
  %v1485 = vunpack.c.l.b16 %v639
  %v1486 = vunpack.c.h.b16 %v639
  %v1487 = vunpack.c.l.b16 %v640
  %v1488 = vunpack.c.h.b16 %v640
  %v1489 = vunpack.c.l.b16 %v641
  %v1490 = vunpack.c.h.b16 %v641
  %v1491 = vunpack.c.l.b16 %v642
  %v1492 = vunpack.c.h.b16 %v642
  %v1493 = vunpack.c.l.b16 %v643
  %v1494 = vunpack.c.h.b16 %v643
  %v1495 = vunpack.c.l.b16 %v644
  %v1496 = vunpack.c.h.b16 %v644
  %v1497 = vunpack.c.l.b16 %v645
  %v1498 = vunpack.c.h.b16 %v645
  %v1499 = vunpack.c.l.b16 %v646
  %v1500 = vunpack.c.h.b16 %v646
  %v1501 = vunpack.c.l.b16 %v647
  %v1502 = vunpack.c.h.b16 %v647
  %v1503 = vunpack.c.l.b16 %v648
  %v1504 = vunpack.c.h.b16 %v648
  %v1505 = vunpack.c.l.b16 %v649
  %v1506 = vunpack.c.h.b16 %v649
  %v1507 = vunpack.c.l.b16 %v650
  %v1508 = vunpack.c.h.b16 %v650
  %v1509 = vunpack.c.l.b16 %v651
  %v1510 = vunpack.c.h.b16 %v651
  %v1511 = vunpack.c.l.b16 %v652
  %v1512 = vunpack.c.h.b16 %v652
  %v1513 = vunpack.c.l.b16 %v653
  %v1514 = vunpack.c.h.b16 %v653
  %v1515 = vunpack.c.l.b16 %v654
  %v1516 = vunpack.c.h.b16 %v654
  %v1517 = vunpack.c.l.b16 %v655
  %v1518 = vunpack.c.h.b16 %v655
  %v1519 = vunpack.c.l.b16 %v656
  %v1520 = vunpack.c.h.b16 %v656
  %v1521 = vunpack.c.l.b16 %v657
  %v1522 = vunpack.c.h.b16 %v657
  %v1523 = vunpack.c.l.b16 %v658
  %v1524 = vunpack.c.h.b16 %v658
  %v1525 = vunpack.c.l.b16 %v659
  %v1526 = vunpack.c.h.b16 %v659
  %v1527 = vunpack.c.l.b16 %v660
  %v1528 = vunpack.c.h.b16 %v660
  %v1529 = vunpack.c.l.b16 %v661
  %v1530 = vunpack.c.h.b16 %v661
  %v1531 = vunpack.c.l.b16 %v662
  %v1532 = vunpack.c.h.b16 %v662
  %v1533 = vunpack.c.l.b16 %v663
  %v1534 = vunpack.c.h.b16 %v663
  %v1535 = vunpack.c.l.b16 %v664
  %v1536 = vunpack.c.h.b16 %v664
  %v1537 = vunpack.c.l.b16 %v665
  %v1538 = vunpack.c.h.b16 %v665
  %v1539 = vunpack.c.l.b16 %v666
  %v1540 = vunpack.c.h.b16 %v666
  %v1541 = vunpack.c.l.b16 %v667
  %v1542 = vunpack.c.h.b16 %v667
  %v1543 = vunpack.c.l.b16 %v668
  %v1544 = vunpack.c.h.b16 %v668
  %v1545 = vunpack.c.l.b16 %v669
  %v1546 = vunpack.c.h.b16 %v669
  %v1547 = vunpack.c.l.b16 %v670
  %v1548 = vunpack.c.h.b16 %v670
  %v1549 = vunpack.c.l.b16 %v671
  %v1550 = vunpack.c.h.b16 %v671
  %v1551 = vunpack.c.l.b16 %v672
  %v1552 = vunpack.c.h.b16 %v672
  %v1553 = vunpack.c.l.b16 %v673
  %v1554 = vunpack.c.h.b16 %v673
  %v1555 = vunpack.c.l.b16 %v674
  %v1556 = vunpack.c.h.b16 %v674
  %v1557 = vunpack.c.l.b16 %v675
  %v1558 = vunpack.c.h.b16 %v675
  %v1559 = vunpack.c.l.b16 %v676
  %v1560 = vunpack.c.h.b16 %v676
  %v1561 = vunpack.c.l.b16 %v677
  %v1562 = vunpack.c.h.b16 %v677
  %v1563 = vunpack.c.l.b16 %v678
  %v1564 = vunpack.c.h.b16 %v678
  %v1565 = vunpack.c.l.b16 %v679
  %v1566 = vunpack.c.h.b16 %v679
  %v1567 = vunpack.c.l.b16 %v680
  %v1568 = vunpack.c.h.b16 %v680
  %v1569 = vunpack.c.l.b16 %v681
  %v1570 = vunpack.c.h.b16 %v681
  %v1571 = vunpack.c.l.b16 %v682
  %v1572 = vunpack.c.h.b16 %v682
  %v1573 = vunpack.c.l.b16 %v683
  %v1574 = vunpack.c.h.b16 %v683
  %v1575 = vunpack.c.l.b16 %v684
  %v1576 = vunpack.c.h.b16 %v684
  %v1577 = vunpack.c.l.b16 %v685
  %v1578 = vunpack.c.h.b16 %v685
  %v1579 = vunpack.c.l.b16 %v686
  %v1580 = vunpack.c.h.b16 %v686
  %v1581 = vunpack.c.l.b16 %v687
  %v1582 = vunpack.c.h.b16 %v687
  %v1583 = vunpack.c.l.b16 %v688
  %v1584 = vunpack.c.h.b16 %v688
  %v1585 = vunpack.c.l.b16 %v689
  %v1586 = vunpack.c.h.b16 %v689
  %v1587 = vunpack.c.l.b16 %v690
  %v1588 = vunpack.c.h.b16 %v690
  %v1589 = vunpack.c.l.b16 %v691
  %v1590 = vunpack.c.h.b16 %v691
  %v1591 = vunpack.c.l.b16 %v692
  %v1592 = vunpack.c.h.b16 %v692
  %v1593 = vunpack.c.l.b16 %v693
  %v1594 = vunpack.c.h.b16 %v693
  %v1595 = vunpack.c.l.b16 %v694
  %v1596 = vunpack.c.h.b16 %v694
  %v1597 = vunpack.c.l.b16 %v695
  %v1598 = vunpack.c.h.b16 %v695
  %v1599 = vunpack.c.l.b16 %v696
  %v1600 = vunpack.c.h.b16 %v696
  %v1601 = vunpack.c.l.b16 %v697
  %v1602 = vunpack.c.h.b16 %v697
  %v1603 = vunpack.c.l.b16 %v698
  %v1604 = vunpack.c.h.b16 %v698
  %v1605 = vunpack.c.l.b16 %v699
  %v1606 = vunpack.c.h.b16 %v699
  %v1607 = vunpack.c.l.b16 %v700
  %v1608 = vunpack.c.h.b16 %v700
  %v1609 = vunpack.c.l.b16 %v701
  %v1610 = vunpack.c.h.b16 %v701
  %v1611 = vunpack.c.l.b16 %v702
  %v1612 = vunpack.c.h.b16 %v702
  %v1613 = vunpack.c.l.b16 %v703
  %v1614 = vunpack.c.h.b16 %v703
  %v1615 = vunpack.c.l.b16 %v704
  %v1616 = vunpack.c.h.b16 %v704
  %v1617 = vunpack.c.l.b16 %v705
  %v1618 = vunpack.c.h.b16 %v705
  %v1619 = vunpack.c.l.b16 %v706
  %v1620 = vunpack.c.h.b16 %v706
  %v1621 = vunpack.c.l.b16 %v707
  %v1622 = vunpack.c.h.b16 %v707
  %v1623 = vunpack.c.l.b16 %v708
  %v1624 = vunpack.c.h.b16 %v708
  %v1625 = vunpack.c.l.b16 %v709
  %v1626 = vunpack.c.h.b16 %v709
  %v1627 = vunpack.c.l.b16 %v710
  %v1628 = vunpack.c.h.b16 %v710
  %v1629 = vunpack.c.l.b16 %v711
  %v1630 = vunpack.c.h.b16 %v711
  %v1631 = vunpack.c.l.b16 %v712
  %v1632 = vunpack.c.h.b16 %v712
  %v1633 = vunpack.c.l.b16 %v713
  %v1634 = vunpack.c.h.b16 %v713
  %v1635 = vunpack.c.l.b16 %v714
  %v1636 = vunpack.c.h.b16 %v714
  %v1637 = vunpack.c.l.b16 %v715
  %v1638 = vunpack.c.h.b16 %v715
  %v1639 = vunpack.c.l.b16 %v716
  %v1640 = vunpack.c.h.b16 %v716
  %v1641 = vunpack.c.l.b16 %v717
  %v1642 = vunpack.c.h.b16 %v717
  %v1643 = vunpack.c.l.b16 %v718
  %v1644 = vunpack.c.h.b16 %v718
  %v1645 = vunpack.c.l.b16 %v719
  %v1646 = vunpack.c.h.b16 %v719
  %v1647 = vunpack.c.l.b16 %v720
  %v1648 = vunpack.c.h.b16 %v720
  %v1649 = vunpack.c.l.b16 %v721
  %v1650 = vunpack.c.h.b16 %v721
  %v1651 = vunpack.c.l.b16 %v722
  %v1652 = vunpack.c.h.b16 %v722
  %v1653 = vunpack.c.l.b16 %v723
  %v1654 = vunpack.c.h.b16 %v723
  %v1655 = vunpack.c.l.b16 %v724
  %v1656 = vunpack.c.h.b16 %v724
  %v1657 = vunpack.c.l.b16 %v725
  %v1658 = vunpack.c.h.b16 %v725
  %v1659 = vunpack.c.l.b16 %v726
  %v1660 = vunpack.c.h.b16 %v726
  %v1661 = vunpack.c.l.b16 %v727
  %v1662 = vunpack.c.h.b16 %v727
  %v1663 = vunpack.c.l.b16 %v728
  %v1664 = vunpack.c.h.b16 %v728
  %v1665 = vunpack.c.l.b16 %v729
  %v1666 = vunpack.c.h.b16 %v729
  %v1667 = vunpack.c.l.b16 %v730
  %v1668 = vunpack.c.h.b16 %v730
  %v1669 = vunpack.c.l.b16 %v731
  %v1670 = vunpack.c.h.b16 %v731
  %v1671 = vunpack.c.l.b16 %v732
  %v1672 = vunpack.c.h.b16 %v732
  %v1673 = vunpack.c.l.b16 %v733
  %v1674 = vunpack.c.h.b16 %v733
  %v1675 = vunpack.c.l.b16 %v734
  %v1676 = vunpack.c.h.b16 %v734
  %v1677 = vunpack.c.l.b16 %v735
  %v1678 = vunpack.c.h.b16 %v735
  %v1679 = vunpack.c.l.b16 %v736
  %v1680 = vunpack.c.h.b16 %v736
  %v1681 = vunpack.c.l.b16 %v737
  %v1682 = vunpack.c.h.b16 %v737
  %v1683 = vunpack.c.l.b16 %v738
  %v1684 = vunpack.c.h.b16 %v738
  %v1685 = vunpack.c.l.b16 %v739
  %v1686 = vunpack.c.h.b16 %v739
  %v1687 = vunpack.c.l.b16 %v740
  %v1688 = vunpack.c.h.b16 %v740
  %v1689 = vunpack.c.l.b16 %v741
  %v1690 = vunpack.c.h.b16 %v741
  %v1691 = vunpack.c.l.b16 %v742
  %v1692 = vunpack.c.h.b16 %v742
  %v1693 = vunpack.c.l.b16 %v743
  %v1694 = vunpack.c.h.b16 %v743
  %v1695 = vunpack.c.l.b16 %v744
  %v1696 = vunpack.c.h.b16 %v744
  %v1697 = vunpack.c.l.b16 %v745
  %v1698 = vunpack.c.h.b16 %v745
  %v1699 = vunpack.c.l.b16 %v746
  %v1700 = vunpack.c.h.b16 %v746
  %v1701 = vunpack.c.l.b16 %v747
  %v1702 = vunpack.c.h.b16 %v747
  %v1703 = vunpack.c.l.b16 %v748
  %v1704 = vunpack.c.h.b16 %v748
  %v1705 = vunpack.c.l.b16 %v749
  %v1706 = vunpack.c.h.b16 %v749
  %v1707 = vunpack.c.l.b16 %v750
  %v1708 = vunpack.c.h.b16 %v750
  %v1709 = vunpack.c.l.b16 %v751
  %v1710 = vunpack.c.h.b16 %v751
  %v1711 = vunpack.c.l.b16 %v752
  %v1712 = vunpack.c.h.b16 %v752
  %v1713 = vunpack.c.l.b16 %v753
  %v1714 = vunpack.c.h.b16 %v753
  %v1715 = vunpack.c.l.b16 %v754
  %v1716 = vunpack.c.h.b16 %v754
  %v1717 = vunpack.c.l.b16 %v755
  %v1718 = vunpack.c.h.b16 %v755
  %v1719 = vunpack.c.l.b16 %v756
  %v1720 = vunpack.c.h.b16 %v756
  %v1721 = vunpack.c.l.b16 %v757
  %v1722 = vunpack.c.h.b16 %v757
  %v1723 = vunpack.c.l.b16 %v758
  %v1724 = vunpack.c.h.b16 %v758
  %v1725 = vunpack.c.l.b16 %v759
  %v1726 = vunpack.c.h.b16 %v759
  %v1727 = vunpack.c.l.b16 %v760
  %v1728 = vunpack.c.h.b16 %v760
  %v1729 = vunpack.c.l.b16 %v761
  %v1730 = vunpack.c.h.b16 %v761
  %v1731 = vunpack.c.l.b16 %v762
  %v1732 = vunpack.c.h.b16 %v762
  %v1733 = vunpack.c.l.b16 %v763
  %v1734 = vunpack.c.h.b16 %v763
  %v1735 = vunpack.c.l.b16 %v764
  %v1736 = vunpack.c.h.b16 %v764
  %v1737 = vunpack.c.l.b16 %v765
  %v1738 = vunpack.c.h.b16 %v765
  %v1739 = vunpack.c.l.b16 %v766
  %v1740 = vunpack.c.h.b16 %v766
  %v1741 = vunpack.c.l.b16 %v767
  %v1742 = vunpack.c.h.b16 %v767
  %v1743 = vunpack.c.l.b16 %v768
  %v1744 = vunpack.c.h.b16 %v768
  %v1745 = vunpack.c.l.b16 %v769
  %v1746 = vunpack.c.h.b16 %v769
  %v1747 = vunpack.c.l.b16 %v770
  %v1748 = vunpack.c.h.b16 %v770
  %v1749 = vunpack.c.l.b16 %v771
  %v1750 = vunpack.c.h.b16 %v771
  %v1751 = vunpack.c.l.b16 %v772
  %v1752 = vunpack.c.h.b16 %v772
  %v1753 = vunpack.c.l.b16 %v773
  %v1754 = vunpack.c.h.b16 %v773
  %v1755 = vunpack.c.l.b16 %v774
  %v1756 = vunpack.c.h.b16 %v774
  %v1757 = vunpack.c.l.b16 %v775
  %v1758 = vunpack.c.h.b16 %v775
  %v1759 = vunpack.c.l.b16 %v776
  %v1760 = vunpack.c.h.b16 %v776
  %v1761 = vunpack.c.l.b16 %v777
  %v1762 = vunpack.c.h.b16 %v777
  %v1763 = vunpack.c.l.b16 %v778
  %v1764 = vunpack.c.h.b16 %v778
  %v1765 = vunpack.c.l.b16 %v779
  %v1766 = vunpack.c.h.b16 %v779
  %v1767 = vunpack.c.l.b16 %v780
  %v1768 = vunpack.c.h.b16 %v780
  %v1769 = vunpack.c.l.b16 %v781
  %v1770 = vunpack.c.h.b16 %v781
  %v1771 = vunpack.c.l.b16 %v782
  %v1772 = vunpack.c.h.b16 %v782
  %v1773 = vunpack.c.l.b16 %v783
  %v1774 = vunpack.c.h.b16 %v783
  %v1775 = vunpack.c.l.b16 %v784
  %v1776 = vunpack.c.h.b16 %v784
  %v1777 = vunpack.c.l.b16 %v785
  %v1778 = vunpack.c.h.b16 %v785
  %v1779 = vunpack.c.l.b16 %v786
  %v1780 = vunpack.c.h.b16 %v786
  %v1781 = vunpack.c.l.b16 %v787
  %v1782 = vunpack.c.h.b16 %v787
  %v1783 = vunpack.c.l.b16 %v788
  %v1784 = vunpack.c.h.b16 %v788
  %v1785 = vunpack.c.l.b16 %v789
  %v1786 = vunpack.c.h.b16 %v789
  %v1787 = vunpack.c.l.b16 %v790
  %v1788 = vunpack.c.h.b16 %v790
  %v1789 = vunpack.c.l.b16 %v791
  %v1790 = vunpack.c.h.b16 %v791
  %v1791 = vunpack.c.l.b16 %v792
  %v1792 = vunpack.c.h.b16 %v792
  %v1793 = vunpack.c.l.b16 %v793
  %v1794 = vunpack.c.h.b16 %v793
  %v1795 = vunpack.c.l.b16 %v794
  %v1796 = vunpack.c.h.b16 %v794
  %v1797 = vunpack.c.l.b16 %v795
  %v1798 = vunpack.c.h.b16 %v795
  %v1799 = vunpack.c.l.b16 %v796
  %v1800 = vunpack.c.h.b16 %v796
  %v1801 = vunpack.c.l.b16 %v797
  %v1802 = vunpack.c.h.b16 %v797
  %v1803 = vunpack.c.l.b16 %v798
  %v1804 = vunpack.c.h.b16 %v798
  %v1805 = vunpack.c.l.b16 %v799
  %v1806 = vunpack.c.h.b16 %v799
  %v1807 = vunpack.c.l.b16 %v800
  %v1808 = vunpack.c.h.b16 %v800
  %v1809 = vunpack.c.l.b16 %v801
  %v1810 = vunpack.c.h.b16 %v801
  %v1811 = vunpack.c.l.b16 %v802
  %v1812 = vunpack.c.h.b16 %v802
  %v1813 = vunpack.c.l.b16 %v803
  %v1814 = vunpack.c.h.b16 %v803
  %v1815 = vunpack.c.l.b16 %v804
  %v1816 = vunpack.c.h.b16 %v804
  %v1817 = vunpack.c.l.b16 %v805
  %v1818 = vunpack.c.h.b16 %v805
  %v1819 = vunpack.c.l.b16 %v806
  %v1820 = vunpack.c.h.b16 %v806
  %v1821 = vunpack.c.l.b16 %v807
  %v1822 = vunpack.c.h.b16 %v807
  %v1823 = vunpack.c.l.b16 %v808
  %v1824 = vunpack.c.h.b16 %v808
  %v1825 = vunpack.c.l.b16 %v809
  %v1826 = vunpack.c.h.b16 %v809
  %v1827 = vunpack.c.l.b16 %v810
  %v1828 = vunpack.c.h.b16 %v810
  %v1829 = vunpack.c.l.b16 %v811
  %v1830 = vunpack.c.h.b16 %v811
  %v1831 = vunpack.c.l.b16 %v812
  %v1832 = vunpack.c.h.b16 %v812
  %v1833 = vunpack.c.l.b16 %v813
  %v1834 = vunpack.c.h.b16 %v813
  %v1835 = vunpack.c.l.b16 %v814
  %v1836 = vunpack.c.h.b16 %v814
  %v1837 = vunpack.c.l.b16 %v815
  %v1838 = vunpack.c.h.b16 %v815
  %v1839 = vunpack.c.l.b16 %v816
  %v1840 = vunpack.c.h.b16 %v816
  %v1841 = vunpack.c.l.b16 %v817
  %v1842 = vunpack.c.h.b16 %v817
  %v1843 = vunpack.c.l.b16 %v818
  %v1844 = vunpack.c.h.b16 %v818
  %v1845 = vunpack.c.l.b16 %v819
  %v1846 = vunpack.c.h.b16 %v819
  %v1847 = vunpack.c.l.b16 %v820
  %v1848 = vunpack.c.h.b16 %v820
  %v1849 = vunpack.c.l.b16 %v821
  %v1850 = vunpack.c.h.b16 %v821
  %v1851 = vunpack.c.l.b16 %v822
  %v1852 = vunpack.c.h.b16 %v822
  %v1853 = vunpack.c.l.b16 %v823
  %v1854 = vunpack.c.h.b16 %v823
  %v1855 = vunpack.c.l.b16 %v824
  %v1856 = vunpack.c.h.b16 %v824
  %v1857 = vunpack.c.l.b16 %v825
  %v1858 = vunpack.c.h.b16 %v825
  %v1859 = vunpack.c.l.b16 %v826
  %v1860 = vunpack.c.h.b16 %v826
  %v1861 = vunpack.c.l.b16 %v827
  %v1862 = vunpack.c.h.b16 %v827
  %v1863 = vunpack.c.l.b16 %v828
  %v1864 = vunpack.c.h.b16 %v828
  %v1865 = vunpack.c.l.b16 %v829
  %v1866 = vunpack.c.h.b16 %v829
  %v1867 = vunpack.c.l.b16 %v830
  %v1868 = vunpack.c.h.b16 %v830
  %v1869 = vunpack.c.l.b16 %v831
  %v1870 = vunpack.c.h.b16 %v831
  %v1871 = vunpack.c.l.b16 %v832
  %v1872 = vunpack.c.h.b16 %v832
  %v1873 = vunpack.c.l.b16 %v833
  %v1874 = vunpack.c.h.b16 %v833
  %v1875 = vunpack.c.l.b16 %v834
  %v1876 = vunpack.c.h.b16 %v834
  %v1877 = vunpack.c.l.b16 %v835
  %v1878 = vunpack.c.h.b16 %v835
  %v1879 = vunpack.c.l.b16 %v836
  %v1880 = vunpack.c.h.b16 %v836
  %v1881 = vunpack.c.l.b16 %v837
  %v1882 = vunpack.c.h.b16 %v837
  %v1883 = vunpack.c.l.b16 %v838
  %v1884 = vunpack.c.h.b16 %v838
  %v1885 = vunpack.c.l.b16 %v839
  %v1886 = vunpack.c.h.b16 %v839
  %v1887 = vunpack.c.l.b16 %v840
  %v1888 = vunpack.c.h.b16 %v840
  %v1889 = vunpack.c.l.b16 %v841
  %v1890 = vunpack.c.h.b16 %v841
  %v1891 = vunpack.c.l.b16 %v842
  %v1892 = vunpack.c.h.b16 %v842
  %v1893 = vunpack.c.l.b16 %v843
  %v1894 = vunpack.c.h.b16 %v843
  %v1895 = vunpack.c.l.b16 %v844
  %v1896 = vunpack.c.h.b16 %v844
  %v1897 = vunpack.c.l.b16 %v845
  %v1898 = vunpack.c.h.b16 %v845
  %v1899 = vunpack.c.l.b16 %v846
  %v1900 = vunpack.c.h.b16 %v846
  %v1901 = vunpack.c.l.b16 %v847
  %v1902 = vunpack.c.h.b16 %v847
  %v1903 = vunpack.c.l.b16 %v848
  %v1904 = vunpack.c.h.b16 %v848
  %v1905 = vunpack.c.l.b16 %v849
  %v1906 = vunpack.c.h.b16 %v849
  %v1907 = vunpack.c.l.b16 %v850
  %v1908 = vunpack.c.h.b16 %v850
  %v1909 = vunpack.c.l.b16 %v851
  %v1910 = vunpack.c.h.b16 %v851
  %v1911 = vunpack.c.l.b16 %v852
  %v1912 = vunpack.c.h.b16 %v852
  %v1913 = vunpack.c.l.b16 %v853
  %v1914 = vunpack.c.h.b16 %v853
  %v1915 = vunpack.c.l.b16 %v854
  %v1916 = vunpack.c.h.b16 %v854
  %v1917 = vunpack.c.l.b16 %v855
  %v1918 = vunpack.c.h.b16 %v855
  %v1919 = vunpack.c.l.b16 %v856
  %v1920 = vunpack.c.h.b16 %v856
  %v1921 = vunpack.c.l.b16 %v857
  %v1922 = vunpack.c.h.b16 %v857
  %v1923 = vunpack.c.l.b16 %v858
  %v1924 = vunpack.c.h.b16 %v858
  %v1925 = vunpack.c.l.b16 %v859
  %v1926 = vunpack.c.h.b16 %v859
  %v1927 = vunpack.c.l.b16 %v860
  %v1928 = vunpack.c.h.b16 %v860
  %v1929 = vunpack.c.l.b16 %v861
  %v1930 = vunpack.c.h.b16 %v861
  %v1931 = vunpack.c.l.b16 %v862
  %v1932 = vunpack.c.h.b16 %v862
  %v1933 = vunpack.c.l.b16 %v863
  %v1934 = vunpack.c.h.b16 %v863
  %v1935 = vunpack.c.l.b16 %v864
  %v1936 = vunpack.c.h.b16 %v864
  %v1937 = vunpack.c.l.b16 %v865
  %v1938 = vunpack.c.h.b16 %v865
  %v1939 = vunpack.c.l.b16 %v866
  %v1940 = vunpack.c.h.b16 %v866
  %v1941 = vunpack.c.l.b16 %v867
  %v1942 = vunpack.c.h.b16 %v867
  %v1943 = vunpack.c.l.b16 %v868
  %v1944 = vunpack.c.h.b16 %v868
  %v1945 = vunpack.c.l.b16 %v869
  %v1946 = vunpack.c.h.b16 %v869
  %v1947 = vunpack.c.l.b16 %v870
  %v1948 = vunpack.c.h.b16 %v870
  %v1949 = vunpack.c.l.b16 %v871
  %v1950 = vunpack.c.h.b16 %v871
  %v1951 = vunpack.c.l.b16 %v872
  %v1952 = vunpack.c.h.b16 %v872
  %v1953 = vunpack.c.l.b16 %v873
  %v1954 = vunpack.c.h.b16 %v873
  %v1955 = vunpack.c.l.b16 %v874
  %v1956 = vunpack.c.h.b16 %v874
  %v1957 = vunpack.c.l.b16 %v875
  %v1958 = vunpack.c.h.b16 %v875
  %v1959 = vunpack.c.l.b16 %v876
  %v1960 = vunpack.c.h.b16 %v876
  %v1961 = vunpack.c.l.b16 %v877
  %v1962 = vunpack.c.h.b16 %v877
  %v1963 = vunpack.c.l.b16 %v878
  %v1964 = vunpack.c.h.b16 %v878
  %v1965 = vunpack.c.l.b16 %v879
  %v1966 = vunpack.c.h.b16 %v879
  %v1967 = vunpack.c.l.b16 %v880
  %v1968 = vunpack.c.h.b16 %v880
  %v1969 = vunpack.c.l.b16 %v881
  %v1970 = vunpack.c.h.b16 %v881
  %v1971 = vunpack.c.l.b16 %v882
  %v1972 = vunpack.c.h.b16 %v882
  %v1973 = vunpack.c.l.b16 %v883
  %v1974 = vunpack.c.h.b16 %v883
  %v1975 = vunpack.c.l.b16 %v884
  %v1976 = vunpack.c.h.b16 %v884
  %v1977 = vunpack.c.l.b16 %v885
  %v1978 = vunpack.c.h.b16 %v885
  %v1979 = vunpack.c.l.b16 %v886
  %v1980 = vunpack.c.h.b16 %v886
  %v1981 = vunpack.c.l.b16 %v887
  %v1982 = vunpack.c.h.b16 %v887
  %v1983 = vunpack.c.l.b16 %v888
  %v1984 = vunpack.c.h.b16 %v888
  %v1985 = vunpack.c.l.b16 %v889
  %v1986 = vunpack.c.h.b16 %v889
  %v1987 = vunpack.c.l.b16 %v890
  %v1988 = vunpack.c.h.b16 %v890
  %v1989 = vunpack.c.l.b16 %v891
  %v1990 = vunpack.c.h.b16 %v891
  %v1991 = vunpack.c.l.b16 %v892
  %v1992 = vunpack.c.h.b16 %v892
  %v1993 = vunpack.c.l.b16 %v893
  %v1994 = vunpack.c.h.b16 %v893
  %v1995 = vunpack.c.l.b16 %v894
  %v1996 = vunpack.c.h.b16 %v894
  %v1997 = vunpack.c.l.b16 %v895
  %v1998 = vunpack.c.h.b16 %v895
  %v1999 = vunpack.c.l.b16 %v896
  %v2000 = vunpack.c.h.b16 %v896
  %v2001 = vunpack.c.l.b16 %v897
  %v2002 = vunpack.c.h.b16 %v897
  %v2003 = vunpack.c.l.b16 %v898
  %v2004 = vunpack.c.h.b16 %v898
  %v2005 = vunpack.c.l.b16 %v899
  %v2006 = vunpack.c.h.b16 %v899
  %v2007 = vunpack.c.l.b16 %v900
  %v2008 = vunpack.c.h.b16 %v900
  %v2009 = vunpack.c.l.b16 %v901
  %v2010 = vunpack.c.h.b16 %v901
  %v2011 = vunpack.c.l.b16 %v902
  %v2012 = vunpack.c.h.b16 %v902
  %v2013 = vunpack.c.l.b16 %v903
  %v2014 = vunpack.c.h.b16 %v903
  %v2015 = vunpack.c.l.b16 %v904
  %v2016 = vunpack.c.h.b16 %v904
  %v2017 = vunpack.c.l.b16 %v905
  %v2018 = vunpack.c.h.b16 %v905
  %v2019 = vunpack.c.l.b16 %v906
  %v2020 = vunpack.c.h.b16 %v906
  %v2021 = vunpack.c.l.b16 %v907
  %v2022 = vunpack.c.h.b16 %v907
  %v2023 = vunpack.c.l.b16 %v908
  %v2024 = vunpack.c.h.b16 %v908
  %v2025 = vunpack.c.l.b16 %v909
  %v2026 = vunpack.c.h.b16 %v909
  %v2027 = vunpack.c.l.b16 %v910
  %v2028 = vunpack.c.h.b16 %v910
  %v2029 = vunpack.c.l.b16 %v911
  %v2030 = vunpack.c.h.b16 %v911
  %v2031 = vunpack.c.l.b16 %v912
  %v2032 = vunpack.c.h.b16 %v912
  %v2033 = vunpack.c.l.b16 %v913
  %v2034 = vunpack.c.h.b16 %v913
  %v2035 = vunpack.c.l.b16 %v914
  %v2036 = vunpack.c.h.b16 %v914
  %v2037 = vunpack.c.l.b16 %v915
  %v2038 = vunpack.c.h.b16 %v915
  %v2039 = vunpack.c.l.b16 %v916
  %v2040 = vunpack.c.h.b16 %v916
  %v2041 = vunpack.c.l.b16 %v917
  %v2042 = vunpack.c.h.b16 %v917
  %v2043 = vunpack.c.l.b16 %v918
  %v2044 = vunpack.c.h.b16 %v918
  %v2045 = vunpack.c.l.b16 %v919
  %v2046 = vunpack.c.h.b16 %v919
  %v2047 = vunpack.c.l.b16 %v920
  %v2048 = vunpack.c.h.b16 %v920
  %v2049 = vunpack.c.l.b16 %v921
  %v2050 = vunpack.c.h.b16 %v921
  %v2051 = vunpack.c.l.b16 %v922
  %v2052 = vunpack.c.h.b16 %v922
  %v2053 = vunpack.c.l.b16 %v923
  %v2054 = vunpack.c.h.b16 %v923
  %v2055 = vunpack.c.l.b16 %v924
  %v2056 = vunpack.c.h.b16 %v924
  %v2057 = vunpack.c.l.b16 %v925
  %v2058 = vunpack.c.h.b16 %v925
  %v2059 = vunpack.c.l.b16 %v926
  %v2060 = vunpack.c.h.b16 %v926
  %v2061 = vunpack.c.l.b16 %v927
  %v2062 = vunpack.c.h.b16 %v927
  %v2063 = vunpack.c.l.b16 %v928
  %v2064 = vunpack.c.h.b16 %v928
  %v2065 = vunpack.c.l.b16 %v929
  %v2066 = vunpack.c.h.b16 %v929
  %v2067 = vunpack.c.l.b16 %v930
  %v2068 = vunpack.c.h.b16 %v930
  %v2069 = vunpack.c.l.b16 %v931
  %v2070 = vunpack.c.h.b16 %v931
  %v2071 = vunpack.c.l.b16 %v932
  %v2072 = vunpack.c.h.b16 %v932
  %v2073 = vunpack.c.l.b16 %v933
  %v2074 = vunpack.c.h.b16 %v933
  %v2075 = vunpack.c.l.b16 %v934
  %v2076 = vunpack.c.h.b16 %v934
  %v2077 = vunpack.c.l.b16 %v935
  %v2078 = vunpack.c.h.b16 %v935
  %v2079 = vunpack.c.l.b16 %v936
  %v2080 = vunpack.c.h.b16 %v936
  %v2081 = vunpack.c.l.b16 %v937
  %v2082 = vunpack.c.h.b16 %v937
  %v2083 = vunpack.c.l.b16 %v938
  %v2084 = vunpack.c.h.b16 %v938
  %v2085 = vunpack.c.l.b16 %v939
  %v2086 = vunpack.c.h.b16 %v939
  %v2087 = vunpack.c.l.b16 %v940
  %v2088 = vunpack.c.h.b16 %v940
  %v2089 = vunpack.c.l.b16 %v941
  %v2090 = vunpack.c.h.b16 %v941
  %v2091 = vunpack.c.l.b16 %v942
  %v2092 = vunpack.c.h.b16 %v942
  %v2093 = vunpack.c.l.b16 %v943
  %v2094 = vunpack.c.h.b16 %v943
  %v2095 = vunpack.c.l.b16 %v944
  %v2096 = vunpack.c.h.b16 %v944
  %v2097 = vunpack.c.l.b16 %v945
  %v2098 = vunpack.c.h.b16 %v945
  %v2099 = vunpack.c.l.b16 %v946
  %v2100 = vunpack.c.h.b16 %v946
  %v2101 = vunpack.c.l.b16 %v947
  %v2102 = vunpack.c.h.b16 %v947
  %v2103 = vunpack.c.l.b16 %v948
  %v2104 = vunpack.c.h.b16 %v948
  %v2105 = vunpack.c.l.b16 %v949
  %v2106 = vunpack.c.h.b16 %v949
  %v2107 = vunpack.c.l.b16 %v950
  %v2108 = vunpack.c.h.b16 %v950
  %v2109 = vunpack.c.l.b16 %v951
  %v2110 = vunpack.c.h.b16 %v951
  %v2111 = vunpack.c.l.b16 %v952
  %v2112 = vunpack.c.h.b16 %v952
  %v2113 = vunpack.c.l.b16 %v953
  %v2114 = vunpack.c.h.b16 %v953
  %v2115 = vunpack.c.l.b16 %v954
  %v2116 = vunpack.c.h.b16 %v954
  %v2117 = vunpack.c.l.b16 %v955
  %v2118 = vunpack.c.h.b16 %v955
  %v2119 = vunpack.c.l.b16 %v956
  %v2120 = vunpack.c.h.b16 %v956
  %v2121 = vunpack.c.l.b16 %v957
  %v2122 = vunpack.c.h.b16 %v957
  %v2123 = vunpack.c.l.b16 %v958
  %v2124 = vunpack.c.h.b16 %v958
  %v2125 = vunpack.c.l.b16 %v959
  %v2126 = vunpack.c.h.b16 %v959
  %v2127 = vunpack.c.l.b16 %v960
  %v2128 = vunpack.c.h.b16 %v960
  %v2129 = vunpack.c.l.b16 %v961
  %v2130 = vunpack.c.h.b16 %v961
  %v2131 = vunpack.c.l.b16 %v962
  %v2132 = vunpack.c.h.b16 %v962
  %v2133 = vunpack.c.l.b16 %v963
  %v2134 = vunpack.c.h.b16 %v963
  %v2135 = vunpack.c.l.b16 %v964
  %v2136 = vunpack.c.h.b16 %v964
  %v2137 = vunpack.c.l.b16 %v965
  %v2138 = vunpack.c.h.b16 %v965
  %v2139 = vunpack.c.l.b16 %v966
  %v2140 = vunpack.c.h.b16 %v966
  %v2141 = vunpack.c.l.b16 %v967
  %v2142 = vunpack.c.h.b16 %v967
  %v2143 = vunpack.c.l.b16 %v968
  %v2144 = vunpack.c.h.b16 %v968
  %v2145 = vunpack.c.l.b16 %v969
  %v2146 = vunpack.c.h.b16 %v969
  %v2147 = vunpack.c.l.b16 %v970
  %v2148 = vunpack.c.h.b16 %v970
  %v2149 = vunpack.c.l.b16 %v971
  %v2150 = vunpack.c.h.b16 %v971
  %v2151 = vunpack.c.l.b16 %v972
  %v2152 = vunpack.c.h.b16 %v972
  %v2153 = vunpack.c.l.b16 %v973
  %v2154 = vunpack.c.h.b16 %v973
  %v2155 = vunpack.c.l.b16 %v974
  %v2156 = vunpack.c.h.b16 %v974
  %v2157 = vunpack.c.l.b16 %v975
  %v2158 = vunpack.c.h.b16 %v975
  %v2159 = vunpack.c.l.b16 %v976
  %v2160 = vunpack.c.h.b16 %v976
  %v2161 = vunpack.c.l.b16 %v977
  %v2162 = vunpack.c.h.b16 %v977
  %v2163 = vunpack.c.l.b16 %v978
  %v2164 = vunpack.c.h.b16 %v978
  %v2165 = vunpack.c.l.b16 %v979
  %v2166 = vunpack.c.h.b16 %v979
  %v2167 = vunpack.c.l.b16 %v980
  %v2168 = vunpack.c.h.b16 %v980
  %v2169 = vunpack.c.l.b16 %v981
  %v2170 = vunpack.c.h.b16 %v981
  %v2171 = vunpack.c.l.b16 %v982
  %v2172 = vunpack.c.h.b16 %v982
  %v2173 = vunpack.c.l.b16 %v983
  %v2174 = vunpack.c.h.b16 %v983
  %v2175 = vunpack.c.l.b16 %v984
  %v2176 = vunpack.c.h.b16 %v984
  %v2177 = vunpack.c.l.b16 %v985
  %v2178 = vunpack.c.h.b16 %v985
  %v2179 = vunpack.c.l.b16 %v986
  %v2180 = vunpack.c.h.b16 %v986
  %v2181 = vpack.c.b16 %v1421, %v1413
  %v2182 = vpack.c.b16 %v1422, %v1414
  %v2183 = vpack.c.b16 %v1423, %v1415
  %v2184 = vpack.c.b16 %v1424, %v1416
  %v2185 = vpack.c.b16 %v1425, %v1417
  %v2186 = vpack.c.b16 %v1426, %v1418
  %v2187 = vpack.c.b16 %v1427, %v1419
  %v2188 = vpack.c.b16 %v1428, %v1420
  %v2189 = vpack.c.b16 %v1437, %v1429
  %v2190 = vpack.c.b16 %v1438, %v1430
  %v2191 = vpack.c.b16 %v1439, %v1431
  %v2192 = vpack.c.b16 %v1440, %v1432
  %v2193 = vpack.c.b16 %v1441, %v1433
  %v2194 = vpack.c.b16 %v1442, %v1434
  %v2195 = vpack.c.b16 %v1443, %v1435
  %v2196 = vpack.c.b16 %v1444, %v1436
  %v2197 = vpack.c.b16 %v1453, %v1445
  %v2198 = vpack.c.b16 %v1454, %v1446
  %v2199 = vpack.c.b16 %v1455, %v1447
  %v2200 = vpack.c.b16 %v1456, %v1448
  %v2201 = vpack.c.b16 %v1457, %v1449
  %v2202 = vpack.c.b16 %v1458, %v1450
  %v2203 = vpack.c.b16 %v1459, %v1451
  %v2204 = vpack.c.b16 %v1460, %v1452
  %v2205 = vpack.c.b16 %v1469, %v1461
  %v2206 = vpack.c.b16 %v1470, %v1462
  %v2207 = vpack.c.b16 %v1471, %v1463
  %v2208 = vpack.c.b16 %v1472, %v1464
  %v2209 = vpack.c.b16 %v1473, %v1465
  %v2210 = vpack.c.b16 %v1474, %v1466
  %v2211 = vpack.c.b16 %v1475, %v1467
  %v2212 = vpack.c.b16 %v1476, %v1468
  %v2213 = vpack.c.b16 %v1485, %v1477
  %v2214 = vpack.c.b16 %v1486, %v1478
  %v2215 = vpack.c.b16 %v1487, %v1479
  %v2216 = vpack.c.b16 %v1488, %v1480
  %v2217 = vpack.c.b16 %v1489, %v1481
  %v2218 = vpack.c.b16 %v1490, %v1482
  %v2219 = vpack.c.b16 %v1491, %v1483
  %v2220 = vpack.c.b16 %v1492, %v1484
  %v2221 = vpack.c.b16 %v1501, %v1493
  %v2222 = vpack.c.b16 %v1502, %v1494
  %v2223 = vpack.c.b16 %v1503, %v1495
  %v2224 = vpack.c.b16 %v1504, %v1496
  %v2225 = vpack.c.b16 %v1505, %v1497
  %v2226 = vpack.c.b16 %v1506, %v1498
  %v2227 = vpack.c.b16 %v1507, %v1499
  %v2228 = vpack.c.b16 %v1508, %v1500
  %v2229 = vpack.c.b16 %v1517, %v1509
  %v2230 = vpack.c.b16 %v1518, %v1510
  %v2231 = vpack.c.b16 %v1519, %v1511
  %v2232 = vpack.c.b16 %v1520, %v1512
  %v2233 = vpack.c.b16 %v1521, %v1513
  %v2234 = vpack.c.b16 %v1522, %v1514
  %v2235 = vpack.c.b16 %v1523, %v1515
  %v2236 = vpack.c.b16 %v1524, %v1516
  %v2237 = vpack.c.b16 %v1533, %v1525
  %v2238 = vpack.c.b16 %v1534, %v1526
  %v2239 = vpack.c.b16 %v1535, %v1527
  %v2240 = vpack.c.b16 %v1536, %v1528
  %v2241 = vpack.c.b16 %v1537, %v1529
  %v2242 = vpack.c.b16 %v1538, %v1530
  %v2243 = vpack.c.b16 %v1539, %v1531
  %v2244 = vpack.c.b16 %v1540, %v1532
  %v2245 = vpack.c.b16 %v1549, %v1541
  %v2246 = vpack.c.b16 %v1550, %v1542
  %v2247 = vpack.c.b16 %v1551, %v1543
  %v2248 = vpack.c.b16 %v1552, %v1544
  %v2249 = vpack.c.b16 %v1553, %v1545
  %v2250 = vpack.c.b16 %v1554, %v1546
  %v2251 = vpack.c.b16 %v1555, %v1547
  %v2252 = vpack.c.b16 %v1556, %v1548
  %v2253 = vpack.c.b16 %v1565, %v1557
  %v2254 = vpack.c.b16 %v1566, %v1558
  %v2255 = vpack.c.b16 %v1567, %v1559
  %v2256 = vpack.c.b16 %v1568, %v1560
  %v2257 = vpack.c.b16 %v1569, %v1561
  %v2258 = vpack.c.b16 %v1570, %v1562
  %v2259 = vpack.c.b16 %v1571, %v1563
  %v2260 = vpack.c.b16 %v1572, %v1564
  %v2261 = vpack.c.b16 %v1581, %v1573
  %v2262 = vpack.c.b16 %v1582, %v1574
  %v2263 = vpack.c.b16 %v1583, %v1575
  %v2264 = vpack.c.b16 %v1584, %v1576
  %v2265 = vpack.c.b16 %v1585, %v1577
  %v2266 = vpack.c.b16 %v1586, %v1578
  %v2267 = vpack.c.b16 %v1587, %v1579
  %v2268 = vpack.c.b16 %v1588, %v1580
  %v2269 = vpack.c.b16 %v1597, %v1589
  %v2270 = vpack.c.b16 %v1598, %v1590
  %v2271 = vpack.c.b16 %v1599, %v1591
  %v2272 = vpack.c.b16 %v1600, %v1592
  %v2273 = vpack.c.b16 %v1601, %v1593
  %v2274 = vpack.c.b16 %v1602, %v1594
  %v2275 = vpack.c.b16 %v1603, %v1595
  %v2276 = vpack.c.b16 %v1604, %v1596
  %v2277 = vpack.c.b16 %v1613, %v1605
  %v2278 = vpack.c.b16 %v1614, %v1606
  %v2279 = vpack.c.b16 %v1615, %v1607
  %v2280 = vpack.c.b16 %v1616, %v1608
  %v2281 = vpack.c.b16 %v1617, %v1609
  %v2282 = vpack.c.b16 %v1618, %v1610
  %v2283 = vpack.c.b16 %v1619, %v1611
  %v2284 = vpack.c.b16 %v1620, %v1612
  %v2285 = vpack.c.b16 %v1629, %v1621
  %v2286 = vpack.c.b16 %v1630, %v1622
  %v2287 = vpack.c.b16 %v1631, %v1623
  %v2288 = vpack.c.b16 %v1632, %v1624
  %v2289 = vpack.c.b16 %v1633, %v1625
  %v2290 = vpack.c.b16 %v1634, %v1626
  %v2291 = vpack.c.b16 %v1635, %v1627
  %v2292 = vpack.c.b16 %v1636, %v1628
  %v2293 = vpack.c.b16 %v1645, %v1637
  %v2294 = vpack.c.b16 %v1646, %v1638
  %v2295 = vpack.c.b16 %v1647, %v1639
  %v2296 = vpack.c.b16 %v1648, %v1640
  %v2297 = vpack.c.b16 %v1649, %v1641
  %v2298 = vpack.c.b16 %v1650, %v1642
  %v2299 = vpack.c.b16 %v1651, %v1643
  %v2300 = vpack.c.b16 %v1652, %v1644
  %v2301 = vpack.c.b16 %v1661, %v1653
  %v2302 = vpack.c.b16 %v1662, %v1654
  %v2303 = vpack.c.b16 %v1663, %v1655
  %v2304 = vpack.c.b16 %v1664, %v1656
  %v2305 = vpack.c.b16 %v1665, %v1657
  %v2306 = vpack.c.b16 %v1666, %v1658
  %v2307 = vpack.c.b16 %v1667, %v1659
  %v2308 = vpack.c.b16 %v1668, %v1660
  %v2309 = vpack.c.b16 %v1677, %v1669
  %v2310 = vpack.c.b16 %v1678, %v1670
  %v2311 = vpack.c.b16 %v1679, %v1671
  %v2312 = vpack.c.b16 %v1680, %v1672
  %v2313 = vpack.c.b16 %v1681, %v1673
  %v2314 = vpack.c.b16 %v1682, %v1674
  %v2315 = vpack.c.b16 %v1683, %v1675
  %v2316 = vpack.c.b16 %v1684, %v1676
  %v2317 = vpack.c.b16 %v1693, %v1685
  %v2318 = vpack.c.b16 %v1694, %v1686
  %v2319 = vpack.c.b16 %v1695, %v1687
  %v2320 = vpack.c.b16 %v1696, %v1688
  %v2321 = vpack.c.b16 %v1697, %v1689
  %v2322 = vpack.c.b16 %v1698, %v1690
  %v2323 = vpack.c.b16 %v1699, %v1691
  %v2324 = vpack.c.b16 %v1700, %v1692
  %v2325 = vpack.c.b16 %v1709, %v1701
  %v2326 = vpack.c.b16 %v1710, %v1702
  %v2327 = vpack.c.b16 %v1711, %v1703
  %v2328 = vpack.c.b16 %v1712, %v1704
  %v2329 = vpack.c.b16 %v1713, %v1705
  %v2330 = vpack.c.b16 %v1714, %v1706
  %v2331 = vpack.c.b16 %v1715, %v1707
  %v2332 = vpack.c.b16 %v1716, %v1708
  %v2333 = vpack.c.b16 %v1725, %v1717
  %v2334 = vpack.c.b16 %v1726, %v1718
  %v2335 = vpack.c.b16 %v1727, %v1719
  %v2336 = vpack.c.b16 %v1728, %v1720
  %v2337 = vpack.c.b16 %v1729, %v1721
  %v2338 = vpack.c.b16 %v1730, %v1722
  %v2339 = vpack.c.b16 %v1731, %v1723
  %v2340 = vpack.c.b16 %v1732, %v1724
  %v2341 = vpack.c.b16 %v1741, %v1733
  %v2342 = vpack.c.b16 %v1742, %v1734
  %v2343 = vpack.c.b16 %v1743, %v1735
  %v2344 = vpack.c.b16 %v1744, %v1736
  %v2345 = vpack.c.b16 %v1745, %v1737
  %v2346 = vpack.c.b16 %v1746, %v1738
  %v2347 = vpack.c.b16 %v1747, %v1739
  %v2348 = vpack.c.b16 %v1748, %v1740
  %v2349 = vpack.c.b16 %v1757, %v1749
  %v2350 = vpack.c.b16 %v1758, %v1750
  %v2351 = vpack.c.b16 %v1759, %v1751
  %v2352 = vpack.c.b16 %v1760, %v1752
  %v2353 = vpack.c.b16 %v1761, %v1753
  %v2354 = vpack.c.b16 %v1762, %v1754
  %v2355 = vpack.c.b16 %v1763, %v1755
  %v2356 = vpack.c.b16 %v1764, %v1756
  %v2357 = vpack.c.b16 %v1773, %v1765
  %v2358 = vpack.c.b16 %v1774, %v1766
  %v2359 = vpack.c.b16 %v1775, %v1767
  %v2360 = vpack.c.b16 %v1776, %v1768
  %v2361 = vpack.c.b16 %v1777, %v1769
  %v2362 = vpack.c.b16 %v1778, %v1770
  %v2363 = vpack.c.b16 %v1779, %v1771
  %v2364 = vpack.c.b16 %v1780, %v1772
  %v2365 = vpack.c.b16 %v1789, %v1781
  %v2366 = vpack.c.b16 %v1790, %v1782
  %v2367 = vpack.c.b16 %v1791, %v1783
  %v2368 = vpack.c.b16 %v1792, %v1784
  %v2369 = vpack.c.b16 %v1793, %v1785
  %v2370 = vpack.c.b16 %v1794, %v1786
  %v2371 = vpack.c.b16 %v1795, %v1787
  %v2372 = vpack.c.b16 %v1796, %v1788
  %v2373 = vpack.c.b16 %v1805, %v1797
  %v2374 = vpack.c.b16 %v1806, %v1798
  %v2375 = vpack.c.b16 %v1807, %v1799
  %v2376 = vpack.c.b16 %v1808, %v1800
  %v2377 = vpack.c.b16 %v1809, %v1801
  %v2378 = vpack.c.b16 %v1810, %v1802
  %v2379 = vpack.c.b16 %v1811, %v1803
  %v2380 = vpack.c.b16 %v1812, %v1804
  %v2381 = vpack.c.b16 %v1821, %v1813
  %v2382 = vpack.c.b16 %v1822, %v1814
  %v2383 = vpack.c.b16 %v1823, %v1815
  %v2384 = vpack.c.b16 %v1824, %v1816
  %v2385 = vpack.c.b16 %v1825, %v1817
  %v2386 = vpack.c.b16 %v1826, %v1818
  %v2387 = vpack.c.b16 %v1827, %v1819
  %v2388 = vpack.c.b16 %v1828, %v1820
  %v2389 = vpack.c.b16 %v1837, %v1829
  %v2390 = vpack.c.b16 %v1838, %v1830
  %v2391 = vpack.c.b16 %v1839, %v1831
  %v2392 = vpack.c.b16 %v1840, %v1832
  %v2393 = vpack.c.b16 %v1841, %v1833
  %v2394 = vpack.c.b16 %v1842, %v1834
  %v2395 = vpack.c.b16 %v1843, %v1835
  %v2396 = vpack.c.b16 %v1844, %v1836
  %v2397 = vpack.c.b16 %v1853, %v1845
  %v2398 = vpack.c.b16 %v1854, %v1846
  %v2399 = vpack.c.b16 %v1855, %v1847
  %v2400 = vpack.c.b16 %v1856, %v1848
  %v2401 = vpack.c.b16 %v1857, %v1849
  %v2402 = vpack.c.b16 %v1858, %v1850
  %v2403 = vpack.c.b16 %v1859, %v1851
  %v2404 = vpack.c.b16 %v1860, %v1852
  %v2405 = vpack.c.b16 %v1869, %v1861
  %v2406 = vpack.c.b16 %v1870, %v1862
  %v2407 = vpack.c.b16 %v1871, %v1863
  %v2408 = vpack.c.b16 %v1872, %v1864
  %v2409 = vpack.c.b16 %v1873, %v1865
  %v2410 = vpack.c.b16 %v1874, %v1866
  %v2411 = vpack.c.b16 %v1875, %v1867
  %v2412 = vpack.c.b16 %v1876, %v1868
  %v2413 = vpack.c.b16 %v1885, %v1877
  %v2414 = vpack.c.b16 %v1886, %v1878
  %v2415 = vpack.c.b16 %v1887, %v1879
  %v2416 = vpack.c.b16 %v1888, %v1880
  %v2417 = vpack.c.b16 %v1889, %v1881
  %v2418 = vpack.c.b16 %v1890, %v1882
  %v2419 = vpack.c.b16 %v1891, %v1883
  %v2420 = vpack.c.b16 %v1892, %v1884
  %v2421 = vpack.c.b16 %v1901, %v1893
  %v2422 = vpack.c.b16 %v1902, %v1894
  %v2423 = vpack.c.b16 %v1903, %v1895
  %v2424 = vpack.c.b16 %v1904, %v1896
  %v2425 = vpack.c.b16 %v1905, %v1897
  %v2426 = vpack.c.b16 %v1906, %v1898
  %v2427 = vpack.c.b16 %v1907, %v1899
  %v2428 = vpack.c.b16 %v1908, %v1900
  %v2429 = vpack.c.b16 %v1917, %v1909
  %v2430 = vpack.c.b16 %v1918, %v1910
  %v2431 = vpack.c.b16 %v1919, %v1911
  %v2432 = vpack.c.b16 %v1920, %v1912
  %v2433 = vpack.c.b16 %v1921, %v1913
  %v2434 = vpack.c.b16 %v1922, %v1914
  %v2435 = vpack.c.b16 %v1923, %v1915
  %v2436 = vpack.c.b16 %v1924, %v1916
  %v2437 = vpack.c.b16 %v1933, %v1925
  %v2438 = vpack.c.b16 %v1934, %v1926
  %v2439 = vpack.c.b16 %v1935, %v1927
  %v2440 = vpack.c.b16 %v1936, %v1928
  %v2441 = vpack.c.b16 %v1937, %v1929
  %v2442 = vpack.c.b16 %v1938, %v1930
  %v2443 = vpack.c.b16 %v1939, %v1931
  %v2444 = vpack.c.b16 %v1940, %v1932
  %v2445 = vpack.c.b16 %v1949, %v1941
  %v2446 = vpack.c.b16 %v1950, %v1942
  %v2447 = vpack.c.b16 %v1951, %v1943
  %v2448 = vpack.c.b16 %v1952, %v1944
  %v2449 = vpack.c.b16 %v1953, %v1945
  %v2450 = vpack.c.b16 %v1954, %v1946
  %v2451 = vpack.c.b16 %v1955, %v1947
  %v2452 = vpack.c.b16 %v1956, %v1948
  %v2453 = vpack.c.b16 %v1965, %v1957
  %v2454 = vpack.c.b16 %v1966, %v1958
  %v2455 = vpack.c.b16 %v1967, %v1959
  %v2456 = vpack.c.b16 %v1968, %v1960
  %v2457 = vpack.c.b16 %v1969, %v1961
  %v2458 = vpack.c.b16 %v1970, %v1962
  %v2459 = vpack.c.b16 %v1971, %v1963
  %v2460 = vpack.c.b16 %v1972, %v1964
  %v2461 = vpack.c.b16 %v1981, %v1973
  %v2462 = vpack.c.b16 %v1982, %v1974
  %v2463 = vpack.c.b16 %v1983, %v1975
  %v2464 = vpack.c.b16 %v1984, %v1976
  %v2465 = vpack.c.b16 %v1985, %v1977
  %v2466 = vpack.c.b16 %v1986, %v1978
  %v2467 = vpack.c.b16 %v1987, %v1979
  %v2468 = vpack.c.b16 %v1988, %v1980
  %v2469 = vpack.c.b16 %v1997, %v1989
  %v2470 = vpack.c.b16 %v1998, %v1990
  %v2471 = vpack.c.b16 %v1999, %v1991
  %v2472 = vpack.c.b16 %v2000, %v1992
  %v2473 = vpack.c.b16 %v2001, %v1993
  %v2474 = vpack.c.b16 %v2002, %v1994
  %v2475 = vpack.c.b16 %v2003, %v1995
  %v2476 = vpack.c.b16 %v2004, %v1996
  %v2477 = vpack.c.b16 %v2013, %v2005
  %v2478 = vpack.c.b16 %v2014, %v2006
  %v2479 = vpack.c.b16 %v2015, %v2007
  %v2480 = vpack.c.b16 %v2016, %v2008
  %v2481 = vpack.c.b16 %v2017, %v2009
  %v2482 = vpack.c.b16 %v2018, %v2010
  %v2483 = vpack.c.b16 %v2019, %v2011
  %v2484 = vpack.c.b16 %v2020, %v2012
  %v2485 = vpack.c.b16 %v2029, %v2021
  %v2486 = vpack.c.b16 %v2030, %v2022
  %v2487 = vpack.c.b16 %v2031, %v2023
  %v2488 = vpack.c.b16 %v2032, %v2024
  %v2489 = vpack.c.b16 %v2033, %v2025
  %v2490 = vpack.c.b16 %v2034, %v2026
  %v2491 = vpack.c.b16 %v2035, %v2027
  %v2492 = vpack.c.b16 %v2036, %v2028
  %v2493 = vpack.c.b16 %v2045, %v2037
  %v2494 = vpack.c.b16 %v2046, %v2038
  %v2495 = vpack.c.b16 %v2047, %v2039
  %v2496 = vpack.c.b16 %v2048, %v2040
  %v2497 = vpack.c.b16 %v2049, %v2041
  %v2498 = vpack.c.b16 %v2050, %v2042
  %v2499 = vpack.c.b16 %v2051, %v2043
  %v2500 = vpack.c.b16 %v2052, %v2044
  %v2501 = vpack.c.b16 %v2061, %v2053
  %v2502 = vpack.c.b16 %v2062, %v2054
  %v2503 = vpack.c.b16 %v2063, %v2055
  %v2504 = vpack.c.b16 %v2064, %v2056
  %v2505 = vpack.c.b16 %v2065, %v2057
  %v2506 = vpack.c.b16 %v2066, %v2058
  %v2507 = vpack.c.b16 %v2067, %v2059
  %v2508 = vpack.c.b16 %v2068, %v2060
  %v2509 = vpack.c.b16 %v2077, %v2069
  %v2510 = vpack.c.b16 %v2078, %v2070
  %v2511 = vpack.c.b16 %v2079, %v2071
  %v2512 = vpack.c.b16 %v2080, %v2072
  %v2513 = vpack.c.b16 %v2081, %v2073
  %v2514 = vpack.c.b16 %v2082, %v2074
  %v2515 = vpack.c.b16 %v2083, %v2075
  %v2516 = vpack.c.b16 %v2084, %v2076
  %v2517 = vpack.c.b16 %v2093, %v2085
  %v2518 = vpack.c.b16 %v2094, %v2086
  %v2519 = vpack.c.b16 %v2095, %v2087
  %v2520 = vpack.c.b16 %v2096, %v2088
  %v2521 = vpack.c.b16 %v2097, %v2089
  %v2522 = vpack.c.b16 %v2098, %v2090
  %v2523 = vpack.c.b16 %v2099, %v2091
  %v2524 = vpack.c.b16 %v2100, %v2092
  %v2525 = vpack.c.b16 %v2109, %v2101
  %v2526 = vpack.c.b16 %v2110, %v2102
  %v2527 = vpack.c.b16 %v2111, %v2103
  %v2528 = vpack.c.b16 %v2112, %v2104
  %v2529 = vpack.c.b16 %v2113, %v2105
  %v2530 = vpack.c.b16 %v2114, %v2106
  %v2531 = vpack.c.b16 %v2115, %v2107
  %v2532 = vpack.c.b16 %v2116, %v2108
  %v2533 = vpack.c.b16 %v2125, %v2117
  %v2534 = vpack.c.b16 %v2126, %v2118
  %v2535 = vpack.c.b16 %v2127, %v2119
  %v2536 = vpack.c.b16 %v2128, %v2120
  %v2537 = vpack.c.b16 %v2129, %v2121
  %v2538 = vpack.c.b16 %v2130, %v2122
  %v2539 = vpack.c.b16 %v2131, %v2123
  %v2540 = vpack.c.b16 %v2132, %v2124
  %v2541 = vpack.c.b16 %v2141, %v2133
  %v2542 = vpack.c.b16 %v2142, %v2134
  %v2543 = vpack.c.b16 %v2143, %v2135
  %v2544 = vpack.c.b16 %v2144, %v2136
  %v2545 = vpack.c.b16 %v2145, %v2137
  %v2546 = vpack.c.b16 %v2146, %v2138
  %v2547 = vpack.c.b16 %v2147, %v2139
  %v2548 = vpack.c.b16 %v2148, %v2140
  %v2549 = vpack.c.b16 %v2157, %v2149
  %v2550 = vpack.c.b16 %v2158, %v2150
  %v2551 = vpack.c.b16 %v2159, %v2151
  %v2552 = vpack.c.b16 %v2160, %v2152
  %v2553 = vpack.c.b16 %v2161, %v2153
  %v2554 = vpack.c.b16 %v2162, %v2154
  %v2555 = vpack.c.b16 %v2163, %v2155
  %v2556 = vpack.c.b16 %v2164, %v2156
  %v2557 = vpack.c.b16 %v2173, %v2165
  %v2558 = vpack.c.b16 %v2174, %v2166
  %v2559 = vpack.c.b16 %v2175, %v2167
  %v2560 = vpack.c.b16 %v2176, %v2168
  %v2561 = vpack.c.b16 %v2177, %v2169
  %v2562 = vpack.c.b16 %v2178, %v2170
  %v2563 = vpack.c.b16 %v2179, %v2171
  %v2564 = vpack.c.b16 %v2180, %v2172
  %2949 = vmatprep.subr.bf16.mxu0 %v2182
  %2950 = vmatpush1.bf16.msra.mxu0 %v2181
  %2951 = vmatprep.subr.bf16.mxu0 %v2190
  %2952 = vmatpush1.bf16.msra.mxu0 %v2189
  %2953 = vmatprep.subr.bf16.mxu0 %v2198
  %2954 = vmatpush1.bf16.msra.mxu0 %v2197
  %2955 = vmatprep.subr.bf16.mxu0 %v2206
  %2956 = vmatpush1.bf16.msra.mxu0 %v2205
  %2957 = vmatprep.subr.bf16.mxu0 %v2214
  %2958 = vmatpush1.bf16.msra.mxu0 %v2213
  %2959 = vmatprep.subr.bf16.mxu0 %v2222
  %2960 = vmatpush1.bf16.msra.mxu0 %v2221
  %2961 = vmatprep.subr.bf16.mxu0 %v2230
  %2962 = vmatpush1.bf16.msra.mxu0 %v2229
  %2963 = vmatprep.subr.bf16.mxu0 %v2238
  %2964 = vmatpush1.bf16.msra.mxu0 %v2237
  %2965 = vmatprep.subr.bf16.mxu0 %v2246
  %2966 = vmatpush1.bf16.msra.mxu0 %v2245
  %2967 = vmatprep.subr.bf16.mxu0 %v2254
  %2968 = vmatpush1.bf16.msra.mxu0 %v2253
  %2969 = vmatprep.subr.bf16.mxu0 %v2262
  %2970 = vmatpush1.bf16.msra.mxu0 %v2261
  %2971 = vmatprep.subr.bf16.mxu0 %v2270
  %2972 = vmatpush1.bf16.msra.mxu0 %v2269
  %2973 = vmatprep.subr.bf16.mxu0 %v2278
  %2974 = vmatpush1.bf16.msra.mxu0 %v2277
  %2975 = vmatprep.subr.bf16.mxu0 %v2286
  %2976 = vmatpush1.bf16.msra.mxu0 %v2285
  %2977 = vmatprep.subr.bf16.mxu0 %v2294
  %2978 = vmatpush1.bf16.msra.mxu0 %v2293
  %2979 = vmatprep.subr.bf16.mxu0 %v2302
  %2980 = vmatpush1.bf16.msra.mxu0 %v2301
  %2981 = vmatprep.mubr.bf16.mxu0 %v598
  %2982 = vmatmul.mubr.bf16.gmra.mrb[0].mxu0 %v597
  %v2983 = vpop.f32.mrb[0].mxu0
  %v2984 = vadd.f32 %v992, %v2983
  %v2985 = vpop.f32.mrb[0].mxu0
  %v2986 = vadd.f32 %v996, %v2985
  %v2987 = vpop.f32.mrb[0].mxu0
  %v2988 = vpop.f32.mrb[0].mxu0
  %2989 = vdwg.mxu0
  %2990 = vmatprep.subr.bf16.mxu0 %v2310
  %2991 = vmatpush1.bf16.msra.mxu0 %v2309
  %2992 = vmatprep.subr.bf16.mxu0 %v2318
  %2993 = vmatpush1.bf16.msra.mxu0 %v2317
  %2994 = vmatprep.subr.bf16.mxu0 %v2326
  %2995 = vmatpush1.bf16.msra.mxu0 %v2325
  %2996 = vmatprep.subr.bf16.mxu0 %v2334
  %2997 = vmatpush1.bf16.msra.mxu0 %v2333
  %2998 = vmatprep.subr.bf16.mxu0 %v2342
  %2999 = vmatpush1.bf16.msra.mxu0 %v2341
  %3000 = vmatprep.subr.bf16.mxu0 %v2350
  %3001 = vmatpush1.bf16.msra.mxu0 %v2349
  %3002 = vmatprep.subr.bf16.mxu0 %v2358
  %3003 = vmatpush1.bf16.msra.mxu0 %v2357
  %3004 = vmatprep.subr.bf16.mxu0 %v2366
  %3005 = vmatpush1.bf16.msra.mxu0 %v2365
  %3006 = vmatprep.subr.bf16.mxu0 %v2374
  %3007 = vmatpush1.bf16.msra.mxu0 %v2373
  %3008 = vmatprep.subr.bf16.mxu0 %v2382
  %3009 = vmatpush1.bf16.msra.mxu0 %v2381
  %3010 = vmatprep.subr.bf16.mxu0 %v2390
  %3011 = vmatpush1.bf16.msra.mxu0 %v2389
  %3012 = vmatprep.subr.bf16.mxu0 %v2398
  %3013 = vmatpush1.bf16.msra.mxu0 %v2397
  %3014 = vmatprep.subr.bf16.mxu0 %v2406
  %3015 = vmatpush1.bf16.msra.mxu0 %v2405
  %3016 = vmatprep.subr.bf16.mxu0 %v2414
  %3017 = vmatpush1.bf16.msra.mxu0 %v2413
  %3018 = vmatprep.subr.bf16.mxu0 %v2422
  %3019 = vmatpush1.bf16.msra.mxu0 %v2421
  %3020 = vmatprep.subr.bf16.mxu0 %v2430
  %3021 = vmatpush1.bf16.msra.mxu0 %v2429
  %3022 = vmatprep.mubr.bf16.mxu0 %v600
  %3023 = vmatmul.mubr.bf16.gmra.mrb[0].mxu0 %v599
  %v3024 = vpop.f32.mrb[0].mxu0
  %v3025 = vadd.f32 %v2984, %v3024
  %v3026 = vpop.f32.mrb[0].mxu0
  %v3027 = vadd.f32 %v2986, %v3026
  %v3028 = vpop.f32.mrb[0].mxu0
  %v3029 = vpop.f32.mrb[0].mxu0
  %3030 = vdwg.mxu0
  %3031 = vmatprep.subr.bf16.mxu0 %v2438
  %3032 = vmatpush1.bf16.msra.mxu0 %v2437
  %3033 = vmatprep.subr.bf16.mxu0 %v2446
  %3034 = vmatpush1.bf16.msra.mxu0 %v2445
  %3035 = vmatprep.subr.bf16.mxu0 %v2454
  %3036 = vmatpush1.bf16.msra.mxu0 %v2453
  %3037 = vmatprep.subr.bf16.mxu0 %v2462
  %3038 = vmatpush1.bf16.msra.mxu0 %v2461
  %3039 = vmatprep.subr.bf16.mxu0 %v2470
  %3040 = vmatpush1.bf16.msra.mxu0 %v2469
  %3041 = vmatprep.subr.bf16.mxu0 %v2478
  %3042 = vmatpush1.bf16.msra.mxu0 %v2477
  %3043 = vmatprep.subr.bf16.mxu0 %v2486
  %3044 = vmatpush1.bf16.msra.mxu0 %v2485
  %3045 = vmatprep.subr.bf16.mxu0 %v2494
  %3046 = vmatpush1.bf16.msra.mxu0 %v2493
  %3047 = vmatprep.subr.bf16.mxu0 %v2502
  %3048 = vmatpush1.bf16.msra.mxu0 %v2501
  %3049 = vmatprep.subr.bf16.mxu0 %v2510
  %3050 = vmatpush1.bf16.msra.mxu0 %v2509
  %3051 = vmatprep.subr.bf16.mxu0 %v2518
  %3052 = vmatpush1.bf16.msra.mxu0 %v2517
  %3053 = vmatprep.subr.bf16.mxu0 %v2526
  %3054 = vmatpush1.bf16.msra.mxu0 %v2525
  %3055 = vmatprep.subr.bf16.mxu0 %v2534
  %3056 = vmatpush1.bf16.msra.mxu0 %v2533
  %3057 = vmatprep.subr.bf16.mxu0 %v2542
  %3058 = vmatpush1.bf16.msra.mxu0 %v2541
  %3059 = vmatprep.subr.bf16.mxu0 %v2550
  %3060 = vmatpush1.bf16.msra.mxu0 %v2549
  %3061 = vmatprep.subr.bf16.mxu0 %v2558
  %3062 = vmatpush1.bf16.msra.mxu0 %v2557
  %3063 = vmatprep.mubr.bf16.mxu0 %v602
  %3064 = vmatmul.mubr.bf16.gmra.mrb[0].mxu0 %v601
  %v3065 = vpop.f32.mrb[0].mxu0
  %v3066 = vadd.f32 %v3025, %v3065
  %v3067 = vpop.f32.mrb[0].mxu0
  %v3068 = vadd.f32 %v3027, %v3067
  %v3069 = vpop.f32.mrb[0].mxu0
  %v3070 = vpop.f32.mrb[0].mxu0
  %3071 = vdwg.mxu0
  %3072 = vmatprep.subr.bf16.mxu0 %v2184
  %3073 = vmatpush1.bf16.msra.mxu0 %v2183
  %3074 = vmatprep.subr.bf16.mxu0 %v2192
  %3075 = vmatpush1.bf16.msra.mxu0 %v2191
  %3076 = vmatprep.subr.bf16.mxu0 %v2200
  %3077 = vmatpush1.bf16.msra.mxu0 %v2199
  %3078 = vmatprep.subr.bf16.mxu0 %v2208
  %3079 = vmatpush1.bf16.msra.mxu0 %v2207
  %3080 = vmatprep.subr.bf16.mxu0 %v2216
  %3081 = vmatpush1.bf16.msra.mxu0 %v2215
  %3082 = vmatprep.subr.bf16.mxu0 %v2224
  %3083 = vmatpush1.bf16.msra.mxu0 %v2223
  %3084 = vmatprep.subr.bf16.mxu0 %v2232
  %3085 = vmatpush1.bf16.msra.mxu0 %v2231
  %3086 = vmatprep.subr.bf16.mxu0 %v2240
  %3087 = vmatpush1.bf16.msra.mxu0 %v2239
  %3088 = vmatprep.subr.bf16.mxu0 %v2248
  %3089 = vmatpush1.bf16.msra.mxu0 %v2247
  %3090 = vmatprep.subr.bf16.mxu0 %v2256
  %3091 = vmatpush1.bf16.msra.mxu0 %v2255
  %3092 = vmatprep.subr.bf16.mxu0 %v2264
  %3093 = vmatpush1.bf16.msra.mxu0 %v2263
  %3094 = vmatprep.subr.bf16.mxu0 %v2272
  %3095 = vmatpush1.bf16.msra.mxu0 %v2271
  %3096 = vmatprep.subr.bf16.mxu0 %v2280
  %3097 = vmatpush1.bf16.msra.mxu0 %v2279
  %3098 = vmatprep.subr.bf16.mxu0 %v2288
  %3099 = vmatpush1.bf16.msra.mxu0 %v2287
  %3100 = vmatprep.subr.bf16.mxu0 %v2296
  %3101 = vmatpush1.bf16.msra.mxu0 %v2295
  %3102 = vmatprep.subr.bf16.mxu0 %v2304
  %3103 = vmatpush1.bf16.msra.mxu0 %v2303
  %3104 = vmatprep.mubr.bf16.mxu0 %v598
  %3105 = vmatmul.mubr.bf16.gmra.mrb[0].mxu0 %v597
  %v3106 = vpop.f32.mrb[0].mxu0
  %v3107 = vadd.f32 %v1000, %v3106
  %v3108 = vpop.f32.mrb[0].mxu0
  %v3109 = vadd.f32 %v1004, %v3108
  %v3110 = vpop.f32.mrb[0].mxu0
  %v3111 = vpop.f32.mrb[0].mxu0
  %3112 = vdwg.mxu0
  %3113 = vmatprep.subr.bf16.mxu0 %v2312
  %3114 = vmatpush1.bf16.msra.mxu0 %v2311
  %3115 = vmatprep.subr.bf16.mxu0 %v2320
  %3116 = vmatpush1.bf16.msra.mxu0 %v2319
  %3117 = vmatprep.subr.bf16.mxu0 %v2328
  %3118 = vmatpush1.bf16.msra.mxu0 %v2327
  %3119 = vmatprep.subr.bf16.mxu0 %v2336
  %3120 = vmatpush1.bf16.msra.mxu0 %v2335
  %3121 = vmatprep.subr.bf16.mxu0 %v2344
  %3122 = vmatpush1.bf16.msra.mxu0 %v2343
  %3123 = vmatprep.subr.bf16.mxu0 %v2352
  %3124 = vmatpush1.bf16.msra.mxu0 %v2351
  %3125 = vmatprep.subr.bf16.mxu0 %v2360
  %3126 = vmatpush1.bf16.msra.mxu0 %v2359
  %3127 = vmatprep.subr.bf16.mxu0 %v2368
  %3128 = vmatpush1.bf16.msra.mxu0 %v2367
  %3129 = vmatprep.subr.bf16.mxu0 %v2376
  %3130 = vmatpush1.bf16.msra.mxu0 %v2375
  %3131 = vmatprep.subr.bf16.mxu0 %v2384
  %3132 = vmatpush1.bf16.msra.mxu0 %v2383
  %3133 = vmatprep.subr.bf16.mxu0 %v2392
  %3134 = vmatpush1.bf16.msra.mxu0 %v2391
  %3135 = vmatprep.subr.bf16.mxu0 %v2400
  %3136 = vmatpush1.bf16.msra.mxu0 %v2399
  %3137 = vmatprep.subr.bf16.mxu0 %v2408
  %3138 = vmatpush1.bf16.msra.mxu0 %v2407
  %3139 = vmatprep.subr.bf16.mxu0 %v2416
  %3140 = vmatpush1.bf16.msra.mxu0 %v2415
  %3141 = vmatprep.subr.bf16.mxu0 %v2424
  %3142 = vmatpush1.bf16.msra.mxu0 %v2423
  %3143 = vmatprep.subr.bf16.mxu0 %v2432
  %3144 = vmatpush1.bf16.msra.mxu0 %v2431
  %3145 = vmatprep.mubr.bf16.mxu0 %v600
  %3146 = vmatmul.mubr.bf16.gmra.mrb[0].mxu0 %v599
  %v3147 = vpop.f32.mrb[0].mxu0
  %v3148 = vadd.f32 %v3107, %v3147
  %v3149 = vpop.f32.mrb[0].mxu0
  %v3150 = vadd.f32 %v3109, %v3149
  %v3151 = vpop.f32.mrb[0].mxu0
  %v3152 = vpop.f32.mrb[0].mxu0
  %3153 = vdwg.mxu0
  %3154 = vmatprep.subr.bf16.mxu0 %v2440
  %3155 = vmatpush1.bf16.msra.mxu0 %v2439
  %3156 = vmatprep.subr.bf16.mxu0 %v2448
  %3157 = vmatpush1.bf16.msra.mxu0 %v2447
  %3158 = vmatprep.subr.bf16.mxu0 %v2456
  %3159 = vmatpush1.bf16.msra.mxu0 %v2455
  %3160 = vmatprep.subr.bf16.mxu0 %v2464
  %3161 = vmatpush1.bf16.msra.mxu0 %v2463
  %3162 = vmatprep.subr.bf16.mxu0 %v2472
  %3163 = vmatpush1.bf16.msra.mxu0 %v2471
  %3164 = vmatprep.subr.bf16.mxu0 %v2480
  %3165 = vmatpush1.bf16.msra.mxu0 %v2479
  %3166 = vmatprep.subr.bf16.mxu0 %v2488
  %3167 = vmatpush1.bf16.msra.mxu0 %v2487
  %3168 = vmatprep.subr.bf16.mxu0 %v2496
  %3169 = vmatpush1.bf16.msra.mxu0 %v2495
  %3170 = vmatprep.subr.bf16.mxu0 %v2504
  %3171 = vmatpush1.bf16.msra.mxu0 %v2503
  %3172 = vmatprep.subr.bf16.mxu0 %v2512
  %3173 = vmatpush1.bf16.msra.mxu0 %v2511
  %3174 = vmatprep.subr.bf16.mxu0 %v2520
  %3175 = vmatpush1.bf16.msra.mxu0 %v2519
  %3176 = vmatprep.subr.bf16.mxu0 %v2528
  %3177 = vmatpush1.bf16.msra.mxu0 %v2527
  %3178 = vmatprep.subr.bf16.mxu0 %v2536
  %3179 = vmatpush1.bf16.msra.mxu0 %v2535
  %3180 = vmatprep.subr.bf16.mxu0 %v2544
  %3181 = vmatpush1.bf16.msra.mxu0 %v2543
  %3182 = vmatprep.subr.bf16.mxu0 %v2552
  %3183 = vmatpush1.bf16.msra.mxu0 %v2551
  %3184 = vmatprep.subr.bf16.mxu0 %v2560
  %3185 = vmatpush1.bf16.msra.mxu0 %v2559
  %3186 = vmatprep.mubr.bf16.mxu0 %v602
  %3187 = vmatmul.mubr.bf16.gmra.mrb[0].mxu0 %v601
  %v3188 = vpop.f32.mrb[0].mxu0
  %v3189 = vadd.f32 %v3148, %v3188
  %v3190 = vpop.f32.mrb[0].mxu0
  %v3191 = vadd.f32 %v3150, %v3190
  %v3192 = vpop.f32.mrb[0].mxu0
  %v3193 = vpop.f32.mrb[0].mxu0
  %3194 = vdwg.mxu0
  %3195 = vmatprep.subr.bf16.mxu0 %v2186
  %3196 = vmatpush1.bf16.msra.mxu0 %v2185
  %3197 = vmatprep.subr.bf16.mxu0 %v2194
  %3198 = vmatpush1.bf16.msra.mxu0 %v2193
  %3199 = vmatprep.subr.bf16.mxu0 %v2202
  %3200 = vmatpush1.bf16.msra.mxu0 %v2201
  %3201 = vmatprep.subr.bf16.mxu0 %v2210
  %3202 = vmatpush1.bf16.msra.mxu0 %v2209
  %3203 = vmatprep.subr.bf16.mxu0 %v2218
  %3204 = vmatpush1.bf16.msra.mxu0 %v2217
  %3205 = vmatprep.subr.bf16.mxu0 %v2226
  %3206 = vmatpush1.bf16.msra.mxu0 %v2225
  %3207 = vmatprep.subr.bf16.mxu0 %v2234
  %3208 = vmatpush1.bf16.msra.mxu0 %v2233
  %3209 = vmatprep.subr.bf16.mxu0 %v2242
  %3210 = vmatpush1.bf16.msra.mxu0 %v2241
  %3211 = vmatprep.subr.bf16.mxu0 %v2250
  %3212 = vmatpush1.bf16.msra.mxu0 %v2249
  %3213 = vmatprep.subr.bf16.mxu0 %v2258
  %3214 = vmatpush1.bf16.msra.mxu0 %v2257
  %3215 = vmatprep.subr.bf16.mxu0 %v2266
  %3216 = vmatpush1.bf16.msra.mxu0 %v2265
  %3217 = vmatprep.subr.bf16.mxu0 %v2274
  %3218 = vmatpush1.bf16.msra.mxu0 %v2273
  %3219 = vmatprep.subr.bf16.mxu0 %v2282
  %3220 = vmatpush1.bf16.msra.mxu0 %v2281
  %3221 = vmatprep.subr.bf16.mxu0 %v2290
  %3222 = vmatpush1.bf16.msra.mxu0 %v2289
  %3223 = vmatprep.subr.bf16.mxu0 %v2298
  %3224 = vmatpush1.bf16.msra.mxu0 %v2297
  %3225 = vmatprep.subr.bf16.mxu0 %v2306
  %3226 = vmatpush1.bf16.msra.mxu0 %v2305
  %3227 = vmatprep.mubr.bf16.mxu0 %v598
  %3228 = vmatmul.mubr.bf16.gmra.mrb[0].mxu0 %v597
  %v3229 = vpop.f32.mrb[0].mxu0
  %v3230 = vadd.f32 %v1008, %v3229
  %v3231 = vpop.f32.mrb[0].mxu0
  %v3232 = vadd.f32 %v1012, %v3231
  %v3233 = vpop.f32.mrb[0].mxu0
  %v3234 = vpop.f32.mrb[0].mxu0
  %3235 = vdwg.mxu0
  %3236 = vmatprep.subr.bf16.mxu0 %v2314
  %3237 = vmatpush1.bf16.msra.mxu0 %v2313
  %3238 = vmatprep.subr.bf16.mxu0 %v2322
  %3239 = vmatpush1.bf16.msra.mxu0 %v2321
  %3240 = vmatprep.subr.bf16.mxu0 %v2330
  %3241 = vmatpush1.bf16.msra.mxu0 %v2329
  %3242 = vmatprep.subr.bf16.mxu0 %v2338
  %3243 = vmatpush1.bf16.msra.mxu0 %v2337
  %3244 = vmatprep.subr.bf16.mxu0 %v2346
  %3245 = vmatpush1.bf16.msra.mxu0 %v2345
  %3246 = vmatprep.subr.bf16.mxu0 %v2354
  %3247 = vmatpush1.bf16.msra.mxu0 %v2353
  %3248 = vmatprep.subr.bf16.mxu0 %v2362
  %3249 = vmatpush1.bf16.msra.mxu0 %v2361
  %3250 = vmatprep.subr.bf16.mxu0 %v2370
  %3251 = vmatpush1.bf16.msra.mxu0 %v2369
  %3252 = vmatprep.subr.bf16.mxu0 %v2378
  %3253 = vmatpush1.bf16.msra.mxu0 %v2377
  %3254 = vmatprep.subr.bf16.mxu0 %v2386
  %3255 = vmatpush1.bf16.msra.mxu0 %v2385
  %3256 = vmatprep.subr.bf16.mxu0 %v2394
  %3257 = vmatpush1.bf16.msra.mxu0 %v2393
  %3258 = vmatprep.subr.bf16.mxu0 %v2402
  %3259 = vmatpush1.bf16.msra.mxu0 %v2401
  %3260 = vmatprep.subr.bf16.mxu0 %v2410
  %3261 = vmatpush1.bf16.msra.mxu0 %v2409
  %3262 = vmatprep.subr.bf16.mxu0 %v2418
  %3263 = vmatpush1.bf16.msra.mxu0 %v2417
  %3264 = vmatprep.subr.bf16.mxu0 %v2426
  %3265 = vmatpush1.bf16.msra.mxu0 %v2425
  %3266 = vmatprep.subr.bf16.mxu0 %v2434
  %3267 = vmatpush1.bf16.msra.mxu0 %v2433
  %3268 = vmatprep.mubr.bf16.mxu0 %v600
  %3269 = vmatmul.mubr.bf16.gmra.mrb[0].mxu0 %v599
  %v3270 = vpop.f32.mrb[0].mxu0
  %v3271 = vadd.f32 %v3230, %v3270
  %v3272 = vpop.f32.mrb[0].mxu0
  %v3273 = vadd.f32 %v3232, %v3272
  %v3274 = vpop.f32.mrb[0].mxu0
  %v3275 = vpop.f32.mrb[0].mxu0
  %3276 = vdwg.mxu0
  %3277 = vmatprep.subr.bf16.mxu0 %v2442
  %3278 = vmatpush1.bf16.msra.mxu0 %v2441
  %3279 = vmatprep.subr.bf16.mxu0 %v2450
  %3280 = vmatpush1.bf16.msra.mxu0 %v2449
  %3281 = vmatprep.subr.bf16.mxu0 %v2458
  %3282 = vmatpush1.bf16.msra.mxu0 %v2457
  %3283 = vmatprep.subr.bf16.mxu0 %v2466
  %3284 = vmatpush1.bf16.msra.mxu0 %v2465
  %3285 = vmatprep.subr.bf16.mxu0 %v2474
  %3286 = vmatpush1.bf16.msra.mxu0 %v2473
  %3287 = vmatprep.subr.bf16.mxu0 %v2482
  %3288 = vmatpush1.bf16.msra.mxu0 %v2481
  %3289 = vmatprep.subr.bf16.mxu0 %v2490
  %3290 = vmatpush1.bf16.msra.mxu0 %v2489
  %3291 = vmatprep.subr.bf16.mxu0 %v2498
  %3292 = vmatpush1.bf16.msra.mxu0 %v2497
  %3293 = vmatprep.subr.bf16.mxu0 %v2506
  %3294 = vmatpush1.bf16.msra.mxu0 %v2505
  %3295 = vmatprep.subr.bf16.mxu0 %v2514
  %3296 = vmatpush1.bf16.msra.mxu0 %v2513
  %3297 = vmatprep.subr.bf16.mxu0 %v2522
  %3298 = vmatpush1.bf16.msra.mxu0 %v2521
  %3299 = vmatprep.subr.bf16.mxu0 %v2530
  %3300 = vmatpush1.bf16.msra.mxu0 %v2529
  %3301 = vmatprep.subr.bf16.mxu0 %v2538
  %3302 = vmatpush1.bf16.msra.mxu0 %v2537
  %3303 = vmatprep.subr.bf16.mxu0 %v2546
  %3304 = vmatpush1.bf16.msra.mxu0 %v2545
  %3305 = vmatprep.subr.bf16.mxu0 %v2554
  %3306 = vmatpush1.bf16.msra.mxu0 %v2553
  %3307 = vmatprep.subr.bf16.mxu0 %v2562
  %3308 = vmatpush1.bf16.msra.mxu0 %v2561
  %3309 = vmatprep.mubr.bf16.mxu0 %v602
  %3310 = vmatmul.mubr.bf16.gmra.mrb[0].mxu0 %v601
  %v3311 = vpop.f32.mrb[0].mxu0
  %v3312 = vadd.f32 %v3271, %v3311
  %v3313 = vpop.f32.mrb[0].mxu0
  %v3314 = vadd.f32 %v3273, %v3313
  %v3315 = vpop.f32.mrb[0].mxu0
  %v3316 = vpop.f32.mrb[0].mxu0
  %3317 = vdwg.mxu0
  %3318 = vmatprep.subr.bf16.mxu0 %v2188
  %3319 = vmatpush1.bf16.msra.mxu0 %v2187
  %3320 = vmatprep.subr.bf16.mxu0 %v2196
  %3321 = vmatpush1.bf16.msra.mxu0 %v2195
  %3322 = vmatprep.subr.bf16.mxu0 %v2204
  %3323 = vmatpush1.bf16.msra.mxu0 %v2203
  %3324 = vmatprep.subr.bf16.mxu0 %v2212
  %3325 = vmatpush1.bf16.msra.mxu0 %v2211
  %3326 = vmatprep.subr.bf16.mxu0 %v2220
  %3327 = vmatpush1.bf16.msra.mxu0 %v2219
  %3328 = vmatprep.subr.bf16.mxu0 %v2228
  %3329 = vmatpush1.bf16.msra.mxu0 %v2227
  %3330 = vmatprep.subr.bf16.mxu0 %v2236
  %3331 = vmatpush1.bf16.msra.mxu0 %v2235
  %3332 = vmatprep.subr.bf16.mxu0 %v2244
  %3333 = vmatpush1.bf16.msra.mxu0 %v2243
  %3334 = vmatprep.subr.bf16.mxu0 %v2252
  %3335 = vmatpush1.bf16.msra.mxu0 %v2251
  %3336 = vmatprep.subr.bf16.mxu0 %v2260
  %3337 = vmatpush1.bf16.msra.mxu0 %v2259
  %3338 = vmatprep.subr.bf16.mxu0 %v2268
  %3339 = vmatpush1.bf16.msra.mxu0 %v2267
  %3340 = vmatprep.subr.bf16.mxu0 %v2276
  %3341 = vmatpush1.bf16.msra.mxu0 %v2275
  %3342 = vmatprep.subr.bf16.mxu0 %v2284
  %3343 = vmatpush1.bf16.msra.mxu0 %v2283
  %3344 = vmatprep.subr.bf16.mxu0 %v2292
  %3345 = vmatpush1.bf16.msra.mxu0 %v2291
  %3346 = vmatprep.subr.bf16.mxu0 %v2300
  %3347 = vmatpush1.bf16.msra.mxu0 %v2299
  %3348 = vmatprep.subr.bf16.mxu0 %v2308
  %3349 = vmatpush1.bf16.msra.mxu0 %v2307
  %3350 = vmatprep.mubr.bf16.mxu0 %v598
  %3351 = vmatmul.mubr.bf16.gmra.mrb[0].mxu0 %v597
  %v3352 = vpop.f32.mrb[0].mxu0
  %v3353 = vadd.f32 %v1016, %v3352
  %v3354 = vpop.f32.mrb[0].mxu0
  %v3355 = vadd.f32 %v1020, %v3354
  %v3356 = vpop.f32.mrb[0].mxu0
  %v3357 = vpop.f32.mrb[0].mxu0
  %3358 = vdwg.mxu0
  %3359 = vmatprep.subr.bf16.mxu0 %v2316
  %3360 = vmatpush1.bf16.msra.mxu0 %v2315
  %3361 = vmatprep.subr.bf16.mxu0 %v2324
  %3362 = vmatpush1.bf16.msra.mxu0 %v2323
  %3363 = vmatprep.subr.bf16.mxu0 %v2332
  %3364 = vmatpush1.bf16.msra.mxu0 %v2331
  %3365 = vmatprep.subr.bf16.mxu0 %v2340
  %3366 = vmatpush1.bf16.msra.mxu0 %v2339
  %3367 = vmatprep.subr.bf16.mxu0 %v2348
  %3368 = vmatpush1.bf16.msra.mxu0 %v2347
  %3369 = vmatprep.subr.bf16.mxu0 %v2356
  %3370 = vmatpush1.bf16.msra.mxu0 %v2355
  %3371 = vmatprep.subr.bf16.mxu0 %v2364
  %3372 = vmatpush1.bf16.msra.mxu0 %v2363
  %3373 = vmatprep.subr.bf16.mxu0 %v2372
  %3374 = vmatpush1.bf16.msra.mxu0 %v2371
  %3375 = vmatprep.subr.bf16.mxu0 %v2380
  %3376 = vmatpush1.bf16.msra.mxu0 %v2379
  %3377 = vmatprep.subr.bf16.mxu0 %v2388
  %3378 = vmatpush1.bf16.msra.mxu0 %v2387
  %3379 = vmatprep.subr.bf16.mxu0 %v2396
  %3380 = vmatpush1.bf16.msra.mxu0 %v2395
  %3381 = vmatprep.subr.bf16.mxu0 %v2404
  %3382 = vmatpush1.bf16.msra.mxu0 %v2403
  %3383 = vmatprep.subr.bf16.mxu0 %v2412
  %3384 = vmatpush1.bf16.msra.mxu0 %v2411
  %3385 = vmatprep.subr.bf16.mxu0 %v2420
  %3386 = vmatpush1.bf16.msra.mxu0 %v2419
  %3387 = vmatprep.subr.bf16.mxu0 %v2428
  %3388 = vmatpush1.bf16.msra.mxu0 %v2427
  %3389 = vmatprep.subr.bf16.mxu0 %v2436
  %3390 = vmatpush1.bf16.msra.mxu0 %v2435
  %3391 = vmatprep.mubr.bf16.mxu0 %v600
  %3392 = vmatmul.mubr.bf16.gmra.mrb[0].mxu0 %v599
  %v3393 = vpop.f32.mrb[0].mxu0
  %v3394 = vadd.f32 %v3353, %v3393
  %v3395 = vpop.f32.mrb[0].mxu0
  %v3396 = vadd.f32 %v3355, %v3395
  %v3397 = vpop.f32.mrb[0].mxu0
  %v3398 = vpop.f32.mrb[0].mxu0
  %3399 = vdwg.mxu0
  %3400 = vmatprep.subr.bf16.mxu0 %v2444
  %3401 = vmatpush1.bf16.msra.mxu0 %v2443
  %3402 = vmatprep.subr.bf16.mxu0 %v2452
  %3403 = vmatpush1.bf16.msra.mxu0 %v2451
  %3404 = vmatprep.subr.bf16.mxu0 %v2460
  %3405 = vmatpush1.bf16.msra.mxu0 %v2459
  %3406 = vmatprep.subr.bf16.mxu0 %v2468
  %3407 = vmatpush1.bf16.msra.mxu0 %v2467
  %3408 = vmatprep.subr.bf16.mxu0 %v2476
  %3409 = vmatpush1.bf16.msra.mxu0 %v2475
  %3410 = vmatprep.subr.bf16.mxu0 %v2484
  %3411 = vmatpush1.bf16.msra.mxu0 %v2483
  %3412 = vmatprep.subr.bf16.mxu0 %v2492
  %3413 = vmatpush1.bf16.msra.mxu0 %v2491
  %3414 = vmatprep.subr.bf16.mxu0 %v2500
  %3415 = vmatpush1.bf16.msra.mxu0 %v2499
  %3416 = vmatprep.subr.bf16.mxu0 %v2508
  %3417 = vmatpush1.bf16.msra.mxu0 %v2507
  %3418 = vmatprep.subr.bf16.mxu0 %v2516
  %3419 = vmatpush1.bf16.msra.mxu0 %v2515
  %3420 = vmatprep.subr.bf16.mxu0 %v2524
  %3421 = vmatpush1.bf16.msra.mxu0 %v2523
  %3422 = vmatprep.subr.bf16.mxu0 %v2532
  %3423 = vmatpush1.bf16.msra.mxu0 %v2531
  %3424 = vmatprep.subr.bf16.mxu0 %v2540
  %3425 = vmatpush1.bf16.msra.mxu0 %v2539
  %3426 = vmatprep.subr.bf16.mxu0 %v2548
  %3427 = vmatpush1.bf16.msra.mxu0 %v2547
  %3428 = vmatprep.subr.bf16.mxu0 %v2556
  %3429 = vmatpush1.bf16.msra.mxu0 %v2555
  %3430 = vmatprep.subr.bf16.mxu0 %v2564
  %3431 = vmatpush1.bf16.msra.mxu0 %v2563
  %3432 = vmatprep.mubr.bf16.mxu0 %v602
  %3433 = vmatmul.mubr.bf16.gmra.mrb[0].mxu0 %v601
  %v3434 = vpop.f32.mrb[0].mxu0
  %v3435 = vadd.f32 %v3394, %v3434
  %v3436 = vpop.f32.mrb[0].mxu0
  %v3437 = vadd.f32 %v3396, %v3436
  %v3438 = vpop.f32.mrb[0].mxu0
  %v3439 = vpop.f32.mrb[0].mxu0
  %3440 = vdwg.mxu0
  %v3441 = vsel %vm387, %v3066, 0.0
  %v3442 = vrot.slane %v3441, 4
  %v3443 = vadd.f32 %v3441, %v3442
  %v3444 = vrot.slane %v3443, 2
  %v3445 = vadd.f32 %v3443, %v3444
  %v3446 = vrot.slane %v3445, 1
  %v3447 = vadd.f32 %v3445, %v3446
  %v3448 = vsel %vm387, %v3068, 0.0
  %v3449 = vrot.slane %v3448, 4
  %v3450 = vadd.f32 %v3448, %v3449
  %v3451 = vrot.slane %v3450, 2
  %v3452 = vadd.f32 %v3450, %v3451
  %v3453 = vrot.slane %v3452, 1
  %v3454 = vadd.f32 %v3452, %v3453
  %v3455 = vsel %vm387, %v3189, 0.0
  %v3456 = vrot.slane %v3455, 4
  %v3457 = vadd.f32 %v3455, %v3456
  %v3458 = vrot.slane %v3457, 2
  %v3459 = vadd.f32 %v3457, %v3458
  %v3460 = vrot.slane %v3459, 1
  %v3461 = vadd.f32 %v3459, %v3460
  %v3462 = vsel %vm387, %v3191, 0.0
  %v3463 = vrot.slane %v3462, 4
  %v3464 = vadd.f32 %v3462, %v3463
  %v3465 = vrot.slane %v3464, 2
  %v3466 = vadd.f32 %v3464, %v3465
  %v3467 = vrot.slane %v3466, 1
  %v3468 = vadd.f32 %v3466, %v3467
  %v3469 = vsel %vm387, %v3312, 0.0
  %v3470 = vrot.slane %v3469, 4
  %v3471 = vadd.f32 %v3469, %v3470
  %v3472 = vrot.slane %v3471, 2
  %v3473 = vadd.f32 %v3471, %v3472
  %v3474 = vrot.slane %v3473, 1
  %v3475 = vadd.f32 %v3473, %v3474
  %v3476 = vsel %vm387, %v3314, 0.0
  %v3477 = vrot.slane %v3476, 4
  %v3478 = vadd.f32 %v3476, %v3477
  %v3479 = vrot.slane %v3478, 2
  %v3480 = vadd.f32 %v3478, %v3479
  %v3481 = vrot.slane %v3480, 1
  %v3482 = vadd.f32 %v3480, %v3481
  %v3483 = vsel %vm387, %v3435, 0.0
  %v3484 = vrot.slane %v3483, 4
  %v3485 = vadd.f32 %v3483, %v3484
  %v3486 = vrot.slane %v3485, 2
  %v3487 = vadd.f32 %v3485, %v3486
  %v3488 = vrot.slane %v3487, 1
  %v3489 = vadd.f32 %v3487, %v3488
  %v3490 = vsel %vm387, %v3437, 0.0
  %v3491 = vrot.slane %v3490, 4
  %v3492 = vadd.f32 %v3490, %v3491
  %v3493 = vrot.slane %v3492, 2
  %v3494 = vadd.f32 %v3492, %v3493
  %v3495 = vrot.slane %v3494, 1
  %v3496 = vadd.f32 %v3494, %v3495
  %v3497 = vmul.f32 %v3447, %v430
  %v3498 = vmul.f32 %v3454, %v430
  %v3499 = vmul.f32 %v3461, %v430
  %v3500 = vmul.f32 %v3468, %v430
  %v3501 = vmul.f32 %v3475, %v430
  %v3502 = vmul.f32 %v3482, %v430
  %v3503 = vmul.f32 %v3489, %v430
  %v3504 = vmul.f32 %v3496, %v430
  %v3505 = vsub.f32 %v3066, %v3497
  %v3506 = vsub.f32 %v3068, %v3498
  %v3507 = vsub.f32 %v3189, %v3499
  %v3508 = vsub.f32 %v3191, %v3500
  %v3509 = vsub.f32 %v3312, %v3501
  %v3510 = vsub.f32 %v3314, %v3502
  %v3511 = vsub.f32 %v3435, %v3503
  %v3512 = vsub.f32 %v3437, %v3504
  %v3513 = vmul.f32 %v3505, %v3505
  %v3514 = vmul.f32 %v3506, %v3506
  %v3515 = vmul.f32 %v3507, %v3507
  %v3516 = vmul.f32 %v3508, %v3508
  %v3517 = vmul.f32 %v3509, %v3509
  %v3518 = vmul.f32 %v3510, %v3510
  %v3519 = vmul.f32 %v3511, %v3511
  %v3520 = vmul.f32 %v3512, %v3512
  %v3521 = vsel %vm387, %v3513, 0.0
  %v3522 = vrot.slane %v3521, 4
  %v3523 = vadd.f32 %v3521, %v3522
  %v3524 = vrot.slane %v3523, 2
  %v3525 = vadd.f32 %v3523, %v3524
  %v3526 = vrot.slane %v3525, 1
  %v3527 = vadd.f32 %v3525, %v3526
  %v3528 = vsel %vm387, %v3514, 0.0
  %v3529 = vrot.slane %v3528, 4
  %v3530 = vadd.f32 %v3528, %v3529
  %v3531 = vrot.slane %v3530, 2
  %v3532 = vadd.f32 %v3530, %v3531
  %v3533 = vrot.slane %v3532, 1
  %v3534 = vadd.f32 %v3532, %v3533
  %v3535 = vsel %vm387, %v3515, 0.0
  %v3536 = vrot.slane %v3535, 4
  %v3537 = vadd.f32 %v3535, %v3536
  %v3538 = vrot.slane %v3537, 2
  %v3539 = vadd.f32 %v3537, %v3538
  %v3540 = vrot.slane %v3539, 1
  %v3541 = vadd.f32 %v3539, %v3540
  %v3542 = vsel %vm387, %v3516, 0.0
  %v3543 = vrot.slane %v3542, 4
  %v3544 = vadd.f32 %v3542, %v3543
  %v3545 = vrot.slane %v3544, 2
  %v3546 = vadd.f32 %v3544, %v3545
  %v3547 = vrot.slane %v3546, 1
  %v3548 = vadd.f32 %v3546, %v3547
  %v3549 = vsel %vm387, %v3517, 0.0
  %v3550 = vrot.slane %v3549, 4
  %v3551 = vadd.f32 %v3549, %v3550
  %v3552 = vrot.slane %v3551, 2
  %v3553 = vadd.f32 %v3551, %v3552
  %v3554 = vrot.slane %v3553, 1
  %v3555 = vadd.f32 %v3553, %v3554
  %v3556 = vsel %vm387, %v3518, 0.0
  %v3557 = vrot.slane %v3556, 4
  %v3558 = vadd.f32 %v3556, %v3557
  %v3559 = vrot.slane %v3558, 2
  %v3560 = vadd.f32 %v3558, %v3559
  %v3561 = vrot.slane %v3560, 1
  %v3562 = vadd.f32 %v3560, %v3561
  %v3563 = vsel %vm387, %v3519, 0.0
  %v3564 = vrot.slane %v3563, 4
  %v3565 = vadd.f32 %v3563, %v3564
  %v3566 = vrot.slane %v3565, 2
  %v3567 = vadd.f32 %v3565, %v3566
  %v3568 = vrot.slane %v3567, 1
  %v3569 = vadd.f32 %v3567, %v3568
  %v3570 = vsel %vm387, %v3520, 0.0
  %v3571 = vrot.slane %v3570, 4
  %v3572 = vadd.f32 %v3570, %v3571
  %v3573 = vrot.slane %v3572, 2
  %v3574 = vadd.f32 %v3572, %v3573
  %v3575 = vrot.slane %v3574, 1
  %v3576 = vadd.f32 %v3574, %v3575
  %v3577 = vmul.f32 %v3527, %v430
  %v3578 = vmul.f32 %v3534, %v430
  %v3579 = vmul.f32 %v3541, %v430
  %v3580 = vmul.f32 %v3548, %v430
  %v3581 = vmul.f32 %v3555, %v430
  %v3582 = vmul.f32 %v3562, %v430
  %v3583 = vmul.f32 %v3569, %v430
  %v3584 = vmul.f32 %v3576, %v430
  %v3585 = vadd.f32 %v3577, 1e-05
  %v3586 = vadd.f32 %v3578, 1e-05
  %v3587 = vadd.f32 %v3579, 1e-05
  %v3588 = vadd.f32 %v3580, 1e-05
  %v3589 = vadd.f32 %v3581, 1e-05
  %v3590 = vadd.f32 %v3582, 1e-05
  %v3591 = vadd.f32 %v3583, 1e-05
  %v3592 = vadd.f32 %v3584, 1e-05
  %v3593 = vrsqrt.pop %v3585
  %v3594 = vrsqrt.pop %v3586
  %v3595 = vrsqrt.pop %v3587
  %v3596 = vrsqrt.pop %v3588
  %v3597 = vrsqrt.pop %v3589
  %v3598 = vrsqrt.pop %v3590
  %v3599 = vrsqrt.pop %v3591
  %v3600 = vrsqrt.pop %v3592
  %v3601 = vmul.f32 %v3505, %v3593
  %v3602 = vmul.f32 %v3506, %v3594
  %v3603 = vmul.f32 %v3507, %v3595
  %v3604 = vmul.f32 %v3508, %v3596
  %v3605 = vmul.f32 %v3509, %v3597
  %v3606 = vmul.f32 %v3510, %v3598
  %v3607 = vmul.f32 %v3511, %v3599
  %v3608 = vmul.f32 %v3512, %v3600
  %v3609 = vld [vmem:[%s19] sm:$0xff]
  %v3611 = vlaneseq
  %v3612 = vshrl.u32 %v3611, 7
  %v3613 = vsub.s32 0, %v3612
  %v3614 = vrot.slane %v3609, %v3613
  %v3615 = vlaneseq
  %v3616 = vshrl.u32 %v3615, 7
  %v3617 = vsub.s32 1, %v3616
  %v3618 = vrot.slane %v3609, %v3617
  %v3619 = vlaneseq
  %v3620 = vshrl.u32 %v3619, 7
  %v3621 = vsub.s32 2, %v3620
  %v3622 = vrot.slane %v3609, %v3621
  %v3623 = vlaneseq
  %v3624 = vshrl.u32 %v3623, 7
  %v3625 = vsub.s32 3, %v3624
  %v3626 = vrot.slane %v3609, %v3625
  %v3627 = vlaneseq
  %v3628 = vshrl.u32 %v3627, 7
  %v3629 = vsub.s32 4, %v3628
  %v3630 = vrot.slane %v3609, %v3629
  %v3631 = vlaneseq
  %v3632 = vshrl.u32 %v3631, 7
  %v3633 = vsub.s32 5, %v3632
  %v3634 = vrot.slane %v3609, %v3633
  %v3635 = vlaneseq
  %v3636 = vshrl.u32 %v3635, 7
  %v3637 = vsub.s32 6, %v3636
  %v3638 = vrot.slane %v3609, %v3637
  %v3639 = vlaneseq
  %v3640 = vshrl.u32 %v3639, 7
  %v3641 = vsub.s32 7, %v3640
  %v3642 = vrot.slane %v3609, %v3641
  %v3651 = vmul.f32 %v3601, %v3614
  %v3652 = vmul.f32 %v3602, %v3618
  %v3653 = vmul.f32 %v3603, %v3622
  %v3654 = vmul.f32 %v3604, %v3626
  %v3655 = vmul.f32 %v3605, %v3630
  %v3656 = vmul.f32 %v3606, %v3634
  %v3657 = vmul.f32 %v3607, %v3638
  %v3658 = vmul.f32 %v3608, %v3642
  %v3659 = vld [vmem:[%s21] sm:$0xff]
  %v3661 = vlaneseq
  %v3662 = vshrl.u32 %v3661, 7
  %v3663 = vsub.s32 0, %v3662
  %v3664 = vrot.slane %v3659, %v3663
  %v3665 = vlaneseq
  %v3666 = vshrl.u32 %v3665, 7
  %v3667 = vsub.s32 1, %v3666
  %v3668 = vrot.slane %v3659, %v3667
  %v3669 = vlaneseq
  %v3670 = vshrl.u32 %v3669, 7
  %v3671 = vsub.s32 2, %v3670
  %v3672 = vrot.slane %v3659, %v3671
  %v3673 = vlaneseq
  %v3674 = vshrl.u32 %v3673, 7
  %v3675 = vsub.s32 3, %v3674
  %v3676 = vrot.slane %v3659, %v3675
  %v3677 = vlaneseq
  %v3678 = vshrl.u32 %v3677, 7
  %v3679 = vsub.s32 4, %v3678
  %v3680 = vrot.slane %v3659, %v3679
  %v3681 = vlaneseq
  %v3682 = vshrl.u32 %v3681, 7
  %v3683 = vsub.s32 5, %v3682
  %v3684 = vrot.slane %v3659, %v3683
  %v3685 = vlaneseq
  %v3686 = vshrl.u32 %v3685, 7
  %v3687 = vsub.s32 6, %v3686
  %v3688 = vrot.slane %v3659, %v3687
  %v3689 = vlaneseq
  %v3690 = vshrl.u32 %v3689, 7
  %v3691 = vsub.s32 7, %v3690
  %v3692 = vrot.slane %v3659, %v3691
  %v3701 = vadd.f32 %v3651, %v3664
  %v3702 = vadd.f32 %v3652, %v3668
  %v3703 = vadd.f32 %v3653, %v3672
  %v3704 = vadd.f32 %v3654, %v3676
  %v3705 = vadd.f32 %v3655, %v3680
  %v3706 = vadd.f32 %v3656, %v3684
  %v3707 = vadd.f32 %v3657, %v3688
  %v3708 = vadd.f32 %v3658, %v3692
  %v3709 = vmax.f32 %v3701, 0.0
  %v3710 = vmax.f32 %v3702, 0.0
  %v3711 = vmax.f32 %v3703, 0.0
  %v3712 = vmax.f32 %v3704, 0.0
  %v3713 = vmax.f32 %v3705, 0.0
  %v3714 = vmax.f32 %v3706, 0.0
  %v3715 = vmax.f32 %v3707, 0.0
  %v3716 = vmax.f32 %v3708, 0.0
  %v3717 = vld [vmem:[%s23] sm:$0xff]
  %s3718 = scalar_lea.vmem %s23, 8
  %v3719 = vld [vmem:[%s3718] sm:$0xff]
  %vm3720 = vcmask 15360
  %v3722 = vsel %vm3720, %v3719, 0
  %v3725 = vsel %vm387, %v3711, 0
  %v3728 = vsel %vm387, %v3712, 0
  %3730 = vmatprep.subr.mxu0 %v3728
  %3731 = vmatpush1.msra.mxu0 %v3725
  %3732 = vmatprep.subr.mxu0 0.0
  %3733 = vmatpush1.msra.mxu0 0.0
  %3734 = vmatprep.subr.mxu0 0.0
  %3735 = vmatpush1.msra.mxu0 0.0
  %3736 = vmatprep.subr.mxu0 0.0
  %3737 = vmatpush1.msra.mxu0 0.0
  %3738 = vmatprep.subr.mxu0 0.0
  %3739 = vmatpush1.msra.mxu0 0.0
  %3740 = vmatprep.subr.mxu0 0.0
  %3741 = vmatpush1.msra.mxu0 0.0
  %3742 = vmatprep.subr.mxu0 0.0
  %3743 = vmatpush1.msra.mxu0 0.0
  %3744 = vmatprep.subr.mxu0 0.0
  %3745 = vmatpush1.msra.mxu0 0.0
  %3746 = vmatprep.subr.mxu0 0.0
  %3747 = vmatpush1.msra.mxu0 0.0
  %3748 = vmatprep.subr.mxu0 0.0
  %3749 = vmatpush1.msra.mxu0 0.0
  %3750 = vmatprep.subr.mxu0 0.0
  %3751 = vmatpush1.msra.mxu0 0.0
  %3752 = vmatprep.subr.mxu0 0.0
  %3753 = vmatpush1.msra.mxu0 0.0
  %3754 = vmatprep.subr.mxu0 0.0
  %3755 = vmatpush1.msra.mxu0 0.0
  %3756 = vmatprep.subr.mxu0 0.0
  %3757 = vmatpush1.msra.mxu0 0.0
  %3758 = vmatprep.subr.mxu0 0.0
  %3759 = vmatpush1.msra.mxu0 0.0
  %3760 = vmatprep.subr.mxu0 0.0
  %3761 = vmatpush1.msra.mxu0 0.0
  %3762 = vmatprep.subr.mxu0 0.0
  %3763 = vmatpush1.msra.mxu0 0.0
  %3764 = vmatprep.subr.mxu0 0.0
  %3765 = vmatpush1.msra.mxu0 0.0
  %3766 = vmatprep.subr.mxu0 0.0
  %3767 = vmatpush1.msra.mxu0 0.0
  %3768 = vmatprep.subr.mxu0 0.0
  %3769 = vmatpush1.msra.mxu0 0.0
  %3770 = vmatprep.subr.mxu0 0.0
  %3771 = vmatpush1.msra.mxu0 0.0
  %3772 = vmatprep.subr.mxu0 0.0
  %3773 = vmatpush1.msra.mxu0 0.0
  %3774 = vmatprep.subr.mxu0 0.0
  %3775 = vmatpush1.msra.mxu0 0.0
  %3776 = vmatprep.subr.mxu0 0.0
  %3777 = vmatpush1.msra.mxu0 0.0
  %3778 = vmatprep.subr.mxu0 0.0
  %3779 = vmatpush1.msra.mxu0 0.0
  %3780 = vmatprep.subr.mxu0 0.0
  %3781 = vmatpush1.msra.mxu0 0.0
  %3782 = vmatprep.subr.mxu0 0.0
  %3783 = vmatpush1.msra.mxu0 0.0
  %3784 = vmatprep.subr.mxu0 0.0
  %3785 = vmatpush1.msra.mxu0 0.0
  %3786 = vmatprep.subr.mxu0 0.0
  %3787 = vmatpush1.msra.mxu0 0.0
  %3788 = vmatprep.subr.mxu0 0.0
  %3789 = vmatpush1.msra.mxu0 0.0
  %3790 = vmatprep.subr.mxu0 0.0
  %3791 = vmatpush1.msra.mxu0 0.0
  %3792 = vmatprep.subr.mxu0 0.0
  %3793 = vmatpush1.msra.mxu0 0.0
  %3794 = vmatprep.mubr.f32.mxu0 0.0
  %3795 = vmatmul.mubr.f32.gmra.mrb[0].mxu0 %v3722
  %v3796 = vpop.f32.mrb[0].mxu0
  %v3797 = vadd.f32 0.0, %v3796
  %v3798 = vpop.f32.mrb[0].mxu0
  %v3799 = vadd.f32 0.0, %v3798
  %3800 = vdwg.mxu0
  %v3802 = vsel %vm3720, %v3717, 0
  %v3805 = vsel %vm387, %v3709, 0
  %v3808 = vsel %vm387, %v3710, 0
  %3810 = vmatprep.subr.mxu0 %v3808
  %3811 = vmatpush1.msra.mxu0 %v3805
  %3812 = vmatprep.subr.mxu0 0.0
  %3813 = vmatpush1.msra.mxu0 0.0
  %3814 = vmatprep.subr.mxu0 0.0
  %3815 = vmatpush1.msra.mxu0 0.0
  %3816 = vmatprep.subr.mxu0 0.0
  %3817 = vmatpush1.msra.mxu0 0.0
  %3818 = vmatprep.subr.mxu0 0.0
  %3819 = vmatpush1.msra.mxu0 0.0
  %3820 = vmatprep.subr.mxu0 0.0
  %3821 = vmatpush1.msra.mxu0 0.0
  %3822 = vmatprep.subr.mxu0 0.0
  %3823 = vmatpush1.msra.mxu0 0.0
  %3824 = vmatprep.subr.mxu0 0.0
  %3825 = vmatpush1.msra.mxu0 0.0
  %3826 = vmatprep.subr.mxu0 0.0
  %3827 = vmatpush1.msra.mxu0 0.0
  %3828 = vmatprep.subr.mxu0 0.0
  %3829 = vmatpush1.msra.mxu0 0.0
  %3830 = vmatprep.subr.mxu0 0.0
  %3831 = vmatpush1.msra.mxu0 0.0
  %3832 = vmatprep.subr.mxu0 0.0
  %3833 = vmatpush1.msra.mxu0 0.0
  %3834 = vmatprep.subr.mxu0 0.0
  %3835 = vmatpush1.msra.mxu0 0.0
  %3836 = vmatprep.subr.mxu0 0.0
  %3837 = vmatpush1.msra.mxu0 0.0
  %3838 = vmatprep.subr.mxu0 0.0
  %3839 = vmatpush1.msra.mxu0 0.0
  %3840 = vmatprep.subr.mxu0 0.0
  %3841 = vmatpush1.msra.mxu0 0.0
  %3842 = vmatprep.subr.mxu0 0.0
  %3843 = vmatpush1.msra.mxu0 0.0
  %3844 = vmatprep.subr.mxu0 0.0
  %3845 = vmatpush1.msra.mxu0 0.0
  %3846 = vmatprep.subr.mxu0 0.0
  %3847 = vmatpush1.msra.mxu0 0.0
  %3848 = vmatprep.subr.mxu0 0.0
  %3849 = vmatpush1.msra.mxu0 0.0
  %3850 = vmatprep.subr.mxu0 0.0
  %3851 = vmatpush1.msra.mxu0 0.0
  %3852 = vmatprep.subr.mxu0 0.0
  %3853 = vmatpush1.msra.mxu0 0.0
  %3854 = vmatprep.subr.mxu0 0.0
  %3855 = vmatpush1.msra.mxu0 0.0
  %3856 = vmatprep.subr.mxu0 0.0
  %3857 = vmatpush1.msra.mxu0 0.0
  %3858 = vmatprep.subr.mxu0 0.0
  %3859 = vmatpush1.msra.mxu0 0.0
  %3860 = vmatprep.subr.mxu0 0.0
  %3861 = vmatpush1.msra.mxu0 0.0
  %3862 = vmatprep.subr.mxu0 0.0
  %3863 = vmatpush1.msra.mxu0 0.0
  %3864 = vmatprep.subr.mxu0 0.0
  %3865 = vmatpush1.msra.mxu0 0.0
  %3866 = vmatprep.subr.mxu0 0.0
  %3867 = vmatpush1.msra.mxu0 0.0
  %3868 = vmatprep.subr.mxu0 0.0
  %3869 = vmatpush1.msra.mxu0 0.0
  %3870 = vmatprep.subr.mxu0 0.0
  %3871 = vmatpush1.msra.mxu0 0.0
  %3872 = vmatprep.subr.mxu0 0.0
  %3873 = vmatpush1.msra.mxu0 0.0
  %3874 = vmatprep.mubr.f32.mxu0 0.0
  %3875 = vmatmul.mubr.f32.gmra.mrb[0].mxu0 %v3802
  %v3876 = vpop.f32.mrb[0].mxu0
  %v3877 = vadd.f32 %v3797, %v3876
  %v3878 = vpop.f32.mrb[0].mxu0
  %v3879 = vadd.f32 %v3799, %v3878
  %3880 = vdwg.mxu0
  %s3881 = scalar_lea.vmem %s23, 16
  %v3882 = vld [vmem:[%s3881] sm:$0xff]
  %v3884 = vsel %vm3720, %v3882, 0
  %v3887 = vsel %vm387, %v3713, 0
  %v3890 = vsel %vm387, %v3714, 0
  %3892 = vmatprep.subr.mxu0 %v3890
  %3893 = vmatpush1.msra.mxu0 %v3887
  %3894 = vmatprep.subr.mxu0 0.0
  %3895 = vmatpush1.msra.mxu0 0.0
  %3896 = vmatprep.subr.mxu0 0.0
  %3897 = vmatpush1.msra.mxu0 0.0
  %3898 = vmatprep.subr.mxu0 0.0
  %3899 = vmatpush1.msra.mxu0 0.0
  %3900 = vmatprep.subr.mxu0 0.0
  %3901 = vmatpush1.msra.mxu0 0.0
  %3902 = vmatprep.subr.mxu0 0.0
  %3903 = vmatpush1.msra.mxu0 0.0
  %3904 = vmatprep.subr.mxu0 0.0
  %3905 = vmatpush1.msra.mxu0 0.0
  %3906 = vmatprep.subr.mxu0 0.0
  %3907 = vmatpush1.msra.mxu0 0.0
  %3908 = vmatprep.subr.mxu0 0.0
  %3909 = vmatpush1.msra.mxu0 0.0
  %3910 = vmatprep.subr.mxu0 0.0
  %3911 = vmatpush1.msra.mxu0 0.0
  %3912 = vmatprep.subr.mxu0 0.0
  %3913 = vmatpush1.msra.mxu0 0.0
  %3914 = vmatprep.subr.mxu0 0.0
  %3915 = vmatpush1.msra.mxu0 0.0
  %3916 = vmatprep.subr.mxu0 0.0
  %3917 = vmatpush1.msra.mxu0 0.0
  %3918 = vmatprep.subr.mxu0 0.0
  %3919 = vmatpush1.msra.mxu0 0.0
  %3920 = vmatprep.subr.mxu0 0.0
  %3921 = vmatpush1.msra.mxu0 0.0
  %3922 = vmatprep.subr.mxu0 0.0
  %3923 = vmatpush1.msra.mxu0 0.0
  %3924 = vmatprep.subr.mxu0 0.0
  %3925 = vmatpush1.msra.mxu0 0.0
  %3926 = vmatprep.subr.mxu0 0.0
  %3927 = vmatpush1.msra.mxu0 0.0
  %3928 = vmatprep.subr.mxu0 0.0
  %3929 = vmatpush1.msra.mxu0 0.0
  %3930 = vmatprep.subr.mxu0 0.0
  %3931 = vmatpush1.msra.mxu0 0.0
  %3932 = vmatprep.subr.mxu0 0.0
  %3933 = vmatpush1.msra.mxu0 0.0
  %3934 = vmatprep.subr.mxu0 0.0
  %3935 = vmatpush1.msra.mxu0 0.0
  %3936 = vmatprep.subr.mxu0 0.0
  %3937 = vmatpush1.msra.mxu0 0.0
  %3938 = vmatprep.subr.mxu0 0.0
  %3939 = vmatpush1.msra.mxu0 0.0
  %3940 = vmatprep.subr.mxu0 0.0
  %3941 = vmatpush1.msra.mxu0 0.0
  %3942 = vmatprep.subr.mxu0 0.0
  %3943 = vmatpush1.msra.mxu0 0.0
  %3944 = vmatprep.subr.mxu0 0.0
  %3945 = vmatpush1.msra.mxu0 0.0
  %3946 = vmatprep.subr.mxu0 0.0
  %3947 = vmatpush1.msra.mxu0 0.0
  %3948 = vmatprep.subr.mxu0 0.0
  %3949 = vmatpush1.msra.mxu0 0.0
  %3950 = vmatprep.subr.mxu0 0.0
  %3951 = vmatpush1.msra.mxu0 0.0
  %3952 = vmatprep.subr.mxu0 0.0
  %3953 = vmatpush1.msra.mxu0 0.0
  %3954 = vmatprep.subr.mxu0 0.0
  %3955 = vmatpush1.msra.mxu0 0.0
  %3956 = vmatprep.mubr.f32.mxu0 0.0
  %3957 = vmatmul.mubr.f32.gmra.mrb[0].mxu0 %v3884
  %v3958 = vpop.f32.mrb[0].mxu0
  %v3959 = vadd.f32 0.0, %v3958
  %v3960 = vpop.f32.mrb[0].mxu0
  %v3961 = vadd.f32 0.0, %v3960
  %3962 = vdwg.mxu0
  %v3963 = vadd.f32 %v3877, %v3959
  %v3964 = vadd.f32 %v3879, %v3961
  %s3965 = scalar_lea.vmem %s23, 24
  %v3966 = vld [vmem:[%s3965] sm:$0xff]
  %v3968 = vsel %vm3720, %v3966, 0
  %v3971 = vsel %vm387, %v3715, 0
  %v3974 = vsel %vm387, %v3716, 0
  %3976 = vmatprep.subr.mxu0 %v3974
  %3977 = vmatpush1.msra.mxu0 %v3971
  %3978 = vmatprep.subr.mxu0 0.0
  %3979 = vmatpush1.msra.mxu0 0.0
  %3980 = vmatprep.subr.mxu0 0.0
  %3981 = vmatpush1.msra.mxu0 0.0
  %3982 = vmatprep.subr.mxu0 0.0
  %3983 = vmatpush1.msra.mxu0 0.0
  %3984 = vmatprep.subr.mxu0 0.0
  %3985 = vmatpush1.msra.mxu0 0.0
  %3986 = vmatprep.subr.mxu0 0.0
  %3987 = vmatpush1.msra.mxu0 0.0
  %3988 = vmatprep.subr.mxu0 0.0
  %3989 = vmatpush1.msra.mxu0 0.0
  %3990 = vmatprep.subr.mxu0 0.0
  %3991 = vmatpush1.msra.mxu0 0.0
  %3992 = vmatprep.subr.mxu0 0.0
  %3993 = vmatpush1.msra.mxu0 0.0
  %3994 = vmatprep.subr.mxu0 0.0
  %3995 = vmatpush1.msra.mxu0 0.0
  %3996 = vmatprep.subr.mxu0 0.0
  %3997 = vmatpush1.msra.mxu0 0.0
  %3998 = vmatprep.subr.mxu0 0.0
  %3999 = vmatpush1.msra.mxu0 0.0
  %4000 = vmatprep.subr.mxu0 0.0
  %4001 = vmatpush1.msra.mxu0 0.0
  %4002 = vmatprep.subr.mxu0 0.0
  %4003 = vmatpush1.msra.mxu0 0.0
  %4004 = vmatprep.subr.mxu0 0.0
  %4005 = vmatpush1.msra.mxu0 0.0
  %4006 = vmatprep.subr.mxu0 0.0
  %4007 = vmatpush1.msra.mxu0 0.0
  %4008 = vmatprep.subr.mxu0 0.0
  %4009 = vmatpush1.msra.mxu0 0.0
  %4010 = vmatprep.subr.mxu0 0.0
  %4011 = vmatpush1.msra.mxu0 0.0
  %4012 = vmatprep.subr.mxu0 0.0
  %4013 = vmatpush1.msra.mxu0 0.0
  %4014 = vmatprep.subr.mxu0 0.0
  %4015 = vmatpush1.msra.mxu0 0.0
  %4016 = vmatprep.subr.mxu0 0.0
  %4017 = vmatpush1.msra.mxu0 0.0
  %4018 = vmatprep.subr.mxu0 0.0
  %4019 = vmatpush1.msra.mxu0 0.0
  %4020 = vmatprep.subr.mxu0 0.0
  %4021 = vmatpush1.msra.mxu0 0.0
  %4022 = vmatprep.subr.mxu0 0.0
  %4023 = vmatpush1.msra.mxu0 0.0
  %4024 = vmatprep.subr.mxu0 0.0
  %4025 = vmatpush1.msra.mxu0 0.0
  %4026 = vmatprep.subr.mxu0 0.0
  %4027 = vmatpush1.msra.mxu0 0.0
  %4028 = vmatprep.subr.mxu0 0.0
  %4029 = vmatpush1.msra.mxu0 0.0
  %4030 = vmatprep.subr.mxu0 0.0
  %4031 = vmatpush1.msra.mxu0 0.0
  %4032 = vmatprep.subr.mxu0 0.0
  %4033 = vmatpush1.msra.mxu0 0.0
  %4034 = vmatprep.subr.mxu0 0.0
  %4035 = vmatpush1.msra.mxu0 0.0
  %4036 = vmatprep.subr.mxu0 0.0
  %4037 = vmatpush1.msra.mxu0 0.0
  %4038 = vmatprep.subr.mxu0 0.0
  %4039 = vmatpush1.msra.mxu0 0.0
  %4040 = vmatprep.mubr.f32.mxu0 0.0
  %4041 = vmatmul.mubr.f32.gmra.mrb[0].mxu0 %v3968
  %v4042 = vpop.f32.mrb[0].mxu0
  %v4043 = vadd.f32 0.0, %v4042
  %v4044 = vpop.f32.mrb[0].mxu0
  %v4045 = vadd.f32 0.0, %v4044
  %4046 = vdwg.mxu0
  %v4047 = vadd.f32 %v3963, %v4043
  %v4048 = vadd.f32 %v3964, %v4045
  %v4049 = vpack.c.bf16 %v4047, %v4047
  %v4050 = vpack.c.bf16 %v4048, %v4048
  %v4051 = vld [vmem:[%s25] sm:$0xff]
  %v4052 = vld [vmem:[%s25 + $0x8] sm:$0xf]
  %v4053 = vld [vmem:[%s25 + $0xc] sm:$0xff]
  %v4054 = vld [vmem:[%s25 + $0x14] sm:$0xf]
  %v4055 = vld [vmem:[%s25 + $0x18] sm:$0xff]
  %v4056 = vld [vmem:[%s25 + $0x20] sm:$0xf]
  %v4057 = vld [vmem:[%s25 + $0x24] sm:$0xff]
  %v4058 = vld [vmem:[%s25 + $0x2c] sm:$0xf]
  %v4059 = vld [vmem:[%s25 + $0x30] sm:$0xff]
  %v4060 = vld [vmem:[%s25 + $0x38] sm:$0xf]
  %v4061 = vld [vmem:[%s25 + $0x3c] sm:$0xff]
  %v4062 = vld [vmem:[%s25 + $0x44] sm:$0xf]
  %v4063 = vld [vmem:[%s25 + $0x48] sm:$0xff]
  %v4064 = vld [vmem:[%s25 + $0x50] sm:$0xf]
  %v4065 = vld [vmem:[%s25 + $0x54] sm:$0xff]
  %v4066 = vld [vmem:[%s25 + $0x5c] sm:$0xf]
  %v4067 = vld [vmem:[%s25 + $0x60] sm:$0xff]
  %v4068 = vld [vmem:[%s25 + $0x68] sm:$0xf]
  %v4069 = vld [vmem:[%s25 + $0x6c] sm:$0xff]
  %v4070 = vld [vmem:[%s25 + $0x74] sm:$0xf]
  %v4071 = vld [vmem:[%s25 + $0x78] sm:$0xff]
  %v4072 = vld [vmem:[%s25 + $0x80] sm:$0xf]
  %v4073 = vld [vmem:[%s25 + $0x84] sm:$0xff]
  %v4074 = vld [vmem:[%s25 + $0x8c] sm:$0xf]
  %v4075 = vld [vmem:[%s25 + $0x90] sm:$0xff]
  %v4076 = vld [vmem:[%s25 + $0x98] sm:$0xf]
  %v4077 = vld [vmem:[%s25 + $0x9c] sm:$0xff]
  %v4078 = vld [vmem:[%s25 + $0xa4] sm:$0xf]
  %v4079 = vld [vmem:[%s25 + $0xa8] sm:$0xff]
  %v4080 = vld [vmem:[%s25 + $0xb0] sm:$0xf]
  %v4081 = vld [vmem:[%s25 + $0xb4] sm:$0xff]
  %v4082 = vld [vmem:[%s25 + $0xbc] sm:$0xf]
  %v4083 = vld [vmem:[%s25 + $0xc0] sm:$0xff]
  %v4084 = vld [vmem:[%s25 + $0xc8] sm:$0xf]
  %v4085 = vld [vmem:[%s25 + $0xcc] sm:$0xff]
  %v4086 = vld [vmem:[%s25 + $0xd4] sm:$0xf]
  %v4087 = vld [vmem:[%s25 + $0xd8] sm:$0xff]
  %v4088 = vld [vmem:[%s25 + $0xe0] sm:$0xf]
  %v4089 = vld [vmem:[%s25 + $0xe4] sm:$0xff]
  %v4090 = vld [vmem:[%s25 + $0xec] sm:$0xf]
  %v4091 = vld [vmem:[%s25 + $0xf0] sm:$0xff]
  %v4092 = vld [vmem:[%s25 + $0xf8] sm:$0xf]
  %v4093 = vld [vmem:[%s25 + $0xfc] sm:$0xff]
  %v4094 = vld [vmem:[%s25 + $0x104] sm:$0xf]
  %v4095 = vld [vmem:[%s25 + $0x108] sm:$0xff]
  %v4096 = vld [vmem:[%s25 + $0x110] sm:$0xf]
  %v4097 = vld [vmem:[%s25 + $0x114] sm:$0xff]
  %v4098 = vld [vmem:[%s25 + $0x11c] sm:$0xf]
  %v4099 = vld [vmem:[%s25 + $0x120] sm:$0xff]
  %v4100 = vld [vmem:[%s25 + $0x128] sm:$0xf]
  %v4101 = vld [vmem:[%s25 + $0x12c] sm:$0xff]
  %v4102 = vld [vmem:[%s25 + $0x134] sm:$0xf]
  %v4103 = vld [vmem:[%s25 + $0x138] sm:$0xff]
  %v4104 = vld [vmem:[%s25 + $0x140] sm:$0xf]
  %v4105 = vld [vmem:[%s25 + $0x144] sm:$0xff]
  %v4106 = vld [vmem:[%s25 + $0x14c] sm:$0xf]
  %v4107 = vld [vmem:[%s25 + $0x150] sm:$0xff]
  %v4108 = vld [vmem:[%s25 + $0x158] sm:$0xf]
  %v4109 = vld [vmem:[%s25 + $0x15c] sm:$0xff]
  %v4110 = vld [vmem:[%s25 + $0x164] sm:$0xf]
  %v4111 = vld [vmem:[%s25 + $0x168] sm:$0xff]
  %v4112 = vld [vmem:[%s25 + $0x170] sm:$0xf]
  %v4113 = vld [vmem:[%s25 + $0x174] sm:$0xff]
  %v4114 = vld [vmem:[%s25 + $0x17c] sm:$0xf]
  %v4179 = vunpack.c.l.b16 %v4051
  %v4180 = vunpack.c.h.b16 %v4051
  %v4181 = vunpack.c.l.b16 %v4052
  %v4182 = vunpack.c.l.b16 %v4053
  %v4183 = vunpack.c.h.b16 %v4053
  %v4184 = vunpack.c.l.b16 %v4054
  %v4185 = vunpack.c.l.b16 %v4055
  %v4186 = vunpack.c.h.b16 %v4055
  %v4187 = vunpack.c.l.b16 %v4056
  %v4188 = vunpack.c.l.b16 %v4057
  %v4189 = vunpack.c.h.b16 %v4057
  %v4190 = vunpack.c.l.b16 %v4058
  %v4191 = vunpack.c.l.b16 %v4059
  %v4192 = vunpack.c.h.b16 %v4059
  %v4193 = vunpack.c.l.b16 %v4060
  %v4194 = vunpack.c.l.b16 %v4061
  %v4195 = vunpack.c.h.b16 %v4061
  %v4196 = vunpack.c.l.b16 %v4062
  %v4197 = vunpack.c.l.b16 %v4063
  %v4198 = vunpack.c.h.b16 %v4063
  %v4199 = vunpack.c.l.b16 %v4064
  %v4200 = vunpack.c.l.b16 %v4065
  %v4201 = vunpack.c.h.b16 %v4065
  %v4202 = vunpack.c.l.b16 %v4066
  %v4203 = vunpack.c.l.b16 %v4067
  %v4204 = vunpack.c.h.b16 %v4067
  %v4205 = vunpack.c.l.b16 %v4068
  %v4206 = vunpack.c.l.b16 %v4069
  %v4207 = vunpack.c.h.b16 %v4069
  %v4208 = vunpack.c.l.b16 %v4070
  %v4209 = vunpack.c.l.b16 %v4071
  %v4210 = vunpack.c.h.b16 %v4071
  %v4211 = vunpack.c.l.b16 %v4072
  %v4212 = vunpack.c.l.b16 %v4073
  %v4213 = vunpack.c.h.b16 %v4073
  %v4214 = vunpack.c.l.b16 %v4074
  %v4215 = vunpack.c.l.b16 %v4075
  %v4216 = vunpack.c.h.b16 %v4075
  %v4217 = vunpack.c.l.b16 %v4076
  %v4218 = vunpack.c.l.b16 %v4077
  %v4219 = vunpack.c.h.b16 %v4077
  %v4220 = vunpack.c.l.b16 %v4078
  %v4221 = vunpack.c.l.b16 %v4079
  %v4222 = vunpack.c.h.b16 %v4079
  %v4223 = vunpack.c.l.b16 %v4080
  %v4224 = vunpack.c.l.b16 %v4081
  %v4225 = vunpack.c.h.b16 %v4081
  %v4226 = vunpack.c.l.b16 %v4082
  %v4227 = vunpack.c.l.b16 %v4083
  %v4228 = vunpack.c.h.b16 %v4083
  %v4229 = vunpack.c.l.b16 %v4084
  %v4230 = vunpack.c.l.b16 %v4085
  %v4231 = vunpack.c.h.b16 %v4085
  %v4232 = vunpack.c.l.b16 %v4086
  %v4233 = vunpack.c.l.b16 %v4087
  %v4234 = vunpack.c.h.b16 %v4087
  %v4235 = vunpack.c.l.b16 %v4088
  %v4236 = vunpack.c.l.b16 %v4089
  %v4237 = vunpack.c.h.b16 %v4089
  %v4238 = vunpack.c.l.b16 %v4090
  %v4239 = vunpack.c.l.b16 %v4091
  %v4240 = vunpack.c.h.b16 %v4091
  %v4241 = vunpack.c.l.b16 %v4092
  %v4242 = vunpack.c.l.b16 %v4093
  %v4243 = vunpack.c.h.b16 %v4093
  %v4244 = vunpack.c.l.b16 %v4094
  %v4245 = vunpack.c.l.b16 %v4095
  %v4246 = vunpack.c.h.b16 %v4095
  %v4247 = vunpack.c.l.b16 %v4096
  %v4248 = vunpack.c.l.b16 %v4097
  %v4249 = vunpack.c.h.b16 %v4097
  %v4250 = vunpack.c.l.b16 %v4098
  %v4251 = vunpack.c.l.b16 %v4099
  %v4252 = vunpack.c.h.b16 %v4099
  %v4253 = vunpack.c.l.b16 %v4100
  %v4254 = vunpack.c.l.b16 %v4101
  %v4255 = vunpack.c.h.b16 %v4101
  %v4256 = vunpack.c.l.b16 %v4102
  %v4257 = vunpack.c.l.b16 %v4103
  %v4258 = vunpack.c.h.b16 %v4103
  %v4259 = vunpack.c.l.b16 %v4104
  %v4260 = vunpack.c.l.b16 %v4105
  %v4261 = vunpack.c.h.b16 %v4105
  %v4262 = vunpack.c.l.b16 %v4106
  %v4263 = vunpack.c.l.b16 %v4107
  %v4264 = vunpack.c.h.b16 %v4107
  %v4265 = vunpack.c.l.b16 %v4108
  %v4266 = vunpack.c.l.b16 %v4109
  %v4267 = vunpack.c.h.b16 %v4109
  %v4268 = vunpack.c.l.b16 %v4110
  %v4269 = vunpack.c.l.b16 %v4111
  %v4270 = vunpack.c.h.b16 %v4111
  %v4271 = vunpack.c.l.b16 %v4112
  %v4272 = vunpack.c.l.b16 %v4113
  %v4273 = vunpack.c.h.b16 %v4113
  %v4274 = vunpack.c.l.b16 %v4114
  %v4275 = vpack.c.b16 %v4182, %v4179
  %v4276 = vpack.c.b16 %v4183, %v4180
  %v4277 = vpack.c.b16 %v4184, %v4181
  %v4278 = vpack.c.b16 %v4188, %v4185
  %v4279 = vpack.c.b16 %v4189, %v4186
  %v4280 = vpack.c.b16 %v4190, %v4187
  %v4281 = vpack.c.b16 %v4194, %v4191
  %v4282 = vpack.c.b16 %v4195, %v4192
  %v4283 = vpack.c.b16 %v4196, %v4193
  %v4284 = vpack.c.b16 %v4200, %v4197
  %v4285 = vpack.c.b16 %v4201, %v4198
  %v4286 = vpack.c.b16 %v4202, %v4199
  %v4287 = vpack.c.b16 %v4206, %v4203
  %v4288 = vpack.c.b16 %v4207, %v4204
  %v4289 = vpack.c.b16 %v4208, %v4205
  %v4290 = vpack.c.b16 %v4212, %v4209
  %v4291 = vpack.c.b16 %v4213, %v4210
  %v4292 = vpack.c.b16 %v4214, %v4211
  %v4293 = vpack.c.b16 %v4218, %v4215
  %v4294 = vpack.c.b16 %v4219, %v4216
  %v4295 = vpack.c.b16 %v4220, %v4217
  %v4296 = vpack.c.b16 %v4224, %v4221
  %v4297 = vpack.c.b16 %v4225, %v4222
  %v4298 = vpack.c.b16 %v4226, %v4223
  %v4299 = vpack.c.b16 %v4230, %v4227
  %v4300 = vpack.c.b16 %v4231, %v4228
  %v4301 = vpack.c.b16 %v4232, %v4229
  %v4302 = vpack.c.b16 %v4236, %v4233
  %v4303 = vpack.c.b16 %v4237, %v4234
  %v4304 = vpack.c.b16 %v4238, %v4235
  %v4305 = vpack.c.b16 %v4242, %v4239
  %v4306 = vpack.c.b16 %v4243, %v4240
  %v4307 = vpack.c.b16 %v4244, %v4241
  %v4308 = vpack.c.b16 %v4248, %v4245
  %v4309 = vpack.c.b16 %v4249, %v4246
  %v4310 = vpack.c.b16 %v4250, %v4247
  %v4311 = vpack.c.b16 %v4254, %v4251
  %v4312 = vpack.c.b16 %v4255, %v4252
  %v4313 = vpack.c.b16 %v4256, %v4253
  %v4314 = vpack.c.b16 %v4260, %v4257
  %v4315 = vpack.c.b16 %v4261, %v4258
  %v4316 = vpack.c.b16 %v4262, %v4259
  %v4317 = vpack.c.b16 %v4266, %v4263
  %v4318 = vpack.c.b16 %v4267, %v4264
  %v4319 = vpack.c.b16 %v4268, %v4265
  %v4320 = vpack.c.b16 %v4272, %v4269
  %v4321 = vpack.c.b16 %v4273, %v4270
  %v4322 = vpack.c.b16 %v4274, %v4271
  %4371 = vmatprep.subr.bf16.mxu0 %v4276
  %4372 = vmatpush1.bf16.msra.mxu0 %v4275
  %4373 = vmatprep.subr.bf16.mxu0 %v4279
  %4374 = vmatpush1.bf16.msra.mxu0 %v4278
  %4375 = vmatprep.subr.bf16.mxu0 %v4282
  %4376 = vmatpush1.bf16.msra.mxu0 %v4281
  %4377 = vmatprep.subr.bf16.mxu0 %v4285
  %4378 = vmatpush1.bf16.msra.mxu0 %v4284
  %4379 = vmatprep.subr.bf16.mxu0 %v4288
  %4380 = vmatpush1.bf16.msra.mxu0 %v4287
  %4381 = vmatprep.subr.bf16.mxu0 %v4291
  %4382 = vmatpush1.bf16.msra.mxu0 %v4290
  %4383 = vmatprep.subr.bf16.mxu0 %v4294
  %4384 = vmatpush1.bf16.msra.mxu0 %v4293
  %4385 = vmatprep.subr.bf16.mxu0 %v4297
  %4386 = vmatpush1.bf16.msra.mxu0 %v4296
  %4387 = vmatprep.subr.bf16.mxu0 %v4300
  %4388 = vmatpush1.bf16.msra.mxu0 %v4299
  %4389 = vmatprep.subr.bf16.mxu0 %v4303
  %4390 = vmatpush1.bf16.msra.mxu0 %v4302
  %4391 = vmatprep.subr.bf16.mxu0 %v4306
  %4392 = vmatpush1.bf16.msra.mxu0 %v4305
  %4393 = vmatprep.subr.bf16.mxu0 %v4309
  %4394 = vmatpush1.bf16.msra.mxu0 %v4308
  %4395 = vmatprep.subr.bf16.mxu0 %v4312
  %4396 = vmatpush1.bf16.msra.mxu0 %v4311
  %4397 = vmatprep.subr.bf16.mxu0 %v4315
  %4398 = vmatpush1.bf16.msra.mxu0 %v4314
  %4399 = vmatprep.subr.bf16.mxu0 %v4318
  %4400 = vmatpush1.bf16.msra.mxu0 %v4317
  %4401 = vmatprep.subr.bf16.mxu0 %v4321
  %4402 = vmatpush1.bf16.msra.mxu0 %v4320
  %4403 = vmatprep.mubr.bf16.mxu0 %v4050
  %4404 = vmatmul.mubr.bf16.gmra.mrb[0].mxu0 %v4049
  %v4405 = vpop.f32.mrb[0].mxu0
  %v4406 = vadd.f32 0.0, %v4405
  %v4407 = vpop.f32.mrb[0].mxu0
  %v4408 = vadd.f32 0.0, %v4407
  %v4409 = vpop.f32.mrb[0].mxu0
  %v4410 = vpop.f32.mrb[0].mxu0
  %4411 = vdwg.mxu0
  %4412 = vmatprep.subr.bf16.mxu0 0
  %4413 = vmatpush1.bf16.msra.mxu0 %v4277
  %4414 = vmatprep.subr.bf16.mxu0 0
  %4415 = vmatpush1.bf16.msra.mxu0 %v4280
  %4416 = vmatprep.subr.bf16.mxu0 0
  %4417 = vmatpush1.bf16.msra.mxu0 %v4283
  %4418 = vmatprep.subr.bf16.mxu0 0
  %4419 = vmatpush1.bf16.msra.mxu0 %v4286
  %4420 = vmatprep.subr.bf16.mxu0 0
  %4421 = vmatpush1.bf16.msra.mxu0 %v4289
  %4422 = vmatprep.subr.bf16.mxu0 0
  %4423 = vmatpush1.bf16.msra.mxu0 %v4292
  %4424 = vmatprep.subr.bf16.mxu0 0
  %4425 = vmatpush1.bf16.msra.mxu0 %v4295
  %4426 = vmatprep.subr.bf16.mxu0 0
  %4427 = vmatpush1.bf16.msra.mxu0 %v4298
  %4428 = vmatprep.subr.bf16.mxu0 0
  %4429 = vmatpush1.bf16.msra.mxu0 %v4301
  %4430 = vmatprep.subr.bf16.mxu0 0
  %4431 = vmatpush1.bf16.msra.mxu0 %v4304
  %4432 = vmatprep.subr.bf16.mxu0 0
  %4433 = vmatpush1.bf16.msra.mxu0 %v4307
  %4434 = vmatprep.subr.bf16.mxu0 0
  %4435 = vmatpush1.bf16.msra.mxu0 %v4310
  %4436 = vmatprep.subr.bf16.mxu0 0
  %4437 = vmatpush1.bf16.msra.mxu0 %v4313
  %4438 = vmatprep.subr.bf16.mxu0 0
  %4439 = vmatpush1.bf16.msra.mxu0 %v4316
  %4440 = vmatprep.subr.bf16.mxu0 0
  %4441 = vmatpush1.bf16.msra.mxu0 %v4319
  %4442 = vmatprep.subr.bf16.mxu0 0
  %4443 = vmatpush1.bf16.msra.mxu0 %v4322
  %4444 = vmatprep.mubr.bf16.mxu0 %v4050
  %4445 = vmatmul.mubr.bf16.gmra.mrb[0].mxu0 %v4049
  %v4446 = vpop.f32.mrb[0].mxu0
  %v4447 = vadd.f32 0.0, %v4446
  %v4448 = vpop.f32.mrb[0].mxu0
  %v4449 = vpop.f32.mrb[0].mxu0
  %v4450 = vpop.f32.mrb[0].mxu0
  %4451 = vdwg.mxu0
  %v4452 = vld [vmem:[%s27] sm:$0xff]
  %v4453 = vld [vmem:[%s27 + $0x8] sm:$0xff]
  %v4454 = vld [vmem:[%s27 + $0x10] sm:$0x3]
  %s4455 = scalar_lea.vmem %s25, 384
  %v4456 = vld [vmem:[%s4455] sm:$0xff]
  %v4457 = vld [vmem:[%s4455 + $0x8] sm:$0xf]
  %v4458 = vld [vmem:[%s4455 + $0xc] sm:$0xff]
  %v4459 = vld [vmem:[%s4455 + $0x14] sm:$0xf]
  %v4460 = vld [vmem:[%s4455 + $0x18] sm:$0xff]
  %v4461 = vld [vmem:[%s4455 + $0x20] sm:$0xf]
  %v4462 = vld [vmem:[%s4455 + $0x24] sm:$0xff]
  %v4463 = vld [vmem:[%s4455 + $0x2c] sm:$0xf]
  %v4464 = vld [vmem:[%s4455 + $0x30] sm:$0xff]
  %v4465 = vld [vmem:[%s4455 + $0x38] sm:$0xf]
  %v4466 = vld [vmem:[%s4455 + $0x3c] sm:$0xff]
  %v4467 = vld [vmem:[%s4455 + $0x44] sm:$0xf]
  %v4468 = vld [vmem:[%s4455 + $0x48] sm:$0xff]
  %v4469 = vld [vmem:[%s4455 + $0x50] sm:$0xf]
  %v4470 = vld [vmem:[%s4455 + $0x54] sm:$0xff]
  %v4471 = vld [vmem:[%s4455 + $0x5c] sm:$0xf]
  %v4472 = vld [vmem:[%s4455 + $0x60] sm:$0xff]
  %v4473 = vld [vmem:[%s4455 + $0x68] sm:$0xf]
  %v4474 = vld [vmem:[%s4455 + $0x6c] sm:$0xff]
  %v4475 = vld [vmem:[%s4455 + $0x74] sm:$0xf]
  %v4476 = vld [vmem:[%s4455 + $0x78] sm:$0xff]
  %v4477 = vld [vmem:[%s4455 + $0x80] sm:$0xf]
  %v4478 = vld [vmem:[%s4455 + $0x84] sm:$0xff]
  %v4479 = vld [vmem:[%s4455 + $0x8c] sm:$0xf]
  %v4480 = vld [vmem:[%s4455 + $0x90] sm:$0xff]
  %v4481 = vld [vmem:[%s4455 + $0x98] sm:$0xf]
  %v4482 = vld [vmem:[%s4455 + $0x9c] sm:$0xff]
  %v4483 = vld [vmem:[%s4455 + $0xa4] sm:$0xf]
  %v4484 = vld [vmem:[%s4455 + $0xa8] sm:$0xff]
  %v4485 = vld [vmem:[%s4455 + $0xb0] sm:$0xf]
  %v4486 = vld [vmem:[%s4455 + $0xb4] sm:$0xff]
  %v4487 = vld [vmem:[%s4455 + $0xbc] sm:$0xf]
  %v4488 = vld [vmem:[%s4455 + $0xc0] sm:$0xff]
  %v4489 = vld [vmem:[%s4455 + $0xc8] sm:$0xf]
  %v4490 = vld [vmem:[%s4455 + $0xcc] sm:$0xff]
  %v4491 = vld [vmem:[%s4455 + $0xd4] sm:$0xf]
  %v4492 = vld [vmem:[%s4455 + $0xd8] sm:$0xff]
  %v4493 = vld [vmem:[%s4455 + $0xe0] sm:$0xf]
  %v4494 = vld [vmem:[%s4455 + $0xe4] sm:$0xff]
  %v4495 = vld [vmem:[%s4455 + $0xec] sm:$0xf]
  %v4496 = vld [vmem:[%s4455 + $0xf0] sm:$0xff]
  %v4497 = vld [vmem:[%s4455 + $0xf8] sm:$0xf]
  %v4498 = vld [vmem:[%s4455 + $0xfc] sm:$0xff]
  %v4499 = vld [vmem:[%s4455 + $0x104] sm:$0xf]
  %v4500 = vld [vmem:[%s4455 + $0x108] sm:$0xff]
  %v4501 = vld [vmem:[%s4455 + $0x110] sm:$0xf]
  %v4502 = vld [vmem:[%s4455 + $0x114] sm:$0xff]
  %v4503 = vld [vmem:[%s4455 + $0x11c] sm:$0xf]
  %v4504 = vld [vmem:[%s4455 + $0x120] sm:$0xff]
  %v4505 = vld [vmem:[%s4455 + $0x128] sm:$0xf]
  %v4506 = vld [vmem:[%s4455 + $0x12c] sm:$0xff]
  %v4507 = vld [vmem:[%s4455 + $0x134] sm:$0xf]
  %v4508 = vld [vmem:[%s4455 + $0x138] sm:$0xff]
  %v4509 = vld [vmem:[%s4455 + $0x140] sm:$0xf]
  %v4510 = vld [vmem:[%s4455 + $0x144] sm:$0xff]
  %v4511 = vld [vmem:[%s4455 + $0x14c] sm:$0xf]
  %v4512 = vld [vmem:[%s4455 + $0x150] sm:$0xff]
  %v4513 = vld [vmem:[%s4455 + $0x158] sm:$0xf]
  %v4514 = vld [vmem:[%s4455 + $0x15c] sm:$0xff]
  %v4515 = vld [vmem:[%s4455 + $0x164] sm:$0xf]
  %v4516 = vld [vmem:[%s4455 + $0x168] sm:$0xff]
  %v4517 = vld [vmem:[%s4455 + $0x170] sm:$0xf]
  %v4518 = vld [vmem:[%s4455 + $0x174] sm:$0xff]
  %v4519 = vld [vmem:[%s4455 + $0x17c] sm:$0xf]
  %v4584 = vunpack.c.l.b16 %v4456
  %v4585 = vunpack.c.h.b16 %v4456
  %v4586 = vunpack.c.l.b16 %v4457
  %v4587 = vunpack.c.l.b16 %v4458
  %v4588 = vunpack.c.h.b16 %v4458
  %v4589 = vunpack.c.l.b16 %v4459
  %v4590 = vunpack.c.l.b16 %v4460
  %v4591 = vunpack.c.h.b16 %v4460
  %v4592 = vunpack.c.l.b16 %v4461
  %v4593 = vunpack.c.l.b16 %v4462
  %v4594 = vunpack.c.h.b16 %v4462
  %v4595 = vunpack.c.l.b16 %v4463
  %v4596 = vunpack.c.l.b16 %v4464
  %v4597 = vunpack.c.h.b16 %v4464
  %v4598 = vunpack.c.l.b16 %v4465
  %v4599 = vunpack.c.l.b16 %v4466
  %v4600 = vunpack.c.h.b16 %v4466
  %v4601 = vunpack.c.l.b16 %v4467
  %v4602 = vunpack.c.l.b16 %v4468
  %v4603 = vunpack.c.h.b16 %v4468
  %v4604 = vunpack.c.l.b16 %v4469
  %v4605 = vunpack.c.l.b16 %v4470
  %v4606 = vunpack.c.h.b16 %v4470
  %v4607 = vunpack.c.l.b16 %v4471
  %v4608 = vunpack.c.l.b16 %v4472
  %v4609 = vunpack.c.h.b16 %v4472
  %v4610 = vunpack.c.l.b16 %v4473
  %v4611 = vunpack.c.l.b16 %v4474
  %v4612 = vunpack.c.h.b16 %v4474
  %v4613 = vunpack.c.l.b16 %v4475
  %v4614 = vunpack.c.l.b16 %v4476
  %v4615 = vunpack.c.h.b16 %v4476
  %v4616 = vunpack.c.l.b16 %v4477
  %v4617 = vunpack.c.l.b16 %v4478
  %v4618 = vunpack.c.h.b16 %v4478
  %v4619 = vunpack.c.l.b16 %v4479
  %v4620 = vunpack.c.l.b16 %v4480
  %v4621 = vunpack.c.h.b16 %v4480
  %v4622 = vunpack.c.l.b16 %v4481
  %v4623 = vunpack.c.l.b16 %v4482
  %v4624 = vunpack.c.h.b16 %v4482
  %v4625 = vunpack.c.l.b16 %v4483
  %v4626 = vunpack.c.l.b16 %v4484
  %v4627 = vunpack.c.h.b16 %v4484
  %v4628 = vunpack.c.l.b16 %v4485
  %v4629 = vunpack.c.l.b16 %v4486
  %v4630 = vunpack.c.h.b16 %v4486
  %v4631 = vunpack.c.l.b16 %v4487
  %v4632 = vunpack.c.l.b16 %v4488
  %v4633 = vunpack.c.h.b16 %v4488
  %v4634 = vunpack.c.l.b16 %v4489
  %v4635 = vunpack.c.l.b16 %v4490
  %v4636 = vunpack.c.h.b16 %v4490
  %v4637 = vunpack.c.l.b16 %v4491
  %v4638 = vunpack.c.l.b16 %v4492
  %v4639 = vunpack.c.h.b16 %v4492
  %v4640 = vunpack.c.l.b16 %v4493
  %v4641 = vunpack.c.l.b16 %v4494
  %v4642 = vunpack.c.h.b16 %v4494
  %v4643 = vunpack.c.l.b16 %v4495
  %v4644 = vunpack.c.l.b16 %v4496
  %v4645 = vunpack.c.h.b16 %v4496
  %v4646 = vunpack.c.l.b16 %v4497
  %v4647 = vunpack.c.l.b16 %v4498
  %v4648 = vunpack.c.h.b16 %v4498
  %v4649 = vunpack.c.l.b16 %v4499
  %v4650 = vunpack.c.l.b16 %v4500
  %v4651 = vunpack.c.h.b16 %v4500
  %v4652 = vunpack.c.l.b16 %v4501
  %v4653 = vunpack.c.l.b16 %v4502
  %v4654 = vunpack.c.h.b16 %v4502
  %v4655 = vunpack.c.l.b16 %v4503
  %v4656 = vunpack.c.l.b16 %v4504
  %v4657 = vunpack.c.h.b16 %v4504
  %v4658 = vunpack.c.l.b16 %v4505
  %v4659 = vunpack.c.l.b16 %v4506
  %v4660 = vunpack.c.h.b16 %v4506
  %v4661 = vunpack.c.l.b16 %v4507
  %v4662 = vunpack.c.l.b16 %v4508
  %v4663 = vunpack.c.h.b16 %v4508
  %v4664 = vunpack.c.l.b16 %v4509
  %v4665 = vunpack.c.l.b16 %v4510
  %v4666 = vunpack.c.h.b16 %v4510
  %v4667 = vunpack.c.l.b16 %v4511
  %v4668 = vunpack.c.l.b16 %v4512
  %v4669 = vunpack.c.h.b16 %v4512
  %v4670 = vunpack.c.l.b16 %v4513
  %v4671 = vunpack.c.l.b16 %v4514
  %v4672 = vunpack.c.h.b16 %v4514
  %v4673 = vunpack.c.l.b16 %v4515
  %v4674 = vunpack.c.l.b16 %v4516
  %v4675 = vunpack.c.h.b16 %v4516
  %v4676 = vunpack.c.l.b16 %v4517
  %v4677 = vunpack.c.l.b16 %v4518
  %v4678 = vunpack.c.h.b16 %v4518
  %v4679 = vunpack.c.l.b16 %v4519
  %v4680 = vpack.c.b16 %v4587, %v4584
  %v4681 = vpack.c.b16 %v4588, %v4585
  %v4682 = vpack.c.b16 %v4589, %v4586
  %v4683 = vpack.c.b16 %v4593, %v4590
  %v4684 = vpack.c.b16 %v4594, %v4591
  %v4685 = vpack.c.b16 %v4595, %v4592
  %v4686 = vpack.c.b16 %v4599, %v4596
  %v4687 = vpack.c.b16 %v4600, %v4597
  %v4688 = vpack.c.b16 %v4601, %v4598
  %v4689 = vpack.c.b16 %v4605, %v4602
  %v4690 = vpack.c.b16 %v4606, %v4603
  %v4691 = vpack.c.b16 %v4607, %v4604
  %v4692 = vpack.c.b16 %v4611, %v4608
  %v4693 = vpack.c.b16 %v4612, %v4609
  %v4694 = vpack.c.b16 %v4613, %v4610
  %v4695 = vpack.c.b16 %v4617, %v4614
  %v4696 = vpack.c.b16 %v4618, %v4615
  %v4697 = vpack.c.b16 %v4619, %v4616
  %v4698 = vpack.c.b16 %v4623, %v4620
  %v4699 = vpack.c.b16 %v4624, %v4621
  %v4700 = vpack.c.b16 %v4625, %v4622
  %v4701 = vpack.c.b16 %v4629, %v4626
  %v4702 = vpack.c.b16 %v4630, %v4627
  %v4703 = vpack.c.b16 %v4631, %v4628
  %v4704 = vpack.c.b16 %v4635, %v4632
  %v4705 = vpack.c.b16 %v4636, %v4633
  %v4706 = vpack.c.b16 %v4637, %v4634
  %v4707 = vpack.c.b16 %v4641, %v4638
  %v4708 = vpack.c.b16 %v4642, %v4639
  %v4709 = vpack.c.b16 %v4643, %v4640
  %v4710 = vpack.c.b16 %v4647, %v4644
  %v4711 = vpack.c.b16 %v4648, %v4645
  %v4712 = vpack.c.b16 %v4649, %v4646
  %v4713 = vpack.c.b16 %v4653, %v4650
  %v4714 = vpack.c.b16 %v4654, %v4651
  %v4715 = vpack.c.b16 %v4655, %v4652
  %v4716 = vpack.c.b16 %v4659, %v4656
  %v4717 = vpack.c.b16 %v4660, %v4657
  %v4718 = vpack.c.b16 %v4661, %v4658
  %v4719 = vpack.c.b16 %v4665, %v4662
  %v4720 = vpack.c.b16 %v4666, %v4663
  %v4721 = vpack.c.b16 %v4667, %v4664
  %v4722 = vpack.c.b16 %v4671, %v4668
  %v4723 = vpack.c.b16 %v4672, %v4669
  %v4724 = vpack.c.b16 %v4673, %v4670
  %v4725 = vpack.c.b16 %v4677, %v4674
  %v4726 = vpack.c.b16 %v4678, %v4675
  %v4727 = vpack.c.b16 %v4679, %v4676
  %4776 = vmatprep.subr.bf16.mxu0 %v4681
  %4777 = vmatpush1.bf16.msra.mxu0 %v4680
  %4778 = vmatprep.subr.bf16.mxu0 %v4684
  %4779 = vmatpush1.bf16.msra.mxu0 %v4683
  %4780 = vmatprep.subr.bf16.mxu0 %v4687
  %4781 = vmatpush1.bf16.msra.mxu0 %v4686
  %4782 = vmatprep.subr.bf16.mxu0 %v4690
  %4783 = vmatpush1.bf16.msra.mxu0 %v4689
  %4784 = vmatprep.subr.bf16.mxu0 %v4693
  %4785 = vmatpush1.bf16.msra.mxu0 %v4692
  %4786 = vmatprep.subr.bf16.mxu0 %v4696
  %4787 = vmatpush1.bf16.msra.mxu0 %v4695
  %4788 = vmatprep.subr.bf16.mxu0 %v4699
  %4789 = vmatpush1.bf16.msra.mxu0 %v4698
  %4790 = vmatprep.subr.bf16.mxu0 %v4702
  %4791 = vmatpush1.bf16.msra.mxu0 %v4701
  %4792 = vmatprep.subr.bf16.mxu0 %v4705
  %4793 = vmatpush1.bf16.msra.mxu0 %v4704
  %4794 = vmatprep.subr.bf16.mxu0 %v4708
  %4795 = vmatpush1.bf16.msra.mxu0 %v4707
  %4796 = vmatprep.subr.bf16.mxu0 %v4711
  %4797 = vmatpush1.bf16.msra.mxu0 %v4710
  %4798 = vmatprep.subr.bf16.mxu0 %v4714
  %4799 = vmatpush1.bf16.msra.mxu0 %v4713
  %4800 = vmatprep.subr.bf16.mxu0 %v4717
  %4801 = vmatpush1.bf16.msra.mxu0 %v4716
  %4802 = vmatprep.subr.bf16.mxu0 %v4720
  %4803 = vmatpush1.bf16.msra.mxu0 %v4719
  %4804 = vmatprep.subr.bf16.mxu0 %v4723
  %4805 = vmatpush1.bf16.msra.mxu0 %v4722
  %4806 = vmatprep.subr.bf16.mxu0 %v4726
  %4807 = vmatpush1.bf16.msra.mxu0 %v4725
  %4808 = vmatprep.mubr.bf16.mxu0 %v4050
  %4809 = vmatmul.mubr.bf16.gmra.mrb[0].mxu0 %v4049
  %v4810 = vpop.f32.mrb[0].mxu0
  %v4811 = vadd.f32 0.0, %v4810
  %v4812 = vpop.f32.mrb[0].mxu0
  %v4813 = vadd.f32 0.0, %v4812
  %v4814 = vpop.f32.mrb[0].mxu0
  %v4815 = vpop.f32.mrb[0].mxu0
  %4816 = vdwg.mxu0
  %4817 = vmatprep.subr.bf16.mxu0 0
  %4818 = vmatpush1.bf16.msra.mxu0 %v4682
  %4819 = vmatprep.subr.bf16.mxu0 0
  %4820 = vmatpush1.bf16.msra.mxu0 %v4685
  %4821 = vmatprep.subr.bf16.mxu0 0
  %4822 = vmatpush1.bf16.msra.mxu0 %v4688
  %4823 = vmatprep.subr.bf16.mxu0 0
  %4824 = vmatpush1.bf16.msra.mxu0 %v4691
  %4825 = vmatprep.subr.bf16.mxu0 0
  %4826 = vmatpush1.bf16.msra.mxu0 %v4694
  %4827 = vmatprep.subr.bf16.mxu0 0
  %4828 = vmatpush1.bf16.msra.mxu0 %v4697
  %4829 = vmatprep.subr.bf16.mxu0 0
  %4830 = vmatpush1.bf16.msra.mxu0 %v4700
  %4831 = vmatprep.subr.bf16.mxu0 0
  %4832 = vmatpush1.bf16.msra.mxu0 %v4703
  %4833 = vmatprep.subr.bf16.mxu0 0
  %4834 = vmatpush1.bf16.msra.mxu0 %v4706
  %4835 = vmatprep.subr.bf16.mxu0 0
  %4836 = vmatpush1.bf16.msra.mxu0 %v4709
  %4837 = vmatprep.subr.bf16.mxu0 0
  %4838 = vmatpush1.bf16.msra.mxu0 %v4712
  %4839 = vmatprep.subr.bf16.mxu0 0
  %4840 = vmatpush1.bf16.msra.mxu0 %v4715
  %4841 = vmatprep.subr.bf16.mxu0 0
  %4842 = vmatpush1.bf16.msra.mxu0 %v4718
  %4843 = vmatprep.subr.bf16.mxu0 0
  %4844 = vmatpush1.bf16.msra.mxu0 %v4721
  %4845 = vmatprep.subr.bf16.mxu0 0
  %4846 = vmatpush1.bf16.msra.mxu0 %v4724
  %4847 = vmatprep.subr.bf16.mxu0 0
  %4848 = vmatpush1.bf16.msra.mxu0 %v4727
  %4849 = vmatprep.mubr.bf16.mxu0 %v4050
  %4850 = vmatmul.mubr.bf16.gmra.mrb[0].mxu0 %v4049
  %v4851 = vpop.f32.mrb[0].mxu0
  %v4852 = vadd.f32 0.0, %v4851
  %v4853 = vpop.f32.mrb[0].mxu0
  %v4854 = vpop.f32.mrb[0].mxu0
  %v4855 = vpop.f32.mrb[0].mxu0
  %4856 = vdwg.mxu0
  %s4857 = scalar_lea.vmem %s27, 24
  %v4858 = vld [vmem:[%s4857] sm:$0xff]
  %v4859 = vld [vmem:[%s4857 + $0x8] sm:$0xff]
  %v4860 = vld [vmem:[%s4857 + $0x10] sm:$0x3]
  %v4862 = vsel %vm203, %v4858, 0
  %v4865 = vsel %vm203, %v4859, 0
  %v4868 = vsel %vm203, %v4860, 0
  %4870 = vmatprep.subr.mxu0 %v4813
  %4871 = vmatpush1.msra.mxu0 %v4811
  %4872 = vmatprep.subr.mxu0 0.0
  %4873 = vmatpush1.msra.mxu0 0.0
  %4874 = vmatprep.subr.mxu0 0.0
  %4875 = vmatpush1.msra.mxu0 0.0
  %4876 = vmatprep.subr.mxu0 0.0
  %4877 = vmatpush1.msra.mxu0 0.0
  %4878 = vmatprep.subr.mxu0 0.0
  %4879 = vmatpush1.msra.mxu0 0.0
  %4880 = vmatprep.subr.mxu0 0.0
  %4881 = vmatpush1.msra.mxu0 0.0
  %4882 = vmatprep.subr.mxu0 0.0
  %4883 = vmatpush1.msra.mxu0 0.0
  %4884 = vmatprep.subr.mxu0 0.0
  %4885 = vmatpush1.msra.mxu0 0.0
  %4886 = vmatprep.subr.mxu0 0.0
  %4887 = vmatpush1.msra.mxu0 0.0
  %4888 = vmatprep.subr.mxu0 0.0
  %4889 = vmatpush1.msra.mxu0 0.0
  %4890 = vmatprep.subr.mxu0 0.0
  %4891 = vmatpush1.msra.mxu0 0.0
  %4892 = vmatprep.subr.mxu0 0.0
  %4893 = vmatpush1.msra.mxu0 0.0
  %4894 = vmatprep.subr.mxu0 0.0
  %4895 = vmatpush1.msra.mxu0 0.0
  %4896 = vmatprep.subr.mxu0 0.0
  %4897 = vmatpush1.msra.mxu0 0.0
  %4898 = vmatprep.subr.mxu0 0.0
  %4899 = vmatpush1.msra.mxu0 0.0
  %4900 = vmatprep.subr.mxu0 0.0
  %4901 = vmatpush1.msra.mxu0 0.0
  %4902 = vmatprep.subr.mxu0 0.0
  %4903 = vmatpush1.msra.mxu0 0.0
  %4904 = vmatprep.subr.mxu0 0.0
  %4905 = vmatpush1.msra.mxu0 0.0
  %4906 = vmatprep.subr.mxu0 0.0
  %4907 = vmatpush1.msra.mxu0 0.0
  %4908 = vmatprep.subr.mxu0 0.0
  %4909 = vmatpush1.msra.mxu0 0.0
  %4910 = vmatprep.subr.mxu0 0.0
  %4911 = vmatpush1.msra.mxu0 0.0
  %4912 = vmatprep.subr.mxu0 0.0
  %4913 = vmatpush1.msra.mxu0 0.0
  %4914 = vmatprep.subr.mxu0 0.0
  %4915 = vmatpush1.msra.mxu0 0.0
  %4916 = vmatprep.subr.mxu0 0.0
  %4917 = vmatpush1.msra.mxu0 0.0
  %4918 = vmatprep.subr.mxu0 0.0
  %4919 = vmatpush1.msra.mxu0 0.0
  %4920 = vmatprep.subr.mxu0 0.0
  %4921 = vmatpush1.msra.mxu0 0.0
  %4922 = vmatprep.subr.mxu0 0.0
  %4923 = vmatpush1.msra.mxu0 0.0
  %4924 = vmatprep.subr.mxu0 0.0
  %4925 = vmatpush1.msra.mxu0 0.0
  %4926 = vmatprep.subr.mxu0 0.0
  %4927 = vmatpush1.msra.mxu0 0.0
  %4928 = vmatprep.subr.mxu0 0.0
  %4929 = vmatpush1.msra.mxu0 0.0
  %4930 = vmatprep.subr.mxu0 0.0
  %4931 = vmatpush1.msra.mxu0 0.0
  %4932 = vmatprep.subr.mxu0 0.0
  %4933 = vmatpush1.msra.mxu0 0.0
  %4934 = vmatprep.mubr.f32.mxu0 0.0
  %4935 = vmatmul.mubr.f32.gmra.mrb[0].mxu0 %v4862
  %v4936 = vpop.f32.mrb[0].mxu0
  %v4937 = vadd.f32 0.0, %v4936
  %v4938 = vpop.f32.mrb[0].mxu0
  %v4939 = vadd.f32 0.0, %v4938
  %4940 = vmatprep.mubr.f32.mxu0 0.0
  %4941 = vmatmul.mubr.f32.gmra.mrb[0].mxu0 %v4865
  %v4942 = vpop.f32.mrb[0].mxu0
  %v4943 = vadd.f32 0.0, %v4942
  %v4944 = vpop.f32.mrb[0].mxu0
  %v4945 = vadd.f32 0.0, %v4944
  %4946 = vmatprep.mubr.f32.mxu0 0.0
  %4947 = vmatmul.mubr.f32.gmra.mrb[0].mxu0 %v4868
  %v4948 = vpop.f32.mrb[0].mxu0
  %v4949 = vadd.f32 0.0, %v4948
  %v4950 = vpop.f32.mrb[0].mxu0
  %v4951 = vadd.f32 0.0, %v4950
  %4952 = vdwg.mxu0
  %4953 = vmatprep.subr.mxu0 0.0
  %4954 = vmatpush1.msra.mxu0 %v4852
  %4955 = vmatprep.subr.mxu0 0.0
  %4956 = vmatpush1.msra.mxu0 0.0
  %4957 = vmatprep.subr.mxu0 0.0
  %4958 = vmatpush1.msra.mxu0 0.0
  %4959 = vmatprep.subr.mxu0 0.0
  %4960 = vmatpush1.msra.mxu0 0.0
  %4961 = vmatprep.subr.mxu0 0.0
  %4962 = vmatpush1.msra.mxu0 0.0
  %4963 = vmatprep.subr.mxu0 0.0
  %4964 = vmatpush1.msra.mxu0 0.0
  %4965 = vmatprep.subr.mxu0 0.0
  %4966 = vmatpush1.msra.mxu0 0.0
  %4967 = vmatprep.subr.mxu0 0.0
  %4968 = vmatpush1.msra.mxu0 0.0
  %4969 = vmatprep.subr.mxu0 0.0
  %4970 = vmatpush1.msra.mxu0 0.0
  %4971 = vmatprep.subr.mxu0 0.0
  %4972 = vmatpush1.msra.mxu0 0.0
  %4973 = vmatprep.subr.mxu0 0.0
  %4974 = vmatpush1.msra.mxu0 0.0
  %4975 = vmatprep.subr.mxu0 0.0
  %4976 = vmatpush1.msra.mxu0 0.0
  %4977 = vmatprep.subr.mxu0 0.0
  %4978 = vmatpush1.msra.mxu0 0.0
  %4979 = vmatprep.subr.mxu0 0.0
  %4980 = vmatpush1.msra.mxu0 0.0
  %4981 = vmatprep.subr.mxu0 0.0
  %4982 = vmatpush1.msra.mxu0 0.0
  %4983 = vmatprep.subr.mxu0 0.0
  %4984 = vmatpush1.msra.mxu0 0.0
  %4985 = vmatprep.subr.mxu0 0.0
  %4986 = vmatpush1.msra.mxu0 0.0
  %4987 = vmatprep.subr.mxu0 0.0
  %4988 = vmatpush1.msra.mxu0 0.0
  %4989 = vmatprep.subr.mxu0 0.0
  %4990 = vmatpush1.msra.mxu0 0.0
  %4991 = vmatprep.subr.mxu0 0.0
  %4992 = vmatpush1.msra.mxu0 0.0
  %4993 = vmatprep.subr.mxu0 0.0
  %4994 = vmatpush1.msra.mxu0 0.0
  %4995 = vmatprep.subr.mxu0 0.0
  %4996 = vmatpush1.msra.mxu0 0.0
  %4997 = vmatprep.subr.mxu0 0.0
  %4998 = vmatpush1.msra.mxu0 0.0
  %4999 = vmatprep.subr.mxu0 0.0
  %5000 = vmatpush1.msra.mxu0 0.0
  %5001 = vmatprep.subr.mxu0 0.0
  %5002 = vmatpush1.msra.mxu0 0.0
  %5003 = vmatprep.subr.mxu0 0.0
  %5004 = vmatpush1.msra.mxu0 0.0
  %5005 = vmatprep.subr.mxu0 0.0
  %5006 = vmatpush1.msra.mxu0 0.0
  %5007 = vmatprep.subr.mxu0 0.0
  %5008 = vmatpush1.msra.mxu0 0.0
  %5009 = vmatprep.subr.mxu0 0.0
  %5010 = vmatpush1.msra.mxu0 0.0
  %5011 = vmatprep.subr.mxu0 0.0
  %5012 = vmatpush1.msra.mxu0 0.0
  %5013 = vmatprep.subr.mxu0 0.0
  %5014 = vmatpush1.msra.mxu0 0.0
  %5015 = vmatprep.subr.mxu0 0.0
  %5016 = vmatpush1.msra.mxu0 0.0
  %5017 = vmatprep.mubr.f32.mxu0 0.0
  %5018 = vmatmul.mubr.f32.gmra.mrb[0].mxu0 %v4862
  %v5019 = vpop.f32.mrb[0].mxu0
  %v5020 = vadd.f32 0.0, %v5019
  %v5021 = vpop.f32.mrb[0].mxu0
  %5022 = vmatprep.mubr.f32.mxu0 0.0
  %5023 = vmatmul.mubr.f32.gmra.mrb[0].mxu0 %v4865
  %v5024 = vpop.f32.mrb[0].mxu0
  %v5025 = vadd.f32 0.0, %v5024
  %v5026 = vpop.f32.mrb[0].mxu0
  %5027 = vmatprep.mubr.f32.mxu0 0.0
  %5028 = vmatmul.mubr.f32.gmra.mrb[0].mxu0 %v4868
  %v5029 = vpop.f32.mrb[0].mxu0
  %v5030 = vadd.f32 0.0, %v5029
  %v5031 = vpop.f32.mrb[0].mxu0
  %5032 = vdwg.mxu0
  %v5034 = vsel %vm203, %v4452, 0
  %v5037 = vsel %vm203, %v4453, 0
  %v5040 = vsel %vm203, %v4454, 0
  %5042 = vmatprep.subr.mxu0 %v4408
  %5043 = vmatpush1.msra.mxu0 %v4406
  %5044 = vmatprep.subr.mxu0 0.0
  %5045 = vmatpush1.msra.mxu0 0.0
  %5046 = vmatprep.subr.mxu0 0.0
  %5047 = vmatpush1.msra.mxu0 0.0
  %5048 = vmatprep.subr.mxu0 0.0
  %5049 = vmatpush1.msra.mxu0 0.0
  %5050 = vmatprep.subr.mxu0 0.0
  %5051 = vmatpush1.msra.mxu0 0.0
  %5052 = vmatprep.subr.mxu0 0.0
  %5053 = vmatpush1.msra.mxu0 0.0
  %5054 = vmatprep.subr.mxu0 0.0
  %5055 = vmatpush1.msra.mxu0 0.0
  %5056 = vmatprep.subr.mxu0 0.0
  %5057 = vmatpush1.msra.mxu0 0.0
  %5058 = vmatprep.subr.mxu0 0.0
  %5059 = vmatpush1.msra.mxu0 0.0
  %5060 = vmatprep.subr.mxu0 0.0
  %5061 = vmatpush1.msra.mxu0 0.0
  %5062 = vmatprep.subr.mxu0 0.0
  %5063 = vmatpush1.msra.mxu0 0.0
  %5064 = vmatprep.subr.mxu0 0.0
  %5065 = vmatpush1.msra.mxu0 0.0
  %5066 = vmatprep.subr.mxu0 0.0
  %5067 = vmatpush1.msra.mxu0 0.0
  %5068 = vmatprep.subr.mxu0 0.0
  %5069 = vmatpush1.msra.mxu0 0.0
  %5070 = vmatprep.subr.mxu0 0.0
  %5071 = vmatpush1.msra.mxu0 0.0
  %5072 = vmatprep.subr.mxu0 0.0
  %5073 = vmatpush1.msra.mxu0 0.0
  %5074 = vmatprep.subr.mxu0 0.0
  %5075 = vmatpush1.msra.mxu0 0.0
  %5076 = vmatprep.subr.mxu0 0.0
  %5077 = vmatpush1.msra.mxu0 0.0
  %5078 = vmatprep.subr.mxu0 0.0
  %5079 = vmatpush1.msra.mxu0 0.0
  %5080 = vmatprep.subr.mxu0 0.0
  %5081 = vmatpush1.msra.mxu0 0.0
  %5082 = vmatprep.subr.mxu0 0.0
  %5083 = vmatpush1.msra.mxu0 0.0
  %5084 = vmatprep.subr.mxu0 0.0
  %5085 = vmatpush1.msra.mxu0 0.0
  %5086 = vmatprep.subr.mxu0 0.0
  %5087 = vmatpush1.msra.mxu0 0.0
  %5088 = vmatprep.subr.mxu0 0.0
  %5089 = vmatpush1.msra.mxu0 0.0
  %5090 = vmatprep.subr.mxu0 0.0
  %5091 = vmatpush1.msra.mxu0 0.0
  %5092 = vmatprep.subr.mxu0 0.0
  %5093 = vmatpush1.msra.mxu0 0.0
  %5094 = vmatprep.subr.mxu0 0.0
  %5095 = vmatpush1.msra.mxu0 0.0
  %5096 = vmatprep.subr.mxu0 0.0
  %5097 = vmatpush1.msra.mxu0 0.0
  %5098 = vmatprep.subr.mxu0 0.0
  %5099 = vmatpush1.msra.mxu0 0.0
  %5100 = vmatprep.subr.mxu0 0.0
  %5101 = vmatpush1.msra.mxu0 0.0
  %5102 = vmatprep.subr.mxu0 0.0
  %5103 = vmatpush1.msra.mxu0 0.0
  %5104 = vmatprep.subr.mxu0 0.0
  %5105 = vmatpush1.msra.mxu0 0.0
  %5106 = vmatprep.mubr.f32.mxu0 0.0
  %5107 = vmatmul.mubr.f32.gmra.mrb[0].mxu0 %v5034
  %v5108 = vpop.f32.mrb[0].mxu0
  %v5109 = vadd.f32 %v4937, %v5108
  %v5110 = vpop.f32.mrb[0].mxu0
  %v5111 = vadd.f32 %v4939, %v5110
  %5112 = vmatprep.mubr.f32.mxu0 0.0
  %5113 = vmatmul.mubr.f32.gmra.mrb[0].mxu0 %v5037
  %v5114 = vpop.f32.mrb[0].mxu0
  %v5115 = vadd.f32 %v4943, %v5114
  %v5116 = vpop.f32.mrb[0].mxu0
  %v5117 = vadd.f32 %v4945, %v5116
  %5118 = vmatprep.mubr.f32.mxu0 0.0
  %5119 = vmatmul.mubr.f32.gmra.mrb[0].mxu0 %v5040
  %v5120 = vpop.f32.mrb[0].mxu0
  %v5121 = vadd.f32 %v4949, %v5120
  %v5122 = vpop.f32.mrb[0].mxu0
  %v5123 = vadd.f32 %v4951, %v5122
  %5124 = vdwg.mxu0
  %5125 = vmatprep.subr.mxu0 0.0
  %5126 = vmatpush1.msra.mxu0 %v4447
  %5127 = vmatprep.subr.mxu0 0.0
  %5128 = vmatpush1.msra.mxu0 0.0
  %5129 = vmatprep.subr.mxu0 0.0
  %5130 = vmatpush1.msra.mxu0 0.0
  %5131 = vmatprep.subr.mxu0 0.0
  %5132 = vmatpush1.msra.mxu0 0.0
  %5133 = vmatprep.subr.mxu0 0.0
  %5134 = vmatpush1.msra.mxu0 0.0
  %5135 = vmatprep.subr.mxu0 0.0
  %5136 = vmatpush1.msra.mxu0 0.0
  %5137 = vmatprep.subr.mxu0 0.0
  %5138 = vmatpush1.msra.mxu0 0.0
  %5139 = vmatprep.subr.mxu0 0.0
  %5140 = vmatpush1.msra.mxu0 0.0
  %5141 = vmatprep.subr.mxu0 0.0
  %5142 = vmatpush1.msra.mxu0 0.0
  %5143 = vmatprep.subr.mxu0 0.0
  %5144 = vmatpush1.msra.mxu0 0.0
  %5145 = vmatprep.subr.mxu0 0.0
  %5146 = vmatpush1.msra.mxu0 0.0
  %5147 = vmatprep.subr.mxu0 0.0
  %5148 = vmatpush1.msra.mxu0 0.0
  %5149 = vmatprep.subr.mxu0 0.0
  %5150 = vmatpush1.msra.mxu0 0.0
  %5151 = vmatprep.subr.mxu0 0.0
  %5152 = vmatpush1.msra.mxu0 0.0
  %5153 = vmatprep.subr.mxu0 0.0
  %5154 = vmatpush1.msra.mxu0 0.0
  %5155 = vmatprep.subr.mxu0 0.0
  %5156 = vmatpush1.msra.mxu0 0.0
  %5157 = vmatprep.subr.mxu0 0.0
  %5158 = vmatpush1.msra.mxu0 0.0
  %5159 = vmatprep.subr.mxu0 0.0
  %5160 = vmatpush1.msra.mxu0 0.0
  %5161 = vmatprep.subr.mxu0 0.0
  %5162 = vmatpush1.msra.mxu0 0.0
  %5163 = vmatprep.subr.mxu0 0.0
  %5164 = vmatpush1.msra.mxu0 0.0
  %5165 = vmatprep.subr.mxu0 0.0
  %5166 = vmatpush1.msra.mxu0 0.0
  %5167 = vmatprep.subr.mxu0 0.0
  %5168 = vmatpush1.msra.mxu0 0.0
  %5169 = vmatprep.subr.mxu0 0.0
  %5170 = vmatpush1.msra.mxu0 0.0
  %5171 = vmatprep.subr.mxu0 0.0
  %5172 = vmatpush1.msra.mxu0 0.0
  %5173 = vmatprep.subr.mxu0 0.0
  %5174 = vmatpush1.msra.mxu0 0.0
  %5175 = vmatprep.subr.mxu0 0.0
  %5176 = vmatpush1.msra.mxu0 0.0
  %5177 = vmatprep.subr.mxu0 0.0
  %5178 = vmatpush1.msra.mxu0 0.0
  %5179 = vmatprep.subr.mxu0 0.0
  %5180 = vmatpush1.msra.mxu0 0.0
  %5181 = vmatprep.subr.mxu0 0.0
  %5182 = vmatpush1.msra.mxu0 0.0
  %5183 = vmatprep.subr.mxu0 0.0
  %5184 = vmatpush1.msra.mxu0 0.0
  %5185 = vmatprep.subr.mxu0 0.0
  %5186 = vmatpush1.msra.mxu0 0.0
  %5187 = vmatprep.subr.mxu0 0.0
  %5188 = vmatpush1.msra.mxu0 0.0
  %5189 = vmatprep.mubr.f32.mxu0 0.0
  %5190 = vmatmul.mubr.f32.gmra.mrb[0].mxu0 %v5034
  %v5191 = vpop.f32.mrb[0].mxu0
  %v5192 = vadd.f32 %v5020, %v5191
  %v5193 = vpop.f32.mrb[0].mxu0
  %5194 = vmatprep.mubr.f32.mxu0 0.0
  %5195 = vmatmul.mubr.f32.gmra.mrb[0].mxu0 %v5037
  %v5196 = vpop.f32.mrb[0].mxu0
  %v5197 = vadd.f32 %v5025, %v5196
  %v5198 = vpop.f32.mrb[0].mxu0
  %5199 = vmatprep.mubr.f32.mxu0 0.0
  %5200 = vmatmul.mubr.f32.gmra.mrb[0].mxu0 %v5040
  %v5201 = vpop.f32.mrb[0].mxu0
  %v5202 = vadd.f32 %v5030, %v5201
  %v5203 = vpop.f32.mrb[0].mxu0
  %5204 = vdwg.mxu0
  %s5205 = scalar_lea.vmem %s25, 768
  %v5206 = vld [vmem:[%s5205] sm:$0xff]
  %v5207 = vld [vmem:[%s5205 + $0x8] sm:$0xf]
  %v5208 = vld [vmem:[%s5205 + $0xc] sm:$0xff]
  %v5209 = vld [vmem:[%s5205 + $0x14] sm:$0xf]
  %v5210 = vld [vmem:[%s5205 + $0x18] sm:$0xff]
  %v5211 = vld [vmem:[%s5205 + $0x20] sm:$0xf]
  %v5212 = vld [vmem:[%s5205 + $0x24] sm:$0xff]
  %v5213 = vld [vmem:[%s5205 + $0x2c] sm:$0xf]
  %v5214 = vld [vmem:[%s5205 + $0x30] sm:$0xff]
  %v5215 = vld [vmem:[%s5205 + $0x38] sm:$0xf]
  %v5216 = vld [vmem:[%s5205 + $0x3c] sm:$0xff]
  %v5217 = vld [vmem:[%s5205 + $0x44] sm:$0xf]
  %v5218 = vld [vmem:[%s5205 + $0x48] sm:$0xff]
  %v5219 = vld [vmem:[%s5205 + $0x50] sm:$0xf]
  %v5220 = vld [vmem:[%s5205 + $0x54] sm:$0xff]
  %v5221 = vld [vmem:[%s5205 + $0x5c] sm:$0xf]
  %v5222 = vld [vmem:[%s5205 + $0x60] sm:$0xff]
  %v5223 = vld [vmem:[%s5205 + $0x68] sm:$0xf]
  %v5224 = vld [vmem:[%s5205 + $0x6c] sm:$0xff]
  %v5225 = vld [vmem:[%s5205 + $0x74] sm:$0xf]
  %v5226 = vld [vmem:[%s5205 + $0x78] sm:$0xff]
  %v5227 = vld [vmem:[%s5205 + $0x80] sm:$0xf]
  %v5228 = vld [vmem:[%s5205 + $0x84] sm:$0xff]
  %v5229 = vld [vmem:[%s5205 + $0x8c] sm:$0xf]
  %v5230 = vld [vmem:[%s5205 + $0x90] sm:$0xff]
  %v5231 = vld [vmem:[%s5205 + $0x98] sm:$0xf]
  %v5232 = vld [vmem:[%s5205 + $0x9c] sm:$0xff]
  %v5233 = vld [vmem:[%s5205 + $0xa4] sm:$0xf]
  %v5234 = vld [vmem:[%s5205 + $0xa8] sm:$0xff]
  %v5235 = vld [vmem:[%s5205 + $0xb0] sm:$0xf]
  %v5236 = vld [vmem:[%s5205 + $0xb4] sm:$0xff]
  %v5237 = vld [vmem:[%s5205 + $0xbc] sm:$0xf]
  %v5238 = vld [vmem:[%s5205 + $0xc0] sm:$0xff]
  %v5239 = vld [vmem:[%s5205 + $0xc8] sm:$0xf]
  %v5240 = vld [vmem:[%s5205 + $0xcc] sm:$0xff]
  %v5241 = vld [vmem:[%s5205 + $0xd4] sm:$0xf]
  %v5242 = vld [vmem:[%s5205 + $0xd8] sm:$0xff]
  %v5243 = vld [vmem:[%s5205 + $0xe0] sm:$0xf]
  %v5244 = vld [vmem:[%s5205 + $0xe4] sm:$0xff]
  %v5245 = vld [vmem:[%s5205 + $0xec] sm:$0xf]
  %v5246 = vld [vmem:[%s5205 + $0xf0] sm:$0xff]
  %v5247 = vld [vmem:[%s5205 + $0xf8] sm:$0xf]
  %v5248 = vld [vmem:[%s5205 + $0xfc] sm:$0xff]
  %v5249 = vld [vmem:[%s5205 + $0x104] sm:$0xf]
  %v5250 = vld [vmem:[%s5205 + $0x108] sm:$0xff]
  %v5251 = vld [vmem:[%s5205 + $0x110] sm:$0xf]
  %v5252 = vld [vmem:[%s5205 + $0x114] sm:$0xff]
  %v5253 = vld [vmem:[%s5205 + $0x11c] sm:$0xf]
  %v5254 = vld [vmem:[%s5205 + $0x120] sm:$0xff]
  %v5255 = vld [vmem:[%s5205 + $0x128] sm:$0xf]
  %v5256 = vld [vmem:[%s5205 + $0x12c] sm:$0xff]
  %v5257 = vld [vmem:[%s5205 + $0x134] sm:$0xf]
  %v5258 = vld [vmem:[%s5205 + $0x138] sm:$0xff]
  %v5259 = vld [vmem:[%s5205 + $0x140] sm:$0xf]
  %v5260 = vld [vmem:[%s5205 + $0x144] sm:$0xff]
  %v5261 = vld [vmem:[%s5205 + $0x14c] sm:$0xf]
  %v5262 = vld [vmem:[%s5205 + $0x150] sm:$0xff]
  %v5263 = vld [vmem:[%s5205 + $0x158] sm:$0xf]
  %v5264 = vld [vmem:[%s5205 + $0x15c] sm:$0xff]
  %v5265 = vld [vmem:[%s5205 + $0x164] sm:$0xf]
  %v5266 = vld [vmem:[%s5205 + $0x168] sm:$0xff]
  %v5267 = vld [vmem:[%s5205 + $0x170] sm:$0xf]
  %v5268 = vld [vmem:[%s5205 + $0x174] sm:$0xff]
  %v5269 = vld [vmem:[%s5205 + $0x17c] sm:$0xf]
  %v5334 = vunpack.c.l.b16 %v5206
  %v5335 = vunpack.c.h.b16 %v5206
  %v5336 = vunpack.c.l.b16 %v5207
  %v5337 = vunpack.c.l.b16 %v5208
  %v5338 = vunpack.c.h.b16 %v5208
  %v5339 = vunpack.c.l.b16 %v5209
  %v5340 = vunpack.c.l.b16 %v5210
  %v5341 = vunpack.c.h.b16 %v5210
  %v5342 = vunpack.c.l.b16 %v5211
  %v5343 = vunpack.c.l.b16 %v5212
  %v5344 = vunpack.c.h.b16 %v5212
  %v5345 = vunpack.c.l.b16 %v5213
  %v5346 = vunpack.c.l.b16 %v5214
  %v5347 = vunpack.c.h.b16 %v5214
  %v5348 = vunpack.c.l.b16 %v5215
  %v5349 = vunpack.c.l.b16 %v5216
  %v5350 = vunpack.c.h.b16 %v5216
  %v5351 = vunpack.c.l.b16 %v5217
  %v5352 = vunpack.c.l.b16 %v5218
  %v5353 = vunpack.c.h.b16 %v5218
  %v5354 = vunpack.c.l.b16 %v5219
  %v5355 = vunpack.c.l.b16 %v5220
  %v5356 = vunpack.c.h.b16 %v5220
  %v5357 = vunpack.c.l.b16 %v5221
  %v5358 = vunpack.c.l.b16 %v5222
  %v5359 = vunpack.c.h.b16 %v5222
  %v5360 = vunpack.c.l.b16 %v5223
  %v5361 = vunpack.c.l.b16 %v5224
  %v5362 = vunpack.c.h.b16 %v5224
  %v5363 = vunpack.c.l.b16 %v5225
  %v5364 = vunpack.c.l.b16 %v5226
  %v5365 = vunpack.c.h.b16 %v5226
  %v5366 = vunpack.c.l.b16 %v5227
  %v5367 = vunpack.c.l.b16 %v5228
  %v5368 = vunpack.c.h.b16 %v5228
  %v5369 = vunpack.c.l.b16 %v5229
  %v5370 = vunpack.c.l.b16 %v5230
  %v5371 = vunpack.c.h.b16 %v5230
  %v5372 = vunpack.c.l.b16 %v5231
  %v5373 = vunpack.c.l.b16 %v5232
  %v5374 = vunpack.c.h.b16 %v5232
  %v5375 = vunpack.c.l.b16 %v5233
  %v5376 = vunpack.c.l.b16 %v5234
  %v5377 = vunpack.c.h.b16 %v5234
  %v5378 = vunpack.c.l.b16 %v5235
  %v5379 = vunpack.c.l.b16 %v5236
  %v5380 = vunpack.c.h.b16 %v5236
  %v5381 = vunpack.c.l.b16 %v5237
  %v5382 = vunpack.c.l.b16 %v5238
  %v5383 = vunpack.c.h.b16 %v5238
  %v5384 = vunpack.c.l.b16 %v5239
  %v5385 = vunpack.c.l.b16 %v5240
  %v5386 = vunpack.c.h.b16 %v5240
  %v5387 = vunpack.c.l.b16 %v5241
  %v5388 = vunpack.c.l.b16 %v5242
  %v5389 = vunpack.c.h.b16 %v5242
  %v5390 = vunpack.c.l.b16 %v5243
  %v5391 = vunpack.c.l.b16 %v5244
  %v5392 = vunpack.c.h.b16 %v5244
  %v5393 = vunpack.c.l.b16 %v5245
  %v5394 = vunpack.c.l.b16 %v5246
  %v5395 = vunpack.c.h.b16 %v5246
  %v5396 = vunpack.c.l.b16 %v5247
  %v5397 = vunpack.c.l.b16 %v5248
  %v5398 = vunpack.c.h.b16 %v5248
  %v5399 = vunpack.c.l.b16 %v5249
  %v5400 = vunpack.c.l.b16 %v5250
  %v5401 = vunpack.c.h.b16 %v5250
  %v5402 = vunpack.c.l.b16 %v5251
  %v5403 = vunpack.c.l.b16 %v5252
  %v5404 = vunpack.c.h.b16 %v5252
  %v5405 = vunpack.c.l.b16 %v5253
  %v5406 = vunpack.c.l.b16 %v5254
  %v5407 = vunpack.c.h.b16 %v5254
  %v5408 = vunpack.c.l.b16 %v5255
  %v5409 = vunpack.c.l.b16 %v5256
  %v5410 = vunpack.c.h.b16 %v5256
  %v5411 = vunpack.c.l.b16 %v5257
  %v5412 = vunpack.c.l.b16 %v5258
  %v5413 = vunpack.c.h.b16 %v5258
  %v5414 = vunpack.c.l.b16 %v5259
  %v5415 = vunpack.c.l.b16 %v5260
  %v5416 = vunpack.c.h.b16 %v5260
  %v5417 = vunpack.c.l.b16 %v5261
  %v5418 = vunpack.c.l.b16 %v5262
  %v5419 = vunpack.c.h.b16 %v5262
  %v5420 = vunpack.c.l.b16 %v5263
  %v5421 = vunpack.c.l.b16 %v5264
  %v5422 = vunpack.c.h.b16 %v5264
  %v5423 = vunpack.c.l.b16 %v5265
  %v5424 = vunpack.c.l.b16 %v5266
  %v5425 = vunpack.c.h.b16 %v5266
  %v5426 = vunpack.c.l.b16 %v5267
  %v5427 = vunpack.c.l.b16 %v5268
  %v5428 = vunpack.c.h.b16 %v5268
  %v5429 = vunpack.c.l.b16 %v5269
  %v5430 = vpack.c.b16 %v5337, %v5334
  %v5431 = vpack.c.b16 %v5338, %v5335
  %v5432 = vpack.c.b16 %v5339, %v5336
  %v5433 = vpack.c.b16 %v5343, %v5340
  %v5434 = vpack.c.b16 %v5344, %v5341
  %v5435 = vpack.c.b16 %v5345, %v5342
  %v5436 = vpack.c.b16 %v5349, %v5346
  %v5437 = vpack.c.b16 %v5350, %v5347
  %v5438 = vpack.c.b16 %v5351, %v5348
  %v5439 = vpack.c.b16 %v5355, %v5352
  %v5440 = vpack.c.b16 %v5356, %v5353
  %v5441 = vpack.c.b16 %v5357, %v5354
  %v5442 = vpack.c.b16 %v5361, %v5358
  %v5443 = vpack.c.b16 %v5362, %v5359
  %v5444 = vpack.c.b16 %v5363, %v5360
  %v5445 = vpack.c.b16 %v5367, %v5364
  %v5446 = vpack.c.b16 %v5368, %v5365
  %v5447 = vpack.c.b16 %v5369, %v5366
  %v5448 = vpack.c.b16 %v5373, %v5370
  %v5449 = vpack.c.b16 %v5374, %v5371
  %v5450 = vpack.c.b16 %v5375, %v5372
  %v5451 = vpack.c.b16 %v5379, %v5376
  %v5452 = vpack.c.b16 %v5380, %v5377
  %v5453 = vpack.c.b16 %v5381, %v5378
  %v5454 = vpack.c.b16 %v5385, %v5382
  %v5455 = vpack.c.b16 %v5386, %v5383
  %v5456 = vpack.c.b16 %v5387, %v5384
  %v5457 = vpack.c.b16 %v5391, %v5388
  %v5458 = vpack.c.b16 %v5392, %v5389
  %v5459 = vpack.c.b16 %v5393, %v5390
  %v5460 = vpack.c.b16 %v5397, %v5394
  %v5461 = vpack.c.b16 %v5398, %v5395
  %v5462 = vpack.c.b16 %v5399, %v5396
  %v5463 = vpack.c.b16 %v5403, %v5400
  %v5464 = vpack.c.b16 %v5404, %v5401
  %v5465 = vpack.c.b16 %v5405, %v5402
  %v5466 = vpack.c.b16 %v5409, %v5406
  %v5467 = vpack.c.b16 %v5410, %v5407
  %v5468 = vpack.c.b16 %v5411, %v5408
  %v5469 = vpack.c.b16 %v5415, %v5412
  %v5470 = vpack.c.b16 %v5416, %v5413
  %v5471 = vpack.c.b16 %v5417, %v5414
  %v5472 = vpack.c.b16 %v5421, %v5418
  %v5473 = vpack.c.b16 %v5422, %v5419
  %v5474 = vpack.c.b16 %v5423, %v5420
  %v5475 = vpack.c.b16 %v5427, %v5424
  %v5476 = vpack.c.b16 %v5428, %v5425
  %v5477 = vpack.c.b16 %v5429, %v5426
  %5526 = vmatprep.subr.bf16.mxu0 %v5431
  %5527 = vmatpush1.bf16.msra.mxu0 %v5430
  %5528 = vmatprep.subr.bf16.mxu0 %v5434
  %5529 = vmatpush1.bf16.msra.mxu0 %v5433
  %5530 = vmatprep.subr.bf16.mxu0 %v5437
  %5531 = vmatpush1.bf16.msra.mxu0 %v5436
  %5532 = vmatprep.subr.bf16.mxu0 %v5440
  %5533 = vmatpush1.bf16.msra.mxu0 %v5439
  %5534 = vmatprep.subr.bf16.mxu0 %v5443
  %5535 = vmatpush1.bf16.msra.mxu0 %v5442
  %5536 = vmatprep.subr.bf16.mxu0 %v5446
  %5537 = vmatpush1.bf16.msra.mxu0 %v5445
  %5538 = vmatprep.subr.bf16.mxu0 %v5449
  %5539 = vmatpush1.bf16.msra.mxu0 %v5448
  %5540 = vmatprep.subr.bf16.mxu0 %v5452
  %5541 = vmatpush1.bf16.msra.mxu0 %v5451
  %5542 = vmatprep.subr.bf16.mxu0 %v5455
  %5543 = vmatpush1.bf16.msra.mxu0 %v5454
  %5544 = vmatprep.subr.bf16.mxu0 %v5458
  %5545 = vmatpush1.bf16.msra.mxu0 %v5457
  %5546 = vmatprep.subr.bf16.mxu0 %v5461
  %5547 = vmatpush1.bf16.msra.mxu0 %v5460
  %5548 = vmatprep.subr.bf16.mxu0 %v5464
  %5549 = vmatpush1.bf16.msra.mxu0 %v5463
  %5550 = vmatprep.subr.bf16.mxu0 %v5467
  %5551 = vmatpush1.bf16.msra.mxu0 %v5466
  %5552 = vmatprep.subr.bf16.mxu0 %v5470
  %5553 = vmatpush1.bf16.msra.mxu0 %v5469
  %5554 = vmatprep.subr.bf16.mxu0 %v5473
  %5555 = vmatpush1.bf16.msra.mxu0 %v5472
  %5556 = vmatprep.subr.bf16.mxu0 %v5476
  %5557 = vmatpush1.bf16.msra.mxu0 %v5475
  %5558 = vmatprep.mubr.bf16.mxu0 %v4050
  %5559 = vmatmul.mubr.bf16.gmra.mrb[0].mxu0 %v4049
  %v5560 = vpop.f32.mrb[0].mxu0
  %v5561 = vadd.f32 0.0, %v5560
  %v5562 = vpop.f32.mrb[0].mxu0
  %v5563 = vadd.f32 0.0, %v5562
  %v5564 = vpop.f32.mrb[0].mxu0
  %v5565 = vpop.f32.mrb[0].mxu0
  %5566 = vdwg.mxu0
  %5567 = vmatprep.subr.bf16.mxu0 0
  %5568 = vmatpush1.bf16.msra.mxu0 %v5432
  %5569 = vmatprep.subr.bf16.mxu0 0
  %5570 = vmatpush1.bf16.msra.mxu0 %v5435
  %5571 = vmatprep.subr.bf16.mxu0 0
  %5572 = vmatpush1.bf16.msra.mxu0 %v5438
  %5573 = vmatprep.subr.bf16.mxu0 0
  %5574 = vmatpush1.bf16.msra.mxu0 %v5441
  %5575 = vmatprep.subr.bf16.mxu0 0
  %5576 = vmatpush1.bf16.msra.mxu0 %v5444
  %5577 = vmatprep.subr.bf16.mxu0 0
  %5578 = vmatpush1.bf16.msra.mxu0 %v5447
  %5579 = vmatprep.subr.bf16.mxu0 0
  %5580 = vmatpush1.bf16.msra.mxu0 %v5450
  %5581 = vmatprep.subr.bf16.mxu0 0
  %5582 = vmatpush1.bf16.msra.mxu0 %v5453
  %5583 = vmatprep.subr.bf16.mxu0 0
  %5584 = vmatpush1.bf16.msra.mxu0 %v5456
  %5585 = vmatprep.subr.bf16.mxu0 0
  %5586 = vmatpush1.bf16.msra.mxu0 %v5459
  %5587 = vmatprep.subr.bf16.mxu0 0
  %5588 = vmatpush1.bf16.msra.mxu0 %v5462
  %5589 = vmatprep.subr.bf16.mxu0 0
  %5590 = vmatpush1.bf16.msra.mxu0 %v5465
  %5591 = vmatprep.subr.bf16.mxu0 0
  %5592 = vmatpush1.bf16.msra.mxu0 %v5468
  %5593 = vmatprep.subr.bf16.mxu0 0
  %5594 = vmatpush1.bf16.msra.mxu0 %v5471
  %5595 = vmatprep.subr.bf16.mxu0 0
  %5596 = vmatpush1.bf16.msra.mxu0 %v5474
  %5597 = vmatprep.subr.bf16.mxu0 0
  %5598 = vmatpush1.bf16.msra.mxu0 %v5477
  %5599 = vmatprep.mubr.bf16.mxu0 %v4050
  %5600 = vmatmul.mubr.bf16.gmra.mrb[0].mxu0 %v4049
  %v5601 = vpop.f32.mrb[0].mxu0
  %v5602 = vadd.f32 0.0, %v5601
  %v5603 = vpop.f32.mrb[0].mxu0
  %v5604 = vpop.f32.mrb[0].mxu0
  %v5605 = vpop.f32.mrb[0].mxu0
  %5606 = vdwg.mxu0
  %s5607 = scalar_lea.vmem %s27, 48
  %v5608 = vld [vmem:[%s5607] sm:$0xff]
  %v5609 = vld [vmem:[%s5607 + $0x8] sm:$0xff]
  %v5610 = vld [vmem:[%s5607 + $0x10] sm:$0x3]
  %v5612 = vsel %vm203, %v5608, 0
  %v5615 = vsel %vm203, %v5609, 0
  %v5618 = vsel %vm203, %v5610, 0
  %5620 = vmatprep.subr.mxu0 %v5563
  %5621 = vmatpush1.msra.mxu0 %v5561
  %5622 = vmatprep.subr.mxu0 0.0
  %5623 = vmatpush1.msra.mxu0 0.0
  %5624 = vmatprep.subr.mxu0 0.0
  %5625 = vmatpush1.msra.mxu0 0.0
  %5626 = vmatprep.subr.mxu0 0.0
  %5627 = vmatpush1.msra.mxu0 0.0
  %5628 = vmatprep.subr.mxu0 0.0
  %5629 = vmatpush1.msra.mxu0 0.0
  %5630 = vmatprep.subr.mxu0 0.0
  %5631 = vmatpush1.msra.mxu0 0.0
  %5632 = vmatprep.subr.mxu0 0.0
  %5633 = vmatpush1.msra.mxu0 0.0
  %5634 = vmatprep.subr.mxu0 0.0
  %5635 = vmatpush1.msra.mxu0 0.0
  %5636 = vmatprep.subr.mxu0 0.0
  %5637 = vmatpush1.msra.mxu0 0.0
  %5638 = vmatprep.subr.mxu0 0.0
  %5639 = vmatpush1.msra.mxu0 0.0
  %5640 = vmatprep.subr.mxu0 0.0
  %5641 = vmatpush1.msra.mxu0 0.0
  %5642 = vmatprep.subr.mxu0 0.0
  %5643 = vmatpush1.msra.mxu0 0.0
  %5644 = vmatprep.subr.mxu0 0.0
  %5645 = vmatpush1.msra.mxu0 0.0
  %5646 = vmatprep.subr.mxu0 0.0
  %5647 = vmatpush1.msra.mxu0 0.0
  %5648 = vmatprep.subr.mxu0 0.0
  %5649 = vmatpush1.msra.mxu0 0.0
  %5650 = vmatprep.subr.mxu0 0.0
  %5651 = vmatpush1.msra.mxu0 0.0
  %5652 = vmatprep.subr.mxu0 0.0
  %5653 = vmatpush1.msra.mxu0 0.0
  %5654 = vmatprep.subr.mxu0 0.0
  %5655 = vmatpush1.msra.mxu0 0.0
  %5656 = vmatprep.subr.mxu0 0.0
  %5657 = vmatpush1.msra.mxu0 0.0
  %5658 = vmatprep.subr.mxu0 0.0
  %5659 = vmatpush1.msra.mxu0 0.0
  %5660 = vmatprep.subr.mxu0 0.0
  %5661 = vmatpush1.msra.mxu0 0.0
  %5662 = vmatprep.subr.mxu0 0.0
  %5663 = vmatpush1.msra.mxu0 0.0
  %5664 = vmatprep.subr.mxu0 0.0
  %5665 = vmatpush1.msra.mxu0 0.0
  %5666 = vmatprep.subr.mxu0 0.0
  %5667 = vmatpush1.msra.mxu0 0.0
  %5668 = vmatprep.subr.mxu0 0.0
  %5669 = vmatpush1.msra.mxu0 0.0
  %5670 = vmatprep.subr.mxu0 0.0
  %5671 = vmatpush1.msra.mxu0 0.0
  %5672 = vmatprep.subr.mxu0 0.0
  %5673 = vmatpush1.msra.mxu0 0.0
  %5674 = vmatprep.subr.mxu0 0.0
  %5675 = vmatpush1.msra.mxu0 0.0
  %5676 = vmatprep.subr.mxu0 0.0
  %5677 = vmatpush1.msra.mxu0 0.0
  %5678 = vmatprep.subr.mxu0 0.0
  %5679 = vmatpush1.msra.mxu0 0.0
  %5680 = vmatprep.subr.mxu0 0.0
  %5681 = vmatpush1.msra.mxu0 0.0
  %5682 = vmatprep.subr.mxu0 0.0
  %5683 = vmatpush1.msra.mxu0 0.0
  %5684 = vmatprep.mubr.f32.mxu0 0.0
  %5685 = vmatmul.mubr.f32.gmra.mrb[0].mxu0 %v5612
  %v5686 = vpop.f32.mrb[0].mxu0
  %v5687 = vadd.f32 0.0, %v5686
  %v5688 = vpop.f32.mrb[0].mxu0
  %v5689 = vadd.f32 0.0, %v5688
  %5690 = vmatprep.mubr.f32.mxu0 0.0
  %5691 = vmatmul.mubr.f32.gmra.mrb[0].mxu0 %v5615
  %v5692 = vpop.f32.mrb[0].mxu0
  %v5693 = vadd.f32 0.0, %v5692
  %v5694 = vpop.f32.mrb[0].mxu0
  %v5695 = vadd.f32 0.0, %v5694
  %5696 = vmatprep.mubr.f32.mxu0 0.0
  %5697 = vmatmul.mubr.f32.gmra.mrb[0].mxu0 %v5618
  %v5698 = vpop.f32.mrb[0].mxu0
  %v5699 = vadd.f32 0.0, %v5698
  %v5700 = vpop.f32.mrb[0].mxu0
  %v5701 = vadd.f32 0.0, %v5700
  %5702 = vdwg.mxu0
  %5703 = vmatprep.subr.mxu0 0.0
  %5704 = vmatpush1.msra.mxu0 %v5602
  %5705 = vmatprep.subr.mxu0 0.0
  %5706 = vmatpush1.msra.mxu0 0.0
  %5707 = vmatprep.subr.mxu0 0.0
  %5708 = vmatpush1.msra.mxu0 0.0
  %5709 = vmatprep.subr.mxu0 0.0
  %5710 = vmatpush1.msra.mxu0 0.0
  %5711 = vmatprep.subr.mxu0 0.0
  %5712 = vmatpush1.msra.mxu0 0.0
  %5713 = vmatprep.subr.mxu0 0.0
  %5714 = vmatpush1.msra.mxu0 0.0
  %5715 = vmatprep.subr.mxu0 0.0
  %5716 = vmatpush1.msra.mxu0 0.0
  %5717 = vmatprep.subr.mxu0 0.0
  %5718 = vmatpush1.msra.mxu0 0.0
  %5719 = vmatprep.subr.mxu0 0.0
  %5720 = vmatpush1.msra.mxu0 0.0
  %5721 = vmatprep.subr.mxu0 0.0
  %5722 = vmatpush1.msra.mxu0 0.0
  %5723 = vmatprep.subr.mxu0 0.0
  %5724 = vmatpush1.msra.mxu0 0.0
  %5725 = vmatprep.subr.mxu0 0.0
  %5726 = vmatpush1.msra.mxu0 0.0
  %5727 = vmatprep.subr.mxu0 0.0
  %5728 = vmatpush1.msra.mxu0 0.0
  %5729 = vmatprep.subr.mxu0 0.0
  %5730 = vmatpush1.msra.mxu0 0.0
  %5731 = vmatprep.subr.mxu0 0.0
  %5732 = vmatpush1.msra.mxu0 0.0
  %5733 = vmatprep.subr.mxu0 0.0
  %5734 = vmatpush1.msra.mxu0 0.0
  %5735 = vmatprep.subr.mxu0 0.0
  %5736 = vmatpush1.msra.mxu0 0.0
  %5737 = vmatprep.subr.mxu0 0.0
  %5738 = vmatpush1.msra.mxu0 0.0
  %5739 = vmatprep.subr.mxu0 0.0
  %5740 = vmatpush1.msra.mxu0 0.0
  %5741 = vmatprep.subr.mxu0 0.0
  %5742 = vmatpush1.msra.mxu0 0.0
  %5743 = vmatprep.subr.mxu0 0.0
  %5744 = vmatpush1.msra.mxu0 0.0
  %5745 = vmatprep.subr.mxu0 0.0
  %5746 = vmatpush1.msra.mxu0 0.0
  %5747 = vmatprep.subr.mxu0 0.0
  %5748 = vmatpush1.msra.mxu0 0.0
  %5749 = vmatprep.subr.mxu0 0.0
  %5750 = vmatpush1.msra.mxu0 0.0
  %5751 = vmatprep.subr.mxu0 0.0
  %5752 = vmatpush1.msra.mxu0 0.0
  %5753 = vmatprep.subr.mxu0 0.0
  %5754 = vmatpush1.msra.mxu0 0.0
  %5755 = vmatprep.subr.mxu0 0.0
  %5756 = vmatpush1.msra.mxu0 0.0
  %5757 = vmatprep.subr.mxu0 0.0
  %5758 = vmatpush1.msra.mxu0 0.0
  %5759 = vmatprep.subr.mxu0 0.0
  %5760 = vmatpush1.msra.mxu0 0.0
  %5761 = vmatprep.subr.mxu0 0.0
  %5762 = vmatpush1.msra.mxu0 0.0
  %5763 = vmatprep.subr.mxu0 0.0
  %5764 = vmatpush1.msra.mxu0 0.0
  %5765 = vmatprep.subr.mxu0 0.0
  %5766 = vmatpush1.msra.mxu0 0.0
  %5767 = vmatprep.mubr.f32.mxu0 0.0
  %5768 = vmatmul.mubr.f32.gmra.mrb[0].mxu0 %v5612
  %v5769 = vpop.f32.mrb[0].mxu0
  %v5770 = vadd.f32 0.0, %v5769
  %v5771 = vpop.f32.mrb[0].mxu0
  %5772 = vmatprep.mubr.f32.mxu0 0.0
  %5773 = vmatmul.mubr.f32.gmra.mrb[0].mxu0 %v5615
  %v5774 = vpop.f32.mrb[0].mxu0
  %v5775 = vadd.f32 0.0, %v5774
  %v5776 = vpop.f32.mrb[0].mxu0
  %5777 = vmatprep.mubr.f32.mxu0 0.0
  %5778 = vmatmul.mubr.f32.gmra.mrb[0].mxu0 %v5618
  %v5779 = vpop.f32.mrb[0].mxu0
  %v5780 = vadd.f32 0.0, %v5779
  %v5781 = vpop.f32.mrb[0].mxu0
  %5782 = vdwg.mxu0
  %v5783 = vadd.f32 %v5109, %v5687
  %v5784 = vadd.f32 %v5111, %v5689
  %v5785 = vadd.f32 %v5192, %v5770
  %v5786 = vadd.f32 %v5115, %v5693
  %v5787 = vadd.f32 %v5117, %v5695
  %v5788 = vadd.f32 %v5197, %v5775
  %v5789 = vadd.f32 %v5121, %v5699
  %v5790 = vadd.f32 %v5123, %v5701
  %v5791 = vadd.f32 %v5202, %v5780
  %v5792 = vld [vmem:[%s29] sm:$0xff]
  %v5793 = vld [vmem:[%s29 + $0x8] sm:$0xff]
  %v5794 = vld [vmem:[%s29 + $0x10] sm:$0xff]
  %v5795 = vld [vmem:[%s29 + $0x18] sm:$0xff]
  %v5796 = vld [vmem:[%s29 + $0x20] sm:$0xff]
  %v5797 = vld [vmem:[%s29 + $0x28] sm:$0xff]
  %v5798 = vld [vmem:[%s29 + $0x30] sm:$0xff]
  %v5799 = vld [vmem:[%s29 + $0x38] sm:$0xff]
  %v5800 = vld [vmem:[%s29 + $0x40] sm:$0xff]
  %v5801 = vld [vmem:[%s29 + $0x48] sm:$0xff]
  %v5802 = vld [vmem:[%s29 + $0x50] sm:$0xff]
  %v5803 = vld [vmem:[%s29 + $0x58] sm:$0xff]
  %v5804 = vld [vmem:[%s31] sm:$0xff]
  %v5805 = vld [vmem:[%s31 + $0x8] sm:$0xff]
  %v5806 = vld [vmem:[%s31 + $0x10] sm:$0xff]
  %v5807 = vld [vmem:[%s31 + $0x18] sm:$0xff]
  %v5808 = vld [vmem:[%s31 + $0x20] sm:$0xff]
  %v5809 = vld [vmem:[%s31 + $0x28] sm:$0xff]
  %v5810 = vld [vmem:[%s31 + $0x30] sm:$0xff]
  %v5811 = vld [vmem:[%s31 + $0x38] sm:$0xff]
  %v5812 = vld [vmem:[%s31 + $0x40] sm:$0xff]
  %v5813 = vld [vmem:[%s31 + $0x48] sm:$0xff]
  %v5814 = vld [vmem:[%s31 + $0x50] sm:$0xff]
  %v5815 = vld [vmem:[%s31 + $0x58] sm:$0xff]
  %v5816 = vld [vmem:[%s31 + $0x60] sm:$0xff]
  %v5817 = vld [vmem:[%s31 + $0x68] sm:$0xff]
  %v5818 = vld [vmem:[%s31 + $0x70] sm:$0xff]
  %v5819 = vld [vmem:[%s31 + $0x78] sm:$0xff]
  %v5820 = vld [vmem:[%s31 + $0x80] sm:$0xff]
  %v5821 = vld [vmem:[%s31 + $0x88] sm:$0xff]
  %v5822 = vld [vmem:[%s31 + $0x90] sm:$0xff]
  %v5823 = vld [vmem:[%s31 + $0x98] sm:$0xff]
  %v5824 = vld [vmem:[%s31 + $0xa0] sm:$0xff]
  %v5825 = vld [vmem:[%s31 + $0xa8] sm:$0xff]
  %v5826 = vld [vmem:[%s31 + $0xb0] sm:$0xff]
  %v5827 = vld [vmem:[%s31 + $0xb8] sm:$0xff]
  %v5828 = vld [vmem:[%s31 + $0xc0] sm:$0xff]
  %v5829 = vld [vmem:[%s31 + $0xc8] sm:$0xff]
  %v5830 = vld [vmem:[%s31 + $0xd0] sm:$0xff]
  %v5831 = vld [vmem:[%s31 + $0xd8] sm:$0xff]
  %v5832 = vld [vmem:[%s31 + $0xe0] sm:$0xff]
  %v5833 = vld [vmem:[%s31 + $0xe8] sm:$0xff]
  %v5834 = vld [vmem:[%s31 + $0xf0] sm:$0xff]
  %v5835 = vld [vmem:[%s31 + $0xf8] sm:$0xff]
  %v5836 = vld [vmem:[%s31 + $0x100] sm:$0xff]
  %v5837 = vld [vmem:[%s31 + $0x108] sm:$0xff]
  %v5838 = vld [vmem:[%s31 + $0x110] sm:$0xff]
  %v5839 = vld [vmem:[%s31 + $0x118] sm:$0xff]
  %v5840 = vld [vmem:[%s33] sm:$0x1]
  %v5841 = vld [vmem:[%s35] sm:$0x1]
  %v5842 = vld [vmem:[%s37] sm:$0x1]
  %vm5843 = vcmask 261120
  %v5845 = vsel %vm5843, %v5840, 0
  %5847 = vmatprep.subr.mxu0 %v5793
  %5848 = vmatpush1.msra.mxu0 %v5792
  %5849 = vmatprep.subr.mxu0 %v5796
  %5850 = vmatpush1.msra.mxu0 %v5795
  %5851 = vmatprep.subr.mxu0 %v5799
  %5852 = vmatpush1.msra.mxu0 %v5798
  %5853 = vmatprep.subr.mxu0 %v5802
  %5854 = vmatpush1.msra.mxu0 %v5801
  %5855 = vmatprep.subr.mxu0 0.0
  %5856 = vmatpush1.msra.mxu0 0.0
  %5857 = vmatprep.subr.mxu0 0.0
  %5858 = vmatpush1.msra.mxu0 0.0
  %5859 = vmatprep.subr.mxu0 0.0
  %5860 = vmatpush1.msra.mxu0 0.0
  %5861 = vmatprep.subr.mxu0 0.0
  %5862 = vmatpush1.msra.mxu0 0.0
  %5863 = vmatprep.subr.mxu0 0.0
  %5864 = vmatpush1.msra.mxu0 0.0
  %5865 = vmatprep.subr.mxu0 0.0
  %5866 = vmatpush1.msra.mxu0 0.0
  %5867 = vmatprep.subr.mxu0 0.0
  %5868 = vmatpush1.msra.mxu0 0.0
  %5869 = vmatprep.subr.mxu0 0.0
  %5870 = vmatpush1.msra.mxu0 0.0
  %5871 = vmatprep.subr.mxu0 0.0
  %5872 = vmatpush1.msra.mxu0 0.0
  %5873 = vmatprep.subr.mxu0 0.0
  %5874 = vmatpush1.msra.mxu0 0.0
  %5875 = vmatprep.subr.mxu0 0.0
  %5876 = vmatpush1.msra.mxu0 0.0
  %5877 = vmatprep.subr.mxu0 0.0
  %5878 = vmatpush1.msra.mxu0 0.0
  %5879 = vmatprep.subr.mxu0 0.0
  %5880 = vmatpush1.msra.mxu0 0.0
  %5881 = vmatprep.subr.mxu0 0.0
  %5882 = vmatpush1.msra.mxu0 0.0
  %5883 = vmatprep.subr.mxu0 0.0
  %5884 = vmatpush1.msra.mxu0 0.0
  %5885 = vmatprep.subr.mxu0 0.0
  %5886 = vmatpush1.msra.mxu0 0.0
  %5887 = vmatprep.subr.mxu0 0.0
  %5888 = vmatpush1.msra.mxu0 0.0
  %5889 = vmatprep.subr.mxu0 0.0
  %5890 = vmatpush1.msra.mxu0 0.0
  %5891 = vmatprep.subr.mxu0 0.0
  %5892 = vmatpush1.msra.mxu0 0.0
  %5893 = vmatprep.subr.mxu0 0.0
  %5894 = vmatpush1.msra.mxu0 0.0
  %5895 = vmatprep.subr.mxu0 0.0
  %5896 = vmatpush1.msra.mxu0 0.0
  %5897 = vmatprep.subr.mxu0 0.0
  %5898 = vmatpush1.msra.mxu0 0.0
  %5899 = vmatprep.subr.mxu0 0.0
  %5900 = vmatpush1.msra.mxu0 0.0
  %5901 = vmatprep.subr.mxu0 0.0
  %5902 = vmatpush1.msra.mxu0 0.0
  %5903 = vmatprep.subr.mxu0 0.0
  %5904 = vmatpush1.msra.mxu0 0.0
  %5905 = vmatprep.subr.mxu0 0.0
  %5906 = vmatpush1.msra.mxu0 0.0
  %5907 = vmatprep.subr.mxu0 0.0
  %5908 = vmatpush1.msra.mxu0 0.0
  %5909 = vmatprep.subr.mxu0 0.0
  %5910 = vmatpush1.msra.mxu0 0.0
  %5911 = vmatprep.mubr.f32.mxu0 0.0
  %5912 = vmatmul.mubr.f32.gmra.mrb[0].mxu0 %v5845
  %v5913 = vpop.f32.mrb[0].mxu0
  %v5914 = vadd.f32 0.0, %v5913
  %v5915 = vpop.f32.mrb[0].mxu0
  %v5916 = vadd.f32 0.0, %v5915
  %5917 = vdwg.mxu0
  %5918 = vmatprep.subr.mxu0 0.0
  %5919 = vmatpush1.msra.mxu0 %v5794
  %5920 = vmatprep.subr.mxu0 0.0
  %5921 = vmatpush1.msra.mxu0 %v5797
  %5922 = vmatprep.subr.mxu0 0.0
  %5923 = vmatpush1.msra.mxu0 %v5800
  %5924 = vmatprep.subr.mxu0 0.0
  %5925 = vmatpush1.msra.mxu0 %v5803
  %5926 = vmatprep.subr.mxu0 0.0
  %5927 = vmatpush1.msra.mxu0 0.0
  %5928 = vmatprep.subr.mxu0 0.0
  %5929 = vmatpush1.msra.mxu0 0.0
  %5930 = vmatprep.subr.mxu0 0.0
  %5931 = vmatpush1.msra.mxu0 0.0
  %5932 = vmatprep.subr.mxu0 0.0
  %5933 = vmatpush1.msra.mxu0 0.0
  %5934 = vmatprep.subr.mxu0 0.0
  %5935 = vmatpush1.msra.mxu0 0.0
  %5936 = vmatprep.subr.mxu0 0.0
  %5937 = vmatpush1.msra.mxu0 0.0
  %5938 = vmatprep.subr.mxu0 0.0
  %5939 = vmatpush1.msra.mxu0 0.0
  %5940 = vmatprep.subr.mxu0 0.0
  %5941 = vmatpush1.msra.mxu0 0.0
  %5942 = vmatprep.subr.mxu0 0.0
  %5943 = vmatpush1.msra.mxu0 0.0
  %5944 = vmatprep.subr.mxu0 0.0
  %5945 = vmatpush1.msra.mxu0 0.0
  %5946 = vmatprep.subr.mxu0 0.0
  %5947 = vmatpush1.msra.mxu0 0.0
  %5948 = vmatprep.subr.mxu0 0.0
  %5949 = vmatpush1.msra.mxu0 0.0
  %5950 = vmatprep.subr.mxu0 0.0
  %5951 = vmatpush1.msra.mxu0 0.0
  %5952 = vmatprep.subr.mxu0 0.0
  %5953 = vmatpush1.msra.mxu0 0.0
  %5954 = vmatprep.subr.mxu0 0.0
  %5955 = vmatpush1.msra.mxu0 0.0
  %5956 = vmatprep.subr.mxu0 0.0
  %5957 = vmatpush1.msra.mxu0 0.0
  %5958 = vmatprep.subr.mxu0 0.0
  %5959 = vmatpush1.msra.mxu0 0.0
  %5960 = vmatprep.subr.mxu0 0.0
  %5961 = vmatpush1.msra.mxu0 0.0
  %5962 = vmatprep.subr.mxu0 0.0
  %5963 = vmatpush1.msra.mxu0 0.0
  %5964 = vmatprep.subr.mxu0 0.0
  %5965 = vmatpush1.msra.mxu0 0.0
  %5966 = vmatprep.subr.mxu0 0.0
  %5967 = vmatpush1.msra.mxu0 0.0
  %5968 = vmatprep.subr.mxu0 0.0
  %5969 = vmatpush1.msra.mxu0 0.0
  %5970 = vmatprep.subr.mxu0 0.0
  %5971 = vmatpush1.msra.mxu0 0.0
  %5972 = vmatprep.subr.mxu0 0.0
  %5973 = vmatpush1.msra.mxu0 0.0
  %5974 = vmatprep.subr.mxu0 0.0
  %5975 = vmatpush1.msra.mxu0 0.0
  %5976 = vmatprep.subr.mxu0 0.0
  %5977 = vmatpush1.msra.mxu0 0.0
  %5978 = vmatprep.subr.mxu0 0.0
  %5979 = vmatpush1.msra.mxu0 0.0
  %5980 = vmatprep.subr.mxu0 0.0
  %5981 = vmatpush1.msra.mxu0 0.0
  %5982 = vmatprep.mubr.f32.mxu0 0.0
  %5983 = vmatmul.mubr.f32.gmra.mrb[0].mxu0 %v5845
  %v5984 = vpop.f32.mrb[0].mxu0
  %v5985 = vadd.f32 0.0, %v5984
  %v5986 = vpop.f32.mrb[0].mxu0
  %5987 = vdwg.mxu0
  %v5988 = vlaneseq
  %v5989 = vshrl.u32 %v5988, 7
  %v5990 = vsub.s32 0, %v5989
  %v5991 = vrot.slane %v5914, %v5990
  %v5992 = vlaneseq
  %v5993 = vshrl.u32 %v5992, 7
  %v5994 = vsub.s32 0, %v5993
  %v5995 = vrot.slane %v5916, %v5994
  %v5996 = vlaneseq
  %v5997 = vshrl.u32 %v5996, 7
  %v5998 = vsub.s32 0, %v5997
  %v5999 = vrot.slane %v5985, %v5998
  %v6000 = vadd.f32 %v5783, %v5991
  %v6001 = vadd.f32 %v5784, %v5995
  %v6002 = vadd.f32 %v5785, %v5999
  %v6003 = vadd.f32 %v5786, %v5991
  %v6004 = vadd.f32 %v5787, %v5995
  %v6005 = vadd.f32 %v5788, %v5999
  %v6006 = vadd.f32 %v5789, %v5991
  %v6007 = vadd.f32 %v5790, %v5995
  %v6008 = vadd.f32 %v5791, %v5999
  %v6009 = vadd.f32 %v6000, %v6003
  %v6010 = vsel %vm387, %v6006, 0.0
  %v6011 = vadd.f32 %v6009, %v6010
  %v6012 = vrot.slane %v6011, 4
  %v6013 = vadd.f32 %v6011, %v6012
  %v6014 = vrot.slane %v6013, 2
  %v6015 = vadd.f32 %v6013, %v6014
  %v6016 = vrot.slane %v6015, 1
  %v6017 = vadd.f32 %v6015, %v6016
  %v6018 = vadd.f32 %v6001, %v6004
  %v6019 = vsel %vm387, %v6007, 0.0
  %v6020 = vadd.f32 %v6018, %v6019
  %v6021 = vrot.slane %v6020, 4
  %v6022 = vadd.f32 %v6020, %v6021
  %v6023 = vrot.slane %v6022, 2
  %v6024 = vadd.f32 %v6022, %v6023
  %v6025 = vrot.slane %v6024, 1
  %v6026 = vadd.f32 %v6024, %v6025
  %v6027 = vsel %vm5843, %v6002, 0.0
  %v6028 = vsel %vm5843, %v6005, 0.0
  %v6029 = vadd.f32 %v6027, %v6028
  %vm6030 = vcmask 254976
  %v6031 = vsel %vm6030, %v6008, 0.0
  %v6032 = vadd.f32 %v6029, %v6031
  %v6033 = vrot.slane %v6032, 4
  %v6034 = vadd.f32 %v6032, %v6033
  %v6035 = vrot.slane %v6034, 2
  %v6036 = vadd.f32 %v6034, %v6035
  %v6037 = vrot.slane %v6036, 1
  %v6038 = vadd.f32 %v6036, %v6037
  %v6040 = vsel %vm5843, %v6038, 0
  %6042 = vmatprep.subr.mxu0 0.0
  %6043 = vmatpush1.msra.mxu0 %v5804
  %6044 = vmatprep.subr.mxu0 0.0
  %6045 = vmatpush1.msra.mxu0 %v5805
  %6046 = vmatprep.subr.mxu0 0.0
  %6047 = vmatpush1.msra.mxu0 %v5806
  %6048 = vmatprep.subr.mxu0 0.0
  %6049 = vmatpush1.msra.mxu0 %v5807
  %6050 = vmatprep.subr.mxu0 0.0
  %6051 = vmatpush1.msra.mxu0 %v5808
  %6052 = vmatprep.subr.mxu0 0.0
  %6053 = vmatpush1.msra.mxu0 %v5809
  %6054 = vmatprep.subr.mxu0 0.0
  %6055 = vmatpush1.msra.mxu0 %v5810
  %6056 = vmatprep.subr.mxu0 0.0
  %6057 = vmatpush1.msra.mxu0 %v5811
  %6058 = vmatprep.subr.mxu0 0.0
  %6059 = vmatpush1.msra.mxu0 %v5812
  %6060 = vmatprep.subr.mxu0 0.0
  %6061 = vmatpush1.msra.mxu0 %v5813
  %6062 = vmatprep.subr.mxu0 0.0
  %6063 = vmatpush1.msra.mxu0 %v5814
  %6064 = vmatprep.subr.mxu0 0.0
  %6065 = vmatpush1.msra.mxu0 %v5815
  %6066 = vmatprep.subr.mxu0 0.0
  %6067 = vmatpush1.msra.mxu0 %v5816
  %6068 = vmatprep.subr.mxu0 0.0
  %6069 = vmatpush1.msra.mxu0 %v5817
  %6070 = vmatprep.subr.mxu0 0.0
  %6071 = vmatpush1.msra.mxu0 %v5818
  %6072 = vmatprep.subr.mxu0 0.0
  %6073 = vmatpush1.msra.mxu0 %v5819
  %6074 = vmatprep.subr.mxu0 0.0
  %6075 = vmatpush1.msra.mxu0 %v5820
  %6076 = vmatprep.subr.mxu0 0.0
  %6077 = vmatpush1.msra.mxu0 %v5821
  %6078 = vmatprep.subr.mxu0 0.0
  %6079 = vmatpush1.msra.mxu0 %v5822
  %6080 = vmatprep.subr.mxu0 0.0
  %6081 = vmatpush1.msra.mxu0 %v5823
  %6082 = vmatprep.subr.mxu0 0.0
  %6083 = vmatpush1.msra.mxu0 %v5824
  %6084 = vmatprep.subr.mxu0 0.0
  %6085 = vmatpush1.msra.mxu0 %v5825
  %6086 = vmatprep.subr.mxu0 0.0
  %6087 = vmatpush1.msra.mxu0 %v5826
  %6088 = vmatprep.subr.mxu0 0.0
  %6089 = vmatpush1.msra.mxu0 %v5827
  %6090 = vmatprep.subr.mxu0 0.0
  %6091 = vmatpush1.msra.mxu0 %v5828
  %6092 = vmatprep.subr.mxu0 0.0
  %6093 = vmatpush1.msra.mxu0 %v5829
  %6094 = vmatprep.subr.mxu0 0.0
  %6095 = vmatpush1.msra.mxu0 %v5830
  %6096 = vmatprep.subr.mxu0 0.0
  %6097 = vmatpush1.msra.mxu0 %v5831
  %6098 = vmatprep.subr.mxu0 0.0
  %6099 = vmatpush1.msra.mxu0 %v5832
  %6100 = vmatprep.subr.mxu0 0.0
  %6101 = vmatpush1.msra.mxu0 %v5833
  %6102 = vmatprep.subr.mxu0 0.0
  %6103 = vmatpush1.msra.mxu0 %v5834
  %6104 = vmatprep.subr.mxu0 0.0
  %6105 = vmatpush1.msra.mxu0 %v5835
  %6106 = vmatprep.mubr.f32.mxu0 %v6026
  %6107 = vmatmul.mubr.f32.gmra.mrb[0].mxu0 %v6017
  %v6108 = vpop.f32.mrb[0].mxu0
  %v6109 = vadd.f32 0.0, %v6108
  %v6110 = vpop.f32.mrb[0].mxu0
  %6111 = vdwg.mxu0
  %6112 = vmatprep.subr.mxu0 0.0
  %6113 = vmatpush1.msra.mxu0 %v5836
  %6114 = vmatprep.subr.mxu0 0.0
  %6115 = vmatpush1.msra.mxu0 %v5837
  %6116 = vmatprep.subr.mxu0 0.0
  %6117 = vmatpush1.msra.mxu0 %v5838
  %6118 = vmatprep.subr.mxu0 0.0
  %6119 = vmatpush1.msra.mxu0 %v5839
  %6120 = vmatprep.subr.mxu0 0.0
  %6121 = vmatpush1.msra.mxu0 0.0
  %6122 = vmatprep.subr.mxu0 0.0
  %6123 = vmatpush1.msra.mxu0 0.0
  %6124 = vmatprep.subr.mxu0 0.0
  %6125 = vmatpush1.msra.mxu0 0.0
  %6126 = vmatprep.subr.mxu0 0.0
  %6127 = vmatpush1.msra.mxu0 0.0
  %6128 = vmatprep.subr.mxu0 0.0
  %6129 = vmatpush1.msra.mxu0 0.0
  %6130 = vmatprep.subr.mxu0 0.0
  %6131 = vmatpush1.msra.mxu0 0.0
  %6132 = vmatprep.subr.mxu0 0.0
  %6133 = vmatpush1.msra.mxu0 0.0
  %6134 = vmatprep.subr.mxu0 0.0
  %6135 = vmatpush1.msra.mxu0 0.0
  %6136 = vmatprep.subr.mxu0 0.0
  %6137 = vmatpush1.msra.mxu0 0.0
  %6138 = vmatprep.subr.mxu0 0.0
  %6139 = vmatpush1.msra.mxu0 0.0
  %6140 = vmatprep.subr.mxu0 0.0
  %6141 = vmatpush1.msra.mxu0 0.0
  %6142 = vmatprep.subr.mxu0 0.0
  %6143 = vmatpush1.msra.mxu0 0.0
  %6144 = vmatprep.subr.mxu0 0.0
  %6145 = vmatpush1.msra.mxu0 0.0
  %6146 = vmatprep.subr.mxu0 0.0
  %6147 = vmatpush1.msra.mxu0 0.0
  %6148 = vmatprep.subr.mxu0 0.0
  %6149 = vmatpush1.msra.mxu0 0.0
  %6150 = vmatprep.subr.mxu0 0.0
  %6151 = vmatpush1.msra.mxu0 0.0
  %6152 = vmatprep.subr.mxu0 0.0
  %6153 = vmatpush1.msra.mxu0 0.0
  %6154 = vmatprep.subr.mxu0 0.0
  %6155 = vmatpush1.msra.mxu0 0.0
  %6156 = vmatprep.subr.mxu0 0.0
  %6157 = vmatpush1.msra.mxu0 0.0
  %6158 = vmatprep.subr.mxu0 0.0
  %6159 = vmatpush1.msra.mxu0 0.0
  %6160 = vmatprep.subr.mxu0 0.0
  %6161 = vmatpush1.msra.mxu0 0.0
  %6162 = vmatprep.subr.mxu0 0.0
  %6163 = vmatpush1.msra.mxu0 0.0
  %6164 = vmatprep.subr.mxu0 0.0
  %6165 = vmatpush1.msra.mxu0 0.0
  %6166 = vmatprep.subr.mxu0 0.0
  %6167 = vmatpush1.msra.mxu0 0.0
  %6168 = vmatprep.subr.mxu0 0.0
  %6169 = vmatpush1.msra.mxu0 0.0
  %6170 = vmatprep.subr.mxu0 0.0
  %6171 = vmatpush1.msra.mxu0 0.0
  %6172 = vmatprep.subr.mxu0 0.0
  %6173 = vmatpush1.msra.mxu0 0.0
  %6174 = vmatprep.subr.mxu0 0.0
  %6175 = vmatpush1.msra.mxu0 0.0
  %6176 = vmatprep.mubr.f32.mxu0 0.0
  %6177 = vmatmul.mubr.f32.gmra.mrb[0].mxu0 %v6040
  %v6178 = vpop.f32.mrb[0].mxu0
  %v6179 = vadd.f32 %v6109, %v6178
  %v6180 = vpop.f32.mrb[0].mxu0
  %6181 = vdwg.mxu0
  %v6182 = vrcp.pop 162.0
  %v6183 = vmul.f32 %v6179, %v6182
  %v6185 = vsel %vm5843, %v6183, 0
  %6187 = vmatprep.subr.mxu0 %v5793
  %6188 = vmatpush1.msra.mxu0 %v5792
  %6189 = vmatprep.subr.mxu0 %v5796
  %6190 = vmatpush1.msra.mxu0 %v5795
  %6191 = vmatprep.subr.mxu0 %v5799
  %6192 = vmatpush1.msra.mxu0 %v5798
  %6193 = vmatprep.subr.mxu0 %v5802
  %6194 = vmatpush1.msra.mxu0 %v5801
  %6195 = vmatprep.subr.mxu0 0.0
  %6196 = vmatpush1.msra.mxu0 0.0
  %6197 = vmatprep.subr.mxu0 0.0
  %6198 = vmatpush1.msra.mxu0 0.0
  %6199 = vmatprep.subr.mxu0 0.0
  %6200 = vmatpush1.msra.mxu0 0.0
  %6201 = vmatprep.subr.mxu0 0.0
  %6202 = vmatpush1.msra.mxu0 0.0
  %6203 = vmatprep.subr.mxu0 0.0
  %6204 = vmatpush1.msra.mxu0 0.0
  %6205 = vmatprep.subr.mxu0 0.0
  %6206 = vmatpush1.msra.mxu0 0.0
  %6207 = vmatprep.subr.mxu0 0.0
  %6208 = vmatpush1.msra.mxu0 0.0
  %6209 = vmatprep.subr.mxu0 0.0
  %6210 = vmatpush1.msra.mxu0 0.0
  %6211 = vmatprep.subr.mxu0 0.0
  %6212 = vmatpush1.msra.mxu0 0.0
  %6213 = vmatprep.subr.mxu0 0.0
  %6214 = vmatpush1.msra.mxu0 0.0
  %6215 = vmatprep.subr.mxu0 0.0
  %6216 = vmatpush1.msra.mxu0 0.0
  %6217 = vmatprep.subr.mxu0 0.0
  %6218 = vmatpush1.msra.mxu0 0.0
  %6219 = vmatprep.subr.mxu0 0.0
  %6220 = vmatpush1.msra.mxu0 0.0
  %6221 = vmatprep.subr.mxu0 0.0
  %6222 = vmatpush1.msra.mxu0 0.0
  %6223 = vmatprep.subr.mxu0 0.0
  %6224 = vmatpush1.msra.mxu0 0.0
  %6225 = vmatprep.subr.mxu0 0.0
  %6226 = vmatpush1.msra.mxu0 0.0
  %6227 = vmatprep.subr.mxu0 0.0
  %6228 = vmatpush1.msra.mxu0 0.0
  %6229 = vmatprep.subr.mxu0 0.0
  %6230 = vmatpush1.msra.mxu0 0.0
  %6231 = vmatprep.subr.mxu0 0.0
  %6232 = vmatpush1.msra.mxu0 0.0
  %6233 = vmatprep.subr.mxu0 0.0
  %6234 = vmatpush1.msra.mxu0 0.0
  %6235 = vmatprep.subr.mxu0 0.0
  %6236 = vmatpush1.msra.mxu0 0.0
  %6237 = vmatprep.subr.mxu0 0.0
  %6238 = vmatpush1.msra.mxu0 0.0
  %6239 = vmatprep.subr.mxu0 0.0
  %6240 = vmatpush1.msra.mxu0 0.0
  %6241 = vmatprep.subr.mxu0 0.0
  %6242 = vmatpush1.msra.mxu0 0.0
  %6243 = vmatprep.subr.mxu0 0.0
  %6244 = vmatpush1.msra.mxu0 0.0
  %6245 = vmatprep.subr.mxu0 0.0
  %6246 = vmatpush1.msra.mxu0 0.0
  %6247 = vmatprep.subr.mxu0 0.0
  %6248 = vmatpush1.msra.mxu0 0.0
  %6249 = vmatprep.subr.mxu0 0.0
  %6250 = vmatpush1.msra.mxu0 0.0
  %6251 = vmatprep.mubr.f32.mxu0 0.0
  %6252 = vmatmul.mubr.f32.gmra.mrb[0].mxu0 %v6185
  %v6253 = vpop.f32.mrb[0].mxu0
  %v6254 = vadd.f32 0.0, %v6253
  %v6255 = vpop.f32.mrb[0].mxu0
  %v6256 = vadd.f32 0.0, %v6255
  %6257 = vdwg.mxu0
  %6258 = vmatprep.subr.mxu0 0.0
  %6259 = vmatpush1.msra.mxu0 %v5794
  %6260 = vmatprep.subr.mxu0 0.0
  %6261 = vmatpush1.msra.mxu0 %v5797
  %6262 = vmatprep.subr.mxu0 0.0
  %6263 = vmatpush1.msra.mxu0 %v5800
  %6264 = vmatprep.subr.mxu0 0.0
  %6265 = vmatpush1.msra.mxu0 %v5803
  %6266 = vmatprep.subr.mxu0 0.0
  %6267 = vmatpush1.msra.mxu0 0.0
  %6268 = vmatprep.subr.mxu0 0.0
  %6269 = vmatpush1.msra.mxu0 0.0
  %6270 = vmatprep.subr.mxu0 0.0
  %6271 = vmatpush1.msra.mxu0 0.0
  %6272 = vmatprep.subr.mxu0 0.0
  %6273 = vmatpush1.msra.mxu0 0.0
  %6274 = vmatprep.subr.mxu0 0.0
  %6275 = vmatpush1.msra.mxu0 0.0
  %6276 = vmatprep.subr.mxu0 0.0
  %6277 = vmatpush1.msra.mxu0 0.0
  %6278 = vmatprep.subr.mxu0 0.0
  %6279 = vmatpush1.msra.mxu0 0.0
  %6280 = vmatprep.subr.mxu0 0.0
  %6281 = vmatpush1.msra.mxu0 0.0
  %6282 = vmatprep.subr.mxu0 0.0
  %6283 = vmatpush1.msra.mxu0 0.0
  %6284 = vmatprep.subr.mxu0 0.0
  %6285 = vmatpush1.msra.mxu0 0.0
  %6286 = vmatprep.subr.mxu0 0.0
  %6287 = vmatpush1.msra.mxu0 0.0
  %6288 = vmatprep.subr.mxu0 0.0
  %6289 = vmatpush1.msra.mxu0 0.0
  %6290 = vmatprep.subr.mxu0 0.0
  %6291 = vmatpush1.msra.mxu0 0.0
  %6292 = vmatprep.subr.mxu0 0.0
  %6293 = vmatpush1.msra.mxu0 0.0
  %6294 = vmatprep.subr.mxu0 0.0
  %6295 = vmatpush1.msra.mxu0 0.0
  %6296 = vmatprep.subr.mxu0 0.0
  %6297 = vmatpush1.msra.mxu0 0.0
  %6298 = vmatprep.subr.mxu0 0.0
  %6299 = vmatpush1.msra.mxu0 0.0
  %6300 = vmatprep.subr.mxu0 0.0
  %6301 = vmatpush1.msra.mxu0 0.0
  %6302 = vmatprep.subr.mxu0 0.0
  %6303 = vmatpush1.msra.mxu0 0.0
  %6304 = vmatprep.subr.mxu0 0.0
  %6305 = vmatpush1.msra.mxu0 0.0
  %6306 = vmatprep.subr.mxu0 0.0
  %6307 = vmatpush1.msra.mxu0 0.0
  %6308 = vmatprep.subr.mxu0 0.0
  %6309 = vmatpush1.msra.mxu0 0.0
  %6310 = vmatprep.subr.mxu0 0.0
  %6311 = vmatpush1.msra.mxu0 0.0
  %6312 = vmatprep.subr.mxu0 0.0
  %6313 = vmatpush1.msra.mxu0 0.0
  %6314 = vmatprep.subr.mxu0 0.0
  %6315 = vmatpush1.msra.mxu0 0.0
  %6316 = vmatprep.subr.mxu0 0.0
  %6317 = vmatpush1.msra.mxu0 0.0
  %6318 = vmatprep.subr.mxu0 0.0
  %6319 = vmatpush1.msra.mxu0 0.0
  %6320 = vmatprep.subr.mxu0 0.0
  %6321 = vmatpush1.msra.mxu0 0.0
  %6322 = vmatprep.mubr.f32.mxu0 0.0
  %6323 = vmatmul.mubr.f32.gmra.mrb[0].mxu0 %v6185
  %v6324 = vpop.f32.mrb[0].mxu0
  %v6325 = vadd.f32 0.0, %v6324
  %v6326 = vpop.f32.mrb[0].mxu0
  %6327 = vdwg.mxu0
  %v6328 = vlaneseq
  %v6329 = vshrl.u32 %v6328, 7
  %v6330 = vsub.s32 0, %v6329
  %v6331 = vrot.slane %v6254, %v6330
  %v6332 = vlaneseq
  %v6333 = vshrl.u32 %v6332, 7
  %v6334 = vsub.s32 0, %v6333
  %v6335 = vrot.slane %v6256, %v6334
  %v6336 = vlaneseq
  %v6337 = vshrl.u32 %v6336, 7
  %v6338 = vsub.s32 0, %v6337
  %v6339 = vrot.slane %v6325, %v6338
  %v6340 = vsub.f32 %v6000, %v6331
  %v6341 = vsub.f32 %v6001, %v6335
  %v6342 = vsub.f32 %v6002, %v6339
  %v6343 = vsub.f32 %v6003, %v6331
  %v6344 = vsub.f32 %v6004, %v6335
  %v6345 = vsub.f32 %v6005, %v6339
  %v6346 = vsub.f32 %v6006, %v6331
  %v6347 = vsub.f32 %v6007, %v6335
  %v6348 = vsub.f32 %v6008, %v6339
  %v6349 = vmul.f32 %v6340, %v6340
  %v6350 = vmul.f32 %v6341, %v6341
  %v6351 = vmul.f32 %v6342, %v6342
  %v6352 = vmul.f32 %v6343, %v6343
  %v6353 = vmul.f32 %v6344, %v6344
  %v6354 = vmul.f32 %v6345, %v6345
  %v6355 = vmul.f32 %v6346, %v6346
  %v6356 = vmul.f32 %v6347, %v6347
  %v6357 = vmul.f32 %v6348, %v6348
  %v6358 = vadd.f32 %v6349, %v6352
  %v6359 = vsel %vm387, %v6355, 0.0
  %v6360 = vadd.f32 %v6358, %v6359
  %v6361 = vrot.slane %v6360, 4
  %v6362 = vadd.f32 %v6360, %v6361
  %v6363 = vrot.slane %v6362, 2
  %v6364 = vadd.f32 %v6362, %v6363
  %v6365 = vrot.slane %v6364, 1
  %v6366 = vadd.f32 %v6364, %v6365
  %v6367 = vadd.f32 %v6350, %v6353
  %v6368 = vsel %vm387, %v6356, 0.0
  %v6369 = vadd.f32 %v6367, %v6368
  %v6370 = vrot.slane %v6369, 4
  %v6371 = vadd.f32 %v6369, %v6370
  %v6372 = vrot.slane %v6371, 2
  %v6373 = vadd.f32 %v6371, %v6372
  %v6374 = vrot.slane %v6373, 1
  %v6375 = vadd.f32 %v6373, %v6374
  %v6376 = vsel %vm5843, %v6351, 0.0
  %v6377 = vsel %vm5843, %v6354, 0.0
  %v6378 = vadd.f32 %v6376, %v6377
  %v6379 = vsel %vm6030, %v6357, 0.0
  %v6380 = vadd.f32 %v6378, %v6379
  %v6381 = vrot.slane %v6380, 4
  %v6382 = vadd.f32 %v6380, %v6381
  %v6383 = vrot.slane %v6382, 2
  %v6384 = vadd.f32 %v6382, %v6383
  %v6385 = vrot.slane %v6384, 1
  %v6386 = vadd.f32 %v6384, %v6385
  %v6388 = vsel %vm5843, %v6386, 0
  %6390 = vmatprep.subr.mxu0 0.0
  %6391 = vmatpush1.msra.mxu0 %v5804
  %6392 = vmatprep.subr.mxu0 0.0
  %6393 = vmatpush1.msra.mxu0 %v5805
  %6394 = vmatprep.subr.mxu0 0.0
  %6395 = vmatpush1.msra.mxu0 %v5806
  %6396 = vmatprep.subr.mxu0 0.0
  %6397 = vmatpush1.msra.mxu0 %v5807
  %6398 = vmatprep.subr.mxu0 0.0
  %6399 = vmatpush1.msra.mxu0 %v5808
  %6400 = vmatprep.subr.mxu0 0.0
  %6401 = vmatpush1.msra.mxu0 %v5809
  %6402 = vmatprep.subr.mxu0 0.0
  %6403 = vmatpush1.msra.mxu0 %v5810
  %6404 = vmatprep.subr.mxu0 0.0
  %6405 = vmatpush1.msra.mxu0 %v5811
  %6406 = vmatprep.subr.mxu0 0.0
  %6407 = vmatpush1.msra.mxu0 %v5812
  %6408 = vmatprep.subr.mxu0 0.0
  %6409 = vmatpush1.msra.mxu0 %v5813
  %6410 = vmatprep.subr.mxu0 0.0
  %6411 = vmatpush1.msra.mxu0 %v5814
  %6412 = vmatprep.subr.mxu0 0.0
  %6413 = vmatpush1.msra.mxu0 %v5815
  %6414 = vmatprep.subr.mxu0 0.0
  %6415 = vmatpush1.msra.mxu0 %v5816
  %6416 = vmatprep.subr.mxu0 0.0
  %6417 = vmatpush1.msra.mxu0 %v5817
  %6418 = vmatprep.subr.mxu0 0.0
  %6419 = vmatpush1.msra.mxu0 %v5818
  %6420 = vmatprep.subr.mxu0 0.0
  %6421 = vmatpush1.msra.mxu0 %v5819
  %6422 = vmatprep.subr.mxu0 0.0
  %6423 = vmatpush1.msra.mxu0 %v5820
  %6424 = vmatprep.subr.mxu0 0.0
  %6425 = vmatpush1.msra.mxu0 %v5821
  %6426 = vmatprep.subr.mxu0 0.0
  %6427 = vmatpush1.msra.mxu0 %v5822
  %6428 = vmatprep.subr.mxu0 0.0
  %6429 = vmatpush1.msra.mxu0 %v5823
  %6430 = vmatprep.subr.mxu0 0.0
  %6431 = vmatpush1.msra.mxu0 %v5824
  %6432 = vmatprep.subr.mxu0 0.0
  %6433 = vmatpush1.msra.mxu0 %v5825
  %6434 = vmatprep.subr.mxu0 0.0
  %6435 = vmatpush1.msra.mxu0 %v5826
  %6436 = vmatprep.subr.mxu0 0.0
  %6437 = vmatpush1.msra.mxu0 %v5827
  %6438 = vmatprep.subr.mxu0 0.0
  %6439 = vmatpush1.msra.mxu0 %v5828
  %6440 = vmatprep.subr.mxu0 0.0
  %6441 = vmatpush1.msra.mxu0 %v5829
  %6442 = vmatprep.subr.mxu0 0.0
  %6443 = vmatpush1.msra.mxu0 %v5830
  %6444 = vmatprep.subr.mxu0 0.0
  %6445 = vmatpush1.msra.mxu0 %v5831
  %6446 = vmatprep.subr.mxu0 0.0
  %6447 = vmatpush1.msra.mxu0 %v5832
  %6448 = vmatprep.subr.mxu0 0.0
  %6449 = vmatpush1.msra.mxu0 %v5833
  %6450 = vmatprep.subr.mxu0 0.0
  %6451 = vmatpush1.msra.mxu0 %v5834
  %6452 = vmatprep.subr.mxu0 0.0
  %6453 = vmatpush1.msra.mxu0 %v5835
  %6454 = vmatprep.mubr.f32.mxu0 %v6375
  %6455 = vmatmul.mubr.f32.gmra.mrb[0].mxu0 %v6366
  %v6456 = vpop.f32.mrb[0].mxu0
  %v6457 = vadd.f32 0.0, %v6456
  %v6458 = vpop.f32.mrb[0].mxu0
  %6459 = vdwg.mxu0
  %6460 = vmatprep.subr.mxu0 0.0
  %6461 = vmatpush1.msra.mxu0 %v5836
  %6462 = vmatprep.subr.mxu0 0.0
  %6463 = vmatpush1.msra.mxu0 %v5837
  %6464 = vmatprep.subr.mxu0 0.0
  %6465 = vmatpush1.msra.mxu0 %v5838
  %6466 = vmatprep.subr.mxu0 0.0
  %6467 = vmatpush1.msra.mxu0 %v5839
  %6468 = vmatprep.subr.mxu0 0.0
  %6469 = vmatpush1.msra.mxu0 0.0
  %6470 = vmatprep.subr.mxu0 0.0
  %6471 = vmatpush1.msra.mxu0 0.0
  %6472 = vmatprep.subr.mxu0 0.0
  %6473 = vmatpush1.msra.mxu0 0.0
  %6474 = vmatprep.subr.mxu0 0.0
  %6475 = vmatpush1.msra.mxu0 0.0
  %6476 = vmatprep.subr.mxu0 0.0
  %6477 = vmatpush1.msra.mxu0 0.0
  %6478 = vmatprep.subr.mxu0 0.0
  %6479 = vmatpush1.msra.mxu0 0.0
  %6480 = vmatprep.subr.mxu0 0.0
  %6481 = vmatpush1.msra.mxu0 0.0
  %6482 = vmatprep.subr.mxu0 0.0
  %6483 = vmatpush1.msra.mxu0 0.0
  %6484 = vmatprep.subr.mxu0 0.0
  %6485 = vmatpush1.msra.mxu0 0.0
  %6486 = vmatprep.subr.mxu0 0.0
  %6487 = vmatpush1.msra.mxu0 0.0
  %6488 = vmatprep.subr.mxu0 0.0
  %6489 = vmatpush1.msra.mxu0 0.0
  %6490 = vmatprep.subr.mxu0 0.0
  %6491 = vmatpush1.msra.mxu0 0.0
  %6492 = vmatprep.subr.mxu0 0.0
  %6493 = vmatpush1.msra.mxu0 0.0
  %6494 = vmatprep.subr.mxu0 0.0
  %6495 = vmatpush1.msra.mxu0 0.0
  %6496 = vmatprep.subr.mxu0 0.0
  %6497 = vmatpush1.msra.mxu0 0.0
  %6498 = vmatprep.subr.mxu0 0.0
  %6499 = vmatpush1.msra.mxu0 0.0
  %6500 = vmatprep.subr.mxu0 0.0
  %6501 = vmatpush1.msra.mxu0 0.0
  %6502 = vmatprep.subr.mxu0 0.0
  %6503 = vmatpush1.msra.mxu0 0.0
  %6504 = vmatprep.subr.mxu0 0.0
  %6505 = vmatpush1.msra.mxu0 0.0
  %6506 = vmatprep.subr.mxu0 0.0
  %6507 = vmatpush1.msra.mxu0 0.0
  %6508 = vmatprep.subr.mxu0 0.0
  %6509 = vmatpush1.msra.mxu0 0.0
  %6510 = vmatprep.subr.mxu0 0.0
  %6511 = vmatpush1.msra.mxu0 0.0
  %6512 = vmatprep.subr.mxu0 0.0
  %6513 = vmatpush1.msra.mxu0 0.0
  %6514 = vmatprep.subr.mxu0 0.0
  %6515 = vmatpush1.msra.mxu0 0.0
  %6516 = vmatprep.subr.mxu0 0.0
  %6517 = vmatpush1.msra.mxu0 0.0
  %6518 = vmatprep.subr.mxu0 0.0
  %6519 = vmatpush1.msra.mxu0 0.0
  %6520 = vmatprep.subr.mxu0 0.0
  %6521 = vmatpush1.msra.mxu0 0.0
  %6522 = vmatprep.subr.mxu0 0.0
  %6523 = vmatpush1.msra.mxu0 0.0
  %6524 = vmatprep.mubr.f32.mxu0 0.0
  %6525 = vmatmul.mubr.f32.gmra.mrb[0].mxu0 %v6388
  %v6526 = vpop.f32.mrb[0].mxu0
  %v6527 = vadd.f32 %v6457, %v6526
  %v6528 = vpop.f32.mrb[0].mxu0
  %6529 = vdwg.mxu0
  %v6530 = vmul.f32 %v6527, %v6182
  %v6531 = vadd.f32 %v6530, 1e-05
  %v6532 = vrsqrt.pop %v6531
  %v6533 = vmul.f32 %v5841, %v6532
  %v6535 = vsel %vm5843, %v6533, 0
  %6537 = vmatprep.subr.mxu0 %v5793
  %6538 = vmatpush1.msra.mxu0 %v5792
  %6539 = vmatprep.subr.mxu0 %v5796
  %6540 = vmatpush1.msra.mxu0 %v5795
  %6541 = vmatprep.subr.mxu0 %v5799
  %6542 = vmatpush1.msra.mxu0 %v5798
  %6543 = vmatprep.subr.mxu0 %v5802
  %6544 = vmatpush1.msra.mxu0 %v5801
  %6545 = vmatprep.subr.mxu0 0.0
  %6546 = vmatpush1.msra.mxu0 0.0
  %6547 = vmatprep.subr.mxu0 0.0
  %6548 = vmatpush1.msra.mxu0 0.0
  %6549 = vmatprep.subr.mxu0 0.0
  %6550 = vmatpush1.msra.mxu0 0.0
  %6551 = vmatprep.subr.mxu0 0.0
  %6552 = vmatpush1.msra.mxu0 0.0
  %6553 = vmatprep.subr.mxu0 0.0
  %6554 = vmatpush1.msra.mxu0 0.0
  %6555 = vmatprep.subr.mxu0 0.0
  %6556 = vmatpush1.msra.mxu0 0.0
  %6557 = vmatprep.subr.mxu0 0.0
  %6558 = vmatpush1.msra.mxu0 0.0
  %6559 = vmatprep.subr.mxu0 0.0
  %6560 = vmatpush1.msra.mxu0 0.0
  %6561 = vmatprep.subr.mxu0 0.0
  %6562 = vmatpush1.msra.mxu0 0.0
  %6563 = vmatprep.subr.mxu0 0.0
  %6564 = vmatpush1.msra.mxu0 0.0
  %6565 = vmatprep.subr.mxu0 0.0
  %6566 = vmatpush1.msra.mxu0 0.0
  %6567 = vmatprep.subr.mxu0 0.0
  %6568 = vmatpush1.msra.mxu0 0.0
  %6569 = vmatprep.subr.mxu0 0.0
  %6570 = vmatpush1.msra.mxu0 0.0
  %6571 = vmatprep.subr.mxu0 0.0
  %6572 = vmatpush1.msra.mxu0 0.0
  %6573 = vmatprep.subr.mxu0 0.0
  %6574 = vmatpush1.msra.mxu0 0.0
  %6575 = vmatprep.subr.mxu0 0.0
  %6576 = vmatpush1.msra.mxu0 0.0
  %6577 = vmatprep.subr.mxu0 0.0
  %6578 = vmatpush1.msra.mxu0 0.0
  %6579 = vmatprep.subr.mxu0 0.0
  %6580 = vmatpush1.msra.mxu0 0.0
  %6581 = vmatprep.subr.mxu0 0.0
  %6582 = vmatpush1.msra.mxu0 0.0
  %6583 = vmatprep.subr.mxu0 0.0
  %6584 = vmatpush1.msra.mxu0 0.0
  %6585 = vmatprep.subr.mxu0 0.0
  %6586 = vmatpush1.msra.mxu0 0.0
  %6587 = vmatprep.subr.mxu0 0.0
  %6588 = vmatpush1.msra.mxu0 0.0
  %6589 = vmatprep.subr.mxu0 0.0
  %6590 = vmatpush1.msra.mxu0 0.0
  %6591 = vmatprep.subr.mxu0 0.0
  %6592 = vmatpush1.msra.mxu0 0.0
  %6593 = vmatprep.subr.mxu0 0.0
  %6594 = vmatpush1.msra.mxu0 0.0
  %6595 = vmatprep.subr.mxu0 0.0
  %6596 = vmatpush1.msra.mxu0 0.0
  %6597 = vmatprep.subr.mxu0 0.0
  %6598 = vmatpush1.msra.mxu0 0.0
  %6599 = vmatprep.subr.mxu0 0.0
  %6600 = vmatpush1.msra.mxu0 0.0
  %6601 = vmatprep.mubr.f32.mxu0 0.0
  %6602 = vmatmul.mubr.f32.gmra.mrb[0].mxu0 %v6535
  %v6603 = vpop.f32.mrb[0].mxu0
  %v6604 = vadd.f32 0.0, %v6603
  %v6605 = vpop.f32.mrb[0].mxu0
  %v6606 = vadd.f32 0.0, %v6605
  %6607 = vdwg.mxu0
  %6608 = vmatprep.subr.mxu0 0.0
  %6609 = vmatpush1.msra.mxu0 %v5794
  %6610 = vmatprep.subr.mxu0 0.0
  %6611 = vmatpush1.msra.mxu0 %v5797
  %6612 = vmatprep.subr.mxu0 0.0
  %6613 = vmatpush1.msra.mxu0 %v5800
  %6614 = vmatprep.subr.mxu0 0.0
  %6615 = vmatpush1.msra.mxu0 %v5803
  %6616 = vmatprep.subr.mxu0 0.0
  %6617 = vmatpush1.msra.mxu0 0.0
  %6618 = vmatprep.subr.mxu0 0.0
  %6619 = vmatpush1.msra.mxu0 0.0
  %6620 = vmatprep.subr.mxu0 0.0
  %6621 = vmatpush1.msra.mxu0 0.0
  %6622 = vmatprep.subr.mxu0 0.0
  %6623 = vmatpush1.msra.mxu0 0.0
  %6624 = vmatprep.subr.mxu0 0.0
  %6625 = vmatpush1.msra.mxu0 0.0
  %6626 = vmatprep.subr.mxu0 0.0
  %6627 = vmatpush1.msra.mxu0 0.0
  %6628 = vmatprep.subr.mxu0 0.0
  %6629 = vmatpush1.msra.mxu0 0.0
  %6630 = vmatprep.subr.mxu0 0.0
  %6631 = vmatpush1.msra.mxu0 0.0
  %6632 = vmatprep.subr.mxu0 0.0
  %6633 = vmatpush1.msra.mxu0 0.0
  %6634 = vmatprep.subr.mxu0 0.0
  %6635 = vmatpush1.msra.mxu0 0.0
  %6636 = vmatprep.subr.mxu0 0.0
  %6637 = vmatpush1.msra.mxu0 0.0
  %6638 = vmatprep.subr.mxu0 0.0
  %6639 = vmatpush1.msra.mxu0 0.0
  %6640 = vmatprep.subr.mxu0 0.0
  %6641 = vmatpush1.msra.mxu0 0.0
  %6642 = vmatprep.subr.mxu0 0.0
  %6643 = vmatpush1.msra.mxu0 0.0
  %6644 = vmatprep.subr.mxu0 0.0
  %6645 = vmatpush1.msra.mxu0 0.0
  %6646 = vmatprep.subr.mxu0 0.0
  %6647 = vmatpush1.msra.mxu0 0.0
  %6648 = vmatprep.subr.mxu0 0.0
  %6649 = vmatpush1.msra.mxu0 0.0
  %6650 = vmatprep.subr.mxu0 0.0
  %6651 = vmatpush1.msra.mxu0 0.0
  %6652 = vmatprep.subr.mxu0 0.0
  %6653 = vmatpush1.msra.mxu0 0.0
  %6654 = vmatprep.subr.mxu0 0.0
  %6655 = vmatpush1.msra.mxu0 0.0
  %6656 = vmatprep.subr.mxu0 0.0
  %6657 = vmatpush1.msra.mxu0 0.0
  %6658 = vmatprep.subr.mxu0 0.0
  %6659 = vmatpush1.msra.mxu0 0.0
  %6660 = vmatprep.subr.mxu0 0.0
  %6661 = vmatpush1.msra.mxu0 0.0
  %6662 = vmatprep.subr.mxu0 0.0
  %6663 = vmatpush1.msra.mxu0 0.0
  %6664 = vmatprep.subr.mxu0 0.0
  %6665 = vmatpush1.msra.mxu0 0.0
  %6666 = vmatprep.subr.mxu0 0.0
  %6667 = vmatpush1.msra.mxu0 0.0
  %6668 = vmatprep.subr.mxu0 0.0
  %6669 = vmatpush1.msra.mxu0 0.0
  %6670 = vmatprep.subr.mxu0 0.0
  %6671 = vmatpush1.msra.mxu0 0.0
  %6672 = vmatprep.mubr.f32.mxu0 0.0
  %6673 = vmatmul.mubr.f32.gmra.mrb[0].mxu0 %v6535
  %v6674 = vpop.f32.mrb[0].mxu0
  %v6675 = vadd.f32 0.0, %v6674
  %v6676 = vpop.f32.mrb[0].mxu0
  %6677 = vdwg.mxu0
  %v6678 = vlaneseq
  %v6679 = vshrl.u32 %v6678, 7
  %v6680 = vsub.s32 0, %v6679
  %v6681 = vrot.slane %v6604, %v6680
  %v6682 = vlaneseq
  %v6683 = vshrl.u32 %v6682, 7
  %v6684 = vsub.s32 0, %v6683
  %v6685 = vrot.slane %v6606, %v6684
  %v6686 = vlaneseq
  %v6687 = vshrl.u32 %v6686, 7
  %v6688 = vsub.s32 0, %v6687
  %v6689 = vrot.slane %v6675, %v6688
  %v6690 = vmul.f32 %v6340, %v6681
  %v6691 = vmul.f32 %v6341, %v6685
  %v6692 = vmul.f32 %v6342, %v6689
  %v6693 = vmul.f32 %v6343, %v6681
  %v6694 = vmul.f32 %v6344, %v6685
  %v6695 = vmul.f32 %v6345, %v6689
  %v6696 = vmul.f32 %v6346, %v6681
  %v6697 = vmul.f32 %v6347, %v6685
  %v6698 = vmul.f32 %v6348, %v6689
  %v6700 = vsel %vm5843, %v5842, 0
  %6702 = vmatprep.subr.mxu0 %v5793
  %6703 = vmatpush1.msra.mxu0 %v5792
  %6704 = vmatprep.subr.mxu0 %v5796
  %6705 = vmatpush1.msra.mxu0 %v5795
  %6706 = vmatprep.subr.mxu0 %v5799
  %6707 = vmatpush1.msra.mxu0 %v5798
  %6708 = vmatprep.subr.mxu0 %v5802
  %6709 = vmatpush1.msra.mxu0 %v5801
  %6710 = vmatprep.subr.mxu0 0.0
  %6711 = vmatpush1.msra.mxu0 0.0
  %6712 = vmatprep.subr.mxu0 0.0
  %6713 = vmatpush1.msra.mxu0 0.0
  %6714 = vmatprep.subr.mxu0 0.0
  %6715 = vmatpush1.msra.mxu0 0.0
  %6716 = vmatprep.subr.mxu0 0.0
  %6717 = vmatpush1.msra.mxu0 0.0
  %6718 = vmatprep.subr.mxu0 0.0
  %6719 = vmatpush1.msra.mxu0 0.0
  %6720 = vmatprep.subr.mxu0 0.0
  %6721 = vmatpush1.msra.mxu0 0.0
  %6722 = vmatprep.subr.mxu0 0.0
  %6723 = vmatpush1.msra.mxu0 0.0
  %6724 = vmatprep.subr.mxu0 0.0
  %6725 = vmatpush1.msra.mxu0 0.0
  %6726 = vmatprep.subr.mxu0 0.0
  %6727 = vmatpush1.msra.mxu0 0.0
  %6728 = vmatprep.subr.mxu0 0.0
  %6729 = vmatpush1.msra.mxu0 0.0
  %6730 = vmatprep.subr.mxu0 0.0
  %6731 = vmatpush1.msra.mxu0 0.0
  %6732 = vmatprep.subr.mxu0 0.0
  %6733 = vmatpush1.msra.mxu0 0.0
  %6734 = vmatprep.subr.mxu0 0.0
  %6735 = vmatpush1.msra.mxu0 0.0
  %6736 = vmatprep.subr.mxu0 0.0
  %6737 = vmatpush1.msra.mxu0 0.0
  %6738 = vmatprep.subr.mxu0 0.0
  %6739 = vmatpush1.msra.mxu0 0.0
  %6740 = vmatprep.subr.mxu0 0.0
  %6741 = vmatpush1.msra.mxu0 0.0
  %6742 = vmatprep.subr.mxu0 0.0
  %6743 = vmatpush1.msra.mxu0 0.0
  %6744 = vmatprep.subr.mxu0 0.0
  %6745 = vmatpush1.msra.mxu0 0.0
  %6746 = vmatprep.subr.mxu0 0.0
  %6747 = vmatpush1.msra.mxu0 0.0
  %6748 = vmatprep.subr.mxu0 0.0
  %6749 = vmatpush1.msra.mxu0 0.0
  %6750 = vmatprep.subr.mxu0 0.0
  %6751 = vmatpush1.msra.mxu0 0.0
  %6752 = vmatprep.subr.mxu0 0.0
  %6753 = vmatpush1.msra.mxu0 0.0
  %6754 = vmatprep.subr.mxu0 0.0
  %6755 = vmatpush1.msra.mxu0 0.0
  %6756 = vmatprep.subr.mxu0 0.0
  %6757 = vmatpush1.msra.mxu0 0.0
  %6758 = vmatprep.subr.mxu0 0.0
  %6759 = vmatpush1.msra.mxu0 0.0
  %6760 = vmatprep.subr.mxu0 0.0
  %6761 = vmatpush1.msra.mxu0 0.0
  %6762 = vmatprep.subr.mxu0 0.0
  %6763 = vmatpush1.msra.mxu0 0.0
  %6764 = vmatprep.subr.mxu0 0.0
  %6765 = vmatpush1.msra.mxu0 0.0
  %6766 = vmatprep.mubr.f32.mxu0 0.0
  %6767 = vmatmul.mubr.f32.gmra.mrb[0].mxu0 %v6700
  %v6768 = vpop.f32.mrb[0].mxu0
  %v6769 = vadd.f32 0.0, %v6768
  %v6770 = vpop.f32.mrb[0].mxu0
  %v6771 = vadd.f32 0.0, %v6770
  %6772 = vdwg.mxu0
  %6773 = vmatprep.subr.mxu0 0.0
  %6774 = vmatpush1.msra.mxu0 %v5794
  %6775 = vmatprep.subr.mxu0 0.0
  %6776 = vmatpush1.msra.mxu0 %v5797
  %6777 = vmatprep.subr.mxu0 0.0
  %6778 = vmatpush1.msra.mxu0 %v5800
  %6779 = vmatprep.subr.mxu0 0.0
  %6780 = vmatpush1.msra.mxu0 %v5803
  %6781 = vmatprep.subr.mxu0 0.0
  %6782 = vmatpush1.msra.mxu0 0.0
  %6783 = vmatprep.subr.mxu0 0.0
  %6784 = vmatpush1.msra.mxu0 0.0
  %6785 = vmatprep.subr.mxu0 0.0
  %6786 = vmatpush1.msra.mxu0 0.0
  %6787 = vmatprep.subr.mxu0 0.0
  %6788 = vmatpush1.msra.mxu0 0.0
  %6789 = vmatprep.subr.mxu0 0.0
  %6790 = vmatpush1.msra.mxu0 0.0
  %6791 = vmatprep.subr.mxu0 0.0
  %6792 = vmatpush1.msra.mxu0 0.0
  %6793 = vmatprep.subr.mxu0 0.0
  %6794 = vmatpush1.msra.mxu0 0.0
  %6795 = vmatprep.subr.mxu0 0.0
  %6796 = vmatpush1.msra.mxu0 0.0
  %6797 = vmatprep.subr.mxu0 0.0
  %6798 = vmatpush1.msra.mxu0 0.0
  %6799 = vmatprep.subr.mxu0 0.0
  %6800 = vmatpush1.msra.mxu0 0.0
  %6801 = vmatprep.subr.mxu0 0.0
  %6802 = vmatpush1.msra.mxu0 0.0
  %6803 = vmatprep.subr.mxu0 0.0
  %6804 = vmatpush1.msra.mxu0 0.0
  %6805 = vmatprep.subr.mxu0 0.0
  %6806 = vmatpush1.msra.mxu0 0.0
  %6807 = vmatprep.subr.mxu0 0.0
  %6808 = vmatpush1.msra.mxu0 0.0
  %6809 = vmatprep.subr.mxu0 0.0
  %6810 = vmatpush1.msra.mxu0 0.0
  %6811 = vmatprep.subr.mxu0 0.0
  %6812 = vmatpush1.msra.mxu0 0.0
  %6813 = vmatprep.subr.mxu0 0.0
  %6814 = vmatpush1.msra.mxu0 0.0
  %6815 = vmatprep.subr.mxu0 0.0
  %6816 = vmatpush1.msra.mxu0 0.0
  %6817 = vmatprep.subr.mxu0 0.0
  %6818 = vmatpush1.msra.mxu0 0.0
  %6819 = vmatprep.subr.mxu0 0.0
  %6820 = vmatpush1.msra.mxu0 0.0
  %6821 = vmatprep.subr.mxu0 0.0
  %6822 = vmatpush1.msra.mxu0 0.0
  %6823 = vmatprep.subr.mxu0 0.0
  %6824 = vmatpush1.msra.mxu0 0.0
  %6825 = vmatprep.subr.mxu0 0.0
  %6826 = vmatpush1.msra.mxu0 0.0
  %6827 = vmatprep.subr.mxu0 0.0
  %6828 = vmatpush1.msra.mxu0 0.0
  %6829 = vmatprep.subr.mxu0 0.0
  %6830 = vmatpush1.msra.mxu0 0.0
  %6831 = vmatprep.subr.mxu0 0.0
  %6832 = vmatpush1.msra.mxu0 0.0
  %6833 = vmatprep.subr.mxu0 0.0
  %6834 = vmatpush1.msra.mxu0 0.0
  %6835 = vmatprep.subr.mxu0 0.0
  %6836 = vmatpush1.msra.mxu0 0.0
  %6837 = vmatprep.mubr.f32.mxu0 0.0
  %6838 = vmatmul.mubr.f32.gmra.mrb[0].mxu0 %v6700
  %v6839 = vpop.f32.mrb[0].mxu0
  %v6840 = vadd.f32 0.0, %v6839
  %v6841 = vpop.f32.mrb[0].mxu0
  %6842 = vdwg.mxu0
  %v6843 = vlaneseq
  %v6844 = vshrl.u32 %v6843, 7
  %v6845 = vsub.s32 0, %v6844
  %v6846 = vrot.slane %v6769, %v6845
  %v6847 = vlaneseq
  %v6848 = vshrl.u32 %v6847, 7
  %v6849 = vsub.s32 0, %v6848
  %v6850 = vrot.slane %v6771, %v6849
  %v6851 = vlaneseq
  %v6852 = vshrl.u32 %v6851, 7
  %v6853 = vsub.s32 0, %v6852
  %v6854 = vrot.slane %v6840, %v6853
  %v6855 = vadd.f32 %v6690, %v6846
  %v6856 = vadd.f32 %v6691, %v6850
  %v6857 = vadd.f32 %v6692, %v6854
  %v6858 = vadd.f32 %v6693, %v6846
  %v6859 = vadd.f32 %v6694, %v6850
  %v6860 = vadd.f32 %v6695, %v6854
  %v6861 = vadd.f32 %v6696, %v6846
  %v6862 = vadd.f32 %v6697, %v6850
  %v6863 = vadd.f32 %v6698, %v6854
  %v6864 = vmax.f32 %v6855, 0.0
  %v6865 = vmax.f32 %v6856, 0.0
  %v6866 = vmax.f32 %v6857, 0.0
  %v6867 = vmax.f32 %v6858, 0.0
  %v6868 = vmax.f32 %v6859, 0.0
  %v6869 = vmax.f32 %v6860, 0.0
  %v6870 = vmax.f32 %v6861, 0.0
  %v6871 = vmax.f32 %v6862, 0.0
  %v6872 = vmax.f32 %v6863, 0.0
  %v6873 = vpack.c.bf16 %v6867, %v6864
  %v6874 = vpack.c.bf16 %v6868, %v6865
  %v6875 = vpack.c.bf16 %v6869, %v6866
  %v6876 = vpack.c.bf16 %v6870, %v6870
  %v6877 = vpack.c.bf16 %v6871, %v6871
  %v6878 = vpack.c.bf16 %v6872, %v6872
  %v6879 = vld [vmem:[%s39] sm:$0xff]
  %v6880 = vld [vmem:[%s39 + $0x8] sm:$0xff]
  %v6881 = vld [vmem:[%s39 + $0x10] sm:$0xff]
  %v6882 = vld [vmem:[%s39 + $0x18] sm:$0xff]
  %v6883 = vld [vmem:[%s39 + $0x20] sm:$0xff]
  %v6884 = vld [vmem:[%s39 + $0x28] sm:$0xff]
  %v6885 = vld [vmem:[%s39 + $0x30] sm:$0xff]
  %v6886 = vld [vmem:[%s39 + $0x38] sm:$0xff]
  %v6887 = vld [vmem:[%s39 + $0x40] sm:$0xff]
  %v6888 = vld [vmem:[%s39 + $0x48] sm:$0xff]
  %v6889 = vld [vmem:[%s39 + $0x50] sm:$0xff]
  %v6890 = vld [vmem:[%s39 + $0x58] sm:$0xff]
  %v6891 = vld [vmem:[%s39 + $0x60] sm:$0xff]
  %v6892 = vld [vmem:[%s39 + $0x68] sm:$0xff]
  %v6893 = vld [vmem:[%s39 + $0x70] sm:$0xff]
  %v6894 = vld [vmem:[%s39 + $0x78] sm:$0xff]
  %v6895 = vld [vmem:[%s39 + $0x80] sm:$0xff]
  %v6896 = vld [vmem:[%s39 + $0x88] sm:$0xff]
  %v6897 = vld [vmem:[%s39 + $0x90] sm:$0xff]
  %v6898 = vld [vmem:[%s39 + $0x98] sm:$0xff]
  %v6899 = vld [vmem:[%s39 + $0xa0] sm:$0xff]
  %v6900 = vld [vmem:[%s39 + $0xa8] sm:$0xff]
  %v6901 = vld [vmem:[%s39 + $0xb0] sm:$0xff]
  %v6902 = vld [vmem:[%s39 + $0xb8] sm:$0xff]
  %v6903 = vld [vmem:[%s39 + $0xc0] sm:$0xff]
  %v6904 = vld [vmem:[%s39 + $0xc8] sm:$0xff]
  %v6905 = vld [vmem:[%s39 + $0xd0] sm:$0xff]
  %v6906 = vld [vmem:[%s39 + $0xd8] sm:$0xff]
  %v6907 = vld [vmem:[%s39 + $0xe0] sm:$0xff]
  %v6908 = vld [vmem:[%s39 + $0xe8] sm:$0xff]
  %v6909 = vld [vmem:[%s39 + $0xf0] sm:$0xff]
  %v6910 = vld [vmem:[%s39 + $0xf8] sm:$0xff]
  %v6911 = vld [vmem:[%s39 + $0x100] sm:$0xff]
  %v6912 = vld [vmem:[%s39 + $0x108] sm:$0xff]
  %v6913 = vld [vmem:[%s39 + $0x110] sm:$0xff]
  %v6914 = vld [vmem:[%s39 + $0x118] sm:$0xff]
  %v6951 = vunpack.c.l.b16 %v6879
  %v6952 = vunpack.c.h.b16 %v6879
  %v6953 = vunpack.c.l.b16 %v6880
  %v6954 = vunpack.c.h.b16 %v6880
  %v6955 = vunpack.c.l.b16 %v6881
  %v6956 = vunpack.c.h.b16 %v6881
  %v6957 = vunpack.c.l.b16 %v6882
  %v6958 = vunpack.c.h.b16 %v6882
  %v6959 = vunpack.c.l.b16 %v6883
  %v6960 = vunpack.c.h.b16 %v6883
  %v6961 = vunpack.c.l.b16 %v6884
  %v6962 = vunpack.c.h.b16 %v6884
  %v6963 = vunpack.c.l.b16 %v6885
  %v6964 = vunpack.c.h.b16 %v6885
  %v6965 = vunpack.c.l.b16 %v6886
  %v6966 = vunpack.c.h.b16 %v6886
  %v6967 = vunpack.c.l.b16 %v6887
  %v6968 = vunpack.c.h.b16 %v6887
  %v6969 = vunpack.c.l.b16 %v6888
  %v6970 = vunpack.c.h.b16 %v6888
  %v6971 = vunpack.c.l.b16 %v6889
  %v6972 = vunpack.c.h.b16 %v6889
  %v6973 = vunpack.c.l.b16 %v6890
  %v6974 = vunpack.c.h.b16 %v6890
  %v6975 = vunpack.c.l.b16 %v6891
  %v6976 = vunpack.c.h.b16 %v6891
  %v6977 = vunpack.c.l.b16 %v6892
  %v6978 = vunpack.c.h.b16 %v6892
  %v6979 = vunpack.c.l.b16 %v6893
  %v6980 = vunpack.c.h.b16 %v6893
  %v6981 = vunpack.c.l.b16 %v6894
  %v6982 = vunpack.c.h.b16 %v6894
  %v6983 = vunpack.c.l.b16 %v6895
  %v6984 = vunpack.c.h.b16 %v6895
  %v6985 = vunpack.c.l.b16 %v6896
  %v6986 = vunpack.c.h.b16 %v6896
  %v6987 = vunpack.c.l.b16 %v6897
  %v6988 = vunpack.c.h.b16 %v6897
  %v6989 = vunpack.c.l.b16 %v6898
  %v6990 = vunpack.c.h.b16 %v6898
  %v6991 = vunpack.c.l.b16 %v6899
  %v6992 = vunpack.c.h.b16 %v6899
  %v6993 = vunpack.c.l.b16 %v6900
  %v6994 = vunpack.c.h.b16 %v6900
  %v6995 = vunpack.c.l.b16 %v6901
  %v6996 = vunpack.c.h.b16 %v6901
  %v6997 = vunpack.c.l.b16 %v6902
  %v6998 = vunpack.c.h.b16 %v6902
  %v6999 = vunpack.c.l.b16 %v6903
  %v7000 = vunpack.c.h.b16 %v6903
  %v7001 = vunpack.c.l.b16 %v6904
  %v7002 = vunpack.c.h.b16 %v6904
  %v7003 = vunpack.c.l.b16 %v6905
  %v7004 = vunpack.c.h.b16 %v6905
  %v7005 = vunpack.c.l.b16 %v6906
  %v7006 = vunpack.c.h.b16 %v6906
  %v7007 = vunpack.c.l.b16 %v6907
  %v7008 = vunpack.c.h.b16 %v6907
  %v7009 = vunpack.c.l.b16 %v6908
  %v7010 = vunpack.c.h.b16 %v6908
  %v7011 = vunpack.c.l.b16 %v6909
  %v7012 = vunpack.c.h.b16 %v6909
  %v7013 = vunpack.c.l.b16 %v6910
  %v7014 = vunpack.c.h.b16 %v6910
  %v7015 = vunpack.c.l.b16 %v6911
  %v7016 = vunpack.c.h.b16 %v6911
  %v7017 = vunpack.c.l.b16 %v6912
  %v7018 = vunpack.c.h.b16 %v6912
  %v7019 = vunpack.c.l.b16 %v6913
  %v7020 = vunpack.c.h.b16 %v6913
  %v7021 = vunpack.c.l.b16 %v6914
  %v7022 = vunpack.c.h.b16 %v6914
  %v7023 = vpack.c.b16 %v6953, %v6951
  %v7024 = vpack.c.b16 %v6954, %v6952
  %v7025 = vpack.c.b16 %v6957, %v6955
  %v7026 = vpack.c.b16 %v6958, %v6956
  %v7027 = vpack.c.b16 %v6961, %v6959
  %v7028 = vpack.c.b16 %v6962, %v6960
  %v7029 = vpack.c.b16 %v6965, %v6963
  %v7030 = vpack.c.b16 %v6966, %v6964
  %v7031 = vpack.c.b16 %v6969, %v6967
  %v7032 = vpack.c.b16 %v6970, %v6968
  %v7033 = vpack.c.b16 %v6973, %v6971
  %v7034 = vpack.c.b16 %v6974, %v6972
  %v7035 = vpack.c.b16 %v6977, %v6975
  %v7036 = vpack.c.b16 %v6978, %v6976
  %v7037 = vpack.c.b16 %v6981, %v6979
  %v7038 = vpack.c.b16 %v6982, %v6980
  %v7039 = vpack.c.b16 %v6985, %v6983
  %v7040 = vpack.c.b16 %v6986, %v6984
  %v7041 = vpack.c.b16 %v6989, %v6987
  %v7042 = vpack.c.b16 %v6990, %v6988
  %v7043 = vpack.c.b16 %v6993, %v6991
  %v7044 = vpack.c.b16 %v6994, %v6992
  %v7045 = vpack.c.b16 %v6997, %v6995
  %v7046 = vpack.c.b16 %v6998, %v6996
  %v7047 = vpack.c.b16 %v7001, %v6999
  %v7048 = vpack.c.b16 %v7002, %v7000
  %v7049 = vpack.c.b16 %v7005, %v7003
  %v7050 = vpack.c.b16 %v7006, %v7004
  %v7051 = vpack.c.b16 %v7009, %v7007
  %v7052 = vpack.c.b16 %v7010, %v7008
  %v7053 = vpack.c.b16 %v7013, %v7011
  %v7054 = vpack.c.b16 %v7014, %v7012
  %v7055 = vpack.c.b16 %v7017, %v7015
  %v7056 = vpack.c.b16 %v7018, %v7016
  %v7057 = vpack.c.b16 %v7021, %v7019
  %v7058 = vpack.c.b16 %v7022, %v7020
  %v7096 = vsel %vm5843, %v6875, 0
  %v7099 = vsel %vm5843, %v6878, 0
  %7101 = vmatprep.subr.bf16.mxu0 %v7024
  %7102 = vmatpush1.bf16.msra.mxu0 %v7023
  %7103 = vmatprep.subr.bf16.mxu0 %v7026
  %7104 = vmatpush1.bf16.msra.mxu0 %v7025
  %7105 = vmatprep.subr.bf16.mxu0 %v7028
  %7106 = vmatpush1.bf16.msra.mxu0 %v7027
  %7107 = vmatprep.subr.bf16.mxu0 %v7030
  %7108 = vmatpush1.bf16.msra.mxu0 %v7029
  %7109 = vmatprep.subr.bf16.mxu0 %v7032
  %7110 = vmatpush1.bf16.msra.mxu0 %v7031
  %7111 = vmatprep.subr.bf16.mxu0 %v7034
  %7112 = vmatpush1.bf16.msra.mxu0 %v7033
  %7113 = vmatprep.subr.bf16.mxu0 %v7036
  %7114 = vmatpush1.bf16.msra.mxu0 %v7035
  %7115 = vmatprep.subr.bf16.mxu0 %v7038
  %7116 = vmatpush1.bf16.msra.mxu0 %v7037
  %7117 = vmatprep.subr.bf16.mxu0 %v7040
  %7118 = vmatpush1.bf16.msra.mxu0 %v7039
  %7119 = vmatprep.subr.bf16.mxu0 %v7042
  %7120 = vmatpush1.bf16.msra.mxu0 %v7041
  %7121 = vmatprep.subr.bf16.mxu0 %v7044
  %7122 = vmatpush1.bf16.msra.mxu0 %v7043
  %7123 = vmatprep.subr.bf16.mxu0 %v7046
  %7124 = vmatpush1.bf16.msra.mxu0 %v7045
  %7125 = vmatprep.subr.bf16.mxu0 %v7048
  %7126 = vmatpush1.bf16.msra.mxu0 %v7047
  %7127 = vmatprep.subr.bf16.mxu0 %v7050
  %7128 = vmatpush1.bf16.msra.mxu0 %v7049
  %7129 = vmatprep.subr.bf16.mxu0 %v7052
  %7130 = vmatpush1.bf16.msra.mxu0 %v7051
  %7131 = vmatprep.subr.bf16.mxu0 %v7054
  %7132 = vmatpush1.bf16.msra.mxu0 %v7053
  %7133 = vmatprep.mubr.bf16.mxu0 %v6874
  %7134 = vmatmul.mubr.bf16.gmra.mrb[0].mxu0 %v6873
  %v7135 = vpop.f32.mrb[0].mxu0
  %v7136 = vadd.f32 0.0, %v7135
  %v7137 = vpop.f32.mrb[0].mxu0
  %v7138 = vadd.f32 0.0, %v7137
  %v7139 = vpop.f32.mrb[0].mxu0
  %v7140 = vadd.f32 0.0, %v7139
  %v7141 = vpop.f32.mrb[0].mxu0
  %v7142 = vadd.f32 0.0, %v7141
  %7143 = vmatprep.mubr.bf16.mxu0 %v6877
  %7144 = vmatmul.mubr.bf16.gmra.mrb[0].mxu0 %v6876
  %v7145 = vpop.f32.mrb[0].mxu0
  %v7146 = vadd.f32 0.0, %v7145
  %v7147 = vpop.f32.mrb[0].mxu0
  %v7148 = vadd.f32 0.0, %v7147
  %v7149 = vpop.f32.mrb[0].mxu0
  %v7150 = vpop.f32.mrb[0].mxu0
  %7151 = vdwg.mxu0
  %7152 = vmatprep.subr.bf16.mxu0 %v7056
  %7153 = vmatpush1.bf16.msra.mxu0 %v7055
  %7154 = vmatprep.subr.bf16.mxu0 %v7058
  %7155 = vmatpush1.bf16.msra.mxu0 %v7057
  %7156 = vmatprep.subr.bf16.mxu0 0
  %7157 = vmatpush1.bf16.msra.mxu0 0
  %7158 = vmatprep.subr.bf16.mxu0 0
  %7159 = vmatpush1.bf16.msra.mxu0 0
  %7160 = vmatprep.subr.bf16.mxu0 0
  %7161 = vmatpush1.bf16.msra.mxu0 0
  %7162 = vmatprep.subr.bf16.mxu0 0
  %7163 = vmatpush1.bf16.msra.mxu0 0
  %7164 = vmatprep.subr.bf16.mxu0 0
  %7165 = vmatpush1.bf16.msra.mxu0 0
  %7166 = vmatprep.subr.bf16.mxu0 0
  %7167 = vmatpush1.bf16.msra.mxu0 0
  %7168 = vmatprep.subr.bf16.mxu0 0
  %7169 = vmatpush1.bf16.msra.mxu0 0
  %7170 = vmatprep.subr.bf16.mxu0 0
  %7171 = vmatpush1.bf16.msra.mxu0 0
  %7172 = vmatprep.subr.bf16.mxu0 0
  %7173 = vmatpush1.bf16.msra.mxu0 0
  %7174 = vmatprep.subr.bf16.mxu0 0
  %7175 = vmatpush1.bf16.msra.mxu0 0
  %7176 = vmatprep.subr.bf16.mxu0 0
  %7177 = vmatpush1.bf16.msra.mxu0 0
  %7178 = vmatprep.subr.bf16.mxu0 0
  %7179 = vmatpush1.bf16.msra.mxu0 0
  %7180 = vmatprep.subr.bf16.mxu0 0
  %7181 = vmatpush1.bf16.msra.mxu0 0
  %7182 = vmatprep.subr.bf16.mxu0 0
  %7183 = vmatpush1.bf16.msra.mxu0 0
  %7184 = vmatprep.mubr.bf16.mxu0 0
  %7185 = vmatmul.mubr.bf16.gmra.mrb[0].mxu0 %v7096
  %v7186 = vpop.f32.mrb[0].mxu0
  %v7187 = vadd.f32 %v7136, %v7186
  %v7188 = vpop.f32.mrb[0].mxu0
  %v7189 = vadd.f32 %v7138, %v7188
  %v7190 = vpop.f32.mrb[0].mxu0
  %v7191 = vadd.f32 %v7140, %v7190
  %v7192 = vpop.f32.mrb[0].mxu0
  %v7193 = vadd.f32 %v7142, %v7192
  %7194 = vmatprep.mubr.bf16.mxu0 0
  %7195 = vmatmul.mubr.bf16.gmra.mrb[0].mxu0 %v7099
  %v7196 = vpop.f32.mrb[0].mxu0
  %v7197 = vadd.f32 %v7146, %v7196
  %v7198 = vpop.f32.mrb[0].mxu0
  %v7199 = vadd.f32 %v7148, %v7198
  %v7200 = vpop.f32.mrb[0].mxu0
  %v7201 = vpop.f32.mrb[0].mxu0
  %7202 = vdwg.mxu0
  %v7203 = vld [vmem:[%s41] sm:$0xff]
  %v7204 = vld [vmem:[%s41 + $0x8] sm:$0xff]
  %v7205 = vld [vmem:[%s41 + $0x10] sm:$0xff]
  %v7206 = vld [vmem:[%s41 + $0x18] sm:$0xff]
  %v7207 = vld [vmem:[%s41 + $0x20] sm:$0x3f]
  %s7208 = scalar_lea.vmem %s39, 288
  %v7209 = vld [vmem:[%s7208] sm:$0xff]
  %v7210 = vld [vmem:[%s7208 + $0x8] sm:$0xff]
  %v7211 = vld [vmem:[%s7208 + $0x10] sm:$0xff]
  %v7212 = vld [vmem:[%s7208 + $0x18] sm:$0xff]
  %v7213 = vld [vmem:[%s7208 + $0x20] sm:$0xff]
  %v7214 = vld [vmem:[%s7208 + $0x28] sm:$0xff]
  %v7215 = vld [vmem:[%s7208 + $0x30] sm:$0xff]
  %v7216 = vld [vmem:[%s7208 + $0x38] sm:$0xff]
  %v7217 = vld [vmem:[%s7208 + $0x40] sm:$0xff]
  %v7218 = vld [vmem:[%s7208 + $0x48] sm:$0xff]
  %v7219 = vld [vmem:[%s7208 + $0x50] sm:$0xff]
  %v7220 = vld [vmem:[%s7208 + $0x58] sm:$0xff]
  %v7221 = vld [vmem:[%s7208 + $0x60] sm:$0xff]
  %v7222 = vld [vmem:[%s7208 + $0x68] sm:$0xff]
  %v7223 = vld [vmem:[%s7208 + $0x70] sm:$0xff]
  %v7224 = vld [vmem:[%s7208 + $0x78] sm:$0xff]
  %v7225 = vld [vmem:[%s7208 + $0x80] sm:$0xff]
  %v7226 = vld [vmem:[%s7208 + $0x88] sm:$0xff]
  %v7227 = vld [vmem:[%s7208 + $0x90] sm:$0xff]
  %v7228 = vld [vmem:[%s7208 + $0x98] sm:$0xff]
  %v7229 = vld [vmem:[%s7208 + $0xa0] sm:$0xff]
  %v7230 = vld [vmem:[%s7208 + $0xa8] sm:$0xff]
  %v7231 = vld [vmem:[%s7208 + $0xb0] sm:$0xff]
  %v7232 = vld [vmem:[%s7208 + $0xb8] sm:$0xff]
  %v7233 = vld [vmem:[%s7208 + $0xc0] sm:$0xff]
  %v7234 = vld [vmem:[%s7208 + $0xc8] sm:$0xff]
  %v7235 = vld [vmem:[%s7208 + $0xd0] sm:$0xff]
  %v7236 = vld [vmem:[%s7208 + $0xd8] sm:$0xff]
  %v7237 = vld [vmem:[%s7208 + $0xe0] sm:$0xff]
  %v7238 = vld [vmem:[%s7208 + $0xe8] sm:$0xff]
  %v7239 = vld [vmem:[%s7208 + $0xf0] sm:$0xff]
  %v7240 = vld [vmem:[%s7208 + $0xf8] sm:$0xff]
  %v7241 = vld [vmem:[%s7208 + $0x100] sm:$0xff]
  %v7242 = vld [vmem:[%s7208 + $0x108] sm:$0xff]
  %v7243 = vld [vmem:[%s7208 + $0x110] sm:$0xff]
  %v7244 = vld [vmem:[%s7208 + $0x118] sm:$0xff]
  %v7281 = vunpack.c.l.b16 %v7209
  %v7282 = vunpack.c.h.b16 %v7209
  %v7283 = vunpack.c.l.b16 %v7210
  %v7284 = vunpack.c.h.b16 %v7210
  %v7285 = vunpack.c.l.b16 %v7211
  %v7286 = vunpack.c.h.b16 %v7211
  %v7287 = vunpack.c.l.b16 %v7212
  %v7288 = vunpack.c.h.b16 %v7212
  %v7289 = vunpack.c.l.b16 %v7213
  %v7290 = vunpack.c.h.b16 %v7213
  %v7291 = vunpack.c.l.b16 %v7214
  %v7292 = vunpack.c.h.b16 %v7214
  %v7293 = vunpack.c.l.b16 %v7215
  %v7294 = vunpack.c.h.b16 %v7215
  %v7295 = vunpack.c.l.b16 %v7216
  %v7296 = vunpack.c.h.b16 %v7216
  %v7297 = vunpack.c.l.b16 %v7217
  %v7298 = vunpack.c.h.b16 %v7217
  %v7299 = vunpack.c.l.b16 %v7218
  %v7300 = vunpack.c.h.b16 %v7218
  %v7301 = vunpack.c.l.b16 %v7219
  %v7302 = vunpack.c.h.b16 %v7219
  %v7303 = vunpack.c.l.b16 %v7220
  %v7304 = vunpack.c.h.b16 %v7220
  %v7305 = vunpack.c.l.b16 %v7221
  %v7306 = vunpack.c.h.b16 %v7221
  %v7307 = vunpack.c.l.b16 %v7222
  %v7308 = vunpack.c.h.b16 %v7222
  %v7309 = vunpack.c.l.b16 %v7223
  %v7310 = vunpack.c.h.b16 %v7223
  %v7311 = vunpack.c.l.b16 %v7224
  %v7312 = vunpack.c.h.b16 %v7224
  %v7313 = vunpack.c.l.b16 %v7225
  %v7314 = vunpack.c.h.b16 %v7225
  %v7315 = vunpack.c.l.b16 %v7226
  %v7316 = vunpack.c.h.b16 %v7226
  %v7317 = vunpack.c.l.b16 %v7227
  %v7318 = vunpack.c.h.b16 %v7227
  %v7319 = vunpack.c.l.b16 %v7228
  %v7320 = vunpack.c.h.b16 %v7228
  %v7321 = vunpack.c.l.b16 %v7229
  %v7322 = vunpack.c.h.b16 %v7229
  %v7323 = vunpack.c.l.b16 %v7230
  %v7324 = vunpack.c.h.b16 %v7230
  %v7325 = vunpack.c.l.b16 %v7231
  %v7326 = vunpack.c.h.b16 %v7231
  %v7327 = vunpack.c.l.b16 %v7232
  %v7328 = vunpack.c.h.b16 %v7232
  %v7329 = vunpack.c.l.b16 %v7233
  %v7330 = vunpack.c.h.b16 %v7233
  %v7331 = vunpack.c.l.b16 %v7234
  %v7332 = vunpack.c.h.b16 %v7234
  %v7333 = vunpack.c.l.b16 %v7235
  %v7334 = vunpack.c.h.b16 %v7235
  %v7335 = vunpack.c.l.b16 %v7236
  %v7336 = vunpack.c.h.b16 %v7236
  %v7337 = vunpack.c.l.b16 %v7237
  %v7338 = vunpack.c.h.b16 %v7237
  %v7339 = vunpack.c.l.b16 %v7238
  %v7340 = vunpack.c.h.b16 %v7238
  %v7341 = vunpack.c.l.b16 %v7239
  %v7342 = vunpack.c.h.b16 %v7239
  %v7343 = vunpack.c.l.b16 %v7240
  %v7344 = vunpack.c.h.b16 %v7240
  %v7345 = vunpack.c.l.b16 %v7241
  %v7346 = vunpack.c.h.b16 %v7241
  %v7347 = vunpack.c.l.b16 %v7242
  %v7348 = vunpack.c.h.b16 %v7242
  %v7349 = vunpack.c.l.b16 %v7243
  %v7350 = vunpack.c.h.b16 %v7243
  %v7351 = vunpack.c.l.b16 %v7244
  %v7352 = vunpack.c.h.b16 %v7244
  %v7353 = vpack.c.b16 %v7283, %v7281
  %v7354 = vpack.c.b16 %v7284, %v7282
  %v7355 = vpack.c.b16 %v7287, %v7285
  %v7356 = vpack.c.b16 %v7288, %v7286
  %v7357 = vpack.c.b16 %v7291, %v7289
  %v7358 = vpack.c.b16 %v7292, %v7290
  %v7359 = vpack.c.b16 %v7295, %v7293
  %v7360 = vpack.c.b16 %v7296, %v7294
  %v7361 = vpack.c.b16 %v7299, %v7297
  %v7362 = vpack.c.b16 %v7300, %v7298
  %v7363 = vpack.c.b16 %v7303, %v7301
  %v7364 = vpack.c.b16 %v7304, %v7302
  %v7365 = vpack.c.b16 %v7307, %v7305
  %v7366 = vpack.c.b16 %v7308, %v7306
  %v7367 = vpack.c.b16 %v7311, %v7309
  %v7368 = vpack.c.b16 %v7312, %v7310
  %v7369 = vpack.c.b16 %v7315, %v7313
  %v7370 = vpack.c.b16 %v7316, %v7314
  %v7371 = vpack.c.b16 %v7319, %v7317
  %v7372 = vpack.c.b16 %v7320, %v7318
  %v7373 = vpack.c.b16 %v7323, %v7321
  %v7374 = vpack.c.b16 %v7324, %v7322
  %v7375 = vpack.c.b16 %v7327, %v7325
  %v7376 = vpack.c.b16 %v7328, %v7326
  %v7377 = vpack.c.b16 %v7331, %v7329
  %v7378 = vpack.c.b16 %v7332, %v7330
  %v7379 = vpack.c.b16 %v7335, %v7333
  %v7380 = vpack.c.b16 %v7336, %v7334
  %v7381 = vpack.c.b16 %v7339, %v7337
  %v7382 = vpack.c.b16 %v7340, %v7338
  %v7383 = vpack.c.b16 %v7343, %v7341
  %v7384 = vpack.c.b16 %v7344, %v7342
  %v7385 = vpack.c.b16 %v7347, %v7345
  %v7386 = vpack.c.b16 %v7348, %v7346
  %v7387 = vpack.c.b16 %v7351, %v7349
  %v7388 = vpack.c.b16 %v7352, %v7350
  %7425 = vmatprep.subr.bf16.mxu0 %v7354
  %7426 = vmatpush1.bf16.msra.mxu0 %v7353
  %7427 = vmatprep.subr.bf16.mxu0 %v7356
  %7428 = vmatpush1.bf16.msra.mxu0 %v7355
  %7429 = vmatprep.subr.bf16.mxu0 %v7358
  %7430 = vmatpush1.bf16.msra.mxu0 %v7357
  %7431 = vmatprep.subr.bf16.mxu0 %v7360
  %7432 = vmatpush1.bf16.msra.mxu0 %v7359
  %7433 = vmatprep.subr.bf16.mxu0 %v7362
  %7434 = vmatpush1.bf16.msra.mxu0 %v7361
  %7435 = vmatprep.subr.bf16.mxu0 %v7364
  %7436 = vmatpush1.bf16.msra.mxu0 %v7363
  %7437 = vmatprep.subr.bf16.mxu0 %v7366
  %7438 = vmatpush1.bf16.msra.mxu0 %v7365
  %7439 = vmatprep.subr.bf16.mxu0 %v7368
  %7440 = vmatpush1.bf16.msra.mxu0 %v7367
  %7441 = vmatprep.subr.bf16.mxu0 %v7370
  %7442 = vmatpush1.bf16.msra.mxu0 %v7369
  %7443 = vmatprep.subr.bf16.mxu0 %v7372
  %7444 = vmatpush1.bf16.msra.mxu0 %v7371
  %7445 = vmatprep.subr.bf16.mxu0 %v7374
  %7446 = vmatpush1.bf16.msra.mxu0 %v7373
  %7447 = vmatprep.subr.bf16.mxu0 %v7376
  %7448 = vmatpush1.bf16.msra.mxu0 %v7375
  %7449 = vmatprep.subr.bf16.mxu0 %v7378
  %7450 = vmatpush1.bf16.msra.mxu0 %v7377
  %7451 = vmatprep.subr.bf16.mxu0 %v7380
  %7452 = vmatpush1.bf16.msra.mxu0 %v7379
  %7453 = vmatprep.subr.bf16.mxu0 %v7382
  %7454 = vmatpush1.bf16.msra.mxu0 %v7381
  %7455 = vmatprep.subr.bf16.mxu0 %v7384
  %7456 = vmatpush1.bf16.msra.mxu0 %v7383
  %7457 = vmatprep.mubr.bf16.mxu0 %v6874
  %7458 = vmatmul.mubr.bf16.gmra.mrb[0].mxu0 %v6873
  %v7459 = vpop.f32.mrb[0].mxu0
  %v7460 = vadd.f32 0.0, %v7459
  %v7461 = vpop.f32.mrb[0].mxu0
  %v7462 = vadd.f32 0.0, %v7461
  %v7463 = vpop.f32.mrb[0].mxu0
  %v7464 = vadd.f32 0.0, %v7463
  %v7465 = vpop.f32.mrb[0].mxu0
  %v7466 = vadd.f32 0.0, %v7465
  %7467 = vmatprep.mubr.bf16.mxu0 %v6877
  %7468 = vmatmul.mubr.bf16.gmra.mrb[0].mxu0 %v6876
  %v7469 = vpop.f32.mrb[0].mxu0
  %v7470 = vadd.f32 0.0, %v7469
  %v7471 = vpop.f32.mrb[0].mxu0
  %v7472 = vadd.f32 0.0, %v7471
  %v7473 = vpop.f32.mrb[0].mxu0
  %v7474 = vpop.f32.mrb[0].mxu0
  %7475 = vdwg.mxu0
  %7476 = vmatprep.subr.bf16.mxu0 %v7386
  %7477 = vmatpush1.bf16.msra.mxu0 %v7385
  %7478 = vmatprep.subr.bf16.mxu0 %v7388
  %7479 = vmatpush1.bf16.msra.mxu0 %v7387
  %7480 = vmatprep.subr.bf16.mxu0 0
  %7481 = vmatpush1.bf16.msra.mxu0 0
  %7482 = vmatprep.subr.bf16.mxu0 0
  %7483 = vmatpush1.bf16.msra.mxu0 0
  %7484 = vmatprep.subr.bf16.mxu0 0
  %7485 = vmatpush1.bf16.msra.mxu0 0
  %7486 = vmatprep.subr.bf16.mxu0 0
  %7487 = vmatpush1.bf16.msra.mxu0 0
  %7488 = vmatprep.subr.bf16.mxu0 0
  %7489 = vmatpush1.bf16.msra.mxu0 0
  %7490 = vmatprep.subr.bf16.mxu0 0
  %7491 = vmatpush1.bf16.msra.mxu0 0
  %7492 = vmatprep.subr.bf16.mxu0 0
  %7493 = vmatpush1.bf16.msra.mxu0 0
  %7494 = vmatprep.subr.bf16.mxu0 0
  %7495 = vmatpush1.bf16.msra.mxu0 0
  %7496 = vmatprep.subr.bf16.mxu0 0
  %7497 = vmatpush1.bf16.msra.mxu0 0
  %7498 = vmatprep.subr.bf16.mxu0 0
  %7499 = vmatpush1.bf16.msra.mxu0 0
  %7500 = vmatprep.subr.bf16.mxu0 0
  %7501 = vmatpush1.bf16.msra.mxu0 0
  %7502 = vmatprep.subr.bf16.mxu0 0
  %7503 = vmatpush1.bf16.msra.mxu0 0
  %7504 = vmatprep.subr.bf16.mxu0 0
  %7505 = vmatpush1.bf16.msra.mxu0 0
  %7506 = vmatprep.subr.bf16.mxu0 0
  %7507 = vmatpush1.bf16.msra.mxu0 0
  %7508 = vmatprep.mubr.bf16.mxu0 0
  %7509 = vmatmul.mubr.bf16.gmra.mrb[0].mxu0 %v7096
  %v7510 = vpop.f32.mrb[0].mxu0
  %v7511 = vadd.f32 %v7460, %v7510
  %v7512 = vpop.f32.mrb[0].mxu0
  %v7513 = vadd.f32 %v7462, %v7512
  %v7514 = vpop.f32.mrb[0].mxu0
  %v7515 = vadd.f32 %v7464, %v7514
  %v7516 = vpop.f32.mrb[0].mxu0
  %v7517 = vadd.f32 %v7466, %v7516
  %7518 = vmatprep.mubr.bf16.mxu0 0
  %7519 = vmatmul.mubr.bf16.gmra.mrb[0].mxu0 %v7099
  %v7520 = vpop.f32.mrb[0].mxu0
  %v7521 = vadd.f32 %v7470, %v7520
  %v7522 = vpop.f32.mrb[0].mxu0
  %v7523 = vadd.f32 %v7472, %v7522
  %v7524 = vpop.f32.mrb[0].mxu0
  %v7525 = vpop.f32.mrb[0].mxu0
  %7526 = vdwg.mxu0
  %s7527 = scalar_lea.vmem %s41, 40
  %v7528 = vld [vmem:[%s7527] sm:$0xff]
  %v7529 = vld [vmem:[%s7527 + $0x8] sm:$0xff]
  %v7530 = vld [vmem:[%s7527 + $0x10] sm:$0xff]
  %v7531 = vld [vmem:[%s7527 + $0x18] sm:$0xff]
  %v7532 = vld [vmem:[%s7527 + $0x20] sm:$0x3f]
  %vm7533 = vcmask 146432
  %v7535 = vsel %vm7533, %v7528, 0
  %v7538 = vsel %vm7533, %v7529, 0
  %v7541 = vsel %vm7533, %v7530, 0
  %v7544 = vsel %vm7533, %v7531, 0
  %v7547 = vsel %vm7533, %v7532, 0
  %v7550 = vsel %vm387, %v7521, 0
  %v7553 = vsel %vm387, %v7523, 0
  %7555 = vmatprep.subr.mxu0 %v7513
  %7556 = vmatpush1.msra.mxu0 %v7511
  %7557 = vmatprep.subr.mxu0 %v7517
  %7558 = vmatpush1.msra.mxu0 %v7515
  %7559 = vmatprep.subr.mxu0 %v7553
  %7560 = vmatpush1.msra.mxu0 %v7550
  %7561 = vmatprep.subr.mxu0 0.0
  %7562 = vmatpush1.msra.mxu0 0.0
  %7563 = vmatprep.subr.mxu0 0.0
  %7564 = vmatpush1.msra.mxu0 0.0
  %7565 = vmatprep.subr.mxu0 0.0
  %7566 = vmatpush1.msra.mxu0 0.0
  %7567 = vmatprep.subr.mxu0 0.0
  %7568 = vmatpush1.msra.mxu0 0.0
  %7569 = vmatprep.subr.mxu0 0.0
  %7570 = vmatpush1.msra.mxu0 0.0
  %7571 = vmatprep.subr.mxu0 0.0
  %7572 = vmatpush1.msra.mxu0 0.0
  %7573 = vmatprep.subr.mxu0 0.0
  %7574 = vmatpush1.msra.mxu0 0.0
  %7575 = vmatprep.subr.mxu0 0.0
  %7576 = vmatpush1.msra.mxu0 0.0
  %7577 = vmatprep.subr.mxu0 0.0
  %7578 = vmatpush1.msra.mxu0 0.0
  %7579 = vmatprep.subr.mxu0 0.0
  %7580 = vmatpush1.msra.mxu0 0.0
  %7581 = vmatprep.subr.mxu0 0.0
  %7582 = vmatpush1.msra.mxu0 0.0
  %7583 = vmatprep.subr.mxu0 0.0
  %7584 = vmatpush1.msra.mxu0 0.0
  %7585 = vmatprep.subr.mxu0 0.0
  %7586 = vmatpush1.msra.mxu0 0.0
  %7587 = vmatprep.subr.mxu0 0.0
  %7588 = vmatpush1.msra.mxu0 0.0
  %7589 = vmatprep.subr.mxu0 0.0
  %7590 = vmatpush1.msra.mxu0 0.0
  %7591 = vmatprep.subr.mxu0 0.0
  %7592 = vmatpush1.msra.mxu0 0.0
  %7593 = vmatprep.subr.mxu0 0.0
  %7594 = vmatpush1.msra.mxu0 0.0
  %7595 = vmatprep.subr.mxu0 0.0
  %7596 = vmatpush1.msra.mxu0 0.0
  %7597 = vmatprep.subr.mxu0 0.0
  %7598 = vmatpush1.msra.mxu0 0.0
  %7599 = vmatprep.subr.mxu0 0.0
  %7600 = vmatpush1.msra.mxu0 0.0
  %7601 = vmatprep.subr.mxu0 0.0
  %7602 = vmatpush1.msra.mxu0 0.0
  %7603 = vmatprep.subr.mxu0 0.0
  %7604 = vmatpush1.msra.mxu0 0.0
  %7605 = vmatprep.subr.mxu0 0.0
  %7606 = vmatpush1.msra.mxu0 0.0
  %7607 = vmatprep.subr.mxu0 0.0
  %7608 = vmatpush1.msra.mxu0 0.0
  %7609 = vmatprep.subr.mxu0 0.0
  %7610 = vmatpush1.msra.mxu0 0.0
  %7611 = vmatprep.subr.mxu0 0.0
  %7612 = vmatpush1.msra.mxu0 0.0
  %7613 = vmatprep.subr.mxu0 0.0
  %7614 = vmatpush1.msra.mxu0 0.0
  %7615 = vmatprep.subr.mxu0 0.0
  %7616 = vmatpush1.msra.mxu0 0.0
  %7617 = vmatprep.subr.mxu0 0.0
  %7618 = vmatpush1.msra.mxu0 0.0
  %7619 = vmatprep.mubr.f32.mxu0 0.0
  %7620 = vmatmul.mubr.f32.gmra.mrb[0].mxu0 %v7535
  %v7621 = vpop.f32.mrb[0].mxu0
  %v7622 = vadd.f32 0.0, %v7621
  %v7623 = vpop.f32.mrb[0].mxu0
  %v7624 = vadd.f32 0.0, %v7623
  %7625 = vmatprep.mubr.f32.mxu0 0.0
  %7626 = vmatmul.mubr.f32.gmra.mrb[0].mxu0 %v7538
  %v7627 = vpop.f32.mrb[0].mxu0
  %v7628 = vadd.f32 0.0, %v7627
  %v7629 = vpop.f32.mrb[0].mxu0
  %v7630 = vadd.f32 0.0, %v7629
  %7631 = vmatprep.mubr.f32.mxu0 0.0
  %7632 = vmatmul.mubr.f32.gmra.mrb[0].mxu0 %v7541
  %v7633 = vpop.f32.mrb[0].mxu0
  %v7634 = vadd.f32 0.0, %v7633
  %v7635 = vpop.f32.mrb[0].mxu0
  %v7636 = vadd.f32 0.0, %v7635
  %7637 = vmatprep.mubr.f32.mxu0 0.0
  %7638 = vmatmul.mubr.f32.gmra.mrb[0].mxu0 %v7544
  %v7639 = vpop.f32.mrb[0].mxu0
  %v7640 = vadd.f32 0.0, %v7639
  %v7641 = vpop.f32.mrb[0].mxu0
  %v7642 = vadd.f32 0.0, %v7641
  %7643 = vmatprep.mubr.f32.mxu0 0.0
  %7644 = vmatmul.mubr.f32.gmra.mrb[0].mxu0 %v7547
  %v7645 = vpop.f32.mrb[0].mxu0
  %v7646 = vadd.f32 0.0, %v7645
  %v7647 = vpop.f32.mrb[0].mxu0
  %v7648 = vadd.f32 0.0, %v7647
  %7649 = vdwg.mxu0
  %v7651 = vsel %vm7533, %v7203, 0
  %v7654 = vsel %vm7533, %v7204, 0
  %v7657 = vsel %vm7533, %v7205, 0
  %v7660 = vsel %vm7533, %v7206, 0
  %v7663 = vsel %vm7533, %v7207, 0
  %v7666 = vsel %vm387, %v7197, 0
  %v7669 = vsel %vm387, %v7199, 0
  %7671 = vmatprep.subr.mxu0 %v7189
  %7672 = vmatpush1.msra.mxu0 %v7187
  %7673 = vmatprep.subr.mxu0 %v7193
  %7674 = vmatpush1.msra.mxu0 %v7191
  %7675 = vmatprep.subr.mxu0 %v7669
  %7676 = vmatpush1.msra.mxu0 %v7666
  %7677 = vmatprep.subr.mxu0 0.0
  %7678 = vmatpush1.msra.mxu0 0.0
  %7679 = vmatprep.subr.mxu0 0.0
  %7680 = vmatpush1.msra.mxu0 0.0
  %7681 = vmatprep.subr.mxu0 0.0
  %7682 = vmatpush1.msra.mxu0 0.0
  %7683 = vmatprep.subr.mxu0 0.0
  %7684 = vmatpush1.msra.mxu0 0.0
  %7685 = vmatprep.subr.mxu0 0.0
  %7686 = vmatpush1.msra.mxu0 0.0
  %7687 = vmatprep.subr.mxu0 0.0
  %7688 = vmatpush1.msra.mxu0 0.0
  %7689 = vmatprep.subr.mxu0 0.0
  %7690 = vmatpush1.msra.mxu0 0.0
  %7691 = vmatprep.subr.mxu0 0.0
  %7692 = vmatpush1.msra.mxu0 0.0
  %7693 = vmatprep.subr.mxu0 0.0
  %7694 = vmatpush1.msra.mxu0 0.0
  %7695 = vmatprep.subr.mxu0 0.0
  %7696 = vmatpush1.msra.mxu0 0.0
  %7697 = vmatprep.subr.mxu0 0.0
  %7698 = vmatpush1.msra.mxu0 0.0
  %7699 = vmatprep.subr.mxu0 0.0
  %7700 = vmatpush1.msra.mxu0 0.0
  %7701 = vmatprep.subr.mxu0 0.0
  %7702 = vmatpush1.msra.mxu0 0.0
  %7703 = vmatprep.subr.mxu0 0.0
  %7704 = vmatpush1.msra.mxu0 0.0
  %7705 = vmatprep.subr.mxu0 0.0
  %7706 = vmatpush1.msra.mxu0 0.0
  %7707 = vmatprep.subr.mxu0 0.0
  %7708 = vmatpush1.msra.mxu0 0.0
  %7709 = vmatprep.subr.mxu0 0.0
  %7710 = vmatpush1.msra.mxu0 0.0
  %7711 = vmatprep.subr.mxu0 0.0
  %7712 = vmatpush1.msra.mxu0 0.0
  %7713 = vmatprep.subr.mxu0 0.0
  %7714 = vmatpush1.msra.mxu0 0.0
  %7715 = vmatprep.subr.mxu0 0.0
  %7716 = vmatpush1.msra.mxu0 0.0
  %7717 = vmatprep.subr.mxu0 0.0
  %7718 = vmatpush1.msra.mxu0 0.0
  %7719 = vmatprep.subr.mxu0 0.0
  %7720 = vmatpush1.msra.mxu0 0.0
  %7721 = vmatprep.subr.mxu0 0.0
  %7722 = vmatpush1.msra.mxu0 0.0
  %7723 = vmatprep.subr.mxu0 0.0
  %7724 = vmatpush1.msra.mxu0 0.0
  %7725 = vmatprep.subr.mxu0 0.0
  %7726 = vmatpush1.msra.mxu0 0.0
  %7727 = vmatprep.subr.mxu0 0.0
  %7728 = vmatpush1.msra.mxu0 0.0
  %7729 = vmatprep.subr.mxu0 0.0
  %7730 = vmatpush1.msra.mxu0 0.0
  %7731 = vmatprep.subr.mxu0 0.0
  %7732 = vmatpush1.msra.mxu0 0.0
  %7733 = vmatprep.subr.mxu0 0.0
  %7734 = vmatpush1.msra.mxu0 0.0
  %7735 = vmatprep.mubr.f32.mxu0 0.0
  %7736 = vmatmul.mubr.f32.gmra.mrb[0].mxu0 %v7651
  %v7737 = vpop.f32.mrb[0].mxu0
  %v7738 = vadd.f32 %v7622, %v7737
  %v7739 = vpop.f32.mrb[0].mxu0
  %v7740 = vadd.f32 %v7624, %v7739
  %7741 = vmatprep.mubr.f32.mxu0 0.0
  %7742 = vmatmul.mubr.f32.gmra.mrb[0].mxu0 %v7654
  %v7743 = vpop.f32.mrb[0].mxu0
  %v7744 = vadd.f32 %v7628, %v7743
  %v7745 = vpop.f32.mrb[0].mxu0
  %v7746 = vadd.f32 %v7630, %v7745
  %7747 = vmatprep.mubr.f32.mxu0 0.0
  %7748 = vmatmul.mubr.f32.gmra.mrb[0].mxu0 %v7657
  %v7749 = vpop.f32.mrb[0].mxu0
  %v7750 = vadd.f32 %v7634, %v7749
  %v7751 = vpop.f32.mrb[0].mxu0
  %v7752 = vadd.f32 %v7636, %v7751
  %7753 = vmatprep.mubr.f32.mxu0 0.0
  %7754 = vmatmul.mubr.f32.gmra.mrb[0].mxu0 %v7660
  %v7755 = vpop.f32.mrb[0].mxu0
  %v7756 = vadd.f32 %v7640, %v7755
  %v7757 = vpop.f32.mrb[0].mxu0
  %v7758 = vadd.f32 %v7642, %v7757
  %7759 = vmatprep.mubr.f32.mxu0 0.0
  %7760 = vmatmul.mubr.f32.gmra.mrb[0].mxu0 %v7663
  %v7761 = vpop.f32.mrb[0].mxu0
  %v7762 = vadd.f32 %v7646, %v7761
  %v7763 = vpop.f32.mrb[0].mxu0
  %v7764 = vadd.f32 %v7648, %v7763
  %7765 = vdwg.mxu0
  %s7766 = scalar_lea.vmem %s39, 576
  %v7767 = vld [vmem:[%s7766] sm:$0xff]
  %v7768 = vld [vmem:[%s7766 + $0x8] sm:$0xff]
  %v7769 = vld [vmem:[%s7766 + $0x10] sm:$0xff]
  %v7770 = vld [vmem:[%s7766 + $0x18] sm:$0xff]
  %v7771 = vld [vmem:[%s7766 + $0x20] sm:$0xff]
  %v7772 = vld [vmem:[%s7766 + $0x28] sm:$0xff]
  %v7773 = vld [vmem:[%s7766 + $0x30] sm:$0xff]
  %v7774 = vld [vmem:[%s7766 + $0x38] sm:$0xff]
  %v7775 = vld [vmem:[%s7766 + $0x40] sm:$0xff]
  %v7776 = vld [vmem:[%s7766 + $0x48] sm:$0xff]
  %v7777 = vld [vmem:[%s7766 + $0x50] sm:$0xff]
  %v7778 = vld [vmem:[%s7766 + $0x58] sm:$0xff]
  %v7779 = vld [vmem:[%s7766 + $0x60] sm:$0xff]
  %v7780 = vld [vmem:[%s7766 + $0x68] sm:$0xff]
  %v7781 = vld [vmem:[%s7766 + $0x70] sm:$0xff]
  %v7782 = vld [vmem:[%s7766 + $0x78] sm:$0xff]
  %v7783 = vld [vmem:[%s7766 + $0x80] sm:$0xff]
  %v7784 = vld [vmem:[%s7766 + $0x88] sm:$0xff]
  %v7785 = vld [vmem:[%s7766 + $0x90] sm:$0xff]
  %v7786 = vld [vmem:[%s7766 + $0x98] sm:$0xff]
  %v7787 = vld [vmem:[%s7766 + $0xa0] sm:$0xff]
  %v7788 = vld [vmem:[%s7766 + $0xa8] sm:$0xff]
  %v7789 = vld [vmem:[%s7766 + $0xb0] sm:$0xff]
  %v7790 = vld [vmem:[%s7766 + $0xb8] sm:$0xff]
  %v7791 = vld [vmem:[%s7766 + $0xc0] sm:$0xff]
  %v7792 = vld [vmem:[%s7766 + $0xc8] sm:$0xff]
  %v7793 = vld [vmem:[%s7766 + $0xd0] sm:$0xff]
  %v7794 = vld [vmem:[%s7766 + $0xd8] sm:$0xff]
  %v7795 = vld [vmem:[%s7766 + $0xe0] sm:$0xff]
  %v7796 = vld [vmem:[%s7766 + $0xe8] sm:$0xff]
  %v7797 = vld [vmem:[%s7766 + $0xf0] sm:$0xff]
  %v7798 = vld [vmem:[%s7766 + $0xf8] sm:$0xff]
  %v7799 = vld [vmem:[%s7766 + $0x100] sm:$0xff]
  %v7800 = vld [vmem:[%s7766 + $0x108] sm:$0xff]
  %v7801 = vld [vmem:[%s7766 + $0x110] sm:$0xff]
  %v7802 = vld [vmem:[%s7766 + $0x118] sm:$0xff]
  %v7839 = vunpack.c.l.b16 %v7767
  %v7840 = vunpack.c.h.b16 %v7767
  %v7841 = vunpack.c.l.b16 %v7768
  %v7842 = vunpack.c.h.b16 %v7768
  %v7843 = vunpack.c.l.b16 %v7769
  %v7844 = vunpack.c.h.b16 %v7769
  %v7845 = vunpack.c.l.b16 %v7770
  %v7846 = vunpack.c.h.b16 %v7770
  %v7847 = vunpack.c.l.b16 %v7771
  %v7848 = vunpack.c.h.b16 %v7771
  %v7849 = vunpack.c.l.b16 %v7772
  %v7850 = vunpack.c.h.b16 %v7772
  %v7851 = vunpack.c.l.b16 %v7773
  %v7852 = vunpack.c.h.b16 %v7773
  %v7853 = vunpack.c.l.b16 %v7774
  %v7854 = vunpack.c.h.b16 %v7774
  %v7855 = vunpack.c.l.b16 %v7775
  %v7856 = vunpack.c.h.b16 %v7775
  %v7857 = vunpack.c.l.b16 %v7776
  %v7858 = vunpack.c.h.b16 %v7776
  %v7859 = vunpack.c.l.b16 %v7777
  %v7860 = vunpack.c.h.b16 %v7777
  %v7861 = vunpack.c.l.b16 %v7778
  %v7862 = vunpack.c.h.b16 %v7778
  %v7863 = vunpack.c.l.b16 %v7779
  %v7864 = vunpack.c.h.b16 %v7779
  %v7865 = vunpack.c.l.b16 %v7780
  %v7866 = vunpack.c.h.b16 %v7780
  %v7867 = vunpack.c.l.b16 %v7781
  %v7868 = vunpack.c.h.b16 %v7781
  %v7869 = vunpack.c.l.b16 %v7782
  %v7870 = vunpack.c.h.b16 %v7782
  %v7871 = vunpack.c.l.b16 %v7783
  %v7872 = vunpack.c.h.b16 %v7783
  %v7873 = vunpack.c.l.b16 %v7784
  %v7874 = vunpack.c.h.b16 %v7784
  %v7875 = vunpack.c.l.b16 %v7785
  %v7876 = vunpack.c.h.b16 %v7785
  %v7877 = vunpack.c.l.b16 %v7786
  %v7878 = vunpack.c.h.b16 %v7786
  %v7879 = vunpack.c.l.b16 %v7787
  %v7880 = vunpack.c.h.b16 %v7787
  %v7881 = vunpack.c.l.b16 %v7788
  %v7882 = vunpack.c.h.b16 %v7788
  %v7883 = vunpack.c.l.b16 %v7789
  %v7884 = vunpack.c.h.b16 %v7789
  %v7885 = vunpack.c.l.b16 %v7790
  %v7886 = vunpack.c.h.b16 %v7790
  %v7887 = vunpack.c.l.b16 %v7791
  %v7888 = vunpack.c.h.b16 %v7791
  %v7889 = vunpack.c.l.b16 %v7792
  %v7890 = vunpack.c.h.b16 %v7792
  %v7891 = vunpack.c.l.b16 %v7793
  %v7892 = vunpack.c.h.b16 %v7793
  %v7893 = vunpack.c.l.b16 %v7794
  %v7894 = vunpack.c.h.b16 %v7794
  %v7895 = vunpack.c.l.b16 %v7795
  %v7896 = vunpack.c.h.b16 %v7795
  %v7897 = vunpack.c.l.b16 %v7796
  %v7898 = vunpack.c.h.b16 %v7796
  %v7899 = vunpack.c.l.b16 %v7797
  %v7900 = vunpack.c.h.b16 %v7797
  %v7901 = vunpack.c.l.b16 %v7798
  %v7902 = vunpack.c.h.b16 %v7798
  %v7903 = vunpack.c.l.b16 %v7799
  %v7904 = vunpack.c.h.b16 %v7799
  %v7905 = vunpack.c.l.b16 %v7800
  %v7906 = vunpack.c.h.b16 %v7800
  %v7907 = vunpack.c.l.b16 %v7801
  %v7908 = vunpack.c.h.b16 %v7801
  %v7909 = vunpack.c.l.b16 %v7802
  %v7910 = vunpack.c.h.b16 %v7802
  %v7911 = vpack.c.b16 %v7841, %v7839
  %v7912 = vpack.c.b16 %v7842, %v7840
  %v7913 = vpack.c.b16 %v7845, %v7843
  %v7914 = vpack.c.b16 %v7846, %v7844
  %v7915 = vpack.c.b16 %v7849, %v7847
  %v7916 = vpack.c.b16 %v7850, %v7848
  %v7917 = vpack.c.b16 %v7853, %v7851
  %v7918 = vpack.c.b16 %v7854, %v7852
  %v7919 = vpack.c.b16 %v7857, %v7855
  %v7920 = vpack.c.b16 %v7858, %v7856
  %v7921 = vpack.c.b16 %v7861, %v7859
  %v7922 = vpack.c.b16 %v7862, %v7860
  %v7923 = vpack.c.b16 %v7865, %v7863
  %v7924 = vpack.c.b16 %v7866, %v7864
  %v7925 = vpack.c.b16 %v7869, %v7867
  %v7926 = vpack.c.b16 %v7870, %v7868
  %v7927 = vpack.c.b16 %v7873, %v7871
  %v7928 = vpack.c.b16 %v7874, %v7872
  %v7929 = vpack.c.b16 %v7877, %v7875
  %v7930 = vpack.c.b16 %v7878, %v7876
  %v7931 = vpack.c.b16 %v7881, %v7879
  %v7932 = vpack.c.b16 %v7882, %v7880
  %v7933 = vpack.c.b16 %v7885, %v7883
  %v7934 = vpack.c.b16 %v7886, %v7884
  %v7935 = vpack.c.b16 %v7889, %v7887
  %v7936 = vpack.c.b16 %v7890, %v7888
  %v7937 = vpack.c.b16 %v7893, %v7891
  %v7938 = vpack.c.b16 %v7894, %v7892
  %v7939 = vpack.c.b16 %v7897, %v7895
  %v7940 = vpack.c.b16 %v7898, %v7896
  %v7941 = vpack.c.b16 %v7901, %v7899
  %v7942 = vpack.c.b16 %v7902, %v7900
  %v7943 = vpack.c.b16 %v7905, %v7903
  %v7944 = vpack.c.b16 %v7906, %v7904
  %v7945 = vpack.c.b16 %v7909, %v7907
  %v7946 = vpack.c.b16 %v7910, %v7908
  %7983 = vmatprep.subr.bf16.mxu0 %v7912
  %7984 = vmatpush1.bf16.msra.mxu0 %v7911
  %7985 = vmatprep.subr.bf16.mxu0 %v7914
  %7986 = vmatpush1.bf16.msra.mxu0 %v7913
  %7987 = vmatprep.subr.bf16.mxu0 %v7916
  %7988 = vmatpush1.bf16.msra.mxu0 %v7915
  %7989 = vmatprep.subr.bf16.mxu0 %v7918
  %7990 = vmatpush1.bf16.msra.mxu0 %v7917
  %7991 = vmatprep.subr.bf16.mxu0 %v7920
  %7992 = vmatpush1.bf16.msra.mxu0 %v7919
  %7993 = vmatprep.subr.bf16.mxu0 %v7922
  %7994 = vmatpush1.bf16.msra.mxu0 %v7921
  %7995 = vmatprep.subr.bf16.mxu0 %v7924
  %7996 = vmatpush1.bf16.msra.mxu0 %v7923
  %7997 = vmatprep.subr.bf16.mxu0 %v7926
  %7998 = vmatpush1.bf16.msra.mxu0 %v7925
  %7999 = vmatprep.subr.bf16.mxu0 %v7928
  %8000 = vmatpush1.bf16.msra.mxu0 %v7927
  %8001 = vmatprep.subr.bf16.mxu0 %v7930
  %8002 = vmatpush1.bf16.msra.mxu0 %v7929
  %8003 = vmatprep.subr.bf16.mxu0 %v7932
  %8004 = vmatpush1.bf16.msra.mxu0 %v7931
  %8005 = vmatprep.subr.bf16.mxu0 %v7934
  %8006 = vmatpush1.bf16.msra.mxu0 %v7933
  %8007 = vmatprep.subr.bf16.mxu0 %v7936
  %8008 = vmatpush1.bf16.msra.mxu0 %v7935
  %8009 = vmatprep.subr.bf16.mxu0 %v7938
  %8010 = vmatpush1.bf16.msra.mxu0 %v7937
  %8011 = vmatprep.subr.bf16.mxu0 %v7940
  %8012 = vmatpush1.bf16.msra.mxu0 %v7939
  %8013 = vmatprep.subr.bf16.mxu0 %v7942
  %8014 = vmatpush1.bf16.msra.mxu0 %v7941
  %8015 = vmatprep.mubr.bf16.mxu0 %v6874
  %8016 = vmatmul.mubr.bf16.gmra.mrb[0].mxu0 %v6873
  %v8017 = vpop.f32.mrb[0].mxu0
  %v8018 = vadd.f32 0.0, %v8017
  %v8019 = vpop.f32.mrb[0].mxu0
  %v8020 = vadd.f32 0.0, %v8019
  %v8021 = vpop.f32.mrb[0].mxu0
  %v8022 = vadd.f32 0.0, %v8021
  %v8023 = vpop.f32.mrb[0].mxu0
  %v8024 = vadd.f32 0.0, %v8023
  %8025 = vmatprep.mubr.bf16.mxu0 %v6877
  %8026 = vmatmul.mubr.bf16.gmra.mrb[0].mxu0 %v6876
  %v8027 = vpop.f32.mrb[0].mxu0
  %v8028 = vadd.f32 0.0, %v8027
  %v8029 = vpop.f32.mrb[0].mxu0
  %v8030 = vadd.f32 0.0, %v8029
  %v8031 = vpop.f32.mrb[0].mxu0
  %v8032 = vpop.f32.mrb[0].mxu0
  %8033 = vdwg.mxu0
  %8034 = vmatprep.subr.bf16.mxu0 %v7944
  %8035 = vmatpush1.bf16.msra.mxu0 %v7943
  %8036 = vmatprep.subr.bf16.mxu0 %v7946
  %8037 = vmatpush1.bf16.msra.mxu0 %v7945
  %8038 = vmatprep.subr.bf16.mxu0 0
  %8039 = vmatpush1.bf16.msra.mxu0 0
  %8040 = vmatprep.subr.bf16.mxu0 0
  %8041 = vmatpush1.bf16.msra.mxu0 0
  %8042 = vmatprep.subr.bf16.mxu0 0
  %8043 = vmatpush1.bf16.msra.mxu0 0
  %8044 = vmatprep.subr.bf16.mxu0 0
  %8045 = vmatpush1.bf16.msra.mxu0 0
  %8046 = vmatprep.subr.bf16.mxu0 0
  %8047 = vmatpush1.bf16.msra.mxu0 0
  %8048 = vmatprep.subr.bf16.mxu0 0
  %8049 = vmatpush1.bf16.msra.mxu0 0
  %8050 = vmatprep.subr.bf16.mxu0 0
  %8051 = vmatpush1.bf16.msra.mxu0 0
  %8052 = vmatprep.subr.bf16.mxu0 0
  %8053 = vmatpush1.bf16.msra.mxu0 0
  %8054 = vmatprep.subr.bf16.mxu0 0
  %8055 = vmatpush1.bf16.msra.mxu0 0
  %8056 = vmatprep.subr.bf16.mxu0 0
  %8057 = vmatpush1.bf16.msra.mxu0 0
  %8058 = vmatprep.subr.bf16.mxu0 0
  %8059 = vmatpush1.bf16.msra.mxu0 0
  %8060 = vmatprep.subr.bf16.mxu0 0
  %8061 = vmatpush1.bf16.msra.mxu0 0
  %8062 = vmatprep.subr.bf16.mxu0 0
  %8063 = vmatpush1.bf16.msra.mxu0 0
  %8064 = vmatprep.subr.bf16.mxu0 0
  %8065 = vmatpush1.bf16.msra.mxu0 0
  %8066 = vmatprep.mubr.bf16.mxu0 0
  %8067 = vmatmul.mubr.bf16.gmra.mrb[0].mxu0 %v7096
  %v8068 = vpop.f32.mrb[0].mxu0
  %v8069 = vadd.f32 %v8018, %v8068
  %v8070 = vpop.f32.mrb[0].mxu0
  %v8071 = vadd.f32 %v8020, %v8070
  %v8072 = vpop.f32.mrb[0].mxu0
  %v8073 = vadd.f32 %v8022, %v8072
  %v8074 = vpop.f32.mrb[0].mxu0
  %v8075 = vadd.f32 %v8024, %v8074
  %8076 = vmatprep.mubr.bf16.mxu0 0
  %8077 = vmatmul.mubr.bf16.gmra.mrb[0].mxu0 %v7099
  %v8078 = vpop.f32.mrb[0].mxu0
  %v8079 = vadd.f32 %v8028, %v8078
  %v8080 = vpop.f32.mrb[0].mxu0
  %v8081 = vadd.f32 %v8030, %v8080
  %v8082 = vpop.f32.mrb[0].mxu0
  %v8083 = vpop.f32.mrb[0].mxu0
  %8084 = vdwg.mxu0
  %s8085 = scalar_lea.vmem %s41, 80
  %v8086 = vld [vmem:[%s8085] sm:$0xff]
  %v8087 = vld [vmem:[%s8085 + $0x8] sm:$0xff]
  %v8088 = vld [vmem:[%s8085 + $0x10] sm:$0xff]
  %v8089 = vld [vmem:[%s8085 + $0x18] sm:$0xff]
  %v8090 = vld [vmem:[%s8085 + $0x20] sm:$0x3f]
  %v8092 = vsel %vm7533, %v8086, 0
  %v8095 = vsel %vm7533, %v8087, 0
  %v8098 = vsel %vm7533, %v8088, 0
  %v8101 = vsel %vm7533, %v8089, 0
  %v8104 = vsel %vm7533, %v8090, 0
  %v8107 = vsel %vm387, %v8079, 0
  %v8110 = vsel %vm387, %v8081, 0
  %8112 = vmatprep.subr.mxu0 %v8071
  %8113 = vmatpush1.msra.mxu0 %v8069
  %8114 = vmatprep.subr.mxu0 %v8075
  %8115 = vmatpush1.msra.mxu0 %v8073
  %8116 = vmatprep.subr.mxu0 %v8110
  %8117 = vmatpush1.msra.mxu0 %v8107
  %8118 = vmatprep.subr.mxu0 0.0
  %8119 = vmatpush1.msra.mxu0 0.0
  %8120 = vmatprep.subr.mxu0 0.0
  %8121 = vmatpush1.msra.mxu0 0.0
  %8122 = vmatprep.subr.mxu0 0.0
  %8123 = vmatpush1.msra.mxu0 0.0
  %8124 = vmatprep.subr.mxu0 0.0
  %8125 = vmatpush1.msra.mxu0 0.0
  %8126 = vmatprep.subr.mxu0 0.0
  %8127 = vmatpush1.msra.mxu0 0.0
  %8128 = vmatprep.subr.mxu0 0.0
  %8129 = vmatpush1.msra.mxu0 0.0
  %8130 = vmatprep.subr.mxu0 0.0
  %8131 = vmatpush1.msra.mxu0 0.0
  %8132 = vmatprep.subr.mxu0 0.0
  %8133 = vmatpush1.msra.mxu0 0.0
  %8134 = vmatprep.subr.mxu0 0.0
  %8135 = vmatpush1.msra.mxu0 0.0
  %8136 = vmatprep.subr.mxu0 0.0
  %8137 = vmatpush1.msra.mxu0 0.0
  %8138 = vmatprep.subr.mxu0 0.0
  %8139 = vmatpush1.msra.mxu0 0.0
  %8140 = vmatprep.subr.mxu0 0.0
  %8141 = vmatpush1.msra.mxu0 0.0
  %8142 = vmatprep.subr.mxu0 0.0
  %8143 = vmatpush1.msra.mxu0 0.0
  %8144 = vmatprep.subr.mxu0 0.0
  %8145 = vmatpush1.msra.mxu0 0.0
  %8146 = vmatprep.subr.mxu0 0.0
  %8147 = vmatpush1.msra.mxu0 0.0
  %8148 = vmatprep.subr.mxu0 0.0
  %8149 = vmatpush1.msra.mxu0 0.0
  %8150 = vmatprep.subr.mxu0 0.0
  %8151 = vmatpush1.msra.mxu0 0.0
  %8152 = vmatprep.subr.mxu0 0.0
  %8153 = vmatpush1.msra.mxu0 0.0
  %8154 = vmatprep.subr.mxu0 0.0
  %8155 = vmatpush1.msra.mxu0 0.0
  %8156 = vmatprep.subr.mxu0 0.0
  %8157 = vmatpush1.msra.mxu0 0.0
  %8158 = vmatprep.subr.mxu0 0.0
  %8159 = vmatpush1.msra.mxu0 0.0
  %8160 = vmatprep.subr.mxu0 0.0
  %8161 = vmatpush1.msra.mxu0 0.0
  %8162 = vmatprep.subr.mxu0 0.0
  %8163 = vmatpush1.msra.mxu0 0.0
  %8164 = vmatprep.subr.mxu0 0.0
  %8165 = vmatpush1.msra.mxu0 0.0
  %8166 = vmatprep.subr.mxu0 0.0
  %8167 = vmatpush1.msra.mxu0 0.0
  %8168 = vmatprep.subr.mxu0 0.0
  %8169 = vmatpush1.msra.mxu0 0.0
  %8170 = vmatprep.subr.mxu0 0.0
  %8171 = vmatpush1.msra.mxu0 0.0
  %8172 = vmatprep.subr.mxu0 0.0
  %8173 = vmatpush1.msra.mxu0 0.0
  %8174 = vmatprep.subr.mxu0 0.0
  %8175 = vmatpush1.msra.mxu0 0.0
  %8176 = vmatprep.mubr.f32.mxu0 0.0
  %8177 = vmatmul.mubr.f32.gmra.mrb[0].mxu0 %v8092
  %v8178 = vpop.f32.mrb[0].mxu0
  %v8179 = vadd.f32 0.0, %v8178
  %v8180 = vpop.f32.mrb[0].mxu0
  %v8181 = vadd.f32 0.0, %v8180
  %8182 = vmatprep.mubr.f32.mxu0 0.0
  %8183 = vmatmul.mubr.f32.gmra.mrb[0].mxu0 %v8095
  %v8184 = vpop.f32.mrb[0].mxu0
  %v8185 = vadd.f32 0.0, %v8184
  %v8186 = vpop.f32.mrb[0].mxu0
  %v8187 = vadd.f32 0.0, %v8186
  %8188 = vmatprep.mubr.f32.mxu0 0.0
  %8189 = vmatmul.mubr.f32.gmra.mrb[0].mxu0 %v8098
  %v8190 = vpop.f32.mrb[0].mxu0
  %v8191 = vadd.f32 0.0, %v8190
  %v8192 = vpop.f32.mrb[0].mxu0
  %v8193 = vadd.f32 0.0, %v8192
  %8194 = vmatprep.mubr.f32.mxu0 0.0
  %8195 = vmatmul.mubr.f32.gmra.mrb[0].mxu0 %v8101
  %v8196 = vpop.f32.mrb[0].mxu0
  %v8197 = vadd.f32 0.0, %v8196
  %v8198 = vpop.f32.mrb[0].mxu0
  %v8199 = vadd.f32 0.0, %v8198
  %8200 = vmatprep.mubr.f32.mxu0 0.0
  %8201 = vmatmul.mubr.f32.gmra.mrb[0].mxu0 %v8104
  %v8202 = vpop.f32.mrb[0].mxu0
  %v8203 = vadd.f32 0.0, %v8202
  %v8204 = vpop.f32.mrb[0].mxu0
  %v8205 = vadd.f32 0.0, %v8204
  %8206 = vdwg.mxu0
  %v8207 = vadd.f32 %v7738, %v8179
  %v8208 = vadd.f32 %v7740, %v8181
  %v8209 = vadd.f32 %v7744, %v8185
  %v8210 = vadd.f32 %v7746, %v8187
  %v8211 = vadd.f32 %v7750, %v8191
  %v8212 = vadd.f32 %v7752, %v8193
  %v8213 = vadd.f32 %v7756, %v8197
  %v8214 = vadd.f32 %v7758, %v8199
  %v8215 = vadd.f32 %v7762, %v8203
  %v8216 = vadd.f32 %v7764, %v8205
  %v8217 = vld [vmem:[%s43] sm:$0xff]
  %v8218 = vld [vmem:[%s43 + $0x8] sm:$0xff]
  %v8219 = vld [vmem:[%s45] sm:$0xff]
  %v8220 = vld [vmem:[%s45 + $0x8] sm:$0xff]
  %v8221 = vld [vmem:[%s45 + $0x10] sm:$0xff]
  %v8222 = vld [vmem:[%s45 + $0x18] sm:$0xff]
  %v8223 = vld [vmem:[%s45 + $0x20] sm:$0xff]
  %v8224 = vld [vmem:[%s45 + $0x28] sm:$0xff]
  %v8225 = vld [vmem:[%s45 + $0x30] sm:$0xff]
  %v8226 = vld [vmem:[%s45 + $0x38] sm:$0xff]
  %v8227 = vld [vmem:[%s45 + $0x40] sm:$0xff]
  %v8228 = vld [vmem:[%s45 + $0x48] sm:$0xff]
  %v8229 = vld [vmem:[%s45 + $0x50] sm:$0xff]
  %v8230 = vld [vmem:[%s45 + $0x58] sm:$0xff]
  %v8231 = vld [vmem:[%s45 + $0x60] sm:$0xff]
  %v8232 = vld [vmem:[%s45 + $0x68] sm:$0xff]
  %v8233 = vld [vmem:[%s45 + $0x70] sm:$0xff]
  %v8234 = vld [vmem:[%s45 + $0x78] sm:$0xff]
  %v8235 = vld [vmem:[%s45 + $0x80] sm:$0xff]
  %v8236 = vld [vmem:[%s45 + $0x88] sm:$0xff]
  %v8237 = vld [vmem:[%s45 + $0x90] sm:$0xff]
  %v8238 = vld [vmem:[%s47] sm:$0x1]
  %v8239 = vld [vmem:[%s49] sm:$0x1]
  %v8240 = vld [vmem:[%s51] sm:$0x1]
  %v8242 = vsel %vm203, %v8238, 0
  %8244 = vmatprep.subr.mxu0 %v8218
  %8245 = vmatpush1.msra.mxu0 %v8217
  %8246 = vmatprep.subr.mxu0 0.0
  %8247 = vmatpush1.msra.mxu0 0.0
  %8248 = vmatprep.subr.mxu0 0.0
  %8249 = vmatpush1.msra.mxu0 0.0
  %8250 = vmatprep.subr.mxu0 0.0
  %8251 = vmatpush1.msra.mxu0 0.0
  %8252 = vmatprep.subr.mxu0 0.0
  %8253 = vmatpush1.msra.mxu0 0.0
  %8254 = vmatprep.subr.mxu0 0.0
  %8255 = vmatpush1.msra.mxu0 0.0
  %8256 = vmatprep.subr.mxu0 0.0
  %8257 = vmatpush1.msra.mxu0 0.0
  %8258 = vmatprep.subr.mxu0 0.0
  %8259 = vmatpush1.msra.mxu0 0.0
  %8260 = vmatprep.subr.mxu0 0.0
  %8261 = vmatpush1.msra.mxu0 0.0
  %8262 = vmatprep.subr.mxu0 0.0
  %8263 = vmatpush1.msra.mxu0 0.0
  %8264 = vmatprep.subr.mxu0 0.0
  %8265 = vmatpush1.msra.mxu0 0.0
  %8266 = vmatprep.subr.mxu0 0.0
  %8267 = vmatpush1.msra.mxu0 0.0
  %8268 = vmatprep.subr.mxu0 0.0
  %8269 = vmatpush1.msra.mxu0 0.0
  %8270 = vmatprep.subr.mxu0 0.0
  %8271 = vmatpush1.msra.mxu0 0.0
  %8272 = vmatprep.subr.mxu0 0.0
  %8273 = vmatpush1.msra.mxu0 0.0
  %8274 = vmatprep.subr.mxu0 0.0
  %8275 = vmatpush1.msra.mxu0 0.0
  %8276 = vmatprep.subr.mxu0 0.0
  %8277 = vmatpush1.msra.mxu0 0.0
  %8278 = vmatprep.subr.mxu0 0.0
  %8279 = vmatpush1.msra.mxu0 0.0
  %8280 = vmatprep.subr.mxu0 0.0
  %8281 = vmatpush1.msra.mxu0 0.0
  %8282 = vmatprep.subr.mxu0 0.0
  %8283 = vmatpush1.msra.mxu0 0.0
  %8284 = vmatprep.subr.mxu0 0.0
  %8285 = vmatpush1.msra.mxu0 0.0
  %8286 = vmatprep.subr.mxu0 0.0
  %8287 = vmatpush1.msra.mxu0 0.0
  %8288 = vmatprep.subr.mxu0 0.0
  %8289 = vmatpush1.msra.mxu0 0.0
  %8290 = vmatprep.subr.mxu0 0.0
  %8291 = vmatpush1.msra.mxu0 0.0
  %8292 = vmatprep.subr.mxu0 0.0
  %8293 = vmatpush1.msra.mxu0 0.0
  %8294 = vmatprep.subr.mxu0 0.0
  %8295 = vmatpush1.msra.mxu0 0.0
  %8296 = vmatprep.subr.mxu0 0.0
  %8297 = vmatpush1.msra.mxu0 0.0
  %8298 = vmatprep.subr.mxu0 0.0
  %8299 = vmatpush1.msra.mxu0 0.0
  %8300 = vmatprep.subr.mxu0 0.0
  %8301 = vmatpush1.msra.mxu0 0.0
  %8302 = vmatprep.subr.mxu0 0.0
  %8303 = vmatpush1.msra.mxu0 0.0
  %8304 = vmatprep.subr.mxu0 0.0
  %8305 = vmatpush1.msra.mxu0 0.0
  %8306 = vmatprep.subr.mxu0 0.0
  %8307 = vmatpush1.msra.mxu0 0.0
  %8308 = vmatprep.mubr.f32.mxu0 0.0
  %8309 = vmatmul.mubr.f32.gmra.mrb[0].mxu0 %v8242
  %v8310 = vpop.f32.mrb[0].mxu0
  %v8311 = vadd.f32 0.0, %v8310
  %v8312 = vpop.f32.mrb[0].mxu0
  %v8313 = vadd.f32 0.0, %v8312
  %8314 = vdwg.mxu0
  %v8315 = vlaneseq
  %v8316 = vshrl.u32 %v8315, 7
  %v8317 = vsub.s32 0, %v8316
  %v8318 = vrot.slane %v8311, %v8317
  %v8319 = vlaneseq
  %v8320 = vshrl.u32 %v8319, 7
  %v8321 = vsub.s32 0, %v8320
  %v8322 = vrot.slane %v8313, %v8321
  %v8323 = vadd.f32 %v8207, %v8318
  %v8324 = vadd.f32 %v8208, %v8322
  %v8325 = vadd.f32 %v8209, %v8318
  %v8326 = vadd.f32 %v8210, %v8322
  %v8327 = vadd.f32 %v8211, %v8318
  %v8328 = vadd.f32 %v8212, %v8322
  %v8329 = vadd.f32 %v8213, %v8318
  %v8330 = vadd.f32 %v8214, %v8322
  %v8331 = vadd.f32 %v8215, %v8318
  %v8332 = vadd.f32 %v8216, %v8322
  %v8333 = vadd.f32 %v8323, %v8325
  %v8334 = vadd.f32 %v8333, %v8327
  %v8335 = vadd.f32 %v8334, %v8329
  %vm8336 = vcmask 1045504
  %v8337 = vsel %vm8336, %v8331, 0.0
  %v8338 = vadd.f32 %v8335, %v8337
  %v8339 = vrot.slane %v8338, 4
  %v8340 = vadd.f32 %v8338, %v8339
  %v8341 = vrot.slane %v8340, 2
  %v8342 = vadd.f32 %v8340, %v8341
  %v8343 = vrot.slane %v8342, 1
  %v8344 = vadd.f32 %v8342, %v8343
  %vm8345 = vcmask 195584
  %v8346 = vsel %vm8345, %v8324, 0.0
  %v8347 = vsel %vm8345, %v8326, 0.0
  %v8348 = vadd.f32 %v8346, %v8347
  %v8349 = vsel %vm8345, %v8328, 0.0
  %v8350 = vadd.f32 %v8348, %v8349
  %v8351 = vsel %vm8345, %v8330, 0.0
  %v8352 = vadd.f32 %v8350, %v8351
  %vm8353 = vcmask 193536
  %v8354 = vsel %vm8353, %v8332, 0.0
  %v8355 = vadd.f32 %v8352, %v8354
  %v8356 = vrot.slane %v8355, 4
  %v8357 = vadd.f32 %v8355, %v8356
  %v8358 = vrot.slane %v8357, 2
  %v8359 = vadd.f32 %v8357, %v8358
  %v8360 = vrot.slane %v8359, 1
  %v8361 = vadd.f32 %v8359, %v8360
  %v8363 = vsel %vm8345, %v8361, 0
  %8365 = vmatprep.subr.mxu0 0.0
  %8366 = vmatpush1.msra.mxu0 %v8219
  %8367 = vmatprep.subr.mxu0 0.0
  %8368 = vmatpush1.msra.mxu0 %v8220
  %8369 = vmatprep.subr.mxu0 0.0
  %8370 = vmatpush1.msra.mxu0 %v8221
  %8371 = vmatprep.subr.mxu0 0.0
  %8372 = vmatpush1.msra.mxu0 %v8222
  %8373 = vmatprep.subr.mxu0 0.0
  %8374 = vmatpush1.msra.mxu0 %v8223
  %8375 = vmatprep.subr.mxu0 0.0
  %8376 = vmatpush1.msra.mxu0 %v8224
  %8377 = vmatprep.subr.mxu0 0.0
  %8378 = vmatpush1.msra.mxu0 %v8225
  %8379 = vmatprep.subr.mxu0 0.0
  %8380 = vmatpush1.msra.mxu0 %v8226
  %8381 = vmatprep.subr.mxu0 0.0
  %8382 = vmatpush1.msra.mxu0 %v8227
  %8383 = vmatprep.subr.mxu0 0.0
  %8384 = vmatpush1.msra.mxu0 %v8228
  %8385 = vmatprep.subr.mxu0 0.0
  %8386 = vmatpush1.msra.mxu0 %v8229
  %8387 = vmatprep.subr.mxu0 0.0
  %8388 = vmatpush1.msra.mxu0 %v8230
  %8389 = vmatprep.subr.mxu0 0.0
  %8390 = vmatpush1.msra.mxu0 %v8231
  %8391 = vmatprep.subr.mxu0 0.0
  %8392 = vmatpush1.msra.mxu0 %v8232
  %8393 = vmatprep.subr.mxu0 0.0
  %8394 = vmatpush1.msra.mxu0 %v8233
  %8395 = vmatprep.subr.mxu0 0.0
  %8396 = vmatpush1.msra.mxu0 %v8234
  %8397 = vmatprep.subr.mxu0 0.0
  %8398 = vmatpush1.msra.mxu0 %v8235
  %8399 = vmatprep.subr.mxu0 0.0
  %8400 = vmatpush1.msra.mxu0 %v8236
  %8401 = vmatprep.subr.mxu0 0.0
  %8402 = vmatpush1.msra.mxu0 %v8237
  %8403 = vmatprep.subr.mxu0 0.0
  %8404 = vmatpush1.msra.mxu0 0.0
  %8405 = vmatprep.subr.mxu0 0.0
  %8406 = vmatpush1.msra.mxu0 0.0
  %8407 = vmatprep.subr.mxu0 0.0
  %8408 = vmatpush1.msra.mxu0 0.0
  %8409 = vmatprep.subr.mxu0 0.0
  %8410 = vmatpush1.msra.mxu0 0.0
  %8411 = vmatprep.subr.mxu0 0.0
  %8412 = vmatpush1.msra.mxu0 0.0
  %8413 = vmatprep.subr.mxu0 0.0
  %8414 = vmatpush1.msra.mxu0 0.0
  %8415 = vmatprep.subr.mxu0 0.0
  %8416 = vmatpush1.msra.mxu0 0.0
  %8417 = vmatprep.subr.mxu0 0.0
  %8418 = vmatpush1.msra.mxu0 0.0
  %8419 = vmatprep.subr.mxu0 0.0
  %8420 = vmatpush1.msra.mxu0 0.0
  %8421 = vmatprep.subr.mxu0 0.0
  %8422 = vmatpush1.msra.mxu0 0.0
  %8423 = vmatprep.subr.mxu0 0.0
  %8424 = vmatpush1.msra.mxu0 0.0
  %8425 = vmatprep.subr.mxu0 0.0
  %8426 = vmatpush1.msra.mxu0 0.0
  %8427 = vmatprep.subr.mxu0 0.0
  %8428 = vmatpush1.msra.mxu0 0.0
  %8429 = vmatprep.mubr.f32.mxu0 %v8363
  %8430 = vmatmul.mubr.f32.gmra.mrb[0].mxu0 %v8344
  %v8431 = vpop.f32.mrb[0].mxu0
  %v8432 = vadd.f32 0.0, %v8431
  %v8433 = vpop.f32.mrb[0].mxu0
  %8434 = vdwg.mxu0
  %v8435 = vrcp.pop 722.0
  %v8436 = vmul.f32 %v8432, %v8435
  %v8438 = vsel %vm203, %v8436, 0
  %8440 = vmatprep.subr.mxu0 %v8218
  %8441 = vmatpush1.msra.mxu0 %v8217
  %8442 = vmatprep.subr.mxu0 0.0
  %8443 = vmatpush1.msra.mxu0 0.0
  %8444 = vmatprep.subr.mxu0 0.0
  %8445 = vmatpush1.msra.mxu0 0.0
  %8446 = vmatprep.subr.mxu0 0.0
  %8447 = vmatpush1.msra.mxu0 0.0
  %8448 = vmatprep.subr.mxu0 0.0
  %8449 = vmatpush1.msra.mxu0 0.0
  %8450 = vmatprep.subr.mxu0 0.0
  %8451 = vmatpush1.msra.mxu0 0.0
  %8452 = vmatprep.subr.mxu0 0.0
  %8453 = vmatpush1.msra.mxu0 0.0
  %8454 = vmatprep.subr.mxu0 0.0
  %8455 = vmatpush1.msra.mxu0 0.0
  %8456 = vmatprep.subr.mxu0 0.0
  %8457 = vmatpush1.msra.mxu0 0.0
  %8458 = vmatprep.subr.mxu0 0.0
  %8459 = vmatpush1.msra.mxu0 0.0
  %8460 = vmatprep.subr.mxu0 0.0
  %8461 = vmatpush1.msra.mxu0 0.0
  %8462 = vmatprep.subr.mxu0 0.0
  %8463 = vmatpush1.msra.mxu0 0.0
  %8464 = vmatprep.subr.mxu0 0.0
  %8465 = vmatpush1.msra.mxu0 0.0
  %8466 = vmatprep.subr.mxu0 0.0
  %8467 = vmatpush1.msra.mxu0 0.0
  %8468 = vmatprep.subr.mxu0 0.0
  %8469 = vmatpush1.msra.mxu0 0.0
  %8470 = vmatprep.subr.mxu0 0.0
  %8471 = vmatpush1.msra.mxu0 0.0
  %8472 = vmatprep.subr.mxu0 0.0
  %8473 = vmatpush1.msra.mxu0 0.0
  %8474 = vmatprep.subr.mxu0 0.0
  %8475 = vmatpush1.msra.mxu0 0.0
  %8476 = vmatprep.subr.mxu0 0.0
  %8477 = vmatpush1.msra.mxu0 0.0
  %8478 = vmatprep.subr.mxu0 0.0
  %8479 = vmatpush1.msra.mxu0 0.0
  %8480 = vmatprep.subr.mxu0 0.0
  %8481 = vmatpush1.msra.mxu0 0.0
  %8482 = vmatprep.subr.mxu0 0.0
  %8483 = vmatpush1.msra.mxu0 0.0
  %8484 = vmatprep.subr.mxu0 0.0
  %8485 = vmatpush1.msra.mxu0 0.0
  %8486 = vmatprep.subr.mxu0 0.0
  %8487 = vmatpush1.msra.mxu0 0.0
  %8488 = vmatprep.subr.mxu0 0.0
  %8489 = vmatpush1.msra.mxu0 0.0
  %8490 = vmatprep.subr.mxu0 0.0
  %8491 = vmatpush1.msra.mxu0 0.0
  %8492 = vmatprep.subr.mxu0 0.0
  %8493 = vmatpush1.msra.mxu0 0.0
  %8494 = vmatprep.subr.mxu0 0.0
  %8495 = vmatpush1.msra.mxu0 0.0
  %8496 = vmatprep.subr.mxu0 0.0
  %8497 = vmatpush1.msra.mxu0 0.0
  %8498 = vmatprep.subr.mxu0 0.0
  %8499 = vmatpush1.msra.mxu0 0.0
  %8500 = vmatprep.subr.mxu0 0.0
  %8501 = vmatpush1.msra.mxu0 0.0
  %8502 = vmatprep.subr.mxu0 0.0
  %8503 = vmatpush1.msra.mxu0 0.0
  %8504 = vmatprep.mubr.f32.mxu0 0.0
  %8505 = vmatmul.mubr.f32.gmra.mrb[0].mxu0 %v8438
  %v8506 = vpop.f32.mrb[0].mxu0
  %v8507 = vadd.f32 0.0, %v8506
  %v8508 = vpop.f32.mrb[0].mxu0
  %v8509 = vadd.f32 0.0, %v8508
  %8510 = vdwg.mxu0
  %v8511 = vlaneseq
  %v8512 = vshrl.u32 %v8511, 7
  %v8513 = vsub.s32 0, %v8512
  %v8514 = vrot.slane %v8507, %v8513
  %v8515 = vlaneseq
  %v8516 = vshrl.u32 %v8515, 7
  %v8517 = vsub.s32 0, %v8516
  %v8518 = vrot.slane %v8509, %v8517
  %v8519 = vsub.f32 %v8323, %v8514
  %v8520 = vsub.f32 %v8324, %v8518
  %v8521 = vsub.f32 %v8325, %v8514
  %v8522 = vsub.f32 %v8326, %v8518
  %v8523 = vsub.f32 %v8327, %v8514
  %v8524 = vsub.f32 %v8328, %v8518
  %v8525 = vsub.f32 %v8329, %v8514
  %v8526 = vsub.f32 %v8330, %v8518
  %v8527 = vsub.f32 %v8331, %v8514
  %v8528 = vsub.f32 %v8332, %v8518
  %v8529 = vmul.f32 %v8519, %v8519
  %v8530 = vmul.f32 %v8520, %v8520
  %v8531 = vmul.f32 %v8521, %v8521
  %v8532 = vmul.f32 %v8522, %v8522
  %v8533 = vmul.f32 %v8523, %v8523
  %v8534 = vmul.f32 %v8524, %v8524
  %v8535 = vmul.f32 %v8525, %v8525
  %v8536 = vmul.f32 %v8526, %v8526
  %v8537 = vmul.f32 %v8527, %v8527
  %v8538 = vmul.f32 %v8528, %v8528
  %v8539 = vadd.f32 %v8529, %v8531
  %v8540 = vadd.f32 %v8539, %v8533
  %v8541 = vadd.f32 %v8540, %v8535
  %v8542 = vsel %vm8336, %v8537, 0.0
  %v8543 = vadd.f32 %v8541, %v8542
  %v8544 = vrot.slane %v8543, 4
  %v8545 = vadd.f32 %v8543, %v8544
  %v8546 = vrot.slane %v8545, 2
  %v8547 = vadd.f32 %v8545, %v8546
  %v8548 = vrot.slane %v8547, 1
  %v8549 = vadd.f32 %v8547, %v8548
  %v8550 = vsel %vm8345, %v8530, 0.0
  %v8551 = vsel %vm8345, %v8532, 0.0
  %v8552 = vadd.f32 %v8550, %v8551
  %v8553 = vsel %vm8345, %v8534, 0.0
  %v8554 = vadd.f32 %v8552, %v8553
  %v8555 = vsel %vm8345, %v8536, 0.0
  %v8556 = vadd.f32 %v8554, %v8555
  %v8557 = vsel %vm8353, %v8538, 0.0
  %v8558 = vadd.f32 %v8556, %v8557
  %v8559 = vrot.slane %v8558, 4
  %v8560 = vadd.f32 %v8558, %v8559
  %v8561 = vrot.slane %v8560, 2
  %v8562 = vadd.f32 %v8560, %v8561
  %v8563 = vrot.slane %v8562, 1
  %v8564 = vadd.f32 %v8562, %v8563
  %v8566 = vsel %vm8345, %v8564, 0
  %8568 = vmatprep.subr.mxu0 0.0
  %8569 = vmatpush1.msra.mxu0 %v8219
  %8570 = vmatprep.subr.mxu0 0.0
  %8571 = vmatpush1.msra.mxu0 %v8220
  %8572 = vmatprep.subr.mxu0 0.0
  %8573 = vmatpush1.msra.mxu0 %v8221
  %8574 = vmatprep.subr.mxu0 0.0
  %8575 = vmatpush1.msra.mxu0 %v8222
  %8576 = vmatprep.subr.mxu0 0.0
  %8577 = vmatpush1.msra.mxu0 %v8223
  %8578 = vmatprep.subr.mxu0 0.0
  %8579 = vmatpush1.msra.mxu0 %v8224
  %8580 = vmatprep.subr.mxu0 0.0
  %8581 = vmatpush1.msra.mxu0 %v8225
  %8582 = vmatprep.subr.mxu0 0.0
  %8583 = vmatpush1.msra.mxu0 %v8226
  %8584 = vmatprep.subr.mxu0 0.0
  %8585 = vmatpush1.msra.mxu0 %v8227
  %8586 = vmatprep.subr.mxu0 0.0
  %8587 = vmatpush1.msra.mxu0 %v8228
  %8588 = vmatprep.subr.mxu0 0.0
  %8589 = vmatpush1.msra.mxu0 %v8229
  %8590 = vmatprep.subr.mxu0 0.0
  %8591 = vmatpush1.msra.mxu0 %v8230
  %8592 = vmatprep.subr.mxu0 0.0
  %8593 = vmatpush1.msra.mxu0 %v8231
  %8594 = vmatprep.subr.mxu0 0.0
  %8595 = vmatpush1.msra.mxu0 %v8232
  %8596 = vmatprep.subr.mxu0 0.0
  %8597 = vmatpush1.msra.mxu0 %v8233
  %8598 = vmatprep.subr.mxu0 0.0
  %8599 = vmatpush1.msra.mxu0 %v8234
  %8600 = vmatprep.subr.mxu0 0.0
  %8601 = vmatpush1.msra.mxu0 %v8235
  %8602 = vmatprep.subr.mxu0 0.0
  %8603 = vmatpush1.msra.mxu0 %v8236
  %8604 = vmatprep.subr.mxu0 0.0
  %8605 = vmatpush1.msra.mxu0 %v8237
  %8606 = vmatprep.subr.mxu0 0.0
  %8607 = vmatpush1.msra.mxu0 0.0
  %8608 = vmatprep.subr.mxu0 0.0
  %8609 = vmatpush1.msra.mxu0 0.0
  %8610 = vmatprep.subr.mxu0 0.0
  %8611 = vmatpush1.msra.mxu0 0.0
  %8612 = vmatprep.subr.mxu0 0.0
  %8613 = vmatpush1.msra.mxu0 0.0
  %8614 = vmatprep.subr.mxu0 0.0
  %8615 = vmatpush1.msra.mxu0 0.0
  %8616 = vmatprep.subr.mxu0 0.0
  %8617 = vmatpush1.msra.mxu0 0.0
  %8618 = vmatprep.subr.mxu0 0.0
  %8619 = vmatpush1.msra.mxu0 0.0
  %8620 = vmatprep.subr.mxu0 0.0
  %8621 = vmatpush1.msra.mxu0 0.0
  %8622 = vmatprep.subr.mxu0 0.0
  %8623 = vmatpush1.msra.mxu0 0.0
  %8624 = vmatprep.subr.mxu0 0.0
  %8625 = vmatpush1.msra.mxu0 0.0
  %8626 = vmatprep.subr.mxu0 0.0
  %8627 = vmatpush1.msra.mxu0 0.0
  %8628 = vmatprep.subr.mxu0 0.0
  %8629 = vmatpush1.msra.mxu0 0.0
  %8630 = vmatprep.subr.mxu0 0.0
  %8631 = vmatpush1.msra.mxu0 0.0
  %8632 = vmatprep.mubr.f32.mxu0 %v8566
  %8633 = vmatmul.mubr.f32.gmra.mrb[0].mxu0 %v8549
  %v8634 = vpop.f32.mrb[0].mxu0
  %v8635 = vadd.f32 0.0, %v8634
  %v8636 = vpop.f32.mrb[0].mxu0
  %8637 = vdwg.mxu0
  %v8638 = vmul.f32 %v8635, %v8435
  %v8639 = vadd.f32 %v8638, 1e-05
  %v8640 = vrsqrt.pop %v8639
  %v8641 = vmul.f32 %v8239, %v8640
  %v8643 = vsel %vm203, %v8641, 0
  %8645 = vmatprep.subr.mxu0 %v8218
  %8646 = vmatpush1.msra.mxu0 %v8217
  %8647 = vmatprep.subr.mxu0 0.0
  %8648 = vmatpush1.msra.mxu0 0.0
  %8649 = vmatprep.subr.mxu0 0.0
  %8650 = vmatpush1.msra.mxu0 0.0
  %8651 = vmatprep.subr.mxu0 0.0
  %8652 = vmatpush1.msra.mxu0 0.0
  %8653 = vmatprep.subr.mxu0 0.0
  %8654 = vmatpush1.msra.mxu0 0.0
  %8655 = vmatprep.subr.mxu0 0.0
  %8656 = vmatpush1.msra.mxu0 0.0
  %8657 = vmatprep.subr.mxu0 0.0
  %8658 = vmatpush1.msra.mxu0 0.0
  %8659 = vmatprep.subr.mxu0 0.0
  %8660 = vmatpush1.msra.mxu0 0.0
  %8661 = vmatprep.subr.mxu0 0.0
  %8662 = vmatpush1.msra.mxu0 0.0
  %8663 = vmatprep.subr.mxu0 0.0
  %8664 = vmatpush1.msra.mxu0 0.0
  %8665 = vmatprep.subr.mxu0 0.0
  %8666 = vmatpush1.msra.mxu0 0.0
  %8667 = vmatprep.subr.mxu0 0.0
  %8668 = vmatpush1.msra.mxu0 0.0
  %8669 = vmatprep.subr.mxu0 0.0
  %8670 = vmatpush1.msra.mxu0 0.0
  %8671 = vmatprep.subr.mxu0 0.0
  %8672 = vmatpush1.msra.mxu0 0.0
  %8673 = vmatprep.subr.mxu0 0.0
  %8674 = vmatpush1.msra.mxu0 0.0
  %8675 = vmatprep.subr.mxu0 0.0
  %8676 = vmatpush1.msra.mxu0 0.0
  %8677 = vmatprep.subr.mxu0 0.0
  %8678 = vmatpush1.msra.mxu0 0.0
  %8679 = vmatprep.subr.mxu0 0.0
  %8680 = vmatpush1.msra.mxu0 0.0
  %8681 = vmatprep.subr.mxu0 0.0
  %8682 = vmatpush1.msra.mxu0 0.0
  %8683 = vmatprep.subr.mxu0 0.0
  %8684 = vmatpush1.msra.mxu0 0.0
  %8685 = vmatprep.subr.mxu0 0.0
  %8686 = vmatpush1.msra.mxu0 0.0
  %8687 = vmatprep.subr.mxu0 0.0
  %8688 = vmatpush1.msra.mxu0 0.0
  %8689 = vmatprep.subr.mxu0 0.0
  %8690 = vmatpush1.msra.mxu0 0.0
  %8691 = vmatprep.subr.mxu0 0.0
  %8692 = vmatpush1.msra.mxu0 0.0
  %8693 = vmatprep.subr.mxu0 0.0
  %8694 = vmatpush1.msra.mxu0 0.0
  %8695 = vmatprep.subr.mxu0 0.0
  %8696 = vmatpush1.msra.mxu0 0.0
  %8697 = vmatprep.subr.mxu0 0.0
  %8698 = vmatpush1.msra.mxu0 0.0
  %8699 = vmatprep.subr.mxu0 0.0
  %8700 = vmatpush1.msra.mxu0 0.0
  %8701 = vmatprep.subr.mxu0 0.0
  %8702 = vmatpush1.msra.mxu0 0.0
  %8703 = vmatprep.subr.mxu0 0.0
  %8704 = vmatpush1.msra.mxu0 0.0
  %8705 = vmatprep.subr.mxu0 0.0
  %8706 = vmatpush1.msra.mxu0 0.0
  %8707 = vmatprep.subr.mxu0 0.0
  %8708 = vmatpush1.msra.mxu0 0.0
  %8709 = vmatprep.mubr.f32.mxu0 0.0
  %8710 = vmatmul.mubr.f32.gmra.mrb[0].mxu0 %v8643
  %v8711 = vpop.f32.mrb[0].mxu0
  %v8712 = vadd.f32 0.0, %v8711
  %v8713 = vpop.f32.mrb[0].mxu0
  %v8714 = vadd.f32 0.0, %v8713
  %8715 = vdwg.mxu0
  %v8716 = vlaneseq
  %v8717 = vshrl.u32 %v8716, 7
  %v8718 = vsub.s32 0, %v8717
  %v8719 = vrot.slane %v8712, %v8718
  %v8720 = vlaneseq
  %v8721 = vshrl.u32 %v8720, 7
  %v8722 = vsub.s32 0, %v8721
  %v8723 = vrot.slane %v8714, %v8722
  %v8724 = vmul.f32 %v8519, %v8719
  %v8725 = vmul.f32 %v8520, %v8723
  %v8726 = vmul.f32 %v8521, %v8719
  %v8727 = vmul.f32 %v8522, %v8723
  %v8728 = vmul.f32 %v8523, %v8719
  %v8729 = vmul.f32 %v8524, %v8723
  %v8730 = vmul.f32 %v8525, %v8719
  %v8731 = vmul.f32 %v8526, %v8723
  %v8732 = vmul.f32 %v8527, %v8719
  %v8733 = vmul.f32 %v8528, %v8723
  %v8735 = vsel %vm203, %v8240, 0
  %8737 = vmatprep.subr.mxu0 %v8218
  %8738 = vmatpush1.msra.mxu0 %v8217
  %8739 = vmatprep.subr.mxu0 0.0
  %8740 = vmatpush1.msra.mxu0 0.0
  %8741 = vmatprep.subr.mxu0 0.0
  %8742 = vmatpush1.msra.mxu0 0.0
  %8743 = vmatprep.subr.mxu0 0.0
  %8744 = vmatpush1.msra.mxu0 0.0
  %8745 = vmatprep.subr.mxu0 0.0
  %8746 = vmatpush1.msra.mxu0 0.0
  %8747 = vmatprep.subr.mxu0 0.0
  %8748 = vmatpush1.msra.mxu0 0.0
  %8749 = vmatprep.subr.mxu0 0.0
  %8750 = vmatpush1.msra.mxu0 0.0
  %8751 = vmatprep.subr.mxu0 0.0
  %8752 = vmatpush1.msra.mxu0 0.0
  %8753 = vmatprep.subr.mxu0 0.0
  %8754 = vmatpush1.msra.mxu0 0.0
  %8755 = vmatprep.subr.mxu0 0.0
  %8756 = vmatpush1.msra.mxu0 0.0
  %8757 = vmatprep.subr.mxu0 0.0
  %8758 = vmatpush1.msra.mxu0 0.0
  %8759 = vmatprep.subr.mxu0 0.0
  %8760 = vmatpush1.msra.mxu0 0.0
  %8761 = vmatprep.subr.mxu0 0.0
  %8762 = vmatpush1.msra.mxu0 0.0
  %8763 = vmatprep.subr.mxu0 0.0
  %8764 = vmatpush1.msra.mxu0 0.0
  %8765 = vmatprep.subr.mxu0 0.0
  %8766 = vmatpush1.msra.mxu0 0.0
  %8767 = vmatprep.subr.mxu0 0.0
  %8768 = vmatpush1.msra.mxu0 0.0
  %8769 = vmatprep.subr.mxu0 0.0
  %8770 = vmatpush1.msra.mxu0 0.0
  %8771 = vmatprep.subr.mxu0 0.0
  %8772 = vmatpush1.msra.mxu0 0.0
  %8773 = vmatprep.subr.mxu0 0.0
  %8774 = vmatpush1.msra.mxu0 0.0
  %8775 = vmatprep.subr.mxu0 0.0
  %8776 = vmatpush1.msra.mxu0 0.0
  %8777 = vmatprep.subr.mxu0 0.0
  %8778 = vmatpush1.msra.mxu0 0.0
  %8779 = vmatprep.subr.mxu0 0.0
  %8780 = vmatpush1.msra.mxu0 0.0
  %8781 = vmatprep.subr.mxu0 0.0
  %8782 = vmatpush1.msra.mxu0 0.0
  %8783 = vmatprep.subr.mxu0 0.0
  %8784 = vmatpush1.msra.mxu0 0.0
  %8785 = vmatprep.subr.mxu0 0.0
  %8786 = vmatpush1.msra.mxu0 0.0
  %8787 = vmatprep.subr.mxu0 0.0
  %8788 = vmatpush1.msra.mxu0 0.0
  %8789 = vmatprep.subr.mxu0 0.0
  %8790 = vmatpush1.msra.mxu0 0.0
  %8791 = vmatprep.subr.mxu0 0.0
  %8792 = vmatpush1.msra.mxu0 0.0
  %8793 = vmatprep.subr.mxu0 0.0
  %8794 = vmatpush1.msra.mxu0 0.0
  %8795 = vmatprep.subr.mxu0 0.0
  %8796 = vmatpush1.msra.mxu0 0.0
  %8797 = vmatprep.subr.mxu0 0.0
  %8798 = vmatpush1.msra.mxu0 0.0
  %8799 = vmatprep.subr.mxu0 0.0
  %8800 = vmatpush1.msra.mxu0 0.0
  %8801 = vmatprep.mubr.f32.mxu0 0.0
  %8802 = vmatmul.mubr.f32.gmra.mrb[0].mxu0 %v8735
  %v8803 = vpop.f32.mrb[0].mxu0
  %v8804 = vadd.f32 0.0, %v8803
  %v8805 = vpop.f32.mrb[0].mxu0
  %v8806 = vadd.f32 0.0, %v8805
  %8807 = vdwg.mxu0
  %v8808 = vlaneseq
  %v8809 = vshrl.u32 %v8808, 7
  %v8810 = vsub.s32 0, %v8809
  %v8811 = vrot.slane %v8804, %v8810
  %v8812 = vlaneseq
  %v8813 = vshrl.u32 %v8812, 7
  %v8814 = vsub.s32 0, %v8813
  %v8815 = vrot.slane %v8806, %v8814
  %v8816 = vadd.f32 %v8724, %v8811
  %v8817 = vadd.f32 %v8725, %v8815
  %v8818 = vadd.f32 %v8726, %v8811
  %v8819 = vadd.f32 %v8727, %v8815
  %v8820 = vadd.f32 %v8728, %v8811
  %v8821 = vadd.f32 %v8729, %v8815
  %v8822 = vadd.f32 %v8730, %v8811
  %v8823 = vadd.f32 %v8731, %v8815
  %v8824 = vadd.f32 %v8732, %v8811
  %v8825 = vadd.f32 %v8733, %v8815
  %v8826 = vmax.f32 %v8816, 0.0
  %v8827 = vmax.f32 %v8817, 0.0
  %v8828 = vmax.f32 %v8818, 0.0
  %v8829 = vmax.f32 %v8819, 0.0
  %v8830 = vmax.f32 %v8820, 0.0
  %v8831 = vmax.f32 %v8821, 0.0
  %v8832 = vmax.f32 %v8822, 0.0
  %v8833 = vmax.f32 %v8823, 0.0
  %v8834 = vmax.f32 %v8824, 0.0
  %v8835 = vmax.f32 %v8825, 0.0
  %v8836 = vpack.c.bf16 %v8828, %v8826
  %v8837 = vpack.c.bf16 %v8829, %v8827
  %v8838 = vpack.c.bf16 %v8832, %v8830
  %v8839 = vpack.c.bf16 %v8833, %v8831
  %v8840 = vpack.c.bf16 %v8834, %v8834
  %v8841 = vpack.c.bf16 %v8835, %v8835
  %v8842 = vld [vmem:[%s53] sm:$0xf]
  %v8843 = vld [vmem:[%s53 + $0x4] sm:$0xf]
  %v8844 = vld [vmem:[%s53 + $0x8] sm:$0xf]
  %v8845 = vld [vmem:[%s53 + $0xc] sm:$0xf]
  %v8846 = vld [vmem:[%s53 + $0x10] sm:$0xf]
  %v8847 = vld [vmem:[%s53 + $0x14] sm:$0xf]
  %v8848 = vld [vmem:[%s53 + $0x18] sm:$0xf]
  %v8849 = vld [vmem:[%s53 + $0x1c] sm:$0xf]
  %v8850 = vld [vmem:[%s53 + $0x20] sm:$0xf]
  %v8851 = vld [vmem:[%s53 + $0x24] sm:$0xf]
  %v8852 = vld [vmem:[%s53 + $0x28] sm:$0xf]
  %v8853 = vld [vmem:[%s53 + $0x2c] sm:$0xf]
  %v8854 = vld [vmem:[%s53 + $0x30] sm:$0xf]
  %v8855 = vld [vmem:[%s53 + $0x34] sm:$0xf]
  %v8856 = vld [vmem:[%s53 + $0x38] sm:$0xf]
  %v8857 = vld [vmem:[%s53 + $0x3c] sm:$0xf]
  %v8858 = vld [vmem:[%s53 + $0x40] sm:$0xf]
  %v8859 = vld [vmem:[%s53 + $0x44] sm:$0xf]
  %v8860 = vld [vmem:[%s53 + $0x48] sm:$0xf]
  %v8880 = vunpack.c.l.b16 %v8842
  %v8881 = vunpack.c.l.b16 %v8843
  %v8882 = vunpack.c.l.b16 %v8844
  %v8883 = vunpack.c.l.b16 %v8845
  %v8884 = vunpack.c.l.b16 %v8846
  %v8885 = vunpack.c.l.b16 %v8847
  %v8886 = vunpack.c.l.b16 %v8848
  %v8887 = vunpack.c.l.b16 %v8849
  %v8888 = vunpack.c.l.b16 %v8850
  %v8889 = vunpack.c.l.b16 %v8851
  %v8890 = vunpack.c.l.b16 %v8852
  %v8891 = vunpack.c.l.b16 %v8853
  %v8892 = vunpack.c.l.b16 %v8854
  %v8893 = vunpack.c.l.b16 %v8855
  %v8894 = vunpack.c.l.b16 %v8856
  %v8895 = vunpack.c.l.b16 %v8857
  %v8896 = vunpack.c.l.b16 %v8858
  %v8897 = vunpack.c.l.b16 %v8859
  %v8898 = vunpack.c.l.b16 %v8860
  %v8899 = vpack.c.b16 %v8881, %v8880
  %v8900 = vpack.c.b16 %v8883, %v8882
  %v8901 = vpack.c.b16 %v8885, %v8884
  %v8902 = vpack.c.b16 %v8887, %v8886
  %v8903 = vpack.c.b16 %v8889, %v8888
  %v8904 = vpack.c.b16 %v8891, %v8890
  %v8905 = vpack.c.b16 %v8893, %v8892
  %v8906 = vpack.c.b16 %v8895, %v8894
  %v8907 = vpack.c.b16 %v8897, %v8896
  %v8908 = vpack.c.b16 %v8898, %v8898
  %v8919 = vsel %vm8345, %v8837, 0
  %v8922 = vsel %vm8345, %v8839, 0
  %v8925 = vsel %vm8345, %v8841, 0
  %v8928 = vsel %vm207, %v8908, 0
  %8930 = vmatprep.subr.bf16.mxu0 0
  %8931 = vmatpush1.bf16.msra.mxu0 %v8899
  %8932 = vmatprep.subr.bf16.mxu0 0
  %8933 = vmatpush1.bf16.msra.mxu0 %v8900
  %8934 = vmatprep.subr.bf16.mxu0 0
  %8935 = vmatpush1.bf16.msra.mxu0 %v8901
  %8936 = vmatprep.subr.bf16.mxu0 0
  %8937 = vmatpush1.bf16.msra.mxu0 %v8902
  %8938 = vmatprep.subr.bf16.mxu0 0
  %8939 = vmatpush1.bf16.msra.mxu0 %v8903
  %8940 = vmatprep.subr.bf16.mxu0 0
  %8941 = vmatpush1.bf16.msra.mxu0 %v8904
  %8942 = vmatprep.subr.bf16.mxu0 0
  %8943 = vmatpush1.bf16.msra.mxu0 %v8905
  %8944 = vmatprep.subr.bf16.mxu0 0
  %8945 = vmatpush1.bf16.msra.mxu0 %v8906
  %8946 = vmatprep.subr.bf16.mxu0 0
  %8947 = vmatpush1.bf16.msra.mxu0 %v8907
  %8948 = vmatprep.subr.bf16.mxu0 0
  %8949 = vmatpush1.bf16.msra.mxu0 %v8928
  %8950 = vmatprep.subr.bf16.mxu0 0
  %8951 = vmatpush1.bf16.msra.mxu0 0
  %8952 = vmatprep.subr.bf16.mxu0 0
  %8953 = vmatpush1.bf16.msra.mxu0 0
  %8954 = vmatprep.subr.bf16.mxu0 0
  %8955 = vmatpush1.bf16.msra.mxu0 0
  %8956 = vmatprep.subr.bf16.mxu0 0
  %8957 = vmatpush1.bf16.msra.mxu0 0
  %8958 = vmatprep.subr.bf16.mxu0 0
  %8959 = vmatpush1.bf16.msra.mxu0 0
  %8960 = vmatprep.subr.bf16.mxu0 0
  %8961 = vmatpush1.bf16.msra.mxu0 0
  %8962 = vmatprep.mubr.bf16.mxu0 %v8919
  %8963 = vmatmul.mubr.bf16.gmra.mrb[0].mxu0 %v8836
  %v8964 = vpop.f32.mrb[0].mxu0
  %v8965 = vadd.f32 0.0, %v8964
  %v8966 = vpop.f32.mrb[0].mxu0
  %v8967 = vpop.f32.mrb[0].mxu0
  %v8968 = vadd.f32 0.0, %v8967
  %v8969 = vpop.f32.mrb[0].mxu0
  %8970 = vmatprep.mubr.bf16.mxu0 %v8922
  %8971 = vmatmul.mubr.bf16.gmra.mrb[0].mxu0 %v8838
  %v8972 = vpop.f32.mrb[0].mxu0
  %v8973 = vadd.f32 0.0, %v8972
  %v8974 = vpop.f32.mrb[0].mxu0
  %v8975 = vpop.f32.mrb[0].mxu0
  %v8976 = vadd.f32 0.0, %v8975
  %v8977 = vpop.f32.mrb[0].mxu0
  %8978 = vmatprep.mubr.bf16.mxu0 %v8925
  %8979 = vmatmul.mubr.bf16.gmra.mrb[0].mxu0 %v8840
  %v8980 = vpop.f32.mrb[0].mxu0
  %v8981 = vadd.f32 0.0, %v8980
  %v8982 = vpop.f32.mrb[0].mxu0
  %v8983 = vpop.f32.mrb[0].mxu0
  %v8984 = vpop.f32.mrb[0].mxu0
  %8985 = vdwg.mxu0
  %v8986 = vld [vmem:[%s55] sm:$0xff]
  %v8987 = vld [vmem:[%s55 + $0x8] sm:$0xff]
  %v8988 = vld [vmem:[%s55 + $0x10] sm:$0xff]
  %v8989 = vld [vmem:[%s55 + $0x18] sm:$0xff]
  %v8990 = vld [vmem:[%s55 + $0x20] sm:$0xff]
  %v8991 = vld [vmem:[%s55 + $0x28] sm:$0xff]
  %v8992 = vld [vmem:[%s55 + $0x30] sm:$0xff]
  %v8993 = vld [vmem:[%s55 + $0x38] sm:$0xff]
  %v8994 = vld [vmem:[%s55 + $0x40] sm:$0xff]
  %v8995 = vld [vmem:[%s55 + $0x48] sm:$0x3f]
  %s8996 = scalar_lea.vmem %s53, 76
  %v8997 = vld [vmem:[%s8996] sm:$0xf]
  %v8998 = vld [vmem:[%s8996 + $0x4] sm:$0xf]
  %v8999 = vld [vmem:[%s8996 + $0x8] sm:$0xf]
  %v9000 = vld [vmem:[%s8996 + $0xc] sm:$0xf]
  %v9001 = vld [vmem:[%s8996 + $0x10] sm:$0xf]
  %v9002 = vld [vmem:[%s8996 + $0x14] sm:$0xf]
  %v9003 = vld [vmem:[%s8996 + $0x18] sm:$0xf]
  %v9004 = vld [vmem:[%s8996 + $0x1c] sm:$0xf]
  %v9005 = vld [vmem:[%s8996 + $0x20] sm:$0xf]
  %v9006 = vld [vmem:[%s8996 + $0x24] sm:$0xf]
  %v9007 = vld [vmem:[%s8996 + $0x28] sm:$0xf]
  %v9008 = vld [vmem:[%s8996 + $0x2c] sm:$0xf]
  %v9009 = vld [vmem:[%s8996 + $0x30] sm:$0xf]
  %v9010 = vld [vmem:[%s8996 + $0x34] sm:$0xf]
  %v9011 = vld [vmem:[%s8996 + $0x38] sm:$0xf]
  %v9012 = vld [vmem:[%s8996 + $0x3c] sm:$0xf]
  %v9013 = vld [vmem:[%s8996 + $0x40] sm:$0xf]
  %v9014 = vld [vmem:[%s8996 + $0x44] sm:$0xf]
  %v9015 = vld [vmem:[%s8996 + $0x48] sm:$0xf]
  %v9035 = vunpack.c.l.b16 %v8997
  %v9036 = vunpack.c.l.b16 %v8998
  %v9037 = vunpack.c.l.b16 %v8999
  %v9038 = vunpack.c.l.b16 %v9000
  %v9039 = vunpack.c.l.b16 %v9001
  %v9040 = vunpack.c.l.b16 %v9002
  %v9041 = vunpack.c.l.b16 %v9003
  %v9042 = vunpack.c.l.b16 %v9004
  %v9043 = vunpack.c.l.b16 %v9005
  %v9044 = vunpack.c.l.b16 %v9006
  %v9045 = vunpack.c.l.b16 %v9007
  %v9046 = vunpack.c.l.b16 %v9008
  %v9047 = vunpack.c.l.b16 %v9009
  %v9048 = vunpack.c.l.b16 %v9010
  %v9049 = vunpack.c.l.b16 %v9011
  %v9050 = vunpack.c.l.b16 %v9012
  %v9051 = vunpack.c.l.b16 %v9013
  %v9052 = vunpack.c.l.b16 %v9014
  %v9053 = vunpack.c.l.b16 %v9015
  %v9054 = vpack.c.b16 %v9036, %v9035
  %v9055 = vpack.c.b16 %v9038, %v9037
  %v9056 = vpack.c.b16 %v9040, %v9039
  %v9057 = vpack.c.b16 %v9042, %v9041
  %v9058 = vpack.c.b16 %v9044, %v9043
  %v9059 = vpack.c.b16 %v9046, %v9045
  %v9060 = vpack.c.b16 %v9048, %v9047
  %v9061 = vpack.c.b16 %v9050, %v9049
  %v9062 = vpack.c.b16 %v9052, %v9051
  %v9063 = vpack.c.b16 %v9053, %v9053
  %v9074 = vsel %vm207, %v9063, 0
  %9076 = vmatprep.subr.bf16.mxu0 0
  %9077 = vmatpush1.bf16.msra.mxu0 %v9054
  %9078 = vmatprep.subr.bf16.mxu0 0
  %9079 = vmatpush1.bf16.msra.mxu0 %v9055
  %9080 = vmatprep.subr.bf16.mxu0 0
  %9081 = vmatpush1.bf16.msra.mxu0 %v9056
  %9082 = vmatprep.subr.bf16.mxu0 0
  %9083 = vmatpush1.bf16.msra.mxu0 %v9057
  %9084 = vmatprep.subr.bf16.mxu0 0
  %9085 = vmatpush1.bf16.msra.mxu0 %v9058
  %9086 = vmatprep.subr.bf16.mxu0 0
  %9087 = vmatpush1.bf16.msra.mxu0 %v9059
  %9088 = vmatprep.subr.bf16.mxu0 0
  %9089 = vmatpush1.bf16.msra.mxu0 %v9060
  %9090 = vmatprep.subr.bf16.mxu0 0
  %9091 = vmatpush1.bf16.msra.mxu0 %v9061
  %9092 = vmatprep.subr.bf16.mxu0 0
  %9093 = vmatpush1.bf16.msra.mxu0 %v9062
  %9094 = vmatprep.subr.bf16.mxu0 0
  %9095 = vmatpush1.bf16.msra.mxu0 %v9074
  %9096 = vmatprep.subr.bf16.mxu0 0
  %9097 = vmatpush1.bf16.msra.mxu0 0
  %9098 = vmatprep.subr.bf16.mxu0 0
  %9099 = vmatpush1.bf16.msra.mxu0 0
  %9100 = vmatprep.subr.bf16.mxu0 0
  %9101 = vmatpush1.bf16.msra.mxu0 0
  %9102 = vmatprep.subr.bf16.mxu0 0
  %9103 = vmatpush1.bf16.msra.mxu0 0
  %9104 = vmatprep.subr.bf16.mxu0 0
  %9105 = vmatpush1.bf16.msra.mxu0 0
  %9106 = vmatprep.subr.bf16.mxu0 0
  %9107 = vmatpush1.bf16.msra.mxu0 0
  %9108 = vmatprep.mubr.bf16.mxu0 %v8919
  %9109 = vmatmul.mubr.bf16.gmra.mrb[0].mxu0 %v8836
  %v9110 = vpop.f32.mrb[0].mxu0
  %v9111 = vadd.f32 0.0, %v9110
  %v9112 = vpop.f32.mrb[0].mxu0
  %v9113 = vpop.f32.mrb[0].mxu0
  %v9114 = vadd.f32 0.0, %v9113
  %v9115 = vpop.f32.mrb[0].mxu0
  %9116 = vmatprep.mubr.bf16.mxu0 %v8922
  %9117 = vmatmul.mubr.bf16.gmra.mrb[0].mxu0 %v8838
  %v9118 = vpop.f32.mrb[0].mxu0
  %v9119 = vadd.f32 0.0, %v9118
  %v9120 = vpop.f32.mrb[0].mxu0
  %v9121 = vpop.f32.mrb[0].mxu0
  %v9122 = vadd.f32 0.0, %v9121
  %v9123 = vpop.f32.mrb[0].mxu0
  %9124 = vmatprep.mubr.bf16.mxu0 %v8925
  %9125 = vmatmul.mubr.bf16.gmra.mrb[0].mxu0 %v8840
  %v9126 = vpop.f32.mrb[0].mxu0
  %v9127 = vadd.f32 0.0, %v9126
  %v9128 = vpop.f32.mrb[0].mxu0
  %v9129 = vpop.f32.mrb[0].mxu0
  %v9130 = vpop.f32.mrb[0].mxu0
  %9131 = vdwg.mxu0
  %s9132 = scalar_lea.vmem %s55, 80
  %v9133 = vld [vmem:[%s9132] sm:$0xff]
  %v9134 = vld [vmem:[%s9132 + $0x8] sm:$0xff]
  %v9135 = vld [vmem:[%s9132 + $0x10] sm:$0xff]
  %v9136 = vld [vmem:[%s9132 + $0x18] sm:$0xff]
  %v9137 = vld [vmem:[%s9132 + $0x20] sm:$0xff]
  %v9138 = vld [vmem:[%s9132 + $0x28] sm:$0xff]
  %v9139 = vld [vmem:[%s9132 + $0x30] sm:$0xff]
  %v9140 = vld [vmem:[%s9132 + $0x38] sm:$0xff]
  %v9141 = vld [vmem:[%s9132 + $0x40] sm:$0xff]
  %v9142 = vld [vmem:[%s9132 + $0x48] sm:$0x3f]
  %vm9143 = vcmask 310272
  %v9145 = vsel %vm9143, %v9133, 0
  %v9148 = vsel %vm9143, %v9134, 0
  %v9151 = vsel %vm9143, %v9135, 0
  %v9154 = vsel %vm9143, %v9136, 0
  %v9157 = vsel %vm9143, %v9137, 0
  %v9160 = vsel %vm9143, %v9138, 0
  %v9163 = vsel %vm9143, %v9139, 0
  %v9166 = vsel %vm9143, %v9140, 0
  %v9169 = vsel %vm9143, %v9141, 0
  %v9172 = vsel %vm9143, %v9142, 0
  %v9175 = vsel %vm8336, %v9127, 0
  %9177 = vmatprep.subr.mxu0 0.0
  %9178 = vmatpush1.msra.mxu0 %v9111
  %9179 = vmatprep.subr.mxu0 0.0
  %9180 = vmatpush1.msra.mxu0 %v9114
  %9181 = vmatprep.subr.mxu0 0.0
  %9182 = vmatpush1.msra.mxu0 %v9119
  %9183 = vmatprep.subr.mxu0 0.0
  %9184 = vmatpush1.msra.mxu0 %v9122
  %9185 = vmatprep.subr.mxu0 0.0
  %9186 = vmatpush1.msra.mxu0 %v9175
  %9187 = vmatprep.subr.mxu0 0.0
  %9188 = vmatpush1.msra.mxu0 0.0
  %9189 = vmatprep.subr.mxu0 0.0
  %9190 = vmatpush1.msra.mxu0 0.0
  %9191 = vmatprep.subr.mxu0 0.0
  %9192 = vmatpush1.msra.mxu0 0.0
  %9193 = vmatprep.subr.mxu0 0.0
  %9194 = vmatpush1.msra.mxu0 0.0
  %9195 = vmatprep.subr.mxu0 0.0
  %9196 = vmatpush1.msra.mxu0 0.0
  %9197 = vmatprep.subr.mxu0 0.0
  %9198 = vmatpush1.msra.mxu0 0.0
  %9199 = vmatprep.subr.mxu0 0.0
  %9200 = vmatpush1.msra.mxu0 0.0
  %9201 = vmatprep.subr.mxu0 0.0
  %9202 = vmatpush1.msra.mxu0 0.0
  %9203 = vmatprep.subr.mxu0 0.0
  %9204 = vmatpush1.msra.mxu0 0.0
  %9205 = vmatprep.subr.mxu0 0.0
  %9206 = vmatpush1.msra.mxu0 0.0
  %9207 = vmatprep.subr.mxu0 0.0
  %9208 = vmatpush1.msra.mxu0 0.0
  %9209 = vmatprep.subr.mxu0 0.0
  %9210 = vmatpush1.msra.mxu0 0.0
  %9211 = vmatprep.subr.mxu0 0.0
  %9212 = vmatpush1.msra.mxu0 0.0
  %9213 = vmatprep.subr.mxu0 0.0
  %9214 = vmatpush1.msra.mxu0 0.0
  %9215 = vmatprep.subr.mxu0 0.0
  %9216 = vmatpush1.msra.mxu0 0.0
  %9217 = vmatprep.subr.mxu0 0.0
  %9218 = vmatpush1.msra.mxu0 0.0
  %9219 = vmatprep.subr.mxu0 0.0
  %9220 = vmatpush1.msra.mxu0 0.0
  %9221 = vmatprep.subr.mxu0 0.0
  %9222 = vmatpush1.msra.mxu0 0.0
  %9223 = vmatprep.subr.mxu0 0.0
  %9224 = vmatpush1.msra.mxu0 0.0
  %9225 = vmatprep.subr.mxu0 0.0
  %9226 = vmatpush1.msra.mxu0 0.0
  %9227 = vmatprep.subr.mxu0 0.0
  %9228 = vmatpush1.msra.mxu0 0.0
  %9229 = vmatprep.subr.mxu0 0.0
  %9230 = vmatpush1.msra.mxu0 0.0
  %9231 = vmatprep.subr.mxu0 0.0
  %9232 = vmatpush1.msra.mxu0 0.0
  %9233 = vmatprep.subr.mxu0 0.0
  %9234 = vmatpush1.msra.mxu0 0.0
  %9235 = vmatprep.subr.mxu0 0.0
  %9236 = vmatpush1.msra.mxu0 0.0
  %9237 = vmatprep.subr.mxu0 0.0
  %9238 = vmatpush1.msra.mxu0 0.0
  %9239 = vmatprep.subr.mxu0 0.0
  %9240 = vmatpush1.msra.mxu0 0.0
  %9241 = vmatprep.mubr.f32.mxu0 0.0
  %9242 = vmatmul.mubr.f32.gmra.mrb[0].mxu0 %v9145
  %v9243 = vpop.f32.mrb[0].mxu0
  %v9244 = vadd.f32 0.0, %v9243
  %v9245 = vpop.f32.mrb[0].mxu0
  %9246 = vmatprep.mubr.f32.mxu0 0.0
  %9247 = vmatmul.mubr.f32.gmra.mrb[0].mxu0 %v9148
  %v9248 = vpop.f32.mrb[0].mxu0
  %v9249 = vadd.f32 0.0, %v9248
  %v9250 = vpop.f32.mrb[0].mxu0
  %9251 = vmatprep.mubr.f32.mxu0 0.0
  %9252 = vmatmul.mubr.f32.gmra.mrb[0].mxu0 %v9151
  %v9253 = vpop.f32.mrb[0].mxu0
  %v9254 = vadd.f32 0.0, %v9253
  %v9255 = vpop.f32.mrb[0].mxu0
  %9256 = vmatprep.mubr.f32.mxu0 0.0
  %9257 = vmatmul.mubr.f32.gmra.mrb[0].mxu0 %v9154
  %v9258 = vpop.f32.mrb[0].mxu0
  %v9259 = vadd.f32 0.0, %v9258
  %v9260 = vpop.f32.mrb[0].mxu0
  %9261 = vmatprep.mubr.f32.mxu0 0.0
  %9262 = vmatmul.mubr.f32.gmra.mrb[0].mxu0 %v9157
  %v9263 = vpop.f32.mrb[0].mxu0
  %v9264 = vadd.f32 0.0, %v9263
  %v9265 = vpop.f32.mrb[0].mxu0
  %9266 = vmatprep.mubr.f32.mxu0 0.0
  %9267 = vmatmul.mubr.f32.gmra.mrb[0].mxu0 %v9160
  %v9268 = vpop.f32.mrb[0].mxu0
  %v9269 = vadd.f32 0.0, %v9268
  %v9270 = vpop.f32.mrb[0].mxu0
  %9271 = vmatprep.mubr.f32.mxu0 0.0
  %9272 = vmatmul.mubr.f32.gmra.mrb[0].mxu0 %v9163
  %v9273 = vpop.f32.mrb[0].mxu0
  %v9274 = vadd.f32 0.0, %v9273
  %v9275 = vpop.f32.mrb[0].mxu0
  %9276 = vmatprep.mubr.f32.mxu0 0.0
  %9277 = vmatmul.mubr.f32.gmra.mrb[0].mxu0 %v9166
  %v9278 = vpop.f32.mrb[0].mxu0
  %v9279 = vadd.f32 0.0, %v9278
  %v9280 = vpop.f32.mrb[0].mxu0
  %9281 = vmatprep.mubr.f32.mxu0 0.0
  %9282 = vmatmul.mubr.f32.gmra.mrb[0].mxu0 %v9169
  %v9283 = vpop.f32.mrb[0].mxu0
  %v9284 = vadd.f32 0.0, %v9283
  %v9285 = vpop.f32.mrb[0].mxu0
  %9286 = vmatprep.mubr.f32.mxu0 0.0
  %9287 = vmatmul.mubr.f32.gmra.mrb[0].mxu0 %v9172
  %v9288 = vpop.f32.mrb[0].mxu0
  %v9289 = vadd.f32 0.0, %v9288
  %v9290 = vpop.f32.mrb[0].mxu0
  %9291 = vdwg.mxu0
  %v9293 = vsel %vm9143, %v8986, 0
  %v9296 = vsel %vm9143, %v8987, 0
  %v9299 = vsel %vm9143, %v8988, 0
  %v9302 = vsel %vm9143, %v8989, 0
  %v9305 = vsel %vm9143, %v8990, 0
  %v9308 = vsel %vm9143, %v8991, 0
  %v9311 = vsel %vm9143, %v8992, 0
  %v9314 = vsel %vm9143, %v8993, 0
  %v9317 = vsel %vm9143, %v8994, 0
  %v9320 = vsel %vm9143, %v8995, 0
  %v9323 = vsel %vm8336, %v8981, 0
  %9325 = vmatprep.subr.mxu0 0.0
  %9326 = vmatpush1.msra.mxu0 %v8965
  %9327 = vmatprep.subr.mxu0 0.0
  %9328 = vmatpush1.msra.mxu0 %v8968
  %9329 = vmatprep.subr.mxu0 0.0
  %9330 = vmatpush1.msra.mxu0 %v8973
  %9331 = vmatprep.subr.mxu0 0.0
  %9332 = vmatpush1.msra.mxu0 %v8976
  %9333 = vmatprep.subr.mxu0 0.0
  %9334 = vmatpush1.msra.mxu0 %v9323
  %9335 = vmatprep.subr.mxu0 0.0
  %9336 = vmatpush1.msra.mxu0 0.0
  %9337 = vmatprep.subr.mxu0 0.0
  %9338 = vmatpush1.msra.mxu0 0.0
  %9339 = vmatprep.subr.mxu0 0.0
  %9340 = vmatpush1.msra.mxu0 0.0
  %9341 = vmatprep.subr.mxu0 0.0
  %9342 = vmatpush1.msra.mxu0 0.0
  %9343 = vmatprep.subr.mxu0 0.0
  %9344 = vmatpush1.msra.mxu0 0.0
  %9345 = vmatprep.subr.mxu0 0.0
  %9346 = vmatpush1.msra.mxu0 0.0
  %9347 = vmatprep.subr.mxu0 0.0
  %9348 = vmatpush1.msra.mxu0 0.0
  %9349 = vmatprep.subr.mxu0 0.0
  %9350 = vmatpush1.msra.mxu0 0.0
  %9351 = vmatprep.subr.mxu0 0.0
  %9352 = vmatpush1.msra.mxu0 0.0
  %9353 = vmatprep.subr.mxu0 0.0
  %9354 = vmatpush1.msra.mxu0 0.0
  %9355 = vmatprep.subr.mxu0 0.0
  %9356 = vmatpush1.msra.mxu0 0.0
  %9357 = vmatprep.subr.mxu0 0.0
  %9358 = vmatpush1.msra.mxu0 0.0
  %9359 = vmatprep.subr.mxu0 0.0
  %9360 = vmatpush1.msra.mxu0 0.0
  %9361 = vmatprep.subr.mxu0 0.0
  %9362 = vmatpush1.msra.mxu0 0.0
  %9363 = vmatprep.subr.mxu0 0.0
  %9364 = vmatpush1.msra.mxu0 0.0
  %9365 = vmatprep.subr.mxu0 0.0
  %9366 = vmatpush1.msra.mxu0 0.0
  %9367 = vmatprep.subr.mxu0 0.0
  %9368 = vmatpush1.msra.mxu0 0.0
  %9369 = vmatprep.subr.mxu0 0.0
  %9370 = vmatpush1.msra.mxu0 0.0
  %9371 = vmatprep.subr.mxu0 0.0
  %9372 = vmatpush1.msra.mxu0 0.0
  %9373 = vmatprep.subr.mxu0 0.0
  %9374 = vmatpush1.msra.mxu0 0.0
  %9375 = vmatprep.subr.mxu0 0.0
  %9376 = vmatpush1.msra.mxu0 0.0
  %9377 = vmatprep.subr.mxu0 0.0
  %9378 = vmatpush1.msra.mxu0 0.0
  %9379 = vmatprep.subr.mxu0 0.0
  %9380 = vmatpush1.msra.mxu0 0.0
  %9381 = vmatprep.subr.mxu0 0.0
  %9382 = vmatpush1.msra.mxu0 0.0
  %9383 = vmatprep.subr.mxu0 0.0
  %9384 = vmatpush1.msra.mxu0 0.0
  %9385 = vmatprep.subr.mxu0 0.0
  %9386 = vmatpush1.msra.mxu0 0.0
  %9387 = vmatprep.subr.mxu0 0.0
  %9388 = vmatpush1.msra.mxu0 0.0
  %9389 = vmatprep.mubr.f32.mxu0 0.0
  %9390 = vmatmul.mubr.f32.gmra.mrb[0].mxu0 %v9293
  %v9391 = vpop.f32.mrb[0].mxu0
  %v9392 = vadd.f32 %v9244, %v9391
  %v9393 = vpop.f32.mrb[0].mxu0
  %9394 = vmatprep.mubr.f32.mxu0 0.0
  %9395 = vmatmul.mubr.f32.gmra.mrb[0].mxu0 %v9296
  %v9396 = vpop.f32.mrb[0].mxu0
  %v9397 = vadd.f32 %v9249, %v9396
  %v9398 = vpop.f32.mrb[0].mxu0
  %9399 = vmatprep.mubr.f32.mxu0 0.0
  %9400 = vmatmul.mubr.f32.gmra.mrb[0].mxu0 %v9299
  %v9401 = vpop.f32.mrb[0].mxu0
  %v9402 = vadd.f32 %v9254, %v9401
  %v9403 = vpop.f32.mrb[0].mxu0
  %9404 = vmatprep.mubr.f32.mxu0 0.0
  %9405 = vmatmul.mubr.f32.gmra.mrb[0].mxu0 %v9302
  %v9406 = vpop.f32.mrb[0].mxu0
  %v9407 = vadd.f32 %v9259, %v9406
  %v9408 = vpop.f32.mrb[0].mxu0
  %9409 = vmatprep.mubr.f32.mxu0 0.0
  %9410 = vmatmul.mubr.f32.gmra.mrb[0].mxu0 %v9305
  %v9411 = vpop.f32.mrb[0].mxu0
  %v9412 = vadd.f32 %v9264, %v9411
  %v9413 = vpop.f32.mrb[0].mxu0
  %9414 = vmatprep.mubr.f32.mxu0 0.0
  %9415 = vmatmul.mubr.f32.gmra.mrb[0].mxu0 %v9308
  %v9416 = vpop.f32.mrb[0].mxu0
  %v9417 = vadd.f32 %v9269, %v9416
  %v9418 = vpop.f32.mrb[0].mxu0
  %9419 = vmatprep.mubr.f32.mxu0 0.0
  %9420 = vmatmul.mubr.f32.gmra.mrb[0].mxu0 %v9311
  %v9421 = vpop.f32.mrb[0].mxu0
  %v9422 = vadd.f32 %v9274, %v9421
  %v9423 = vpop.f32.mrb[0].mxu0
  %9424 = vmatprep.mubr.f32.mxu0 0.0
  %9425 = vmatmul.mubr.f32.gmra.mrb[0].mxu0 %v9314
  %v9426 = vpop.f32.mrb[0].mxu0
  %v9427 = vadd.f32 %v9279, %v9426
  %v9428 = vpop.f32.mrb[0].mxu0
  %9429 = vmatprep.mubr.f32.mxu0 0.0
  %9430 = vmatmul.mubr.f32.gmra.mrb[0].mxu0 %v9317
  %v9431 = vpop.f32.mrb[0].mxu0
  %v9432 = vadd.f32 %v9284, %v9431
  %v9433 = vpop.f32.mrb[0].mxu0
  %9434 = vmatprep.mubr.f32.mxu0 0.0
  %9435 = vmatmul.mubr.f32.gmra.mrb[0].mxu0 %v9320
  %v9436 = vpop.f32.mrb[0].mxu0
  %v9437 = vadd.f32 %v9289, %v9436
  %v9438 = vpop.f32.mrb[0].mxu0
  %9439 = vdwg.mxu0
  %s9440 = scalar_lea.vmem %s53, 152
  %v9441 = vld [vmem:[%s9440] sm:$0xf]
  %v9442 = vld [vmem:[%s9440 + $0x4] sm:$0xf]
  %v9443 = vld [vmem:[%s9440 + $0x8] sm:$0xf]
  %v9444 = vld [vmem:[%s9440 + $0xc] sm:$0xf]
  %v9445 = vld [vmem:[%s9440 + $0x10] sm:$0xf]
  %v9446 = vld [vmem:[%s9440 + $0x14] sm:$0xf]
  %v9447 = vld [vmem:[%s9440 + $0x18] sm:$0xf]
  %v9448 = vld [vmem:[%s9440 + $0x1c] sm:$0xf]
  %v9449 = vld [vmem:[%s9440 + $0x20] sm:$0xf]
  %v9450 = vld [vmem:[%s9440 + $0x24] sm:$0xf]
  %v9451 = vld [vmem:[%s9440 + $0x28] sm:$0xf]
  %v9452 = vld [vmem:[%s9440 + $0x2c] sm:$0xf]
  %v9453 = vld [vmem:[%s9440 + $0x30] sm:$0xf]
  %v9454 = vld [vmem:[%s9440 + $0x34] sm:$0xf]
  %v9455 = vld [vmem:[%s9440 + $0x38] sm:$0xf]
  %v9456 = vld [vmem:[%s9440 + $0x3c] sm:$0xf]
  %v9457 = vld [vmem:[%s9440 + $0x40] sm:$0xf]
  %v9458 = vld [vmem:[%s9440 + $0x44] sm:$0xf]
  %v9459 = vld [vmem:[%s9440 + $0x48] sm:$0xf]
  %v9479 = vunpack.c.l.b16 %v9441
  %v9480 = vunpack.c.l.b16 %v9442
  %v9481 = vunpack.c.l.b16 %v9443
  %v9482 = vunpack.c.l.b16 %v9444
  %v9483 = vunpack.c.l.b16 %v9445
  %v9484 = vunpack.c.l.b16 %v9446
  %v9485 = vunpack.c.l.b16 %v9447
  %v9486 = vunpack.c.l.b16 %v9448
  %v9487 = vunpack.c.l.b16 %v9449
  %v9488 = vunpack.c.l.b16 %v9450
  %v9489 = vunpack.c.l.b16 %v9451
  %v9490 = vunpack.c.l.b16 %v9452
  %v9491 = vunpack.c.l.b16 %v9453
  %v9492 = vunpack.c.l.b16 %v9454
  %v9493 = vunpack.c.l.b16 %v9455
  %v9494 = vunpack.c.l.b16 %v9456
  %v9495 = vunpack.c.l.b16 %v9457
  %v9496 = vunpack.c.l.b16 %v9458
  %v9497 = vunpack.c.l.b16 %v9459
  %v9498 = vpack.c.b16 %v9480, %v9479
  %v9499 = vpack.c.b16 %v9482, %v9481
  %v9500 = vpack.c.b16 %v9484, %v9483
  %v9501 = vpack.c.b16 %v9486, %v9485
  %v9502 = vpack.c.b16 %v9488, %v9487
  %v9503 = vpack.c.b16 %v9490, %v9489
  %v9504 = vpack.c.b16 %v9492, %v9491
  %v9505 = vpack.c.b16 %v9494, %v9493
  %v9506 = vpack.c.b16 %v9496, %v9495
  %v9507 = vpack.c.b16 %v9497, %v9497
  %v9518 = vsel %vm207, %v9507, 0
  %9520 = vmatprep.subr.bf16.mxu0 0
  %9521 = vmatpush1.bf16.msra.mxu0 %v9498
  %9522 = vmatprep.subr.bf16.mxu0 0
  %9523 = vmatpush1.bf16.msra.mxu0 %v9499
  %9524 = vmatprep.subr.bf16.mxu0 0
  %9525 = vmatpush1.bf16.msra.mxu0 %v9500
  %9526 = vmatprep.subr.bf16.mxu0 0
  %9527 = vmatpush1.bf16.msra.mxu0 %v9501
  %9528 = vmatprep.subr.bf16.mxu0 0
  %9529 = vmatpush1.bf16.msra.mxu0 %v9502
  %9530 = vmatprep.subr.bf16.mxu0 0
  %9531 = vmatpush1.bf16.msra.mxu0 %v9503
  %9532 = vmatprep.subr.bf16.mxu0 0
  %9533 = vmatpush1.bf16.msra.mxu0 %v9504
  %9534 = vmatprep.subr.bf16.mxu0 0
  %9535 = vmatpush1.bf16.msra.mxu0 %v9505
  %9536 = vmatprep.subr.bf16.mxu0 0
  %9537 = vmatpush1.bf16.msra.mxu0 %v9506
  %9538 = vmatprep.subr.bf16.mxu0 0
  %9539 = vmatpush1.bf16.msra.mxu0 %v9518
  %9540 = vmatprep.subr.bf16.mxu0 0
  %9541 = vmatpush1.bf16.msra.mxu0 0
  %9542 = vmatprep.subr.bf16.mxu0 0
  %9543 = vmatpush1.bf16.msra.mxu0 0
  %9544 = vmatprep.subr.bf16.mxu0 0
  %9545 = vmatpush1.bf16.msra.mxu0 0
  %9546 = vmatprep.subr.bf16.mxu0 0
  %9547 = vmatpush1.bf16.msra.mxu0 0
  %9548 = vmatprep.subr.bf16.mxu0 0
  %9549 = vmatpush1.bf16.msra.mxu0 0
  %9550 = vmatprep.subr.bf16.mxu0 0
  %9551 = vmatpush1.bf16.msra.mxu0 0
  %9552 = vmatprep.mubr.bf16.mxu0 %v8919
  %9553 = vmatmul.mubr.bf16.gmra.mrb[0].mxu0 %v8836
  %v9554 = vpop.f32.mrb[0].mxu0
  %v9555 = vadd.f32 0.0, %v9554
  %v9556 = vpop.f32.mrb[0].mxu0
  %v9557 = vpop.f32.mrb[0].mxu0
  %v9558 = vadd.f32 0.0, %v9557
  %v9559 = vpop.f32.mrb[0].mxu0
  %9560 = vmatprep.mubr.bf16.mxu0 %v8922
  %9561 = vmatmul.mubr.bf16.gmra.mrb[0].mxu0 %v8838
  %v9562 = vpop.f32.mrb[0].mxu0
  %v9563 = vadd.f32 0.0, %v9562
  %v9564 = vpop.f32.mrb[0].mxu0
  %v9565 = vpop.f32.mrb[0].mxu0
  %v9566 = vadd.f32 0.0, %v9565
  %v9567 = vpop.f32.mrb[0].mxu0
  %9568 = vmatprep.mubr.bf16.mxu0 %v8925
  %9569 = vmatmul.mubr.bf16.gmra.mrb[0].mxu0 %v8840
  %v9570 = vpop.f32.mrb[0].mxu0
  %v9571 = vadd.f32 0.0, %v9570
  %v9572 = vpop.f32.mrb[0].mxu0
  %v9573 = vpop.f32.mrb[0].mxu0
  %v9574 = vpop.f32.mrb[0].mxu0
  %9575 = vdwg.mxu0
  %s9576 = scalar_lea.vmem %s55, 160
  %v9577 = vld [vmem:[%s9576] sm:$0xff]
  %v9578 = vld [vmem:[%s9576 + $0x8] sm:$0xff]
  %v9579 = vld [vmem:[%s9576 + $0x10] sm:$0xff]
  %v9580 = vld [vmem:[%s9576 + $0x18] sm:$0xff]
  %v9581 = vld [vmem:[%s9576 + $0x20] sm:$0xff]
  %v9582 = vld [vmem:[%s9576 + $0x28] sm:$0xff]
  %v9583 = vld [vmem:[%s9576 + $0x30] sm:$0xff]
  %v9584 = vld [vmem:[%s9576 + $0x38] sm:$0xff]
  %v9585 = vld [vmem:[%s9576 + $0x40] sm:$0xff]
  %v9586 = vld [vmem:[%s9576 + $0x48] sm:$0x3f]
  %v9588 = vsel %vm9143, %v9577, 0
  %v9591 = vsel %vm9143, %v9578, 0
  %v9594 = vsel %vm9143, %v9579, 0
  %v9597 = vsel %vm9143, %v9580, 0
  %v9600 = vsel %vm9143, %v9581, 0
  %v9603 = vsel %vm9143, %v9582, 0
  %v9606 = vsel %vm9143, %v9583, 0
  %v9609 = vsel %vm9143, %v9584, 0
  %v9612 = vsel %vm9143, %v9585, 0
  %v9615 = vsel %vm9143, %v9586, 0
  %v9618 = vsel %vm8336, %v9571, 0
  %9620 = vmatprep.subr.mxu0 0.0
  %9621 = vmatpush1.msra.mxu0 %v9555
  %9622 = vmatprep.subr.mxu0 0.0
  %9623 = vmatpush1.msra.mxu0 %v9558
  %9624 = vmatprep.subr.mxu0 0.0
  %9625 = vmatpush1.msra.mxu0 %v9563
  %9626 = vmatprep.subr.mxu0 0.0
  %9627 = vmatpush1.msra.mxu0 %v9566
  %9628 = vmatprep.subr.mxu0 0.0
  %9629 = vmatpush1.msra.mxu0 %v9618
  %9630 = vmatprep.subr.mxu0 0.0
  %9631 = vmatpush1.msra.mxu0 0.0
  %9632 = vmatprep.subr.mxu0 0.0
  %9633 = vmatpush1.msra.mxu0 0.0
  %9634 = vmatprep.subr.mxu0 0.0
  %9635 = vmatpush1.msra.mxu0 0.0
  %9636 = vmatprep.subr.mxu0 0.0
  %9637 = vmatpush1.msra.mxu0 0.0
  %9638 = vmatprep.subr.mxu0 0.0
  %9639 = vmatpush1.msra.mxu0 0.0
  %9640 = vmatprep.subr.mxu0 0.0
  %9641 = vmatpush1.msra.mxu0 0.0
  %9642 = vmatprep.subr.mxu0 0.0
  %9643 = vmatpush1.msra.mxu0 0.0
  %9644 = vmatprep.subr.mxu0 0.0
  %9645 = vmatpush1.msra.mxu0 0.0
  %9646 = vmatprep.subr.mxu0 0.0
  %9647 = vmatpush1.msra.mxu0 0.0
  %9648 = vmatprep.subr.mxu0 0.0
  %9649 = vmatpush1.msra.mxu0 0.0
  %9650 = vmatprep.subr.mxu0 0.0
  %9651 = vmatpush1.msra.mxu0 0.0
  %9652 = vmatprep.subr.mxu0 0.0
  %9653 = vmatpush1.msra.mxu0 0.0
  %9654 = vmatprep.subr.mxu0 0.0
  %9655 = vmatpush1.msra.mxu0 0.0
  %9656 = vmatprep.subr.mxu0 0.0
  %9657 = vmatpush1.msra.mxu0 0.0
  %9658 = vmatprep.subr.mxu0 0.0
  %9659 = vmatpush1.msra.mxu0 0.0
  %9660 = vmatprep.subr.mxu0 0.0
  %9661 = vmatpush1.msra.mxu0 0.0
  %9662 = vmatprep.subr.mxu0 0.0
  %9663 = vmatpush1.msra.mxu0 0.0
  %9664 = vmatprep.subr.mxu0 0.0
  %9665 = vmatpush1.msra.mxu0 0.0
  %9666 = vmatprep.subr.mxu0 0.0
  %9667 = vmatpush1.msra.mxu0 0.0
  %9668 = vmatprep.subr.mxu0 0.0
  %9669 = vmatpush1.msra.mxu0 0.0
  %9670 = vmatprep.subr.mxu0 0.0
  %9671 = vmatpush1.msra.mxu0 0.0
  %9672 = vmatprep.subr.mxu0 0.0
  %9673 = vmatpush1.msra.mxu0 0.0
  %9674 = vmatprep.subr.mxu0 0.0
  %9675 = vmatpush1.msra.mxu0 0.0
  %9676 = vmatprep.subr.mxu0 0.0
  %9677 = vmatpush1.msra.mxu0 0.0
  %9678 = vmatprep.subr.mxu0 0.0
  %9679 = vmatpush1.msra.mxu0 0.0
  %9680 = vmatprep.subr.mxu0 0.0
  %9681 = vmatpush1.msra.mxu0 0.0
  %9682 = vmatprep.subr.mxu0 0.0
  %9683 = vmatpush1.msra.mxu0 0.0
  %9684 = vmatprep.mubr.f32.mxu0 0.0
  %9685 = vmatmul.mubr.f32.gmra.mrb[0].mxu0 %v9588
  %v9686 = vpop.f32.mrb[0].mxu0
  %v9687 = vadd.f32 0.0, %v9686
  %v9688 = vpop.f32.mrb[0].mxu0
  %9689 = vmatprep.mubr.f32.mxu0 0.0
  %9690 = vmatmul.mubr.f32.gmra.mrb[0].mxu0 %v9591
  %v9691 = vpop.f32.mrb[0].mxu0
  %v9692 = vadd.f32 0.0, %v9691
  %v9693 = vpop.f32.mrb[0].mxu0
  %9694 = vmatprep.mubr.f32.mxu0 0.0
  %9695 = vmatmul.mubr.f32.gmra.mrb[0].mxu0 %v9594
  %v9696 = vpop.f32.mrb[0].mxu0
  %v9697 = vadd.f32 0.0, %v9696
  %v9698 = vpop.f32.mrb[0].mxu0
  %9699 = vmatprep.mubr.f32.mxu0 0.0
  %9700 = vmatmul.mubr.f32.gmra.mrb[0].mxu0 %v9597
  %v9701 = vpop.f32.mrb[0].mxu0
  %v9702 = vadd.f32 0.0, %v9701
  %v9703 = vpop.f32.mrb[0].mxu0
  %9704 = vmatprep.mubr.f32.mxu0 0.0
  %9705 = vmatmul.mubr.f32.gmra.mrb[0].mxu0 %v9600
  %v9706 = vpop.f32.mrb[0].mxu0
  %v9707 = vadd.f32 0.0, %v9706
  %v9708 = vpop.f32.mrb[0].mxu0
  %9709 = vmatprep.mubr.f32.mxu0 0.0
  %9710 = vmatmul.mubr.f32.gmra.mrb[0].mxu0 %v9603
  %v9711 = vpop.f32.mrb[0].mxu0
  %v9712 = vadd.f32 0.0, %v9711
  %v9713 = vpop.f32.mrb[0].mxu0
  %9714 = vmatprep.mubr.f32.mxu0 0.0
  %9715 = vmatmul.mubr.f32.gmra.mrb[0].mxu0 %v9606
  %v9716 = vpop.f32.mrb[0].mxu0
  %v9717 = vadd.f32 0.0, %v9716
  %v9718 = vpop.f32.mrb[0].mxu0
  %9719 = vmatprep.mubr.f32.mxu0 0.0
  %9720 = vmatmul.mubr.f32.gmra.mrb[0].mxu0 %v9609
  %v9721 = vpop.f32.mrb[0].mxu0
  %v9722 = vadd.f32 0.0, %v9721
  %v9723 = vpop.f32.mrb[0].mxu0
  %9724 = vmatprep.mubr.f32.mxu0 0.0
  %9725 = vmatmul.mubr.f32.gmra.mrb[0].mxu0 %v9612
  %v9726 = vpop.f32.mrb[0].mxu0
  %v9727 = vadd.f32 0.0, %v9726
  %v9728 = vpop.f32.mrb[0].mxu0
  %9729 = vmatprep.mubr.f32.mxu0 0.0
  %9730 = vmatmul.mubr.f32.gmra.mrb[0].mxu0 %v9615
  %v9731 = vpop.f32.mrb[0].mxu0
  %v9732 = vadd.f32 0.0, %v9731
  %v9733 = vpop.f32.mrb[0].mxu0
  %9734 = vdwg.mxu0
  %v9735 = vadd.f32 %v9392, %v9687
  %v9736 = vadd.f32 %v9397, %v9692
  %v9737 = vadd.f32 %v9402, %v9697
  %v9738 = vadd.f32 %v9407, %v9702
  %v9739 = vadd.f32 %v9412, %v9707
  %v9740 = vadd.f32 %v9417, %v9712
  %v9741 = vadd.f32 %v9422, %v9717
  %v9742 = vadd.f32 %v9427, %v9722
  %v9743 = vadd.f32 %v9432, %v9727
  %v9744 = vadd.f32 %v9437, %v9732
  %v9745 = vld [vmem:[%s57] sm:$0x7]
  %v9746 = vld [vmem:[%s59] sm:$0xff]
  %v9747 = vld [vmem:[%s59 + $0x8] sm:$0xff]
  %v9748 = vld [vmem:[%s59 + $0x10] sm:$0xff]
  %v9749 = vld [vmem:[%s59 + $0x18] sm:$0xff]
  %v9750 = vld [vmem:[%s59 + $0x20] sm:$0xff]
  %v9751 = vld [vmem:[%s59 + $0x28] sm:$0xff]
  %v9752 = vld [vmem:[%s59 + $0x30] sm:$0xff]
  %v9753 = vld [vmem:[%s59 + $0x38] sm:$0xff]
  %v9754 = vld [vmem:[%s59 + $0x40] sm:$0xff]
  %v9755 = vld [vmem:[%s59 + $0x48] sm:$0xff]
  %v9756 = vld [vmem:[%s59 + $0x50] sm:$0xff]
  %v9757 = vld [vmem:[%s59 + $0x58] sm:$0xff]
  %v9758 = vld [vmem:[%s59 + $0x60] sm:$0xff]
  %v9759 = vld [vmem:[%s59 + $0x68] sm:$0xff]
  %v9760 = vld [vmem:[%s59 + $0x70] sm:$0x1f]
  %v9761 = vld [vmem:[%s61] sm:$0x1]
  %v9762 = vld [vmem:[%s63] sm:$0x1]
  %v9763 = vld [vmem:[%s65] sm:$0x1]
  %vm9764 = vcmask 23552
  %v9766 = vsel %vm9764, %v9761, 0
  %vm9768 = vcmask 1042432
  %v9770 = vsel %vm9768, %v9745, 0
  %9772 = vmatprep.subr.mxu0 0.0
  %9773 = vmatpush1.msra.mxu0 %v9770
  %9774 = vmatprep.subr.mxu0 0.0
  %9775 = vmatpush1.msra.mxu0 0.0
  %9776 = vmatprep.subr.mxu0 0.0
  %9777 = vmatpush1.msra.mxu0 0.0
  %9778 = vmatprep.subr.mxu0 0.0
  %9779 = vmatpush1.msra.mxu0 0.0
  %9780 = vmatprep.subr.mxu0 0.0
  %9781 = vmatpush1.msra.mxu0 0.0
  %9782 = vmatprep.subr.mxu0 0.0
  %9783 = vmatpush1.msra.mxu0 0.0
  %9784 = vmatprep.subr.mxu0 0.0
  %9785 = vmatpush1.msra.mxu0 0.0
  %9786 = vmatprep.subr.mxu0 0.0
  %9787 = vmatpush1.msra.mxu0 0.0
  %9788 = vmatprep.subr.mxu0 0.0
  %9789 = vmatpush1.msra.mxu0 0.0
  %9790 = vmatprep.subr.mxu0 0.0
  %9791 = vmatpush1.msra.mxu0 0.0
  %9792 = vmatprep.subr.mxu0 0.0
  %9793 = vmatpush1.msra.mxu0 0.0
  %9794 = vmatprep.subr.mxu0 0.0
  %9795 = vmatpush1.msra.mxu0 0.0
  %9796 = vmatprep.subr.mxu0 0.0
  %9797 = vmatpush1.msra.mxu0 0.0
  %9798 = vmatprep.subr.mxu0 0.0
  %9799 = vmatpush1.msra.mxu0 0.0
  %9800 = vmatprep.subr.mxu0 0.0
  %9801 = vmatpush1.msra.mxu0 0.0
  %9802 = vmatprep.subr.mxu0 0.0
  %9803 = vmatpush1.msra.mxu0 0.0
  %9804 = vmatprep.subr.mxu0 0.0
  %9805 = vmatpush1.msra.mxu0 0.0
  %9806 = vmatprep.subr.mxu0 0.0
  %9807 = vmatpush1.msra.mxu0 0.0
  %9808 = vmatprep.subr.mxu0 0.0
  %9809 = vmatpush1.msra.mxu0 0.0
  %9810 = vmatprep.subr.mxu0 0.0
  %9811 = vmatpush1.msra.mxu0 0.0
  %9812 = vmatprep.subr.mxu0 0.0
  %9813 = vmatpush1.msra.mxu0 0.0
  %9814 = vmatprep.subr.mxu0 0.0
  %9815 = vmatpush1.msra.mxu0 0.0
  %9816 = vmatprep.subr.mxu0 0.0
  %9817 = vmatpush1.msra.mxu0 0.0
  %9818 = vmatprep.subr.mxu0 0.0
  %9819 = vmatpush1.msra.mxu0 0.0
  %9820 = vmatprep.subr.mxu0 0.0
  %9821 = vmatpush1.msra.mxu0 0.0
  %9822 = vmatprep.subr.mxu0 0.0
  %9823 = vmatpush1.msra.mxu0 0.0
  %9824 = vmatprep.subr.mxu0 0.0
  %9825 = vmatpush1.msra.mxu0 0.0
  %9826 = vmatprep.subr.mxu0 0.0
  %9827 = vmatpush1.msra.mxu0 0.0
  %9828 = vmatprep.subr.mxu0 0.0
  %9829 = vmatpush1.msra.mxu0 0.0
  %9830 = vmatprep.subr.mxu0 0.0
  %9831 = vmatpush1.msra.mxu0 0.0
  %9832 = vmatprep.subr.mxu0 0.0
  %9833 = vmatpush1.msra.mxu0 0.0
  %9834 = vmatprep.subr.mxu0 0.0
  %9835 = vmatpush1.msra.mxu0 0.0
  %9836 = vmatprep.mubr.f32.mxu0 0.0
  %9837 = vmatmul.mubr.f32.gmra.mrb[0].mxu0 %v9766
  %v9838 = vpop.f32.mrb[0].mxu0
  %v9839 = vadd.f32 0.0, %v9838
  %v9840 = vpop.f32.mrb[0].mxu0
  %9841 = vdwg.mxu0
  %v9842 = vlaneseq
  %v9843 = vshrl.u32 %v9842, 7
  %v9844 = vsub.s32 0, %v9843
  %v9845 = vrot.slane %v9839, %v9844
  %v9846 = vadd.f32 %v9735, %v9845
  %v9847 = vadd.f32 %v9736, %v9845
  %v9848 = vadd.f32 %v9737, %v9845
  %v9849 = vadd.f32 %v9738, %v9845
  %v9850 = vadd.f32 %v9739, %v9845
  %v9851 = vadd.f32 %v9740, %v9845
  %v9852 = vadd.f32 %v9741, %v9845
  %v9853 = vadd.f32 %v9742, %v9845
  %v9854 = vadd.f32 %v9743, %v9845
  %v9855 = vadd.f32 %v9744, %v9845
  %vm9856 = vcmask 957440
  %v9857 = vsel %vm9856, %v9846, 0.0
  %v9858 = vsel %vm9856, %v9847, 0.0
  %v9859 = vadd.f32 %v9857, %v9858
  %v9860 = vsel %vm9856, %v9848, 0.0
  %v9861 = vadd.f32 %v9859, %v9860
  %v9862 = vsel %vm9856, %v9849, 0.0
  %v9863 = vadd.f32 %v9861, %v9862
  %v9864 = vsel %vm9856, %v9850, 0.0
  %v9865 = vadd.f32 %v9863, %v9864
  %v9866 = vsel %vm9856, %v9851, 0.0
  %v9867 = vadd.f32 %v9865, %v9866
  %v9868 = vsel %vm9856, %v9852, 0.0
  %v9869 = vadd.f32 %v9867, %v9868
  %v9870 = vsel %vm9856, %v9853, 0.0
  %v9871 = vadd.f32 %v9869, %v9870
  %v9872 = vsel %vm9856, %v9854, 0.0
  %v9873 = vadd.f32 %v9871, %v9872
  %vm9874 = vcmask 955392
  %v9875 = vsel %vm9874, %v9855, 0.0
  %v9876 = vadd.f32 %v9873, %v9875
  %v9877 = vrot.slane %v9876, 4
  %v9878 = vadd.f32 %v9876, %v9877
  %v9879 = vrot.slane %v9878, 2
  %v9880 = vadd.f32 %v9878, %v9879
  %v9881 = vrot.slane %v9880, 1
  %v9882 = vadd.f32 %v9880, %v9881
  %v9884 = vsel %vm9856, %v9882, 0
  %vm9886 = vcmask 1044480
  %v9888 = vsel %vm9886, %v9760, 0
  %9890 = vmatprep.subr.mxu0 0.0
  %9891 = vmatpush1.msra.mxu0 %v9746
  %9892 = vmatprep.subr.mxu0 0.0
  %9893 = vmatpush1.msra.mxu0 %v9747
  %9894 = vmatprep.subr.mxu0 0.0
  %9895 = vmatpush1.msra.mxu0 %v9748
  %9896 = vmatprep.subr.mxu0 0.0
  %9897 = vmatpush1.msra.mxu0 %v9749
  %9898 = vmatprep.subr.mxu0 0.0
  %9899 = vmatpush1.msra.mxu0 %v9750
  %9900 = vmatprep.subr.mxu0 0.0
  %9901 = vmatpush1.msra.mxu0 %v9751
  %9902 = vmatprep.subr.mxu0 0.0
  %9903 = vmatpush1.msra.mxu0 %v9752
  %9904 = vmatprep.subr.mxu0 0.0
  %9905 = vmatpush1.msra.mxu0 %v9753
  %9906 = vmatprep.subr.mxu0 0.0
  %9907 = vmatpush1.msra.mxu0 %v9754
  %9908 = vmatprep.subr.mxu0 0.0
  %9909 = vmatpush1.msra.mxu0 %v9755
  %9910 = vmatprep.subr.mxu0 0.0
  %9911 = vmatpush1.msra.mxu0 %v9756
  %9912 = vmatprep.subr.mxu0 0.0
  %9913 = vmatpush1.msra.mxu0 %v9757
  %9914 = vmatprep.subr.mxu0 0.0
  %9915 = vmatpush1.msra.mxu0 %v9758
  %9916 = vmatprep.subr.mxu0 0.0
  %9917 = vmatpush1.msra.mxu0 %v9759
  %9918 = vmatprep.subr.mxu0 0.0
  %9919 = vmatpush1.msra.mxu0 %v9888
  %9920 = vmatprep.subr.mxu0 0.0
  %9921 = vmatpush1.msra.mxu0 0.0
  %9922 = vmatprep.subr.mxu0 0.0
  %9923 = vmatpush1.msra.mxu0 0.0
  %9924 = vmatprep.subr.mxu0 0.0
  %9925 = vmatpush1.msra.mxu0 0.0
  %9926 = vmatprep.subr.mxu0 0.0
  %9927 = vmatpush1.msra.mxu0 0.0
  %9928 = vmatprep.subr.mxu0 0.0
  %9929 = vmatpush1.msra.mxu0 0.0
  %9930 = vmatprep.subr.mxu0 0.0
  %9931 = vmatpush1.msra.mxu0 0.0
  %9932 = vmatprep.subr.mxu0 0.0
  %9933 = vmatpush1.msra.mxu0 0.0
  %9934 = vmatprep.subr.mxu0 0.0
  %9935 = vmatpush1.msra.mxu0 0.0
  %9936 = vmatprep.subr.mxu0 0.0
  %9937 = vmatpush1.msra.mxu0 0.0
  %9938 = vmatprep.subr.mxu0 0.0
  %9939 = vmatpush1.msra.mxu0 0.0
  %9940 = vmatprep.subr.mxu0 0.0
  %9941 = vmatpush1.msra.mxu0 0.0
  %9942 = vmatprep.subr.mxu0 0.0
  %9943 = vmatpush1.msra.mxu0 0.0
  %9944 = vmatprep.subr.mxu0 0.0
  %9945 = vmatpush1.msra.mxu0 0.0
  %9946 = vmatprep.subr.mxu0 0.0
  %9947 = vmatpush1.msra.mxu0 0.0
  %9948 = vmatprep.subr.mxu0 0.0
  %9949 = vmatpush1.msra.mxu0 0.0
  %9950 = vmatprep.subr.mxu0 0.0
  %9951 = vmatpush1.msra.mxu0 0.0
  %9952 = vmatprep.subr.mxu0 0.0
  %9953 = vmatpush1.msra.mxu0 0.0
  %9954 = vmatprep.mubr.f32.mxu0 0.0
  %9955 = vmatmul.mubr.f32.gmra.mrb[0].mxu0 %v9884
  %v9956 = vpop.f32.mrb[0].mxu0
  %v9957 = vadd.f32 0.0, %v9956
  %v9958 = vpop.f32.mrb[0].mxu0
  %9959 = vdwg.mxu0
  %v9960 = vrcp.pop 3042.0
  %v9961 = vmul.f32 %v9957, %v9960
  %v9963 = vsel %vm9764, %v9961, 0
  %9965 = vmatprep.subr.mxu0 0.0
  %9966 = vmatpush1.msra.mxu0 %v9770
  %9967 = vmatprep.subr.mxu0 0.0
  %9968 = vmatpush1.msra.mxu0 0.0
  %9969 = vmatprep.subr.mxu0 0.0
  %9970 = vmatpush1.msra.mxu0 0.0
  %9971 = vmatprep.subr.mxu0 0.0
  %9972 = vmatpush1.msra.mxu0 0.0
  %9973 = vmatprep.subr.mxu0 0.0
  %9974 = vmatpush1.msra.mxu0 0.0
  %9975 = vmatprep.subr.mxu0 0.0
  %9976 = vmatpush1.msra.mxu0 0.0
  %9977 = vmatprep.subr.mxu0 0.0
  %9978 = vmatpush1.msra.mxu0 0.0
  %9979 = vmatprep.subr.mxu0 0.0
  %9980 = vmatpush1.msra.mxu0 0.0
  %9981 = vmatprep.subr.mxu0 0.0
  %9982 = vmatpush1.msra.mxu0 0.0
  %9983 = vmatprep.subr.mxu0 0.0
  %9984 = vmatpush1.msra.mxu0 0.0
  %9985 = vmatprep.subr.mxu0 0.0
  %9986 = vmatpush1.msra.mxu0 0.0
  %9987 = vmatprep.subr.mxu0 0.0
  %9988 = vmatpush1.msra.mxu0 0.0
  %9989 = vmatprep.subr.mxu0 0.0
  %9990 = vmatpush1.msra.mxu0 0.0
  %9991 = vmatprep.subr.mxu0 0.0
  %9992 = vmatpush1.msra.mxu0 0.0
  %9993 = vmatprep.subr.mxu0 0.0
  %9994 = vmatpush1.msra.mxu0 0.0
  %9995 = vmatprep.subr.mxu0 0.0
  %9996 = vmatpush1.msra.mxu0 0.0
  %9997 = vmatprep.subr.mxu0 0.0
  %9998 = vmatpush1.msra.mxu0 0.0
  %9999 = vmatprep.subr.mxu0 0.0
  %10000 = vmatpush1.msra.mxu0 0.0
  %10001 = vmatprep.subr.mxu0 0.0
  %10002 = vmatpush1.msra.mxu0 0.0
  %10003 = vmatprep.subr.mxu0 0.0
  %10004 = vmatpush1.msra.mxu0 0.0
  %10005 = vmatprep.subr.mxu0 0.0
  %10006 = vmatpush1.msra.mxu0 0.0
  %10007 = vmatprep.subr.mxu0 0.0
  %10008 = vmatpush1.msra.mxu0 0.0
  %10009 = vmatprep.subr.mxu0 0.0
  %10010 = vmatpush1.msra.mxu0 0.0
  %10011 = vmatprep.subr.mxu0 0.0
  %10012 = vmatpush1.msra.mxu0 0.0
  %10013 = vmatprep.subr.mxu0 0.0
  %10014 = vmatpush1.msra.mxu0 0.0
  %10015 = vmatprep.subr.mxu0 0.0
  %10016 = vmatpush1.msra.mxu0 0.0
  %10017 = vmatprep.subr.mxu0 0.0
  %10018 = vmatpush1.msra.mxu0 0.0
  %10019 = vmatprep.subr.mxu0 0.0
  %10020 = vmatpush1.msra.mxu0 0.0
  %10021 = vmatprep.subr.mxu0 0.0
  %10022 = vmatpush1.msra.mxu0 0.0
  %10023 = vmatprep.subr.mxu0 0.0
  %10024 = vmatpush1.msra.mxu0 0.0
  %10025 = vmatprep.subr.mxu0 0.0
  %10026 = vmatpush1.msra.mxu0 0.0
  %10027 = vmatprep.subr.mxu0 0.0
  %10028 = vmatpush1.msra.mxu0 0.0
  %10029 = vmatprep.mubr.f32.mxu0 0.0
  %10030 = vmatmul.mubr.f32.gmra.mrb[0].mxu0 %v9963
  %v10031 = vpop.f32.mrb[0].mxu0
  %v10032 = vadd.f32 0.0, %v10031
  %v10033 = vpop.f32.mrb[0].mxu0
  %10034 = vdwg.mxu0
  %v10035 = vlaneseq
  %v10036 = vshrl.u32 %v10035, 7
  %v10037 = vsub.s32 0, %v10036
  %v10038 = vrot.slane %v10032, %v10037
  %v10039 = vsub.f32 %v9846, %v10038
  %v10040 = vsub.f32 %v9847, %v10038
  %v10041 = vsub.f32 %v9848, %v10038
  %v10042 = vsub.f32 %v9849, %v10038
  %v10043 = vsub.f32 %v9850, %v10038
  %v10044 = vsub.f32 %v9851, %v10038
  %v10045 = vsub.f32 %v9852, %v10038
  %v10046 = vsub.f32 %v9853, %v10038
  %v10047 = vsub.f32 %v9854, %v10038
  %v10048 = vsub.f32 %v9855, %v10038
  %v10049 = vmul.f32 %v10039, %v10039
  %v10050 = vmul.f32 %v10040, %v10040
  %v10051 = vmul.f32 %v10041, %v10041
  %v10052 = vmul.f32 %v10042, %v10042
  %v10053 = vmul.f32 %v10043, %v10043
  %v10054 = vmul.f32 %v10044, %v10044
  %v10055 = vmul.f32 %v10045, %v10045
  %v10056 = vmul.f32 %v10046, %v10046
  %v10057 = vmul.f32 %v10047, %v10047
  %v10058 = vmul.f32 %v10048, %v10048
  %v10059 = vsel %vm9856, %v10049, 0.0
  %v10060 = vsel %vm9856, %v10050, 0.0
  %v10061 = vadd.f32 %v10059, %v10060
  %v10062 = vsel %vm9856, %v10051, 0.0
  %v10063 = vadd.f32 %v10061, %v10062
  %v10064 = vsel %vm9856, %v10052, 0.0
  %v10065 = vadd.f32 %v10063, %v10064
  %v10066 = vsel %vm9856, %v10053, 0.0
  %v10067 = vadd.f32 %v10065, %v10066
  %v10068 = vsel %vm9856, %v10054, 0.0
  %v10069 = vadd.f32 %v10067, %v10068
  %v10070 = vsel %vm9856, %v10055, 0.0
  %v10071 = vadd.f32 %v10069, %v10070
  %v10072 = vsel %vm9856, %v10056, 0.0
  %v10073 = vadd.f32 %v10071, %v10072
  %v10074 = vsel %vm9856, %v10057, 0.0
  %v10075 = vadd.f32 %v10073, %v10074
  %v10076 = vsel %vm9874, %v10058, 0.0
  %v10077 = vadd.f32 %v10075, %v10076
  %v10078 = vrot.slane %v10077, 4
  %v10079 = vadd.f32 %v10077, %v10078
  %v10080 = vrot.slane %v10079, 2
  %v10081 = vadd.f32 %v10079, %v10080
  %v10082 = vrot.slane %v10081, 1
  %v10083 = vadd.f32 %v10081, %v10082
  %v10085 = vsel %vm9856, %v10083, 0
  %10087 = vmatprep.subr.mxu0 0.0
  %10088 = vmatpush1.msra.mxu0 %v9746
  %10089 = vmatprep.subr.mxu0 0.0
  %10090 = vmatpush1.msra.mxu0 %v9747
  %10091 = vmatprep.subr.mxu0 0.0
  %10092 = vmatpush1.msra.mxu0 %v9748
  %10093 = vmatprep.subr.mxu0 0.0
  %10094 = vmatpush1.msra.mxu0 %v9749
  %10095 = vmatprep.subr.mxu0 0.0
  %10096 = vmatpush1.msra.mxu0 %v9750
  %10097 = vmatprep.subr.mxu0 0.0
  %10098 = vmatpush1.msra.mxu0 %v9751
  %10099 = vmatprep.subr.mxu0 0.0
  %10100 = vmatpush1.msra.mxu0 %v9752
  %10101 = vmatprep.subr.mxu0 0.0
  %10102 = vmatpush1.msra.mxu0 %v9753
  %10103 = vmatprep.subr.mxu0 0.0
  %10104 = vmatpush1.msra.mxu0 %v9754
  %10105 = vmatprep.subr.mxu0 0.0
  %10106 = vmatpush1.msra.mxu0 %v9755
  %10107 = vmatprep.subr.mxu0 0.0
  %10108 = vmatpush1.msra.mxu0 %v9756
  %10109 = vmatprep.subr.mxu0 0.0
  %10110 = vmatpush1.msra.mxu0 %v9757
  %10111 = vmatprep.subr.mxu0 0.0
  %10112 = vmatpush1.msra.mxu0 %v9758
  %10113 = vmatprep.subr.mxu0 0.0
  %10114 = vmatpush1.msra.mxu0 %v9759
  %10115 = vmatprep.subr.mxu0 0.0
  %10116 = vmatpush1.msra.mxu0 %v9888
  %10117 = vmatprep.subr.mxu0 0.0
  %10118 = vmatpush1.msra.mxu0 0.0
  %10119 = vmatprep.subr.mxu0 0.0
  %10120 = vmatpush1.msra.mxu0 0.0
  %10121 = vmatprep.subr.mxu0 0.0
  %10122 = vmatpush1.msra.mxu0 0.0
  %10123 = vmatprep.subr.mxu0 0.0
  %10124 = vmatpush1.msra.mxu0 0.0
  %10125 = vmatprep.subr.mxu0 0.0
  %10126 = vmatpush1.msra.mxu0 0.0
  %10127 = vmatprep.subr.mxu0 0.0
  %10128 = vmatpush1.msra.mxu0 0.0
  %10129 = vmatprep.subr.mxu0 0.0
  %10130 = vmatpush1.msra.mxu0 0.0
  %10131 = vmatprep.subr.mxu0 0.0
  %10132 = vmatpush1.msra.mxu0 0.0
  %10133 = vmatprep.subr.mxu0 0.0
  %10134 = vmatpush1.msra.mxu0 0.0
  %10135 = vmatprep.subr.mxu0 0.0
  %10136 = vmatpush1.msra.mxu0 0.0
  %10137 = vmatprep.subr.mxu0 0.0
  %10138 = vmatpush1.msra.mxu0 0.0
  %10139 = vmatprep.subr.mxu0 0.0
  %10140 = vmatpush1.msra.mxu0 0.0
  %10141 = vmatprep.subr.mxu0 0.0
  %10142 = vmatpush1.msra.mxu0 0.0
  %10143 = vmatprep.subr.mxu0 0.0
  %10144 = vmatpush1.msra.mxu0 0.0
  %10145 = vmatprep.subr.mxu0 0.0
  %10146 = vmatpush1.msra.mxu0 0.0
  %10147 = vmatprep.subr.mxu0 0.0
  %10148 = vmatpush1.msra.mxu0 0.0
  %10149 = vmatprep.subr.mxu0 0.0
  %10150 = vmatpush1.msra.mxu0 0.0
  %10151 = vmatprep.mubr.f32.mxu0 0.0
  %10152 = vmatmul.mubr.f32.gmra.mrb[0].mxu0 %v10085
  %v10153 = vpop.f32.mrb[0].mxu0
  %v10154 = vadd.f32 0.0, %v10153
  %v10155 = vpop.f32.mrb[0].mxu0
  %10156 = vdwg.mxu0
  %v10157 = vmul.f32 %v10154, %v9960
  %v10158 = vadd.f32 %v10157, 1e-05
  %v10159 = vrsqrt.pop %v10158
  %v10160 = vmul.f32 %v9762, %v10159
  %v10162 = vsel %vm9764, %v10160, 0
  %10164 = vmatprep.subr.mxu0 0.0
  %10165 = vmatpush1.msra.mxu0 %v9770
  %10166 = vmatprep.subr.mxu0 0.0
  %10167 = vmatpush1.msra.mxu0 0.0
  %10168 = vmatprep.subr.mxu0 0.0
  %10169 = vmatpush1.msra.mxu0 0.0
  %10170 = vmatprep.subr.mxu0 0.0
  %10171 = vmatpush1.msra.mxu0 0.0
  %10172 = vmatprep.subr.mxu0 0.0
  %10173 = vmatpush1.msra.mxu0 0.0
  %10174 = vmatprep.subr.mxu0 0.0
  %10175 = vmatpush1.msra.mxu0 0.0
  %10176 = vmatprep.subr.mxu0 0.0
  %10177 = vmatpush1.msra.mxu0 0.0
  %10178 = vmatprep.subr.mxu0 0.0
  %10179 = vmatpush1.msra.mxu0 0.0
  %10180 = vmatprep.subr.mxu0 0.0
  %10181 = vmatpush1.msra.mxu0 0.0
  %10182 = vmatprep.subr.mxu0 0.0
  %10183 = vmatpush1.msra.mxu0 0.0
  %10184 = vmatprep.subr.mxu0 0.0
  %10185 = vmatpush1.msra.mxu0 0.0
  %10186 = vmatprep.subr.mxu0 0.0
  %10187 = vmatpush1.msra.mxu0 0.0
  %10188 = vmatprep.subr.mxu0 0.0
  %10189 = vmatpush1.msra.mxu0 0.0
  %10190 = vmatprep.subr.mxu0 0.0
  %10191 = vmatpush1.msra.mxu0 0.0
  %10192 = vmatprep.subr.mxu0 0.0
  %10193 = vmatpush1.msra.mxu0 0.0
  %10194 = vmatprep.subr.mxu0 0.0
  %10195 = vmatpush1.msra.mxu0 0.0
  %10196 = vmatprep.subr.mxu0 0.0
  %10197 = vmatpush1.msra.mxu0 0.0
  %10198 = vmatprep.subr.mxu0 0.0
  %10199 = vmatpush1.msra.mxu0 0.0
  %10200 = vmatprep.subr.mxu0 0.0
  %10201 = vmatpush1.msra.mxu0 0.0
  %10202 = vmatprep.subr.mxu0 0.0
  %10203 = vmatpush1.msra.mxu0 0.0
  %10204 = vmatprep.subr.mxu0 0.0
  %10205 = vmatpush1.msra.mxu0 0.0
  %10206 = vmatprep.subr.mxu0 0.0
  %10207 = vmatpush1.msra.mxu0 0.0
  %10208 = vmatprep.subr.mxu0 0.0
  %10209 = vmatpush1.msra.mxu0 0.0
  %10210 = vmatprep.subr.mxu0 0.0
  %10211 = vmatpush1.msra.mxu0 0.0
  %10212 = vmatprep.subr.mxu0 0.0
  %10213 = vmatpush1.msra.mxu0 0.0
  %10214 = vmatprep.subr.mxu0 0.0
  %10215 = vmatpush1.msra.mxu0 0.0
  %10216 = vmatprep.subr.mxu0 0.0
  %10217 = vmatpush1.msra.mxu0 0.0
  %10218 = vmatprep.subr.mxu0 0.0
  %10219 = vmatpush1.msra.mxu0 0.0
  %10220 = vmatprep.subr.mxu0 0.0
  %10221 = vmatpush1.msra.mxu0 0.0
  %10222 = vmatprep.subr.mxu0 0.0
  %10223 = vmatpush1.msra.mxu0 0.0
  %10224 = vmatprep.subr.mxu0 0.0
  %10225 = vmatpush1.msra.mxu0 0.0
  %10226 = vmatprep.subr.mxu0 0.0
  %10227 = vmatpush1.msra.mxu0 0.0
  %10228 = vmatprep.mubr.f32.mxu0 0.0
  %10229 = vmatmul.mubr.f32.gmra.mrb[0].mxu0 %v10162
  %v10230 = vpop.f32.mrb[0].mxu0
  %v10231 = vadd.f32 0.0, %v10230
  %v10232 = vpop.f32.mrb[0].mxu0
  %10233 = vdwg.mxu0
  %v10234 = vlaneseq
  %v10235 = vshrl.u32 %v10234, 7
  %v10236 = vsub.s32 0, %v10235
  %v10237 = vrot.slane %v10231, %v10236
  %v10238 = vmul.f32 %v10039, %v10237
  %v10239 = vmul.f32 %v10040, %v10237
  %v10240 = vmul.f32 %v10041, %v10237
  %v10241 = vmul.f32 %v10042, %v10237
  %v10242 = vmul.f32 %v10043, %v10237
  %v10243 = vmul.f32 %v10044, %v10237
  %v10244 = vmul.f32 %v10045, %v10237
  %v10245 = vmul.f32 %v10046, %v10237
  %v10246 = vmul.f32 %v10047, %v10237
  %v10247 = vmul.f32 %v10048, %v10237
  %v10249 = vsel %vm9764, %v9763, 0
  %10251 = vmatprep.subr.mxu0 0.0
  %10252 = vmatpush1.msra.mxu0 %v9770
  %10253 = vmatprep.subr.mxu0 0.0
  %10254 = vmatpush1.msra.mxu0 0.0
  %10255 = vmatprep.subr.mxu0 0.0
  %10256 = vmatpush1.msra.mxu0 0.0
  %10257 = vmatprep.subr.mxu0 0.0
  %10258 = vmatpush1.msra.mxu0 0.0
  %10259 = vmatprep.subr.mxu0 0.0
  %10260 = vmatpush1.msra.mxu0 0.0
  %10261 = vmatprep.subr.mxu0 0.0
  %10262 = vmatpush1.msra.mxu0 0.0
  %10263 = vmatprep.subr.mxu0 0.0
  %10264 = vmatpush1.msra.mxu0 0.0
  %10265 = vmatprep.subr.mxu0 0.0
  %10266 = vmatpush1.msra.mxu0 0.0
  %10267 = vmatprep.subr.mxu0 0.0
  %10268 = vmatpush1.msra.mxu0 0.0
  %10269 = vmatprep.subr.mxu0 0.0
  %10270 = vmatpush1.msra.mxu0 0.0
  %10271 = vmatprep.subr.mxu0 0.0
  %10272 = vmatpush1.msra.mxu0 0.0
  %10273 = vmatprep.subr.mxu0 0.0
  %10274 = vmatpush1.msra.mxu0 0.0
  %10275 = vmatprep.subr.mxu0 0.0
  %10276 = vmatpush1.msra.mxu0 0.0
  %10277 = vmatprep.subr.mxu0 0.0
  %10278 = vmatpush1.msra.mxu0 0.0
  %10279 = vmatprep.subr.mxu0 0.0
  %10280 = vmatpush1.msra.mxu0 0.0
  %10281 = vmatprep.subr.mxu0 0.0
  %10282 = vmatpush1.msra.mxu0 0.0
  %10283 = vmatprep.subr.mxu0 0.0
  %10284 = vmatpush1.msra.mxu0 0.0
  %10285 = vmatprep.subr.mxu0 0.0
  %10286 = vmatpush1.msra.mxu0 0.0
  %10287 = vmatprep.subr.mxu0 0.0
  %10288 = vmatpush1.msra.mxu0 0.0
  %10289 = vmatprep.subr.mxu0 0.0
  %10290 = vmatpush1.msra.mxu0 0.0
  %10291 = vmatprep.subr.mxu0 0.0
  %10292 = vmatpush1.msra.mxu0 0.0
  %10293 = vmatprep.subr.mxu0 0.0
  %10294 = vmatpush1.msra.mxu0 0.0
  %10295 = vmatprep.subr.mxu0 0.0
  %10296 = vmatpush1.msra.mxu0 0.0
  %10297 = vmatprep.subr.mxu0 0.0
  %10298 = vmatpush1.msra.mxu0 0.0
  %10299 = vmatprep.subr.mxu0 0.0
  %10300 = vmatpush1.msra.mxu0 0.0
  %10301 = vmatprep.subr.mxu0 0.0
  %10302 = vmatpush1.msra.mxu0 0.0
  %10303 = vmatprep.subr.mxu0 0.0
  %10304 = vmatpush1.msra.mxu0 0.0
  %10305 = vmatprep.subr.mxu0 0.0
  %10306 = vmatpush1.msra.mxu0 0.0
  %10307 = vmatprep.subr.mxu0 0.0
  %10308 = vmatpush1.msra.mxu0 0.0
  %10309 = vmatprep.subr.mxu0 0.0
  %10310 = vmatpush1.msra.mxu0 0.0
  %10311 = vmatprep.subr.mxu0 0.0
  %10312 = vmatpush1.msra.mxu0 0.0
  %10313 = vmatprep.subr.mxu0 0.0
  %10314 = vmatpush1.msra.mxu0 0.0
  %10315 = vmatprep.mubr.f32.mxu0 0.0
  %10316 = vmatmul.mubr.f32.gmra.mrb[0].mxu0 %v10249
  %v10317 = vpop.f32.mrb[0].mxu0
  %v10318 = vadd.f32 0.0, %v10317
  %v10319 = vpop.f32.mrb[0].mxu0
  %10320 = vdwg.mxu0
  %v10321 = vlaneseq
  %v10322 = vshrl.u32 %v10321, 7
  %v10323 = vsub.s32 0, %v10322
  %v10324 = vrot.slane %v10318, %v10323
  %v10325 = vadd.f32 %v10238, %v10324
  %v10326 = vadd.f32 %v10239, %v10324
  %v10327 = vadd.f32 %v10240, %v10324
  %v10328 = vadd.f32 %v10241, %v10324
  %v10329 = vadd.f32 %v10242, %v10324
  %v10330 = vadd.f32 %v10243, %v10324
  %v10331 = vadd.f32 %v10244, %v10324
  %v10332 = vadd.f32 %v10245, %v10324
  %v10333 = vadd.f32 %v10246, %v10324
  %v10334 = vadd.f32 %v10247, %v10324
  %v10335 = vxor.u32 %v10325, 2147483648
  %v10336 = vxor.u32 %v10326, 2147483648
  %v10337 = vxor.u32 %v10327, 2147483648
  %v10338 = vxor.u32 %v10328, 2147483648
  %v10339 = vxor.u32 %v10329, 2147483648
  %v10340 = vxor.u32 %v10330, 2147483648
  %v10341 = vxor.u32 %v10331, 2147483648
  %v10342 = vxor.u32 %v10332, 2147483648
  %v10343 = vxor.u32 %v10333, 2147483648
  %v10344 = vxor.u32 %v10334, 2147483648
  %v10345 = vmul.f32 %v10335, 1.442695
  %v10346 = vpow.pop %v10345
  %v10347 = vmul.f32 %v10336, 1.442695
  %v10348 = vpow.pop %v10347
  %v10349 = vmul.f32 %v10337, 1.442695
  %v10350 = vpow.pop %v10349
  %v10351 = vmul.f32 %v10338, 1.442695
  %v10352 = vpow.pop %v10351
  %v10353 = vmul.f32 %v10339, 1.442695
  %v10354 = vpow.pop %v10353
  %v10355 = vmul.f32 %v10340, 1.442695
  %v10356 = vpow.pop %v10355
  %v10357 = vmul.f32 %v10341, 1.442695
  %v10358 = vpow.pop %v10357
  %v10359 = vmul.f32 %v10342, 1.442695
  %v10360 = vpow.pop %v10359
  %v10361 = vmul.f32 %v10343, 1.442695
  %v10362 = vpow.pop %v10361
  %v10363 = vmul.f32 %v10344, 1.442695
  %v10364 = vpow.pop %v10363
  %v10365 = vadd.f32 %v10346, 1.0
  %v10366 = vadd.f32 %v10348, 1.0
  %v10367 = vadd.f32 %v10350, 1.0
  %v10368 = vadd.f32 %v10352, 1.0
  %v10369 = vadd.f32 %v10354, 1.0
  %v10370 = vadd.f32 %v10356, 1.0
  %v10371 = vadd.f32 %v10358, 1.0
  %v10372 = vadd.f32 %v10360, 1.0
  %v10373 = vadd.f32 %v10362, 1.0
  %v10374 = vadd.f32 %v10364, 1.0
  %v10375 = vrcp.pop %v10365
  %v10376 = vmul.f32 1.0, %v10375
  %v10377 = vrcp.pop %v10366
  %v10378 = vmul.f32 1.0, %v10377
  %v10379 = vrcp.pop %v10367
  %v10380 = vmul.f32 1.0, %v10379
  %v10381 = vrcp.pop %v10368
  %v10382 = vmul.f32 1.0, %v10381
  %v10383 = vrcp.pop %v10369
  %v10384 = vmul.f32 1.0, %v10383
  %v10385 = vrcp.pop %v10370
  %v10386 = vmul.f32 1.0, %v10385
  %v10387 = vrcp.pop %v10371
  %v10388 = vmul.f32 1.0, %v10387
  %v10389 = vrcp.pop %v10372
  %v10390 = vmul.f32 1.0, %v10389
  %v10391 = vrcp.pop %v10373
  %v10392 = vmul.f32 1.0, %v10391
  %v10393 = vrcp.pop %v10374
  %v10394 = vmul.f32 1.0, %v10393
  %10395 = vst.msk [vmem:[%s67] sm:$0xff] %vm9856, %v10376
  %10396 = vst.msk [vmem:[%s67 + $0x8] sm:$0xff] %vm9856, %v10378
  %10397 = vst.msk [vmem:[%s67 + $0x10] sm:$0xff] %vm9856, %v10380
  %10398 = vst.msk [vmem:[%s67 + $0x18] sm:$0xff] %vm9856, %v10382
  %10399 = vst.msk [vmem:[%s67 + $0x20] sm:$0xff] %vm9856, %v10384
  %10400 = vst.msk [vmem:[%s67 + $0x28] sm:$0xff] %vm9856, %v10386
  %10401 = vst.msk [vmem:[%s67 + $0x30] sm:$0xff] %vm9856, %v10388
  %10402 = vst.msk [vmem:[%s67 + $0x38] sm:$0xff] %vm9856, %v10390
  %10403 = vst.msk [vmem:[%s67 + $0x40] sm:$0xff] %vm9856, %v10392
  %10404 = vst.msk [vmem:[%s67 + $0x48] sm:$0x3f] %vm9874, %v10394
  // Predicated region
  $region134: #{private_decoder_forward.2} parent=0 // pred_check
    _
  $region135: #{private_decoder_forward.2} parent=0 // pred_check_branch
    %10406 = sbr.rel (0) target = $region137
  $region136: #{private_decoder_forward.2} parent=0 // pred_region
    _
  $region137: #{private_decoder_forward.2} parent=0 // pred_fallthru
    _
  // Predicated region
  $region138: #{private_decoder_forward.2} parent=0 // pred_check
    _
  $region139: #{private_decoder_forward.2} parent=0 // pred_check_branch
    %10408 = sbr.rel (0) target = $region141
  $region140: #{private_decoder_forward.2} parent=0 // pred_region
    _
  $region141: #{private_decoder_forward.2} parent=0 // pred_fallthru
    _

</llo_original>
